<compile_context>
chip_gen: v7x
topology: tpu7x:2x2x1
jax: 0.10.0
libtpu: 0.0.40
codegen_flags: <defaults>
</compile_context>

<pallas_src>
import functools

import jax
import jax.numpy as jnp
from jax import lax
from jax.experimental import pallas as pl
from jax.experimental.pallas import tpu as pltpu

ACT_PAD = 128  # lane-dense padded width of the fc2 output


def _conv_out(sz, k, s):
    return (sz - k) // s + 1


# ---------------------------------------------------------------------------
# Fused whole-network kernel (one grid step == one batch element)
# ---------------------------------------------------------------------------
def _qnet_kernel(x_ref, w1e_ref, w1ol_ref, w1or_ref, b1_ref,
                 w2_ref, b2_ref, w3_ref, b3_ref,
                 wf1_ref, bf1_ref, wf2_ref, bf2_ref,
                 o_ref, *, dims):
    C, oh1, ow1, oh2, ow2, oh3, ow3 = dims
    c1k = 32 * C          # channels of one blocked (8-col) input column
    half = 16 * C         # low/high half of that channel block
    ne = (ow1 + 1) // 2   # even conv1 output columns
    no = ow1 // 2         # odd  conv1 output columns
    fcu = wf1_ref.shape[1]
    f32, bf16 = jnp.float32, jnp.bfloat16

    # ---- resident weights / biases (loaded once, sliced as values) ---------
    b1 = b1_ref[...]           # (1, 32)  f32
    b2 = b2_ref[...]           # (1, 64)
    b3 = b3_ref[...]           # (1, 64)
    bf1 = bf1_ref[...]         # (1, fcu)
    bf2 = bf2_ref[...]         # (1, ACT_PAD)
    w1e = [w1e_ref[a * c1k:(a + 1) * c1k, :] for a in range(2)]
    w1ol = [w1ol_ref[a * half:(a + 1) * half, :] for a in range(2)]
    w1or = [w1or_ref[a * half:(a + 1) * half, :] for a in range(2)]
    w2 = [w2_ref[t * 32:(t + 1) * 32, :] for t in range(16)]
    w3 = [w3_ref[t * 64:(t + 1) * 64, :] for t in range(9)]

    # ---- conv1 (8x8 / stride 4) on the (rows/4, cols/8)-blocked input ------
    # Output rows kept split by column parity so conv2's stride-2 reads are
    # contiguous slices.
    y1 = {(pe, pw): [] for pe in (0, 1) for pw in (0, 1)}
    for oh in range(oh1):
        rows = (x_ref[oh], x_ref[oh + 1])        # 2 x (Wb, 32C) bf16
        acc_e = jnp.zeros((ne, 32), f32)
        acc_o = jnp.zeros((no, 32), f32)
        for a in range(2):
            acc_e += jnp.dot(rows[a][:ne, :], w1e[a],
                             preferred_element_type=f32)
            acc_o += jnp.dot(rows[a][:no, half:], w1ol[a],
                             preferred_element_type=f32)
            acc_o += jnp.dot(rows[a][1:1 + no, :half], w1or[a],
                             preferred_element_type=f32)
        y1[(oh % 2, 0)].append(jnp.maximum(acc_e + b1, 0.0).astype(bf16))
        y1[(oh % 2, 1)].append(jnp.maximum(acc_o + b1, 0.0).astype(bf16))

    # ---- conv2 (4x4 / stride 2) via parity-indexed contiguous slices -------
    y2 = []
    for i in range(oh2):
        acc = jnp.zeros((ow2, 64), f32)
        for dh in range(4):
            for dw in range(4):
                src = y1[(dh % 2, dw % 2)][i + dh // 2]     # (ne|no, 32)
                win = src[dw // 2:dw // 2 + ow2, :]          # (ow2, 32)
                acc += jnp.dot(win, w2[dh * 4 + dw],
                               preferred_element_type=f32)
        y2.append(jnp.maximum(acc + b2, 0.0).astype(bf16))

    # ---- conv3 (3x3 / stride 1): plain shift-and-matmul ---------------------
    y3 = []
    for p in range(oh3):
        acc = jnp.zeros((ow3, 64), f32)
        for dh in range(3):
            row = y2[p + dh]                                 # (ow2, 64)
            for dw in range(3):
                acc += jnp.dot(row[dw:dw + ow3, :], w3[dh * 3 + dw],
                               preferred_element_type=f32)
        y3.append(jnp.maximum(acc + b3, 0.0).astype(bf16))

    # ---- fc1 (ReLU) + fc2, chained in VMEM ----------------------------------
    h = jnp.zeros((1, fcu), f32)
    for p in range(oh3):
        for q in range(ow3):
            k0 = (p * ow3 + q) * 64
            h += jnp.dot(y3[p][q:q + 1, :], wf1_ref[k0:k0 + 64, :],
                         preferred_element_type=f32)
    h = jnp.maximum(h + bf1, 0.0).astype(bf16)
    qv = jnp.dot(h, wf2_ref[...], preferred_element_type=f32) + bf2
    o_ref[...] = qv


# ---------------------------------------------------------------------------
# Boundary layout op (plain JAX): NCHW -> (rows/4, cols/8)-blocked NHWC, bf16
# channel order inside a block is (dq, dr, c) with dq in [0,8), dr in [0,4).
# TODO(synk): this single input relayout is plain-JAX glue; it could be folded
# into the kernel if the caller guaranteed an NHWC input layout.
# ---------------------------------------------------------------------------
def _space_to_depth_input(state_nchw, oh1, ow1):
    N, C, H, W = state_nchw.shape
    rows_needed = 4 * oh1 + 4
    cols_needed = 4 * ow1 + 4
    wb_cols = ((cols_needed + 7) // 8) * 8
    x = jnp.transpose(state_nchw, (0, 2, 3, 1))              # NHWC
    x = x[:, :rows_needed, :min(W, wb_cols), :]
    if x.shape[2] < wb_cols:                                 # pad <=4 unused cols
        x = jnp.pad(x, ((0, 0), (0, 0), (0, wb_cols - x.shape[2]), (0, 0)))
    hb, wb = rows_needed // 4, wb_cols // 8
    x = x.reshape(N, hb, 4, wb, 8, C)                        # (n, r, dr, q, dq, c)
    x = jnp.transpose(x, (0, 1, 3, 4, 2, 5))                 # (n, r, q, dq, dr, c)
    return x.reshape(N, hb, wb, 32 * C).astype(jnp.bfloat16)


# ---------------------------------------------------------------------------
# Parameters: PyTorch-layout init + one-time kernel-layout preparation
# ---------------------------------------------------------------------------
def init_qnetwork_params(key, input_shape, action_size, fc_units=512):
    channels, height, width = input_shape
    h = _conv_out(_conv_out(_conv_out(height, 8, 4), 4, 2), 3, 1)
    w = _conv_out(_conv_out(_conv_out(width, 8, 4), 4, 2), 3, 1)
    flat_dim = 64 * h * w

    ks = jax.random.split(key, 10)

    def init_w(k, shape, fan_in):
        return jax.random.normal(k, shape, jnp.float32) / jnp.sqrt(fan_in)

    return {
        "conv1_w": init_w(ks[0], (32, channels, 8, 8), channels * 64),
        "conv1_b": init_w(ks[1], (32,), channels * 64),
        "conv2_w": init_w(ks[2], (64, 32, 4, 4), 32 * 16),
        "conv2_b": init_w(ks[3], (64,), 32 * 16),
        "conv3_w": init_w(ks[4], (64, 64, 3, 3), 64 * 9),
        "conv3_b": init_w(ks[5], (64,), 64 * 9),
        "fc1_w": init_w(ks[6], (fc_units, flat_dim), flat_dim),
        "fc1_b": init_w(ks[7], (fc_units,), flat_dim),
        "fc2_w": init_w(ks[8], (action_size, fc_units), fc_units),
        "fc2_b": init_w(ks[9], (action_size,), fc_units),
    }


def prepare_qnetwork_params(params, input_shape):
    C, H, W = input_shape
    oh1, ow1 = _conv_out(H, 8, 4), _conv_out(W, 8, 4)
    oh2, ow2 = _conv_out(oh1, 4, 2), _conv_out(ow1, 4, 2)
    oh3, ow3 = _conv_out(oh2, 3, 1), _conv_out(ow2, 3, 1)

    w1 = params["conv1_w"]                     # (32, C, 8, 8) torch OIHW

    def c1_block(a, lo, hi):                   # rows ordered (kw, dr, c)
        blk = w1[:, :, 4 * a:4 * a + 4, lo:hi]          # (o, c, dr, kw)
        return jnp.transpose(blk, (3, 2, 1, 0)).reshape((hi - lo) * 4 * C, 32)

    w1e = jnp.concatenate([c1_block(0, 0, 8), c1_block(1, 0, 8)], axis=0)
    w1ol = jnp.concatenate([c1_block(0, 0, 4), c1_block(1, 0, 4)], axis=0)
    w1or = jnp.concatenate([c1_block(0, 4, 8), c1_block(1, 4, 8)], axis=0)

    w2 = jnp.transpose(params["conv2_w"], (2, 3, 1, 0)).reshape(16 * 32, 64)
    w3 = jnp.transpose(params["conv3_w"], (2, 3, 1, 0)).reshape(9 * 64, 64)

    fc1 = params["fc1_w"]                      # (fc_units, 64*oh3*ow3), cols (c,h,w)
    fc_units = fc1.shape[0]
    wf1 = (fc1.reshape(fc_units, 64, oh3, ow3)
              .transpose(2, 3, 1, 0)
              .reshape(oh3 * ow3 * 64, fc_units))        # rows (h, w, c)
    fc2 = params["fc2_w"]                      # (A, fc_units)
    A = fc2.shape[0]
    assert A <= ACT_PAD
    wf2 = jnp.pad(fc2.T, ((0, 0), (0, ACT_PAD - A)))
    bf2 = jnp.pad(params["fc2_b"], (0, ACT_PAD - A)).reshape(1, ACT_PAD)

    bf = lambda a: a.astype(jnp.bfloat16)
    return {
        "w1e": bf(w1e), "w1ol": bf(w1ol), "w1or": bf(w1or),
        "b1": params["conv1_b"].reshape(1, 32).astype(jnp.float32),
        "w2": bf(w2), "b2": params["conv2_b"].reshape(1, 64).astype(jnp.float32),
        "w3": bf(w3), "b3": params["conv3_b"].reshape(1, 64).astype(jnp.float32),
        "wf1": bf(wf1),
        "bf1": params["fc1_b"].reshape(1, fc_units).astype(jnp.float32),
        "wf2": bf(wf2), "bf2": bf2.astype(jnp.float32),
    }


_WEIGHT_ORDER = ("w1e", "w1ol", "w1or", "b1", "w2", "b2", "w3", "b3",
                 "wf1", "bf1", "wf2", "bf2")


def _resident_spec(arr):
    ndim = arr.ndim
    return pl.BlockSpec(tuple(arr.shape), lambda n, _nd=ndim: (0,) * _nd)


# ---------------------------------------------------------------------------
# Forward pass: one pallas_call for the whole network
# ---------------------------------------------------------------------------
def qnetwork_forward(prepared, state_nchw, action_size):
    N, C, H, W = state_nchw.shape
    oh1, ow1 = _conv_out(H, 8, 4), _conv_out(W, 8, 4)
    oh2, ow2 = _conv_out(oh1, 4, 2), _conv_out(ow1, 4, 2)
    oh3, ow3 = _conv_out(oh2, 3, 1), _conv_out(ow2, 3, 1)

    x8 = _space_to_depth_input(state_nchw, oh1, ow1)   # (N, Hb, Wb, 32C) bf16
    _, Hb, Wb, CC = x8.shape
    weights = [prepared[k] for k in _WEIGHT_ORDER]
    fcu = prepared["wf1"].shape[1]

    flops = 2 * N * (oh1 * ow1 * 64 * C * 32
                     + oh2 * ow2 * (16 * 32) * 64
                     + oh3 * ow3 * (9 * 64) * 64
                     + (oh3 * ow3 * 64) * fcu
                     + fcu * ACT_PAD)
    bytes_accessed = int(x8.size * 2
                         + sum(w.size * w.dtype.itemsize for w in weights)
                         + N * ACT_PAD * 4)
    cost = pl.CostEstimate(flops=int(flops), transcendentals=0,
                           bytes_accessed=bytes_accessed)

    kernel = functools.partial(
        _qnet_kernel, dims=(C, oh1, ow1, oh2, ow2, oh3, ow3))

    out = pl.pallas_call(
        kernel,
        out_shape=jax.ShapeDtypeStruct((N, 1, ACT_PAD), jnp.float32),
        grid_spec=pltpu.PrefetchScalarGridSpec(
            num_scalar_prefetch=0,
            grid=(N,),
            in_specs=[pl.BlockSpec((None, Hb, Wb, CC), lambda n: (n, 0, 0, 0))]
                     + [_resident_spec(w) for w in weights],
            out_specs=pl.BlockSpec((None, 1, ACT_PAD), lambda n: (n, 0, 0)),
        ),
        compiler_params=pltpu.CompilerParams(
            dimension_semantics=("parallel",),   # v7x megacore over batch
        ),
        cost_estimate=cost,
    )(x8, *weights)

    return out[:, 0, :action_size]


# ---------------------------------------------------------------------------
# Plain-JAX f32 reference (mirrors the PyTorch module) for a sanity check
# ---------------------------------------------------------------------------
def reference_forward(params, state):
    dn = ("NCHW", "OIHW", "NCHW")
    y = lax.conv_general_dilated(state, params["conv1_w"], (4, 4), "VALID",
                                 dimension_numbers=dn)
    y = jnp.maximum(y + params["conv1_b"][None, :, None, None], 0.0)
    y = lax.conv_general_dilated(y, params["conv2_w"], (2, 2), "VALID",
                                 dimension_numbers=dn)
    y = jnp.maximum(y + params["conv2_b"][None, :, None, None], 0.0)
    y = lax.conv_general_dilated(y, params["conv3_w"], (1, 1), "VALID",
                                 dimension_numbers=dn)
    y = jnp.maximum(y + params["conv3_b"][None, :, None, None], 0.0)
    y = y.reshape(y.shape[0], -1)
    y = jnp.maximum(y @ params["fc1_w"].T + params["fc1_b"], 0.0)
    return y @ params["fc2_w"].T + params["fc2_b"]


if __name__ == "__main__":
    # Smallest spatial size the k8/s4 -> k4/s2 -> k3/s1 stack supports cleanly:
    # 36x36 -> 8x8 -> 3x3 -> 1x1.
    batch, channels, height, width = 2, 4, 36, 36
    action_size = 6
    fc_units = 512

    key = jax.random.PRNGKey(0)
    k_params, k_x = jax.random.split(key)

    torch_params = init_qnetwork_params(
        k_params, (channels, height, width), action_size, fc_units)
    prepared = prepare_qnetwork_params(torch_params, (channels, height, width))

    x = jax.random.normal(k_x, (batch, channels, height, width), jnp.float32)

    fwd = jax.jit(lambda s: qnetwork_forward(prepared, s, action_size))
    q = jax.block_until_ready(fwd(x))

    assert q.shape == (batch, action_size), q.shape
    assert q.dtype == jnp.float32
    assert bool(jnp.all(jnp.isfinite(q)))

    # Loose check vs the f32 reference (kernel uses bf16 operands / f32 accum).
    q_ref = reference_forward(torch_params, x)
    err = float(jnp.max(jnp.abs(q - q_ref)))
    assert err < 0.2, f"mismatch vs reference: max abs err {err}"

    print("KERNEL_OK")
</pallas_src>

<mosaic_0001>
module attributes {stable_mosaic.version = 11 : i64} {
  func.func @_qnet_kernel(%arg0: i32, %arg1: memref<1x9x5x128xbf16, #tpu.memory_space<vmem>>, %arg2: memref<256x32xbf16, #tpu.memory_space<vmem>>, %arg3: memref<128x32xbf16, #tpu.memory_space<vmem>>, %arg4: memref<128x32xbf16, #tpu.memory_space<vmem>>, %arg5: memref<1x32xf32, #tpu.memory_space<vmem>>, %arg6: memref<512x64xbf16, #tpu.memory_space<vmem>>, %arg7: memref<1x64xf32, #tpu.memory_space<vmem>>, %arg8: memref<576x64xbf16, #tpu.memory_space<vmem>>, %arg9: memref<1x64xf32, #tpu.memory_space<vmem>>, %arg10: memref<64x512xbf16, #tpu.memory_space<vmem>>, %arg11: memref<1x512xf32, #tpu.memory_space<vmem>>, %arg12: memref<512x128xbf16, #tpu.memory_space<vmem>>, %arg13: memref<1x128xf32, #tpu.memory_space<vmem>>, %arg14: memref<1x1x128xf32, #tpu.memory_space<vmem>>) attributes {dimension_semantics = [#tpu.dimension_semantics<parallel>], iteration_bounds = array<i64: 2>, scalar_prefetch = 0 : i64, scratch_operands = 0 : i64, tpu.core_type = #tpu.core_type<tc>, window_params = [{transform_indices = @transform_0, window_bounds = array<i64: 1, 9, 5, 128>}, {pipeline_mode = #tpu.pipeline_mode<synchronous>, transform_indices = @transform_1, window_bounds = array<i64: 256, 32>}, {pipeline_mode = #tpu.pipeline_mode<synchronous>, transform_indices = @transform_2, window_bounds = array<i64: 128, 32>}, {pipeline_mode = #tpu.pipeline_mode<synchronous>, transform_indices = @transform_3, window_bounds = array<i64: 128, 32>}, {pipeline_mode = #tpu.pipeline_mode<synchronous>, transform_indices = @transform_4, window_bounds = array<i64: 1, 32>}, {pipeline_mode = #tpu.pipeline_mode<synchronous>, transform_indices = @transform_5, window_bounds = array<i64: 512, 64>}, {pipeline_mode = #tpu.pipeline_mode<synchronous>, transform_indices = @transform_6, window_bounds = array<i64: 1, 64>}, {pipeline_mode = #tpu.pipeline_mode<synchronous>, transform_indices = @transform_7, window_bounds = array<i64: 576, 64>}, {pipeline_mode = #tpu.pipeline_mode<synchronous>, transform_indices = @transform_8, window_bounds = array<i64: 1, 64>}, {pipeline_mode = #tpu.pipeline_mode<synchronous>, transform_indices = @transform_9, window_bounds = array<i64: 64, 512>}, {pipeline_mode = #tpu.pipeline_mode<synchronous>, transform_indices = @transform_10, window_bounds = array<i64: 1, 512>}, {pipeline_mode = #tpu.pipeline_mode<synchronous>, transform_indices = @transform_11, window_bounds = array<i64: 512, 128>}, {pipeline_mode = #tpu.pipeline_mode<synchronous>, transform_indices = @transform_12, window_bounds = array<i64: 1, 128>}, {transform_indices = @transform_13, window_bounds = array<i64: 1, 1, 128>}]} {
    %c0 = arith.constant 0 : index
    %c0_0 = arith.constant 0 : index
    %0 = vector.load %arg5[%c0, %c0_0] : memref<1x32xf32, #tpu.memory_space<vmem>>, vector<1x32xf32>
    %c0_1 = arith.constant 0 : index
    %c0_2 = arith.constant 0 : index
    %1 = vector.load %arg7[%c0_1, %c0_2] : memref<1x64xf32, #tpu.memory_space<vmem>>, vector<1x64xf32>
    %c0_3 = arith.constant 0 : index
    %c0_4 = arith.constant 0 : index
    %2 = vector.load %arg9[%c0_3, %c0_4] : memref<1x64xf32, #tpu.memory_space<vmem>>, vector<1x64xf32>
    %c0_5 = arith.constant 0 : index
    %c0_6 = arith.constant 0 : index
    %3 = vector.load %arg11[%c0_5, %c0_6] : memref<1x512xf32, #tpu.memory_space<vmem>>, vector<1x512xf32>
    %c0_7 = arith.constant 0 : index
    %c0_8 = arith.constant 0 : index
    %4 = vector.load %arg13[%c0_7, %c0_8] : memref<1x128xf32, #tpu.memory_space<vmem>>, vector<1x128xf32>
    %c0_9 = arith.constant 0 : index
    %c0_10 = arith.constant 0 : index
    %5 = vector.load %arg2[%c0_9, %c0_10] : memref<256x32xbf16, #tpu.memory_space<vmem>>, vector<128x32xbf16>
    %c128 = arith.constant 128 : index
    %c0_11 = arith.constant 0 : index
    %6 = vector.load %arg2[%c128, %c0_11] : memref<256x32xbf16, #tpu.memory_space<vmem>>, vector<128x32xbf16>
    %c0_12 = arith.constant 0 : index
    %c0_13 = arith.constant 0 : index
    %7 = vector.load %arg3[%c0_12, %c0_13] : memref<128x32xbf16, #tpu.memory_space<vmem>>, vector<64x32xbf16>
    %c64 = arith.constant 64 : index
    %c0_14 = arith.constant 0 : index
    %8 = vector.load %arg3[%c64, %c0_14] : memref<128x32xbf16, #tpu.memory_space<vmem>>, vector<64x32xbf16>
    %c0_15 = arith.constant 0 : index
    %c0_16 = arith.constant 0 : index
    %9 = vector.load %arg4[%c0_15, %c0_16] : memref<128x32xbf16, #tpu.memory_space<vmem>>, vector<64x32xbf16>
    %c64_17 = arith.constant 64 : index
    %c0_18 = arith.constant 0 : index
    %10 = vector.load %arg4[%c64_17, %c0_18] : memref<128x32xbf16, #tpu.memory_space<vmem>>, vector<64x32xbf16>
    %c0_19 = arith.constant 0 : index
    %c0_20 = arith.constant 0 : index
    %11 = vector.load %arg6[%c0_19, %c0_20] : memref<512x64xbf16, #tpu.memory_space<vmem>>, vector<32x64xbf16>
    %c32 = arith.constant 32 : index
    %c0_21 = arith.constant 0 : index
    %12 = vector.load %arg6[%c32, %c0_21] : memref<512x64xbf16, #tpu.memory_space<vmem>>, vector<32x64xbf16>
    %c64_22 = arith.constant 64 : index
    %c0_23 = arith.constant 0 : index
    %13 = vector.load %arg6[%c64_22, %c0_23] : memref<512x64xbf16, #tpu.memory_space<vmem>>, vector<32x64xbf16>
    %c96 = arith.constant 96 : index
    %c0_24 = arith.constant 0 : index
    %14 = vector.load %arg6[%c96, %c0_24] : memref<512x64xbf16, #tpu.memory_space<vmem>>, vector<32x64xbf16>
    %c128_25 = arith.constant 128 : index
    %c0_26 = arith.constant 0 : index
    %15 = vector.load %arg6[%c128_25, %c0_26] : memref<512x64xbf16, #tpu.memory_space<vmem>>, vector<32x64xbf16>
    %c160 = arith.constant 160 : index
    %c0_27 = arith.constant 0 : index
    %16 = vector.load %arg6[%c160, %c0_27] : memref<512x64xbf16, #tpu.memory_space<vmem>>, vector<32x64xbf16>
    %c192 = arith.constant 192 : index
    %c0_28 = arith.constant 0 : index
    %17 = vector.load %arg6[%c192, %c0_28] : memref<512x64xbf16, #tpu.memory_space<vmem>>, vector<32x64xbf16>
    %c224 = arith.constant 224 : index
    %c0_29 = arith.constant 0 : index
    %18 = vector.load %arg6[%c224, %c0_29] : memref<512x64xbf16, #tpu.memory_space<vmem>>, vector<32x64xbf16>
    %c256 = arith.constant 256 : index
    %c0_30 = arith.constant 0 : index
    %19 = vector.load %arg6[%c256, %c0_30] : memref<512x64xbf16, #tpu.memory_space<vmem>>, vector<32x64xbf16>
    %c288 = arith.constant 288 : index
    %c0_31 = arith.constant 0 : index
    %20 = vector.load %arg6[%c288, %c0_31] : memref<512x64xbf16, #tpu.memory_space<vmem>>, vector<32x64xbf16>
    %c320 = arith.constant 320 : index
    %c0_32 = arith.constant 0 : index
    %21 = vector.load %arg6[%c320, %c0_32] : memref<512x64xbf16, #tpu.memory_space<vmem>>, vector<32x64xbf16>
    %c352 = arith.constant 352 : index
    %c0_33 = arith.constant 0 : index
    %22 = vector.load %arg6[%c352, %c0_33] : memref<512x64xbf16, #tpu.memory_space<vmem>>, vector<32x64xbf16>
    %c384 = arith.constant 384 : index
    %c0_34 = arith.constant 0 : index
    %23 = vector.load %arg6[%c384, %c0_34] : memref<512x64xbf16, #tpu.memory_space<vmem>>, vector<32x64xbf16>
    %c416 = arith.constant 416 : index
    %c0_35 = arith.constant 0 : index
    %24 = vector.load %arg6[%c416, %c0_35] : memref<512x64xbf16, #tpu.memory_space<vmem>>, vector<32x64xbf16>
    %c448 = arith.constant 448 : index
    %c0_36 = arith.constant 0 : index
    %25 = vector.load %arg6[%c448, %c0_36] : memref<512x64xbf16, #tpu.memory_space<vmem>>, vector<32x64xbf16>
    %c480 = arith.constant 480 : index
    %c0_37 = arith.constant 0 : index
    %26 = vector.load %arg6[%c480, %c0_37] : memref<512x64xbf16, #tpu.memory_space<vmem>>, vector<32x64xbf16>
    %c0_38 = arith.constant 0 : index
    %c0_39 = arith.constant 0 : index
    %27 = vector.load %arg8[%c0_38, %c0_39] : memref<576x64xbf16, #tpu.memory_space<vmem>>, vector<64x64xbf16>
    %c64_40 = arith.constant 64 : index
    %c0_41 = arith.constant 0 : index
    %28 = vector.load %arg8[%c64_40, %c0_41] : memref<576x64xbf16, #tpu.memory_space<vmem>>, vector<64x64xbf16>
    %c128_42 = arith.constant 128 : index
    %c0_43 = arith.constant 0 : index
    %29 = vector.load %arg8[%c128_42, %c0_43] : memref<576x64xbf16, #tpu.memory_space<vmem>>, vector<64x64xbf16>
    %c192_44 = arith.constant 192 : index
    %c0_45 = arith.constant 0 : index
    %30 = vector.load %arg8[%c192_44, %c0_45] : memref<576x64xbf16, #tpu.memory_space<vmem>>, vector<64x64xbf16>
    %c256_46 = arith.constant 256 : index
    %c0_47 = arith.constant 0 : index
    %31 = vector.load %arg8[%c256_46, %c0_47] : memref<576x64xbf16, #tpu.memory_space<vmem>>, vector<64x64xbf16>
    %c320_48 = arith.constant 320 : index
    %c0_49 = arith.constant 0 : index
    %32 = vector.load %arg8[%c320_48, %c0_49] : memref<576x64xbf16, #tpu.memory_space<vmem>>, vector<64x64xbf16>
    %c384_50 = arith.constant 384 : index
    %c0_51 = arith.constant 0 : index
    %33 = vector.load %arg8[%c384_50, %c0_51] : memref<576x64xbf16, #tpu.memory_space<vmem>>, vector<64x64xbf16>
    %c448_52 = arith.constant 448 : index
    %c0_53 = arith.constant 0 : index
    %34 = vector.load %arg8[%c448_52, %c0_53] : memref<576x64xbf16, #tpu.memory_space<vmem>>, vector<64x64xbf16>
    %c512 = arith.constant 512 : index
    %c0_54 = arith.constant 0 : index
    %35 = vector.load %arg8[%c512, %c0_54] : memref<576x64xbf16, #tpu.memory_space<vmem>>, vector<64x64xbf16>
    %c0_55 = arith.constant 0 : index
    %c0_56 = arith.constant 0 : index
    %c0_57 = arith.constant 0 : index
    %c0_58 = arith.constant 0 : index
    %36 = vector.load %arg1[%c0_55, %c0_56, %c0_57, %c0_58] : memref<1x9x5x128xbf16, #tpu.memory_space<vmem>>, vector<1x1x5x128xbf16>
    %37 = vector.shape_cast %36 : vector<1x1x5x128xbf16> to vector<5x128xbf16>
    %c0_59 = arith.constant 0 : index
    %c1 = arith.constant 1 : index
    %c0_60 = arith.constant 0 : index
    %c0_61 = arith.constant 0 : index
    %38 = vector.load %arg1[%c0_59, %c1, %c0_60, %c0_61] : memref<1x9x5x128xbf16, #tpu.memory_space<vmem>>, vector<1x1x5x128xbf16>
    %39 = vector.shape_cast %38 : vector<1x1x5x128xbf16> to vector<5x128xbf16>
    %cst = arith.constant 0.000000e+00 : f32
    %40 = vector.broadcast %cst : f32 to vector<4x32xf32>
    %cst_62 = arith.constant 0.000000e+00 : f32
    %41 = vector.broadcast %cst_62 : f32 to vector<4x32xf32>
    %42 = vector.extract_strided_slice %37 {offsets = [0, 0], sizes = [4, 128], strides = [1, 1]} : vector<5x128xbf16> to vector<4x128xbf16>
    %cst_63 = arith.constant dense<0.000000e+00> : vector<4x32xf32>
    %43 = tpu.matmul %42, %5, %cst_63 {dimension_numbers = #tpu.dot_dimension_numbers<[1], [0], [0], [1], [0, 0, 1, 1], [], []>} : vector<4x128xbf16>, vector<128x32xbf16>, vector<4x32xf32> -> vector<4x32xf32>
    %44 = arith.addf %40, %43 : vector<4x32xf32>
    %45 = vector.extract_strided_slice %37 {offsets = [0, 64], sizes = [4, 64], strides = [1, 1]} : vector<5x128xbf16> to vector<4x64xbf16>
    %cst_64 = arith.constant dense<0.000000e+00> : vector<4x32xf32>
    %46 = tpu.matmul %45, %7, %cst_64 {dimension_numbers = #tpu.dot_dimension_numbers<[1], [0], [0], [1], [0, 0, 1, 1], [], []>} : vector<4x64xbf16>, vector<64x32xbf16>, vector<4x32xf32> -> vector<4x32xf32>
    %47 = arith.addf %41, %46 : vector<4x32xf32>
    %48 = vector.extract_strided_slice %37 {offsets = [1, 0], sizes = [4, 64], strides = [1, 1]} : vector<5x128xbf16> to vector<4x64xbf16>
    %cst_65 = arith.constant dense<0.000000e+00> : vector<4x32xf32>
    %49 = tpu.matmul %48, %9, %cst_65 {dimension_numbers = #tpu.dot_dimension_numbers<[1], [0], [0], [1], [0, 0, 1, 1], [], []>} : vector<4x64xbf16>, vector<64x32xbf16>, vector<4x32xf32> -> vector<4x32xf32>
    %50 = arith.addf %47, %49 : vector<4x32xf32>
    %51 = vector.extract_strided_slice %39 {offsets = [0, 0], sizes = [4, 128], strides = [1, 1]} : vector<5x128xbf16> to vector<4x128xbf16>
    %cst_66 = arith.constant dense<0.000000e+00> : vector<4x32xf32>
    %52 = tpu.matmul %51, %6, %cst_66 {dimension_numbers = #tpu.dot_dimension_numbers<[1], [0], [0], [1], [0, 0, 1, 1], [], []>} : vector<4x128xbf16>, vector<128x32xbf16>, vector<4x32xf32> -> vector<4x32xf32>
    %53 = arith.addf %44, %52 : vector<4x32xf32>
    %54 = vector.extract_strided_slice %39 {offsets = [0, 64], sizes = [4, 64], strides = [1, 1]} : vector<5x128xbf16> to vector<4x64xbf16>
    %cst_67 = arith.constant dense<0.000000e+00> : vector<4x32xf32>
    %55 = tpu.matmul %54, %8, %cst_67 {dimension_numbers = #tpu.dot_dimension_numbers<[1], [0], [0], [1], [0, 0, 1, 1], [], []>} : vector<4x64xbf16>, vector<64x32xbf16>, vector<4x32xf32> -> vector<4x32xf32>
    %56 = arith.addf %50, %55 : vector<4x32xf32>
    %57 = vector.extract_strided_slice %39 {offsets = [1, 0], sizes = [4, 64], strides = [1, 1]} : vector<5x128xbf16> to vector<4x64xbf16>
    %cst_68 = arith.constant dense<0.000000e+00> : vector<4x32xf32>
    %58 = tpu.matmul %57, %10, %cst_68 {dimension_numbers = #tpu.dot_dimension_numbers<[1], [0], [0], [1], [0, 0, 1, 1], [], []>} : vector<4x64xbf16>, vector<64x32xbf16>, vector<4x32xf32> -> vector<4x32xf32>
    %59 = arith.addf %56, %58 : vector<4x32xf32>
    %60 = vector.broadcast %0 : vector<1x32xf32> to vector<4x32xf32>
    %61 = arith.addf %53, %60 : vector<4x32xf32>
    %cst_69 = arith.constant 0.000000e+00 : f32
    %62 = vector.broadcast %cst_69 : f32 to vector<4x32xf32>
    %63 = arith.maximumf %61, %62 : vector<4x32xf32>
    %64 = arith.truncf %63 : vector<4x32xf32> to vector<4x32xbf16>
    %65 = vector.broadcast %0 : vector<1x32xf32> to vector<4x32xf32>
    %66 = arith.addf %59, %65 : vector<4x32xf32>
    %cst_70 = arith.constant 0.000000e+00 : f32
    %67 = vector.broadcast %cst_70 : f32 to vector<4x32xf32>
    %68 = arith.maximumf %66, %67 : vector<4x32xf32>
    %69 = arith.truncf %68 : vector<4x32xf32> to vector<4x32xbf16>
    %c0_71 = arith.constant 0 : index
    %c1_72 = arith.constant 1 : index
    %c0_73 = arith.constant 0 : index
    %c0_74 = arith.constant 0 : index
    %70 = vector.load %arg1[%c0_71, %c1_72, %c0_73, %c0_74] : memref<1x9x5x128xbf16, #tpu.memory_space<vmem>>, vector<1x1x5x128xbf16>
    %71 = vector.shape_cast %70 : vector<1x1x5x128xbf16> to vector<5x128xbf16>
    %c0_75 = arith.constant 0 : index
    %c2 = arith.constant 2 : index
    %c0_76 = arith.constant 0 : index
    %c0_77 = arith.constant 0 : index
    %72 = vector.load %arg1[%c0_75, %c2, %c0_76, %c0_77] : memref<1x9x5x128xbf16, #tpu.memory_space<vmem>>, vector<1x1x5x128xbf16>
    %73 = vector.shape_cast %72 : vector<1x1x5x128xbf16> to vector<5x128xbf16>
    %cst_78 = arith.constant 0.000000e+00 : f32
    %74 = vector.broadcast %cst_78 : f32 to vector<4x32xf32>
    %cst_79 = arith.constant 0.000000e+00 : f32
    %75 = vector.broadcast %cst_79 : f32 to vector<4x32xf32>
    %76 = vector.extract_strided_slice %71 {offsets = [0, 0], sizes = [4, 128], strides = [1, 1]} : vector<5x128xbf16> to vector<4x128xbf16>
    %cst_80 = arith.constant dense<0.000000e+00> : vector<4x32xf32>
    %77 = tpu.matmul %76, %5, %cst_80 {dimension_numbers = #tpu.dot_dimension_numbers<[1], [0], [0], [1], [0, 0, 1, 1], [], []>} : vector<4x128xbf16>, vector<128x32xbf16>, vector<4x32xf32> -> vector<4x32xf32>
    %78 = arith.addf %74, %77 : vector<4x32xf32>
    %79 = vector.extract_strided_slice %71 {offsets = [0, 64], sizes = [4, 64], strides = [1, 1]} : vector<5x128xbf16> to vector<4x64xbf16>
    %cst_81 = arith.constant dense<0.000000e+00> : vector<4x32xf32>
    %80 = tpu.matmul %79, %7, %cst_81 {dimension_numbers = #tpu.dot_dimension_numbers<[1], [0], [0], [1], [0, 0, 1, 1], [], []>} : vector<4x64xbf16>, vector<64x32xbf16>, vector<4x32xf32> -> vector<4x32xf32>
    %81 = arith.addf %75, %80 : vector<4x32xf32>
    %82 = vector.extract_strided_slice %71 {offsets = [1, 0], sizes = [4, 64], strides = [1, 1]} : vector<5x128xbf16> to vector<4x64xbf16>
    %cst_82 = arith.constant dense<0.000000e+00> : vector<4x32xf32>
    %83 = tpu.matmul %82, %9, %cst_82 {dimension_numbers = #tpu.dot_dimension_numbers<[1], [0], [0], [1], [0, 0, 1, 1], [], []>} : vector<4x64xbf16>, vector<64x32xbf16>, vector<4x32xf32> -> vector<4x32xf32>
    %84 = arith.addf %81, %83 : vector<4x32xf32>
    %85 = vector.extract_strided_slice %73 {offsets = [0, 0], sizes = [4, 128], strides = [1, 1]} : vector<5x128xbf16> to vector<4x128xbf16>
    %cst_83 = arith.constant dense<0.000000e+00> : vector<4x32xf32>
    %86 = tpu.matmul %85, %6, %cst_83 {dimension_numbers = #tpu.dot_dimension_numbers<[1], [0], [0], [1], [0, 0, 1, 1], [], []>} : vector<4x128xbf16>, vector<128x32xbf16>, vector<4x32xf32> -> vector<4x32xf32>
    %87 = arith.addf %78, %86 : vector<4x32xf32>
    %88 = vector.extract_strided_slice %73 {offsets = [0, 64], sizes = [4, 64], strides = [1, 1]} : vector<5x128xbf16> to vector<4x64xbf16>
    %cst_84 = arith.constant dense<0.000000e+00> : vector<4x32xf32>
    %89 = tpu.matmul %88, %8, %cst_84 {dimension_numbers = #tpu.dot_dimension_numbers<[1], [0], [0], [1], [0, 0, 1, 1], [], []>} : vector<4x64xbf16>, vector<64x32xbf16>, vector<4x32xf32> -> vector<4x32xf32>
    %90 = arith.addf %84, %89 : vector<4x32xf32>
    %91 = vector.extract_strided_slice %73 {offsets = [1, 0], sizes = [4, 64], strides = [1, 1]} : vector<5x128xbf16> to vector<4x64xbf16>
    %cst_85 = arith.constant dense<0.000000e+00> : vector<4x32xf32>
    %92 = tpu.matmul %91, %10, %cst_85 {dimension_numbers = #tpu.dot_dimension_numbers<[1], [0], [0], [1], [0, 0, 1, 1], [], []>} : vector<4x64xbf16>, vector<64x32xbf16>, vector<4x32xf32> -> vector<4x32xf32>
    %93 = arith.addf %90, %92 : vector<4x32xf32>
    %94 = vector.broadcast %0 : vector<1x32xf32> to vector<4x32xf32>
    %95 = arith.addf %87, %94 : vector<4x32xf32>
    %cst_86 = arith.constant 0.000000e+00 : f32
    %96 = vector.broadcast %cst_86 : f32 to vector<4x32xf32>
    %97 = arith.maximumf %95, %96 : vector<4x32xf32>
    %98 = arith.truncf %97 : vector<4x32xf32> to vector<4x32xbf16>
    %99 = vector.broadcast %0 : vector<1x32xf32> to vector<4x32xf32>
    %100 = arith.addf %93, %99 : vector<4x32xf32>
    %cst_87 = arith.constant 0.000000e+00 : f32
    %101 = vector.broadcast %cst_87 : f32 to vector<4x32xf32>
    %102 = arith.maximumf %100, %101 : vector<4x32xf32>
    %103 = arith.truncf %102 : vector<4x32xf32> to vector<4x32xbf16>
    %c0_88 = arith.constant 0 : index
    %c2_89 = arith.constant 2 : index
    %c0_90 = arith.constant 0 : index
    %c0_91 = arith.constant 0 : index
    %104 = vector.load %arg1[%c0_88, %c2_89, %c0_90, %c0_91] : memref<1x9x5x128xbf16, #tpu.memory_space<vmem>>, vector<1x1x5x128xbf16>
    %105 = vector.shape_cast %104 : vector<1x1x5x128xbf16> to vector<5x128xbf16>
    %c0_92 = arith.constant 0 : index
    %c3 = arith.constant 3 : index
    %c0_93 = arith.constant 0 : index
    %c0_94 = arith.constant 0 : index
    %106 = vector.load %arg1[%c0_92, %c3, %c0_93, %c0_94] : memref<1x9x5x128xbf16, #tpu.memory_space<vmem>>, vector<1x1x5x128xbf16>
    %107 = vector.shape_cast %106 : vector<1x1x5x128xbf16> to vector<5x128xbf16>
    %cst_95 = arith.constant 0.000000e+00 : f32
    %108 = vector.broadcast %cst_95 : f32 to vector<4x32xf32>
    %cst_96 = arith.constant 0.000000e+00 : f32
    %109 = vector.broadcast %cst_96 : f32 to vector<4x32xf32>
    %110 = vector.extract_strided_slice %105 {offsets = [0, 0], sizes = [4, 128], strides = [1, 1]} : vector<5x128xbf16> to vector<4x128xbf16>
    %cst_97 = arith.constant dense<0.000000e+00> : vector<4x32xf32>
    %111 = tpu.matmul %110, %5, %cst_97 {dimension_numbers = #tpu.dot_dimension_numbers<[1], [0], [0], [1], [0, 0, 1, 1], [], []>} : vector<4x128xbf16>, vector<128x32xbf16>, vector<4x32xf32> -> vector<4x32xf32>
    %112 = arith.addf %108, %111 : vector<4x32xf32>
    %113 = vector.extract_strided_slice %105 {offsets = [0, 64], sizes = [4, 64], strides = [1, 1]} : vector<5x128xbf16> to vector<4x64xbf16>
    %cst_98 = arith.constant dense<0.000000e+00> : vector<4x32xf32>
    %114 = tpu.matmul %113, %7, %cst_98 {dimension_numbers = #tpu.dot_dimension_numbers<[1], [0], [0], [1], [0, 0, 1, 1], [], []>} : vector<4x64xbf16>, vector<64x32xbf16>, vector<4x32xf32> -> vector<4x32xf32>
    %115 = arith.addf %109, %114 : vector<4x32xf32>
    %116 = vector.extract_strided_slice %105 {offsets = [1, 0], sizes = [4, 64], strides = [1, 1]} : vector<5x128xbf16> to vector<4x64xbf16>
    %cst_99 = arith.constant dense<0.000000e+00> : vector<4x32xf32>
    %117 = tpu.matmul %116, %9, %cst_99 {dimension_numbers = #tpu.dot_dimension_numbers<[1], [0], [0], [1], [0, 0, 1, 1], [], []>} : vector<4x64xbf16>, vector<64x32xbf16>, vector<4x32xf32> -> vector<4x32xf32>
    %118 = arith.addf %115, %117 : vector<4x32xf32>
    %119 = vector.extract_strided_slice %107 {offsets = [0, 0], sizes = [4, 128], strides = [1, 1]} : vector<5x128xbf16> to vector<4x128xbf16>
    %cst_100 = arith.constant dense<0.000000e+00> : vector<4x32xf32>
    %120 = tpu.matmul %119, %6, %cst_100 {dimension_numbers = #tpu.dot_dimension_numbers<[1], [0], [0], [1], [0, 0, 1, 1], [], []>} : vector<4x128xbf16>, vector<128x32xbf16>, vector<4x32xf32> -> vector<4x32xf32>
    %121 = arith.addf %112, %120 : vector<4x32xf32>
    %122 = vector.extract_strided_slice %107 {offsets = [0, 64], sizes = [4, 64], strides = [1, 1]} : vector<5x128xbf16> to vector<4x64xbf16>
    %cst_101 = arith.constant dense<0.000000e+00> : vector<4x32xf32>
    %123 = tpu.matmul %122, %8, %cst_101 {dimension_numbers = #tpu.dot_dimension_numbers<[1], [0], [0], [1], [0, 0, 1, 1], [], []>} : vector<4x64xbf16>, vector<64x32xbf16>, vector<4x32xf32> -> vector<4x32xf32>
    %124 = arith.addf %118, %123 : vector<4x32xf32>
    %125 = vector.extract_strided_slice %107 {offsets = [1, 0], sizes = [4, 64], strides = [1, 1]} : vector<5x128xbf16> to vector<4x64xbf16>
    %cst_102 = arith.constant dense<0.000000e+00> : vector<4x32xf32>
    %126 = tpu.matmul %125, %10, %cst_102 {dimension_numbers = #tpu.dot_dimension_numbers<[1], [0], [0], [1], [0, 0, 1, 1], [], []>} : vector<4x64xbf16>, vector<64x32xbf16>, vector<4x32xf32> -> vector<4x32xf32>
    %127 = arith.addf %124, %126 : vector<4x32xf32>
    %128 = vector.broadcast %0 : vector<1x32xf32> to vector<4x32xf32>
    %129 = arith.addf %121, %128 : vector<4x32xf32>
    %cst_103 = arith.constant 0.000000e+00 : f32
    %130 = vector.broadcast %cst_103 : f32 to vector<4x32xf32>
    %131 = arith.maximumf %129, %130 : vector<4x32xf32>
    %132 = arith.truncf %131 : vector<4x32xf32> to vector<4x32xbf16>
    %133 = vector.broadcast %0 : vector<1x32xf32> to vector<4x32xf32>
    %134 = arith.addf %127, %133 : vector<4x32xf32>
    %cst_104 = arith.constant 0.000000e+00 : f32
    %135 = vector.broadcast %cst_104 : f32 to vector<4x32xf32>
    %136 = arith.maximumf %134, %135 : vector<4x32xf32>
    %137 = arith.truncf %136 : vector<4x32xf32> to vector<4x32xbf16>
    %c0_105 = arith.constant 0 : index
    %c3_106 = arith.constant 3 : index
    %c0_107 = arith.constant 0 : index
    %c0_108 = arith.constant 0 : index
    %138 = vector.load %arg1[%c0_105, %c3_106, %c0_107, %c0_108] : memref<1x9x5x128xbf16, #tpu.memory_space<vmem>>, vector<1x1x5x128xbf16>
    %139 = vector.shape_cast %138 : vector<1x1x5x128xbf16> to vector<5x128xbf16>
    %c0_109 = arith.constant 0 : index
    %c4 = arith.constant 4 : index
    %c0_110 = arith.constant 0 : index
    %c0_111 = arith.constant 0 : index
    %140 = vector.load %arg1[%c0_109, %c4, %c0_110, %c0_111] : memref<1x9x5x128xbf16, #tpu.memory_space<vmem>>, vector<1x1x5x128xbf16>
    %141 = vector.shape_cast %140 : vector<1x1x5x128xbf16> to vector<5x128xbf16>
    %cst_112 = arith.constant 0.000000e+00 : f32
    %142 = vector.broadcast %cst_112 : f32 to vector<4x32xf32>
    %cst_113 = arith.constant 0.000000e+00 : f32
    %143 = vector.broadcast %cst_113 : f32 to vector<4x32xf32>
    %144 = vector.extract_strided_slice %139 {offsets = [0, 0], sizes = [4, 128], strides = [1, 1]} : vector<5x128xbf16> to vector<4x128xbf16>
    %cst_114 = arith.constant dense<0.000000e+00> : vector<4x32xf32>
    %145 = tpu.matmul %144, %5, %cst_114 {dimension_numbers = #tpu.dot_dimension_numbers<[1], [0], [0], [1], [0, 0, 1, 1], [], []>} : vector<4x128xbf16>, vector<128x32xbf16>, vector<4x32xf32> -> vector<4x32xf32>
    %146 = arith.addf %142, %145 : vector<4x32xf32>
    %147 = vector.extract_strided_slice %139 {offsets = [0, 64], sizes = [4, 64], strides = [1, 1]} : vector<5x128xbf16> to vector<4x64xbf16>
    %cst_115 = arith.constant dense<0.000000e+00> : vector<4x32xf32>
    %148 = tpu.matmul %147, %7, %cst_115 {dimension_numbers = #tpu.dot_dimension_numbers<[1], [0], [0], [1], [0, 0, 1, 1], [], []>} : vector<4x64xbf16>, vector<64x32xbf16>, vector<4x32xf32> -> vector<4x32xf32>
    %149 = arith.addf %143, %148 : vector<4x32xf32>
    %150 = vector.extract_strided_slice %139 {offsets = [1, 0], sizes = [4, 64], strides = [1, 1]} : vector<5x128xbf16> to vector<4x64xbf16>
    %cst_116 = arith.constant dense<0.000000e+00> : vector<4x32xf32>
    %151 = tpu.matmul %150, %9, %cst_116 {dimension_numbers = #tpu.dot_dimension_numbers<[1], [0], [0], [1], [0, 0, 1, 1], [], []>} : vector<4x64xbf16>, vector<64x32xbf16>, vector<4x32xf32> -> vector<4x32xf32>
    %152 = arith.addf %149, %151 : vector<4x32xf32>
    %153 = vector.extract_strided_slice %141 {offsets = [0, 0], sizes = [4, 128], strides = [1, 1]} : vector<5x128xbf16> to vector<4x128xbf16>
    %cst_117 = arith.constant dense<0.000000e+00> : vector<4x32xf32>
    %154 = tpu.matmul %153, %6, %cst_117 {dimension_numbers = #tpu.dot_dimension_numbers<[1], [0], [0], [1], [0, 0, 1, 1], [], []>} : vector<4x128xbf16>, vector<128x32xbf16>, vector<4x32xf32> -> vector<4x32xf32>
    %155 = arith.addf %146, %154 : vector<4x32xf32>
    %156 = vector.extract_strided_slice %141 {offsets = [0, 64], sizes = [4, 64], strides = [1, 1]} : vector<5x128xbf16> to vector<4x64xbf16>
    %cst_118 = arith.constant dense<0.000000e+00> : vector<4x32xf32>
    %157 = tpu.matmul %156, %8, %cst_118 {dimension_numbers = #tpu.dot_dimension_numbers<[1], [0], [0], [1], [0, 0, 1, 1], [], []>} : vector<4x64xbf16>, vector<64x32xbf16>, vector<4x32xf32> -> vector<4x32xf32>
    %158 = arith.addf %152, %157 : vector<4x32xf32>
    %159 = vector.extract_strided_slice %141 {offsets = [1, 0], sizes = [4, 64], strides = [1, 1]} : vector<5x128xbf16> to vector<4x64xbf16>
    %cst_119 = arith.constant dense<0.000000e+00> : vector<4x32xf32>
    %160 = tpu.matmul %159, %10, %cst_119 {dimension_numbers = #tpu.dot_dimension_numbers<[1], [0], [0], [1], [0, 0, 1, 1], [], []>} : vector<4x64xbf16>, vector<64x32xbf16>, vector<4x32xf32> -> vector<4x32xf32>
    %161 = arith.addf %158, %160 : vector<4x32xf32>
    %162 = vector.broadcast %0 : vector<1x32xf32> to vector<4x32xf32>
    %163 = arith.addf %155, %162 : vector<4x32xf32>
    %cst_120 = arith.constant 0.000000e+00 : f32
    %164 = vector.broadcast %cst_120 : f32 to vector<4x32xf32>
    %165 = arith.maximumf %163, %164 : vector<4x32xf32>
    %166 = arith.truncf %165 : vector<4x32xf32> to vector<4x32xbf16>
    %167 = vector.broadcast %0 : vector<1x32xf32> to vector<4x32xf32>
    %168 = arith.addf %161, %167 : vector<4x32xf32>
    %cst_121 = arith.constant 0.000000e+00 : f32
    %169 = vector.broadcast %cst_121 : f32 to vector<4x32xf32>
    %170 = arith.maximumf %168, %169 : vector<4x32xf32>
    %171 = arith.truncf %170 : vector<4x32xf32> to vector<4x32xbf16>
    %c0_122 = arith.constant 0 : index
    %c4_123 = arith.constant 4 : index
    %c0_124 = arith.constant 0 : index
    %c0_125 = arith.constant 0 : index
    %172 = vector.load %arg1[%c0_122, %c4_123, %c0_124, %c0_125] : memref<1x9x5x128xbf16, #tpu.memory_space<vmem>>, vector<1x1x5x128xbf16>
    %173 = vector.shape_cast %172 : vector<1x1x5x128xbf16> to vector<5x128xbf16>
    %c0_126 = arith.constant 0 : index
    %c5 = arith.constant 5 : index
    %c0_127 = arith.constant 0 : index
    %c0_128 = arith.constant 0 : index
    %174 = vector.load %arg1[%c0_126, %c5, %c0_127, %c0_128] : memref<1x9x5x128xbf16, #tpu.memory_space<vmem>>, vector<1x1x5x128xbf16>
    %175 = vector.shape_cast %174 : vector<1x1x5x128xbf16> to vector<5x128xbf16>
    %cst_129 = arith.constant 0.000000e+00 : f32
    %176 = vector.broadcast %cst_129 : f32 to vector<4x32xf32>
    %cst_130 = arith.constant 0.000000e+00 : f32
    %177 = vector.broadcast %cst_130 : f32 to vector<4x32xf32>
    %178 = vector.extract_strided_slice %173 {offsets = [0, 0], sizes = [4, 128], strides = [1, 1]} : vector<5x128xbf16> to vector<4x128xbf16>
    %cst_131 = arith.constant dense<0.000000e+00> : vector<4x32xf32>
    %179 = tpu.matmul %178, %5, %cst_131 {dimension_numbers = #tpu.dot_dimension_numbers<[1], [0], [0], [1], [0, 0, 1, 1], [], []>} : vector<4x128xbf16>, vector<128x32xbf16>, vector<4x32xf32> -> vector<4x32xf32>
    %180 = arith.addf %176, %179 : vector<4x32xf32>
    %181 = vector.extract_strided_slice %173 {offsets = [0, 64], sizes = [4, 64], strides = [1, 1]} : vector<5x128xbf16> to vector<4x64xbf16>
    %cst_132 = arith.constant dense<0.000000e+00> : vector<4x32xf32>
    %182 = tpu.matmul %181, %7, %cst_132 {dimension_numbers = #tpu.dot_dimension_numbers<[1], [0], [0], [1], [0, 0, 1, 1], [], []>} : vector<4x64xbf16>, vector<64x32xbf16>, vector<4x32xf32> -> vector<4x32xf32>
    %183 = arith.addf %177, %182 : vector<4x32xf32>
    %184 = vector.extract_strided_slice %173 {offsets = [1, 0], sizes = [4, 64], strides = [1, 1]} : vector<5x128xbf16> to vector<4x64xbf16>
    %cst_133 = arith.constant dense<0.000000e+00> : vector<4x32xf32>
    %185 = tpu.matmul %184, %9, %cst_133 {dimension_numbers = #tpu.dot_dimension_numbers<[1], [0], [0], [1], [0, 0, 1, 1], [], []>} : vector<4x64xbf16>, vector<64x32xbf16>, vector<4x32xf32> -> vector<4x32xf32>
    %186 = arith.addf %183, %185 : vector<4x32xf32>
    %187 = vector.extract_strided_slice %175 {offsets = [0, 0], sizes = [4, 128], strides = [1, 1]} : vector<5x128xbf16> to vector<4x128xbf16>
    %cst_134 = arith.constant dense<0.000000e+00> : vector<4x32xf32>
    %188 = tpu.matmul %187, %6, %cst_134 {dimension_numbers = #tpu.dot_dimension_numbers<[1], [0], [0], [1], [0, 0, 1, 1], [], []>} : vector<4x128xbf16>, vector<128x32xbf16>, vector<4x32xf32> -> vector<4x32xf32>
    %189 = arith.addf %180, %188 : vector<4x32xf32>
    %190 = vector.extract_strided_slice %175 {offsets = [0, 64], sizes = [4, 64], strides = [1, 1]} : vector<5x128xbf16> to vector<4x64xbf16>
    %cst_135 = arith.constant dense<0.000000e+00> : vector<4x32xf32>
    %191 = tpu.matmul %190, %8, %cst_135 {dimension_numbers = #tpu.dot_dimension_numbers<[1], [0], [0], [1], [0, 0, 1, 1], [], []>} : vector<4x64xbf16>, vector<64x32xbf16>, vector<4x32xf32> -> vector<4x32xf32>
    %192 = arith.addf %186, %191 : vector<4x32xf32>
    %193 = vector.extract_strided_slice %175 {offsets = [1, 0], sizes = [4, 64], strides = [1, 1]} : vector<5x128xbf16> to vector<4x64xbf16>
    %cst_136 = arith.constant dense<0.000000e+00> : vector<4x32xf32>
    %194 = tpu.matmul %193, %10, %cst_136 {dimension_numbers = #tpu.dot_dimension_numbers<[1], [0], [0], [1], [0, 0, 1, 1], [], []>} : vector<4x64xbf16>, vector<64x32xbf16>, vector<4x32xf32> -> vector<4x32xf32>
    %195 = arith.addf %192, %194 : vector<4x32xf32>
    %196 = vector.broadcast %0 : vector<1x32xf32> to vector<4x32xf32>
    %197 = arith.addf %189, %196 : vector<4x32xf32>
    %cst_137 = arith.constant 0.000000e+00 : f32
    %198 = vector.broadcast %cst_137 : f32 to vector<4x32xf32>
    %199 = arith.maximumf %197, %198 : vector<4x32xf32>
    %200 = arith.truncf %199 : vector<4x32xf32> to vector<4x32xbf16>
    %201 = vector.broadcast %0 : vector<1x32xf32> to vector<4x32xf32>
    %202 = arith.addf %195, %201 : vector<4x32xf32>
    %cst_138 = arith.constant 0.000000e+00 : f32
    %203 = vector.broadcast %cst_138 : f32 to vector<4x32xf32>
    %204 = arith.maximumf %202, %203 : vector<4x32xf32>
    %205 = arith.truncf %204 : vector<4x32xf32> to vector<4x32xbf16>
    %c0_139 = arith.constant 0 : index
    %c5_140 = arith.constant 5 : index
    %c0_141 = arith.constant 0 : index
    %c0_142 = arith.constant 0 : index
    %206 = vector.load %arg1[%c0_139, %c5_140, %c0_141, %c0_142] : memref<1x9x5x128xbf16, #tpu.memory_space<vmem>>, vector<1x1x5x128xbf16>
    %207 = vector.shape_cast %206 : vector<1x1x5x128xbf16> to vector<5x128xbf16>
    %c0_143 = arith.constant 0 : index
    %c6 = arith.constant 6 : index
    %c0_144 = arith.constant 0 : index
    %c0_145 = arith.constant 0 : index
    %208 = vector.load %arg1[%c0_143, %c6, %c0_144, %c0_145] : memref<1x9x5x128xbf16, #tpu.memory_space<vmem>>, vector<1x1x5x128xbf16>
    %209 = vector.shape_cast %208 : vector<1x1x5x128xbf16> to vector<5x128xbf16>
    %cst_146 = arith.constant 0.000000e+00 : f32
    %210 = vector.broadcast %cst_146 : f32 to vector<4x32xf32>
    %cst_147 = arith.constant 0.000000e+00 : f32
    %211 = vector.broadcast %cst_147 : f32 to vector<4x32xf32>
    %212 = vector.extract_strided_slice %207 {offsets = [0, 0], sizes = [4, 128], strides = [1, 1]} : vector<5x128xbf16> to vector<4x128xbf16>
    %cst_148 = arith.constant dense<0.000000e+00> : vector<4x32xf32>
    %213 = tpu.matmul %212, %5, %cst_148 {dimension_numbers = #tpu.dot_dimension_numbers<[1], [0], [0], [1], [0, 0, 1, 1], [], []>} : vector<4x128xbf16>, vector<128x32xbf16>, vector<4x32xf32> -> vector<4x32xf32>
    %214 = arith.addf %210, %213 : vector<4x32xf32>
    %215 = vector.extract_strided_slice %207 {offsets = [0, 64], sizes = [4, 64], strides = [1, 1]} : vector<5x128xbf16> to vector<4x64xbf16>
    %cst_149 = arith.constant dense<0.000000e+00> : vector<4x32xf32>
    %216 = tpu.matmul %215, %7, %cst_149 {dimension_numbers = #tpu.dot_dimension_numbers<[1], [0], [0], [1], [0, 0, 1, 1], [], []>} : vector<4x64xbf16>, vector<64x32xbf16>, vector<4x32xf32> -> vector<4x32xf32>
    %217 = arith.addf %211, %216 : vector<4x32xf32>
    %218 = vector.extract_strided_slice %207 {offsets = [1, 0], sizes = [4, 64], strides = [1, 1]} : vector<5x128xbf16> to vector<4x64xbf16>
    %cst_150 = arith.constant dense<0.000000e+00> : vector<4x32xf32>
    %219 = tpu.matmul %218, %9, %cst_150 {dimension_numbers = #tpu.dot_dimension_numbers<[1], [0], [0], [1], [0, 0, 1, 1], [], []>} : vector<4x64xbf16>, vector<64x32xbf16>, vector<4x32xf32> -> vector<4x32xf32>
    %220 = arith.addf %217, %219 : vector<4x32xf32>
    %221 = vector.extract_strided_slice %209 {offsets = [0, 0], sizes = [4, 128], strides = [1, 1]} : vector<5x128xbf16> to vector<4x128xbf16>
    %cst_151 = arith.constant dense<0.000000e+00> : vector<4x32xf32>
    %222 = tpu.matmul %221, %6, %cst_151 {dimension_numbers = #tpu.dot_dimension_numbers<[1], [0], [0], [1], [0, 0, 1, 1], [], []>} : vector<4x128xbf16>, vector<128x32xbf16>, vector<4x32xf32> -> vector<4x32xf32>
    %223 = arith.addf %214, %222 : vector<4x32xf32>
    %224 = vector.extract_strided_slice %209 {offsets = [0, 64], sizes = [4, 64], strides = [1, 1]} : vector<5x128xbf16> to vector<4x64xbf16>
    %cst_152 = arith.constant dense<0.000000e+00> : vector<4x32xf32>
    %225 = tpu.matmul %224, %8, %cst_152 {dimension_numbers = #tpu.dot_dimension_numbers<[1], [0], [0], [1], [0, 0, 1, 1], [], []>} : vector<4x64xbf16>, vector<64x32xbf16>, vector<4x32xf32> -> vector<4x32xf32>
    %226 = arith.addf %220, %225 : vector<4x32xf32>
    %227 = vector.extract_strided_slice %209 {offsets = [1, 0], sizes = [4, 64], strides = [1, 1]} : vector<5x128xbf16> to vector<4x64xbf16>
    %cst_153 = arith.constant dense<0.000000e+00> : vector<4x32xf32>
    %228 = tpu.matmul %227, %10, %cst_153 {dimension_numbers = #tpu.dot_dimension_numbers<[1], [0], [0], [1], [0, 0, 1, 1], [], []>} : vector<4x64xbf16>, vector<64x32xbf16>, vector<4x32xf32> -> vector<4x32xf32>
    %229 = arith.addf %226, %228 : vector<4x32xf32>
    %230 = vector.broadcast %0 : vector<1x32xf32> to vector<4x32xf32>
    %231 = arith.addf %223, %230 : vector<4x32xf32>
    %cst_154 = arith.constant 0.000000e+00 : f32
    %232 = vector.broadcast %cst_154 : f32 to vector<4x32xf32>
    %233 = arith.maximumf %231, %232 : vector<4x32xf32>
    %234 = arith.truncf %233 : vector<4x32xf32> to vector<4x32xbf16>
    %235 = vector.broadcast %0 : vector<1x32xf32> to vector<4x32xf32>
    %236 = arith.addf %229, %235 : vector<4x32xf32>
    %cst_155 = arith.constant 0.000000e+00 : f32
    %237 = vector.broadcast %cst_155 : f32 to vector<4x32xf32>
    %238 = arith.maximumf %236, %237 : vector<4x32xf32>
    %239 = arith.truncf %238 : vector<4x32xf32> to vector<4x32xbf16>
    %c0_156 = arith.constant 0 : index
    %c6_157 = arith.constant 6 : index
    %c0_158 = arith.constant 0 : index
    %c0_159 = arith.constant 0 : index
    %240 = vector.load %arg1[%c0_156, %c6_157, %c0_158, %c0_159] : memref<1x9x5x128xbf16, #tpu.memory_space<vmem>>, vector<1x1x5x128xbf16>
    %241 = vector.shape_cast %240 : vector<1x1x5x128xbf16> to vector<5x128xbf16>
    %c0_160 = arith.constant 0 : index
    %c7 = arith.constant 7 : index
    %c0_161 = arith.constant 0 : index
    %c0_162 = arith.constant 0 : index
    %242 = vector.load %arg1[%c0_160, %c7, %c0_161, %c0_162] : memref<1x9x5x128xbf16, #tpu.memory_space<vmem>>, vector<1x1x5x128xbf16>
    %243 = vector.shape_cast %242 : vector<1x1x5x128xbf16> to vector<5x128xbf16>
    %cst_163 = arith.constant 0.000000e+00 : f32
    %244 = vector.broadcast %cst_163 : f32 to vector<4x32xf32>
    %cst_164 = arith.constant 0.000000e+00 : f32
    %245 = vector.broadcast %cst_164 : f32 to vector<4x32xf32>
    %246 = vector.extract_strided_slice %241 {offsets = [0, 0], sizes = [4, 128], strides = [1, 1]} : vector<5x128xbf16> to vector<4x128xbf16>
    %cst_165 = arith.constant dense<0.000000e+00> : vector<4x32xf32>
    %247 = tpu.matmul %246, %5, %cst_165 {dimension_numbers = #tpu.dot_dimension_numbers<[1], [0], [0], [1], [0, 0, 1, 1], [], []>} : vector<4x128xbf16>, vector<128x32xbf16>, vector<4x32xf32> -> vector<4x32xf32>
    %248 = arith.addf %244, %247 : vector<4x32xf32>
    %249 = vector.extract_strided_slice %241 {offsets = [0, 64], sizes = [4, 64], strides = [1, 1]} : vector<5x128xbf16> to vector<4x64xbf16>
    %cst_166 = arith.constant dense<0.000000e+00> : vector<4x32xf32>
    %250 = tpu.matmul %249, %7, %cst_166 {dimension_numbers = #tpu.dot_dimension_numbers<[1], [0], [0], [1], [0, 0, 1, 1], [], []>} : vector<4x64xbf16>, vector<64x32xbf16>, vector<4x32xf32> -> vector<4x32xf32>
    %251 = arith.addf %245, %250 : vector<4x32xf32>
    %252 = vector.extract_strided_slice %241 {offsets = [1, 0], sizes = [4, 64], strides = [1, 1]} : vector<5x128xbf16> to vector<4x64xbf16>
    %cst_167 = arith.constant dense<0.000000e+00> : vector<4x32xf32>
    %253 = tpu.matmul %252, %9, %cst_167 {dimension_numbers = #tpu.dot_dimension_numbers<[1], [0], [0], [1], [0, 0, 1, 1], [], []>} : vector<4x64xbf16>, vector<64x32xbf16>, vector<4x32xf32> -> vector<4x32xf32>
    %254 = arith.addf %251, %253 : vector<4x32xf32>
    %255 = vector.extract_strided_slice %243 {offsets = [0, 0], sizes = [4, 128], strides = [1, 1]} : vector<5x128xbf16> to vector<4x128xbf16>
    %cst_168 = arith.constant dense<0.000000e+00> : vector<4x32xf32>
    %256 = tpu.matmul %255, %6, %cst_168 {dimension_numbers = #tpu.dot_dimension_numbers<[1], [0], [0], [1], [0, 0, 1, 1], [], []>} : vector<4x128xbf16>, vector<128x32xbf16>, vector<4x32xf32> -> vector<4x32xf32>
    %257 = arith.addf %248, %256 : vector<4x32xf32>
    %258 = vector.extract_strided_slice %243 {offsets = [0, 64], sizes = [4, 64], strides = [1, 1]} : vector<5x128xbf16> to vector<4x64xbf16>
    %cst_169 = arith.constant dense<0.000000e+00> : vector<4x32xf32>
    %259 = tpu.matmul %258, %8, %cst_169 {dimension_numbers = #tpu.dot_dimension_numbers<[1], [0], [0], [1], [0, 0, 1, 1], [], []>} : vector<4x64xbf16>, vector<64x32xbf16>, vector<4x32xf32> -> vector<4x32xf32>
    %260 = arith.addf %254, %259 : vector<4x32xf32>
    %261 = vector.extract_strided_slice %243 {offsets = [1, 0], sizes = [4, 64], strides = [1, 1]} : vector<5x128xbf16> to vector<4x64xbf16>
    %cst_170 = arith.constant dense<0.000000e+00> : vector<4x32xf32>
    %262 = tpu.matmul %261, %10, %cst_170 {dimension_numbers = #tpu.dot_dimension_numbers<[1], [0], [0], [1], [0, 0, 1, 1], [], []>} : vector<4x64xbf16>, vector<64x32xbf16>, vector<4x32xf32> -> vector<4x32xf32>
    %263 = arith.addf %260, %262 : vector<4x32xf32>
    %264 = vector.broadcast %0 : vector<1x32xf32> to vector<4x32xf32>
    %265 = arith.addf %257, %264 : vector<4x32xf32>
    %cst_171 = arith.constant 0.000000e+00 : f32
    %266 = vector.broadcast %cst_171 : f32 to vector<4x32xf32>
    %267 = arith.maximumf %265, %266 : vector<4x32xf32>
    %268 = arith.truncf %267 : vector<4x32xf32> to vector<4x32xbf16>
    %269 = vector.broadcast %0 : vector<1x32xf32> to vector<4x32xf32>
    %270 = arith.addf %263, %269 : vector<4x32xf32>
    %cst_172 = arith.constant 0.000000e+00 : f32
    %271 = vector.broadcast %cst_172 : f32 to vector<4x32xf32>
    %272 = arith.maximumf %270, %271 : vector<4x32xf32>
    %273 = arith.truncf %272 : vector<4x32xf32> to vector<4x32xbf16>
    %c0_173 = arith.constant 0 : index
    %c7_174 = arith.constant 7 : index
    %c0_175 = arith.constant 0 : index
    %c0_176 = arith.constant 0 : index
    %274 = vector.load %arg1[%c0_173, %c7_174, %c0_175, %c0_176] : memref<1x9x5x128xbf16, #tpu.memory_space<vmem>>, vector<1x1x5x128xbf16>
    %275 = vector.shape_cast %274 : vector<1x1x5x128xbf16> to vector<5x128xbf16>
    %c0_177 = arith.constant 0 : index
    %c8 = arith.constant 8 : index
    %c0_178 = arith.constant 0 : index
    %c0_179 = arith.constant 0 : index
    %276 = vector.load %arg1[%c0_177, %c8, %c0_178, %c0_179] : memref<1x9x5x128xbf16, #tpu.memory_space<vmem>>, vector<1x1x5x128xbf16>
    %277 = vector.shape_cast %276 : vector<1x1x5x128xbf16> to vector<5x128xbf16>
    %cst_180 = arith.constant 0.000000e+00 : f32
    %278 = vector.broadcast %cst_180 : f32 to vector<4x32xf32>
    %cst_181 = arith.constant 0.000000e+00 : f32
    %279 = vector.broadcast %cst_181 : f32 to vector<4x32xf32>
    %280 = vector.extract_strided_slice %275 {offsets = [0, 0], sizes = [4, 128], strides = [1, 1]} : vector<5x128xbf16> to vector<4x128xbf16>
    %cst_182 = arith.constant dense<0.000000e+00> : vector<4x32xf32>
    %281 = tpu.matmul %280, %5, %cst_182 {dimension_numbers = #tpu.dot_dimension_numbers<[1], [0], [0], [1], [0, 0, 1, 1], [], []>} : vector<4x128xbf16>, vector<128x32xbf16>, vector<4x32xf32> -> vector<4x32xf32>
    %282 = arith.addf %278, %281 : vector<4x32xf32>
    %283 = vector.extract_strided_slice %275 {offsets = [0, 64], sizes = [4, 64], strides = [1, 1]} : vector<5x128xbf16> to vector<4x64xbf16>
    %cst_183 = arith.constant dense<0.000000e+00> : vector<4x32xf32>
    %284 = tpu.matmul %283, %7, %cst_183 {dimension_numbers = #tpu.dot_dimension_numbers<[1], [0], [0], [1], [0, 0, 1, 1], [], []>} : vector<4x64xbf16>, vector<64x32xbf16>, vector<4x32xf32> -> vector<4x32xf32>
    %285 = arith.addf %279, %284 : vector<4x32xf32>
    %286 = vector.extract_strided_slice %275 {offsets = [1, 0], sizes = [4, 64], strides = [1, 1]} : vector<5x128xbf16> to vector<4x64xbf16>
    %cst_184 = arith.constant dense<0.000000e+00> : vector<4x32xf32>
    %287 = tpu.matmul %286, %9, %cst_184 {dimension_numbers = #tpu.dot_dimension_numbers<[1], [0], [0], [1], [0, 0, 1, 1], [], []>} : vector<4x64xbf16>, vector<64x32xbf16>, vector<4x32xf32> -> vector<4x32xf32>
    %288 = arith.addf %285, %287 : vector<4x32xf32>
    %289 = vector.extract_strided_slice %277 {offsets = [0, 0], sizes = [4, 128], strides = [1, 1]} : vector<5x128xbf16> to vector<4x128xbf16>
    %cst_185 = arith.constant dense<0.000000e+00> : vector<4x32xf32>
    %290 = tpu.matmul %289, %6, %cst_185 {dimension_numbers = #tpu.dot_dimension_numbers<[1], [0], [0], [1], [0, 0, 1, 1], [], []>} : vector<4x128xbf16>, vector<128x32xbf16>, vector<4x32xf32> -> vector<4x32xf32>
    %291 = arith.addf %282, %290 : vector<4x32xf32>
    %292 = vector.extract_strided_slice %277 {offsets = [0, 64], sizes = [4, 64], strides = [1, 1]} : vector<5x128xbf16> to vector<4x64xbf16>
    %cst_186 = arith.constant dense<0.000000e+00> : vector<4x32xf32>
    %293 = tpu.matmul %292, %8, %cst_186 {dimension_numbers = #tpu.dot_dimension_numbers<[1], [0], [0], [1], [0, 0, 1, 1], [], []>} : vector<4x64xbf16>, vector<64x32xbf16>, vector<4x32xf32> -> vector<4x32xf32>
    %294 = arith.addf %288, %293 : vector<4x32xf32>
    %295 = vector.extract_strided_slice %277 {offsets = [1, 0], sizes = [4, 64], strides = [1, 1]} : vector<5x128xbf16> to vector<4x64xbf16>
    %cst_187 = arith.constant dense<0.000000e+00> : vector<4x32xf32>
    %296 = tpu.matmul %295, %10, %cst_187 {dimension_numbers = #tpu.dot_dimension_numbers<[1], [0], [0], [1], [0, 0, 1, 1], [], []>} : vector<4x64xbf16>, vector<64x32xbf16>, vector<4x32xf32> -> vector<4x32xf32>
    %297 = arith.addf %294, %296 : vector<4x32xf32>
    %298 = vector.broadcast %0 : vector<1x32xf32> to vector<4x32xf32>
    %299 = arith.addf %291, %298 : vector<4x32xf32>
    %cst_188 = arith.constant 0.000000e+00 : f32
    %300 = vector.broadcast %cst_188 : f32 to vector<4x32xf32>
    %301 = arith.maximumf %299, %300 : vector<4x32xf32>
    %302 = arith.truncf %301 : vector<4x32xf32> to vector<4x32xbf16>
    %303 = vector.broadcast %0 : vector<1x32xf32> to vector<4x32xf32>
    %304 = arith.addf %297, %303 : vector<4x32xf32>
    %cst_189 = arith.constant 0.000000e+00 : f32
    %305 = vector.broadcast %cst_189 : f32 to vector<4x32xf32>
    %306 = arith.maximumf %304, %305 : vector<4x32xf32>
    %307 = arith.truncf %306 : vector<4x32xf32> to vector<4x32xbf16>
    %cst_190 = arith.constant 0.000000e+00 : f32
    %308 = vector.broadcast %cst_190 : f32 to vector<3x64xf32>
    %309 = vector.extract_strided_slice %64 {offsets = [0, 0], sizes = [3, 32], strides = [1, 1]} : vector<4x32xbf16> to vector<3x32xbf16>
    %cst_191 = arith.constant dense<0.000000e+00> : vector<3x64xf32>
    %310 = tpu.matmul %309, %11, %cst_191 {dimension_numbers = #tpu.dot_dimension_numbers<[1], [0], [0], [1], [0, 0, 1, 1], [], []>} : vector<3x32xbf16>, vector<32x64xbf16>, vector<3x64xf32> -> vector<3x64xf32>
    %311 = arith.addf %308, %310 : vector<3x64xf32>
    %312 = vector.extract_strided_slice %69 {offsets = [0, 0], sizes = [3, 32], strides = [1, 1]} : vector<4x32xbf16> to vector<3x32xbf16>
    %cst_192 = arith.constant dense<0.000000e+00> : vector<3x64xf32>
    %313 = tpu.matmul %312, %12, %cst_192 {dimension_numbers = #tpu.dot_dimension_numbers<[1], [0], [0], [1], [0, 0, 1, 1], [], []>} : vector<3x32xbf16>, vector<32x64xbf16>, vector<3x64xf32> -> vector<3x64xf32>
    %314 = arith.addf %311, %313 : vector<3x64xf32>
    %315 = vector.extract_strided_slice %64 {offsets = [1, 0], sizes = [3, 32], strides = [1, 1]} : vector<4x32xbf16> to vector<3x32xbf16>
    %cst_193 = arith.constant dense<0.000000e+00> : vector<3x64xf32>
    %316 = tpu.matmul %315, %13, %cst_193 {dimension_numbers = #tpu.dot_dimension_numbers<[1], [0], [0], [1], [0, 0, 1, 1], [], []>} : vector<3x32xbf16>, vector<32x64xbf16>, vector<3x64xf32> -> vector<3x64xf32>
    %317 = arith.addf %314, %316 : vector<3x64xf32>
    %318 = vector.extract_strided_slice %69 {offsets = [1, 0], sizes = [3, 32], strides = [1, 1]} : vector<4x32xbf16> to vector<3x32xbf16>
    %cst_194 = arith.constant dense<0.000000e+00> : vector<3x64xf32>
    %319 = tpu.matmul %318, %14, %cst_194 {dimension_numbers = #tpu.dot_dimension_numbers<[1], [0], [0], [1], [0, 0, 1, 1], [], []>} : vector<3x32xbf16>, vector<32x64xbf16>, vector<3x64xf32> -> vector<3x64xf32>
    %320 = arith.addf %317, %319 : vector<3x64xf32>
    %321 = vector.extract_strided_slice %98 {offsets = [0, 0], sizes = [3, 32], strides = [1, 1]} : vector<4x32xbf16> to vector<3x32xbf16>
    %cst_195 = arith.constant dense<0.000000e+00> : vector<3x64xf32>
    %322 = tpu.matmul %321, %15, %cst_195 {dimension_numbers = #tpu.dot_dimension_numbers<[1], [0], [0], [1], [0, 0, 1, 1], [], []>} : vector<3x32xbf16>, vector<32x64xbf16>, vector<3x64xf32> -> vector<3x64xf32>
    %323 = arith.addf %320, %322 : vector<3x64xf32>
    %324 = vector.extract_strided_slice %103 {offsets = [0, 0], sizes = [3, 32], strides = [1, 1]} : vector<4x32xbf16> to vector<3x32xbf16>
    %cst_196 = arith.constant dense<0.000000e+00> : vector<3x64xf32>
    %325 = tpu.matmul %324, %16, %cst_196 {dimension_numbers = #tpu.dot_dimension_numbers<[1], [0], [0], [1], [0, 0, 1, 1], [], []>} : vector<3x32xbf16>, vector<32x64xbf16>, vector<3x64xf32> -> vector<3x64xf32>
    %326 = arith.addf %323, %325 : vector<3x64xf32>
    %327 = vector.extract_strided_slice %98 {offsets = [1, 0], sizes = [3, 32], strides = [1, 1]} : vector<4x32xbf16> to vector<3x32xbf16>
    %cst_197 = arith.constant dense<0.000000e+00> : vector<3x64xf32>
    %328 = tpu.matmul %327, %17, %cst_197 {dimension_numbers = #tpu.dot_dimension_numbers<[1], [0], [0], [1], [0, 0, 1, 1], [], []>} : vector<3x32xbf16>, vector<32x64xbf16>, vector<3x64xf32> -> vector<3x64xf32>
    %329 = arith.addf %326, %328 : vector<3x64xf32>
    %330 = vector.extract_strided_slice %103 {offsets = [1, 0], sizes = [3, 32], strides = [1, 1]} : vector<4x32xbf16> to vector<3x32xbf16>
    %cst_198 = arith.constant dense<0.000000e+00> : vector<3x64xf32>
    %331 = tpu.matmul %330, %18, %cst_198 {dimension_numbers = #tpu.dot_dimension_numbers<[1], [0], [0], [1], [0, 0, 1, 1], [], []>} : vector<3x32xbf16>, vector<32x64xbf16>, vector<3x64xf32> -> vector<3x64xf32>
    %332 = arith.addf %329, %331 : vector<3x64xf32>
    %333 = vector.extract_strided_slice %132 {offsets = [0, 0], sizes = [3, 32], strides = [1, 1]} : vector<4x32xbf16> to vector<3x32xbf16>
    %cst_199 = arith.constant dense<0.000000e+00> : vector<3x64xf32>
    %334 = tpu.matmul %333, %19, %cst_199 {dimension_numbers = #tpu.dot_dimension_numbers<[1], [0], [0], [1], [0, 0, 1, 1], [], []>} : vector<3x32xbf16>, vector<32x64xbf16>, vector<3x64xf32> -> vector<3x64xf32>
    %335 = arith.addf %332, %334 : vector<3x64xf32>
    %336 = vector.extract_strided_slice %137 {offsets = [0, 0], sizes = [3, 32], strides = [1, 1]} : vector<4x32xbf16> to vector<3x32xbf16>
    %cst_200 = arith.constant dense<0.000000e+00> : vector<3x64xf32>
    %337 = tpu.matmul %336, %20, %cst_200 {dimension_numbers = #tpu.dot_dimension_numbers<[1], [0], [0], [1], [0, 0, 1, 1], [], []>} : vector<3x32xbf16>, vector<32x64xbf16>, vector<3x64xf32> -> vector<3x64xf32>
    %338 = arith.addf %335, %337 : vector<3x64xf32>
    %339 = vector.extract_strided_slice %132 {offsets = [1, 0], sizes = [3, 32], strides = [1, 1]} : vector<4x32xbf16> to vector<3x32xbf16>
    %cst_201 = arith.constant dense<0.000000e+00> : vector<3x64xf32>
    %340 = tpu.matmul %339, %21, %cst_201 {dimension_numbers = #tpu.dot_dimension_numbers<[1], [0], [0], [1], [0, 0, 1, 1], [], []>} : vector<3x32xbf16>, vector<32x64xbf16>, vector<3x64xf32> -> vector<3x64xf32>
    %341 = arith.addf %338, %340 : vector<3x64xf32>
    %342 = vector.extract_strided_slice %137 {offsets = [1, 0], sizes = [3, 32], strides = [1, 1]} : vector<4x32xbf16> to vector<3x32xbf16>
    %cst_202 = arith.constant dense<0.000000e+00> : vector<3x64xf32>
    %343 = tpu.matmul %342, %22, %cst_202 {dimension_numbers = #tpu.dot_dimension_numbers<[1], [0], [0], [1], [0, 0, 1, 1], [], []>} : vector<3x32xbf16>, vector<32x64xbf16>, vector<3x64xf32> -> vector<3x64xf32>
    %344 = arith.addf %341, %343 : vector<3x64xf32>
    %345 = vector.extract_strided_slice %166 {offsets = [0, 0], sizes = [3, 32], strides = [1, 1]} : vector<4x32xbf16> to vector<3x32xbf16>
    %cst_203 = arith.constant dense<0.000000e+00> : vector<3x64xf32>
    %346 = tpu.matmul %345, %23, %cst_203 {dimension_numbers = #tpu.dot_dimension_numbers<[1], [0], [0], [1], [0, 0, 1, 1], [], []>} : vector<3x32xbf16>, vector<32x64xbf16>, vector<3x64xf32> -> vector<3x64xf32>
    %347 = arith.addf %344, %346 : vector<3x64xf32>
    %348 = vector.extract_strided_slice %171 {offsets = [0, 0], sizes = [3, 32], strides = [1, 1]} : vector<4x32xbf16> to vector<3x32xbf16>
    %cst_204 = arith.constant dense<0.000000e+00> : vector<3x64xf32>
    %349 = tpu.matmul %348, %24, %cst_204 {dimension_numbers = #tpu.dot_dimension_numbers<[1], [0], [0], [1], [0, 0, 1, 1], [], []>} : vector<3x32xbf16>, vector<32x64xbf16>, vector<3x64xf32> -> vector<3x64xf32>
    %350 = arith.addf %347, %349 : vector<3x64xf32>
    %351 = vector.extract_strided_slice %166 {offsets = [1, 0], sizes = [3, 32], strides = [1, 1]} : vector<4x32xbf16> to vector<3x32xbf16>
    %cst_205 = arith.constant dense<0.000000e+00> : vector<3x64xf32>
    %352 = tpu.matmul %351, %25, %cst_205 {dimension_numbers = #tpu.dot_dimension_numbers<[1], [0], [0], [1], [0, 0, 1, 1], [], []>} : vector<3x32xbf16>, vector<32x64xbf16>, vector<3x64xf32> -> vector<3x64xf32>
    %353 = arith.addf %350, %352 : vector<3x64xf32>
    %354 = vector.extract_strided_slice %171 {offsets = [1, 0], sizes = [3, 32], strides = [1, 1]} : vector<4x32xbf16> to vector<3x32xbf16>
    %cst_206 = arith.constant dense<0.000000e+00> : vector<3x64xf32>
    %355 = tpu.matmul %354, %26, %cst_206 {dimension_numbers = #tpu.dot_dimension_numbers<[1], [0], [0], [1], [0, 0, 1, 1], [], []>} : vector<3x32xbf16>, vector<32x64xbf16>, vector<3x64xf32> -> vector<3x64xf32>
    %356 = arith.addf %353, %355 : vector<3x64xf32>
    %357 = vector.broadcast %1 : vector<1x64xf32> to vector<3x64xf32>
    %358 = arith.addf %356, %357 : vector<3x64xf32>
    %cst_207 = arith.constant 0.000000e+00 : f32
    %359 = vector.broadcast %cst_207 : f32 to vector<3x64xf32>
    %360 = arith.maximumf %358, %359 : vector<3x64xf32>
    %361 = arith.truncf %360 : vector<3x64xf32> to vector<3x64xbf16>
    %cst_208 = arith.constant 0.000000e+00 : f32
    %362 = vector.broadcast %cst_208 : f32 to vector<3x64xf32>
    %363 = vector.extract_strided_slice %132 {offsets = [0, 0], sizes = [3, 32], strides = [1, 1]} : vector<4x32xbf16> to vector<3x32xbf16>
    %cst_209 = arith.constant dense<0.000000e+00> : vector<3x64xf32>
    %364 = tpu.matmul %363, %11, %cst_209 {dimension_numbers = #tpu.dot_dimension_numbers<[1], [0], [0], [1], [0, 0, 1, 1], [], []>} : vector<3x32xbf16>, vector<32x64xbf16>, vector<3x64xf32> -> vector<3x64xf32>
    %365 = arith.addf %362, %364 : vector<3x64xf32>
    %366 = vector.extract_strided_slice %137 {offsets = [0, 0], sizes = [3, 32], strides = [1, 1]} : vector<4x32xbf16> to vector<3x32xbf16>
    %cst_210 = arith.constant dense<0.000000e+00> : vector<3x64xf32>
    %367 = tpu.matmul %366, %12, %cst_210 {dimension_numbers = #tpu.dot_dimension_numbers<[1], [0], [0], [1], [0, 0, 1, 1], [], []>} : vector<3x32xbf16>, vector<32x64xbf16>, vector<3x64xf32> -> vector<3x64xf32>
    %368 = arith.addf %365, %367 : vector<3x64xf32>
    %369 = vector.extract_strided_slice %132 {offsets = [1, 0], sizes = [3, 32], strides = [1, 1]} : vector<4x32xbf16> to vector<3x32xbf16>
    %cst_211 = arith.constant dense<0.000000e+00> : vector<3x64xf32>
    %370 = tpu.matmul %369, %13, %cst_211 {dimension_numbers = #tpu.dot_dimension_numbers<[1], [0], [0], [1], [0, 0, 1, 1], [], []>} : vector<3x32xbf16>, vector<32x64xbf16>, vector<3x64xf32> -> vector<3x64xf32>
    %371 = arith.addf %368, %370 : vector<3x64xf32>
    %372 = vector.extract_strided_slice %137 {offsets = [1, 0], sizes = [3, 32], strides = [1, 1]} : vector<4x32xbf16> to vector<3x32xbf16>
    %cst_212 = arith.constant dense<0.000000e+00> : vector<3x64xf32>
    %373 = tpu.matmul %372, %14, %cst_212 {dimension_numbers = #tpu.dot_dimension_numbers<[1], [0], [0], [1], [0, 0, 1, 1], [], []>} : vector<3x32xbf16>, vector<32x64xbf16>, vector<3x64xf32> -> vector<3x64xf32>
    %374 = arith.addf %371, %373 : vector<3x64xf32>
    %375 = vector.extract_strided_slice %166 {offsets = [0, 0], sizes = [3, 32], strides = [1, 1]} : vector<4x32xbf16> to vector<3x32xbf16>
    %cst_213 = arith.constant dense<0.000000e+00> : vector<3x64xf32>
    %376 = tpu.matmul %375, %15, %cst_213 {dimension_numbers = #tpu.dot_dimension_numbers<[1], [0], [0], [1], [0, 0, 1, 1], [], []>} : vector<3x32xbf16>, vector<32x64xbf16>, vector<3x64xf32> -> vector<3x64xf32>
    %377 = arith.addf %374, %376 : vector<3x64xf32>
    %378 = vector.extract_strided_slice %171 {offsets = [0, 0], sizes = [3, 32], strides = [1, 1]} : vector<4x32xbf16> to vector<3x32xbf16>
    %cst_214 = arith.constant dense<0.000000e+00> : vector<3x64xf32>
    %379 = tpu.matmul %378, %16, %cst_214 {dimension_numbers = #tpu.dot_dimension_numbers<[1], [0], [0], [1], [0, 0, 1, 1], [], []>} : vector<3x32xbf16>, vector<32x64xbf16>, vector<3x64xf32> -> vector<3x64xf32>
    %380 = arith.addf %377, %379 : vector<3x64xf32>
    %381 = vector.extract_strided_slice %166 {offsets = [1, 0], sizes = [3, 32], strides = [1, 1]} : vector<4x32xbf16> to vector<3x32xbf16>
    %cst_215 = arith.constant dense<0.000000e+00> : vector<3x64xf32>
    %382 = tpu.matmul %381, %17, %cst_215 {dimension_numbers = #tpu.dot_dimension_numbers<[1], [0], [0], [1], [0, 0, 1, 1], [], []>} : vector<3x32xbf16>, vector<32x64xbf16>, vector<3x64xf32> -> vector<3x64xf32>
    %383 = arith.addf %380, %382 : vector<3x64xf32>
    %384 = vector.extract_strided_slice %171 {offsets = [1, 0], sizes = [3, 32], strides = [1, 1]} : vector<4x32xbf16> to vector<3x32xbf16>
    %cst_216 = arith.constant dense<0.000000e+00> : vector<3x64xf32>
    %385 = tpu.matmul %384, %18, %cst_216 {dimension_numbers = #tpu.dot_dimension_numbers<[1], [0], [0], [1], [0, 0, 1, 1], [], []>} : vector<3x32xbf16>, vector<32x64xbf16>, vector<3x64xf32> -> vector<3x64xf32>
    %386 = arith.addf %383, %385 : vector<3x64xf32>
    %387 = vector.extract_strided_slice %200 {offsets = [0, 0], sizes = [3, 32], strides = [1, 1]} : vector<4x32xbf16> to vector<3x32xbf16>
    %cst_217 = arith.constant dense<0.000000e+00> : vector<3x64xf32>
    %388 = tpu.matmul %387, %19, %cst_217 {dimension_numbers = #tpu.dot_dimension_numbers<[1], [0], [0], [1], [0, 0, 1, 1], [], []>} : vector<3x32xbf16>, vector<32x64xbf16>, vector<3x64xf32> -> vector<3x64xf32>
    %389 = arith.addf %386, %388 : vector<3x64xf32>
    %390 = vector.extract_strided_slice %205 {offsets = [0, 0], sizes = [3, 32], strides = [1, 1]} : vector<4x32xbf16> to vector<3x32xbf16>
    %cst_218 = arith.constant dense<0.000000e+00> : vector<3x64xf32>
    %391 = tpu.matmul %390, %20, %cst_218 {dimension_numbers = #tpu.dot_dimension_numbers<[1], [0], [0], [1], [0, 0, 1, 1], [], []>} : vector<3x32xbf16>, vector<32x64xbf16>, vector<3x64xf32> -> vector<3x64xf32>
    %392 = arith.addf %389, %391 : vector<3x64xf32>
    %393 = vector.extract_strided_slice %200 {offsets = [1, 0], sizes = [3, 32], strides = [1, 1]} : vector<4x32xbf16> to vector<3x32xbf16>
    %cst_219 = arith.constant dense<0.000000e+00> : vector<3x64xf32>
    %394 = tpu.matmul %393, %21, %cst_219 {dimension_numbers = #tpu.dot_dimension_numbers<[1], [0], [0], [1], [0, 0, 1, 1], [], []>} : vector<3x32xbf16>, vector<32x64xbf16>, vector<3x64xf32> -> vector<3x64xf32>
    %395 = arith.addf %392, %394 : vector<3x64xf32>
    %396 = vector.extract_strided_slice %205 {offsets = [1, 0], sizes = [3, 32], strides = [1, 1]} : vector<4x32xbf16> to vector<3x32xbf16>
    %cst_220 = arith.constant dense<0.000000e+00> : vector<3x64xf32>
    %397 = tpu.matmul %396, %22, %cst_220 {dimension_numbers = #tpu.dot_dimension_numbers<[1], [0], [0], [1], [0, 0, 1, 1], [], []>} : vector<3x32xbf16>, vector<32x64xbf16>, vector<3x64xf32> -> vector<3x64xf32>
    %398 = arith.addf %395, %397 : vector<3x64xf32>
    %399 = vector.extract_strided_slice %234 {offsets = [0, 0], sizes = [3, 32], strides = [1, 1]} : vector<4x32xbf16> to vector<3x32xbf16>
    %cst_221 = arith.constant dense<0.000000e+00> : vector<3x64xf32>
    %400 = tpu.matmul %399, %23, %cst_221 {dimension_numbers = #tpu.dot_dimension_numbers<[1], [0], [0], [1], [0, 0, 1, 1], [], []>} : vector<3x32xbf16>, vector<32x64xbf16>, vector<3x64xf32> -> vector<3x64xf32>
    %401 = arith.addf %398, %400 : vector<3x64xf32>
    %402 = vector.extract_strided_slice %239 {offsets = [0, 0], sizes = [3, 32], strides = [1, 1]} : vector<4x32xbf16> to vector<3x32xbf16>
    %cst_222 = arith.constant dense<0.000000e+00> : vector<3x64xf32>
    %403 = tpu.matmul %402, %24, %cst_222 {dimension_numbers = #tpu.dot_dimension_numbers<[1], [0], [0], [1], [0, 0, 1, 1], [], []>} : vector<3x32xbf16>, vector<32x64xbf16>, vector<3x64xf32> -> vector<3x64xf32>
    %404 = arith.addf %401, %403 : vector<3x64xf32>
    %405 = vector.extract_strided_slice %234 {offsets = [1, 0], sizes = [3, 32], strides = [1, 1]} : vector<4x32xbf16> to vector<3x32xbf16>
    %cst_223 = arith.constant dense<0.000000e+00> : vector<3x64xf32>
    %406 = tpu.matmul %405, %25, %cst_223 {dimension_numbers = #tpu.dot_dimension_numbers<[1], [0], [0], [1], [0, 0, 1, 1], [], []>} : vector<3x32xbf16>, vector<32x64xbf16>, vector<3x64xf32> -> vector<3x64xf32>
    %407 = arith.addf %404, %406 : vector<3x64xf32>
    %408 = vector.extract_strided_slice %239 {offsets = [1, 0], sizes = [3, 32], strides = [1, 1]} : vector<4x32xbf16> to vector<3x32xbf16>
    %cst_224 = arith.constant dense<0.000000e+00> : vector<3x64xf32>
    %409 = tpu.matmul %408, %26, %cst_224 {dimension_numbers = #tpu.dot_dimension_numbers<[1], [0], [0], [1], [0, 0, 1, 1], [], []>} : vector<3x32xbf16>, vector<32x64xbf16>, vector<3x64xf32> -> vector<3x64xf32>
    %410 = arith.addf %407, %409 : vector<3x64xf32>
    %411 = vector.broadcast %1 : vector<1x64xf32> to vector<3x64xf32>
    %412 = arith.addf %410, %411 : vector<3x64xf32>
    %cst_225 = arith.constant 0.000000e+00 : f32
    %413 = vector.broadcast %cst_225 : f32 to vector<3x64xf32>
    %414 = arith.maximumf %412, %413 : vector<3x64xf32>
    %415 = arith.truncf %414 : vector<3x64xf32> to vector<3x64xbf16>
    %cst_226 = arith.constant 0.000000e+00 : f32
    %416 = vector.broadcast %cst_226 : f32 to vector<3x64xf32>
    %417 = vector.extract_strided_slice %200 {offsets = [0, 0], sizes = [3, 32], strides = [1, 1]} : vector<4x32xbf16> to vector<3x32xbf16>
    %cst_227 = arith.constant dense<0.000000e+00> : vector<3x64xf32>
    %418 = tpu.matmul %417, %11, %cst_227 {dimension_numbers = #tpu.dot_dimension_numbers<[1], [0], [0], [1], [0, 0, 1, 1], [], []>} : vector<3x32xbf16>, vector<32x64xbf16>, vector<3x64xf32> -> vector<3x64xf32>
    %419 = arith.addf %416, %418 : vector<3x64xf32>
    %420 = vector.extract_strided_slice %205 {offsets = [0, 0], sizes = [3, 32], strides = [1, 1]} : vector<4x32xbf16> to vector<3x32xbf16>
    %cst_228 = arith.constant dense<0.000000e+00> : vector<3x64xf32>
    %421 = tpu.matmul %420, %12, %cst_228 {dimension_numbers = #tpu.dot_dimension_numbers<[1], [0], [0], [1], [0, 0, 1, 1], [], []>} : vector<3x32xbf16>, vector<32x64xbf16>, vector<3x64xf32> -> vector<3x64xf32>
    %422 = arith.addf %419, %421 : vector<3x64xf32>
    %423 = vector.extract_strided_slice %200 {offsets = [1, 0], sizes = [3, 32], strides = [1, 1]} : vector<4x32xbf16> to vector<3x32xbf16>
    %cst_229 = arith.constant dense<0.000000e+00> : vector<3x64xf32>
    %424 = tpu.matmul %423, %13, %cst_229 {dimension_numbers = #tpu.dot_dimension_numbers<[1], [0], [0], [1], [0, 0, 1, 1], [], []>} : vector<3x32xbf16>, vector<32x64xbf16>, vector<3x64xf32> -> vector<3x64xf32>
    %425 = arith.addf %422, %424 : vector<3x64xf32>
    %426 = vector.extract_strided_slice %205 {offsets = [1, 0], sizes = [3, 32], strides = [1, 1]} : vector<4x32xbf16> to vector<3x32xbf16>
    %cst_230 = arith.constant dense<0.000000e+00> : vector<3x64xf32>
    %427 = tpu.matmul %426, %14, %cst_230 {dimension_numbers = #tpu.dot_dimension_numbers<[1], [0], [0], [1], [0, 0, 1, 1], [], []>} : vector<3x32xbf16>, vector<32x64xbf16>, vector<3x64xf32> -> vector<3x64xf32>
    %428 = arith.addf %425, %427 : vector<3x64xf32>
    %429 = vector.extract_strided_slice %234 {offsets = [0, 0], sizes = [3, 32], strides = [1, 1]} : vector<4x32xbf16> to vector<3x32xbf16>
    %cst_231 = arith.constant dense<0.000000e+00> : vector<3x64xf32>
    %430 = tpu.matmul %429, %15, %cst_231 {dimension_numbers = #tpu.dot_dimension_numbers<[1], [0], [0], [1], [0, 0, 1, 1], [], []>} : vector<3x32xbf16>, vector<32x64xbf16>, vector<3x64xf32> -> vector<3x64xf32>
    %431 = arith.addf %428, %430 : vector<3x64xf32>
    %432 = vector.extract_strided_slice %239 {offsets = [0, 0], sizes = [3, 32], strides = [1, 1]} : vector<4x32xbf16> to vector<3x32xbf16>
    %cst_232 = arith.constant dense<0.000000e+00> : vector<3x64xf32>
    %433 = tpu.matmul %432, %16, %cst_232 {dimension_numbers = #tpu.dot_dimension_numbers<[1], [0], [0], [1], [0, 0, 1, 1], [], []>} : vector<3x32xbf16>, vector<32x64xbf16>, vector<3x64xf32> -> vector<3x64xf32>
    %434 = arith.addf %431, %433 : vector<3x64xf32>
    %435 = vector.extract_strided_slice %234 {offsets = [1, 0], sizes = [3, 32], strides = [1, 1]} : vector<4x32xbf16> to vector<3x32xbf16>
    %cst_233 = arith.constant dense<0.000000e+00> : vector<3x64xf32>
    %436 = tpu.matmul %435, %17, %cst_233 {dimension_numbers = #tpu.dot_dimension_numbers<[1], [0], [0], [1], [0, 0, 1, 1], [], []>} : vector<3x32xbf16>, vector<32x64xbf16>, vector<3x64xf32> -> vector<3x64xf32>
    %437 = arith.addf %434, %436 : vector<3x64xf32>
    %438 = vector.extract_strided_slice %239 {offsets = [1, 0], sizes = [3, 32], strides = [1, 1]} : vector<4x32xbf16> to vector<3x32xbf16>
    %cst_234 = arith.constant dense<0.000000e+00> : vector<3x64xf32>
    %439 = tpu.matmul %438, %18, %cst_234 {dimension_numbers = #tpu.dot_dimension_numbers<[1], [0], [0], [1], [0, 0, 1, 1], [], []>} : vector<3x32xbf16>, vector<32x64xbf16>, vector<3x64xf32> -> vector<3x64xf32>
    %440 = arith.addf %437, %439 : vector<3x64xf32>
    %441 = vector.extract_strided_slice %268 {offsets = [0, 0], sizes = [3, 32], strides = [1, 1]} : vector<4x32xbf16> to vector<3x32xbf16>
    %cst_235 = arith.constant dense<0.000000e+00> : vector<3x64xf32>
    %442 = tpu.matmul %441, %19, %cst_235 {dimension_numbers = #tpu.dot_dimension_numbers<[1], [0], [0], [1], [0, 0, 1, 1], [], []>} : vector<3x32xbf16>, vector<32x64xbf16>, vector<3x64xf32> -> vector<3x64xf32>
    %443 = arith.addf %440, %442 : vector<3x64xf32>
    %444 = vector.extract_strided_slice %273 {offsets = [0, 0], sizes = [3, 32], strides = [1, 1]} : vector<4x32xbf16> to vector<3x32xbf16>
    %cst_236 = arith.constant dense<0.000000e+00> : vector<3x64xf32>
    %445 = tpu.matmul %444, %20, %cst_236 {dimension_numbers = #tpu.dot_dimension_numbers<[1], [0], [0], [1], [0, 0, 1, 1], [], []>} : vector<3x32xbf16>, vector<32x64xbf16>, vector<3x64xf32> -> vector<3x64xf32>
    %446 = arith.addf %443, %445 : vector<3x64xf32>
    %447 = vector.extract_strided_slice %268 {offsets = [1, 0], sizes = [3, 32], strides = [1, 1]} : vector<4x32xbf16> to vector<3x32xbf16>
    %cst_237 = arith.constant dense<0.000000e+00> : vector<3x64xf32>
    %448 = tpu.matmul %447, %21, %cst_237 {dimension_numbers = #tpu.dot_dimension_numbers<[1], [0], [0], [1], [0, 0, 1, 1], [], []>} : vector<3x32xbf16>, vector<32x64xbf16>, vector<3x64xf32> -> vector<3x64xf32>
    %449 = arith.addf %446, %448 : vector<3x64xf32>
    %450 = vector.extract_strided_slice %273 {offsets = [1, 0], sizes = [3, 32], strides = [1, 1]} : vector<4x32xbf16> to vector<3x32xbf16>
    %cst_238 = arith.constant dense<0.000000e+00> : vector<3x64xf32>
    %451 = tpu.matmul %450, %22, %cst_238 {dimension_numbers = #tpu.dot_dimension_numbers<[1], [0], [0], [1], [0, 0, 1, 1], [], []>} : vector<3x32xbf16>, vector<32x64xbf16>, vector<3x64xf32> -> vector<3x64xf32>
    %452 = arith.addf %449, %451 : vector<3x64xf32>
    %453 = vector.extract_strided_slice %302 {offsets = [0, 0], sizes = [3, 32], strides = [1, 1]} : vector<4x32xbf16> to vector<3x32xbf16>
    %cst_239 = arith.constant dense<0.000000e+00> : vector<3x64xf32>
    %454 = tpu.matmul %453, %23, %cst_239 {dimension_numbers = #tpu.dot_dimension_numbers<[1], [0], [0], [1], [0, 0, 1, 1], [], []>} : vector<3x32xbf16>, vector<32x64xbf16>, vector<3x64xf32> -> vector<3x64xf32>
    %455 = arith.addf %452, %454 : vector<3x64xf32>
    %456 = vector.extract_strided_slice %307 {offsets = [0, 0], sizes = [3, 32], strides = [1, 1]} : vector<4x32xbf16> to vector<3x32xbf16>
    %cst_240 = arith.constant dense<0.000000e+00> : vector<3x64xf32>
    %457 = tpu.matmul %456, %24, %cst_240 {dimension_numbers = #tpu.dot_dimension_numbers<[1], [0], [0], [1], [0, 0, 1, 1], [], []>} : vector<3x32xbf16>, vector<32x64xbf16>, vector<3x64xf32> -> vector<3x64xf32>
    %458 = arith.addf %455, %457 : vector<3x64xf32>
    %459 = vector.extract_strided_slice %302 {offsets = [1, 0], sizes = [3, 32], strides = [1, 1]} : vector<4x32xbf16> to vector<3x32xbf16>
    %cst_241 = arith.constant dense<0.000000e+00> : vector<3x64xf32>
    %460 = tpu.matmul %459, %25, %cst_241 {dimension_numbers = #tpu.dot_dimension_numbers<[1], [0], [0], [1], [0, 0, 1, 1], [], []>} : vector<3x32xbf16>, vector<32x64xbf16>, vector<3x64xf32> -> vector<3x64xf32>
    %461 = arith.addf %458, %460 : vector<3x64xf32>
    %462 = vector.extract_strided_slice %307 {offsets = [1, 0], sizes = [3, 32], strides = [1, 1]} : vector<4x32xbf16> to vector<3x32xbf16>
    %cst_242 = arith.constant dense<0.000000e+00> : vector<3x64xf32>
    %463 = tpu.matmul %462, %26, %cst_242 {dimension_numbers = #tpu.dot_dimension_numbers<[1], [0], [0], [1], [0, 0, 1, 1], [], []>} : vector<3x32xbf16>, vector<32x64xbf16>, vector<3x64xf32> -> vector<3x64xf32>
    %464 = arith.addf %461, %463 : vector<3x64xf32>
    %465 = vector.broadcast %1 : vector<1x64xf32> to vector<3x64xf32>
    %466 = arith.addf %464, %465 : vector<3x64xf32>
    %cst_243 = arith.constant 0.000000e+00 : f32
    %467 = vector.broadcast %cst_243 : f32 to vector<3x64xf32>
    %468 = arith.maximumf %466, %467 : vector<3x64xf32>
    %469 = arith.truncf %468 : vector<3x64xf32> to vector<3x64xbf16>
    %cst_244 = arith.constant 0.000000e+00 : f32
    %470 = vector.broadcast %cst_244 : f32 to vector<1x64xf32>
    %471 = vector.extract_strided_slice %361 {offsets = [0, 0], sizes = [1, 64], strides = [1, 1]} : vector<3x64xbf16> to vector<1x64xbf16>
    %cst_245 = arith.constant dense<0.000000e+00> : vector<1x64xf32>
    %472 = tpu.matmul %471, %27, %cst_245 {dimension_numbers = #tpu.dot_dimension_numbers<[1], [0], [0], [1], [0, 0, 1, 1], [], []>} : vector<1x64xbf16>, vector<64x64xbf16>, vector<1x64xf32> -> vector<1x64xf32>
    %473 = arith.addf %470, %472 : vector<1x64xf32>
    %474 = vector.extract_strided_slice %361 {offsets = [1, 0], sizes = [1, 64], strides = [1, 1]} : vector<3x64xbf16> to vector<1x64xbf16>
    %cst_246 = arith.constant dense<0.000000e+00> : vector<1x64xf32>
    %475 = tpu.matmul %474, %28, %cst_246 {dimension_numbers = #tpu.dot_dimension_numbers<[1], [0], [0], [1], [0, 0, 1, 1], [], []>} : vector<1x64xbf16>, vector<64x64xbf16>, vector<1x64xf32> -> vector<1x64xf32>
    %476 = arith.addf %473, %475 : vector<1x64xf32>
    %477 = vector.extract_strided_slice %361 {offsets = [2, 0], sizes = [1, 64], strides = [1, 1]} : vector<3x64xbf16> to vector<1x64xbf16>
    %cst_247 = arith.constant dense<0.000000e+00> : vector<1x64xf32>
    %478 = tpu.matmul %477, %29, %cst_247 {dimension_numbers = #tpu.dot_dimension_numbers<[1], [0], [0], [1], [0, 0, 1, 1], [], []>} : vector<1x64xbf16>, vector<64x64xbf16>, vector<1x64xf32> -> vector<1x64xf32>
    %479 = arith.addf %476, %478 : vector<1x64xf32>
    %480 = vector.extract_strided_slice %415 {offsets = [0, 0], sizes = [1, 64], strides = [1, 1]} : vector<3x64xbf16> to vector<1x64xbf16>
    %cst_248 = arith.constant dense<0.000000e+00> : vector<1x64xf32>
    %481 = tpu.matmul %480, %30, %cst_248 {dimension_numbers = #tpu.dot_dimension_numbers<[1], [0], [0], [1], [0, 0, 1, 1], [], []>} : vector<1x64xbf16>, vector<64x64xbf16>, vector<1x64xf32> -> vector<1x64xf32>
    %482 = arith.addf %479, %481 : vector<1x64xf32>
    %483 = vector.extract_strided_slice %415 {offsets = [1, 0], sizes = [1, 64], strides = [1, 1]} : vector<3x64xbf16> to vector<1x64xbf16>
    %cst_249 = arith.constant dense<0.000000e+00> : vector<1x64xf32>
    %484 = tpu.matmul %483, %31, %cst_249 {dimension_numbers = #tpu.dot_dimension_numbers<[1], [0], [0], [1], [0, 0, 1, 1], [], []>} : vector<1x64xbf16>, vector<64x64xbf16>, vector<1x64xf32> -> vector<1x64xf32>
    %485 = arith.addf %482, %484 : vector<1x64xf32>
    %486 = vector.extract_strided_slice %415 {offsets = [2, 0], sizes = [1, 64], strides = [1, 1]} : vector<3x64xbf16> to vector<1x64xbf16>
    %cst_250 = arith.constant dense<0.000000e+00> : vector<1x64xf32>
    %487 = tpu.matmul %486, %32, %cst_250 {dimension_numbers = #tpu.dot_dimension_numbers<[1], [0], [0], [1], [0, 0, 1, 1], [], []>} : vector<1x64xbf16>, vector<64x64xbf16>, vector<1x64xf32> -> vector<1x64xf32>
    %488 = arith.addf %485, %487 : vector<1x64xf32>
    %489 = vector.extract_strided_slice %469 {offsets = [0, 0], sizes = [1, 64], strides = [1, 1]} : vector<3x64xbf16> to vector<1x64xbf16>
    %cst_251 = arith.constant dense<0.000000e+00> : vector<1x64xf32>
    %490 = tpu.matmul %489, %33, %cst_251 {dimension_numbers = #tpu.dot_dimension_numbers<[1], [0], [0], [1], [0, 0, 1, 1], [], []>} : vector<1x64xbf16>, vector<64x64xbf16>, vector<1x64xf32> -> vector<1x64xf32>
    %491 = arith.addf %488, %490 : vector<1x64xf32>
    %492 = vector.extract_strided_slice %469 {offsets = [1, 0], sizes = [1, 64], strides = [1, 1]} : vector<3x64xbf16> to vector<1x64xbf16>
    %cst_252 = arith.constant dense<0.000000e+00> : vector<1x64xf32>
    %493 = tpu.matmul %492, %34, %cst_252 {dimension_numbers = #tpu.dot_dimension_numbers<[1], [0], [0], [1], [0, 0, 1, 1], [], []>} : vector<1x64xbf16>, vector<64x64xbf16>, vector<1x64xf32> -> vector<1x64xf32>
    %494 = arith.addf %491, %493 : vector<1x64xf32>
    %495 = vector.extract_strided_slice %469 {offsets = [2, 0], sizes = [1, 64], strides = [1, 1]} : vector<3x64xbf16> to vector<1x64xbf16>
    %cst_253 = arith.constant dense<0.000000e+00> : vector<1x64xf32>
    %496 = tpu.matmul %495, %35, %cst_253 {dimension_numbers = #tpu.dot_dimension_numbers<[1], [0], [0], [1], [0, 0, 1, 1], [], []>} : vector<1x64xbf16>, vector<64x64xbf16>, vector<1x64xf32> -> vector<1x64xf32>
    %497 = arith.addf %494, %496 : vector<1x64xf32>
    %498 = arith.addf %497, %2 : vector<1x64xf32>
    %cst_254 = arith.constant 0.000000e+00 : f32
    %499 = vector.broadcast %cst_254 : f32 to vector<1x64xf32>
    %500 = arith.maximumf %498, %499 : vector<1x64xf32>
    %501 = arith.truncf %500 : vector<1x64xf32> to vector<1x64xbf16>
    %cst_255 = arith.constant 0.000000e+00 : f32
    %502 = vector.broadcast %cst_255 : f32 to vector<1x512xf32>
    %c0_256 = arith.constant 0 : index
    %c0_257 = arith.constant 0 : index
    %503 = vector.load %arg10[%c0_256, %c0_257] : memref<64x512xbf16, #tpu.memory_space<vmem>>, vector<64x512xbf16>
    %cst_258 = arith.constant dense<0.000000e+00> : vector<1x512xf32>
    %504 = tpu.matmul %501, %503, %cst_258 {dimension_numbers = #tpu.dot_dimension_numbers<[1], [0], [0], [1], [0, 0, 1, 1], [], []>} : vector<1x64xbf16>, vector<64x512xbf16>, vector<1x512xf32> -> vector<1x512xf32>
    %505 = arith.addf %502, %504 : vector<1x512xf32>
    %506 = arith.addf %505, %3 : vector<1x512xf32>
    %cst_259 = arith.constant 0.000000e+00 : f32
    %507 = vector.broadcast %cst_259 : f32 to vector<1x512xf32>
    %508 = arith.maximumf %506, %507 : vector<1x512xf32>
    %509 = arith.truncf %508 : vector<1x512xf32> to vector<1x512xbf16>
    %c0_260 = arith.constant 0 : index
    %c0_261 = arith.constant 0 : index
    %510 = vector.load %arg12[%c0_260, %c0_261] : memref<512x128xbf16, #tpu.memory_space<vmem>>, vector<512x128xbf16>
    %cst_262 = arith.constant dense<0.000000e+00> : vector<1x128xf32>
    %511 = tpu.matmul %509, %510, %cst_262 {dimension_numbers = #tpu.dot_dimension_numbers<[1], [0], [0], [1], [0, 0, 1, 1], [], []>} : vector<1x512xbf16>, vector<512x128xbf16>, vector<1x128xf32> -> vector<1x128xf32>
    %512 = arith.addf %511, %4 : vector<1x128xf32>
    %c0_263 = arith.constant 0 : index
    %c0_264 = arith.constant 0 : index
    %c0_265 = arith.constant 0 : index
    %513 = vector.load %arg14[%c0_263, %c0_264, %c0_265] : memref<1x1x128xf32, #tpu.memory_space<vmem>>, vector<1x1x128xf32>
    %514 = vector.shape_cast %513 : vector<1x1x128xf32> to vector<1x128xf32>
    %515 = vector.shape_cast %512 : vector<1x128xf32> to vector<1x1x128xf32>
    tpu.vector_store %arg14[%c0_263, %c0_264, %c0_265], %515 {strides = array<i32>} : memref<1x1x128xf32, #tpu.memory_space<vmem>>, vector<1x1x128xf32>,
    return
  }
  func.func @transform_0(%arg0: i32) -> (i32, i32, i32, i32) {
    %c0_i32 = arith.constant 0 : i32
    %c0_i32_0 = arith.constant 0 : i32
    %c0_i32_1 = arith.constant 0 : i32
    %c0_i32_2 = arith.constant 0 : i32
    return %arg0, %c0_i32, %c0_i32_0, %c0_i32_1 : i32, i32, i32, i32
  }
  func.func @transform_1(%arg0: i32) -> (i32, i32) {
    %c0_i32 = arith.constant 0 : i32
    %c0_i32_0 = arith.constant 0 : i32
    %c0_i32_1 = arith.constant 0 : i32
    return %c0_i32, %c0_i32_0 : i32, i32
  }
  func.func @transform_2(%arg0: i32) -> (i32, i32) {
    %c0_i32 = arith.constant 0 : i32
    %c0_i32_0 = arith.constant 0 : i32
    %c0_i32_1 = arith.constant 0 : i32
    return %c0_i32, %c0_i32_0 : i32, i32
  }
  func.func @transform_3(%arg0: i32) -> (i32, i32) {
    %c0_i32 = arith.constant 0 : i32
    %c0_i32_0 = arith.constant 0 : i32
    %c0_i32_1 = arith.constant 0 : i32
    return %c0_i32, %c0_i32_0 : i32, i32
  }
  func.func @transform_4(%arg0: i32) -> (i32, i32) {
    %c0_i32 = arith.constant 0 : i32
    %c0_i32_0 = arith.constant 0 : i32
    %c0_i32_1 = arith.constant 0 : i32
    return %c0_i32, %c0_i32_0 : i32, i32
  }
  func.func @transform_5(%arg0: i32) -> (i32, i32) {
    %c0_i32 = arith.constant 0 : i32
    %c0_i32_0 = arith.constant 0 : i32
    %c0_i32_1 = arith.constant 0 : i32
    return %c0_i32, %c0_i32_0 : i32, i32
  }
  func.func @transform_6(%arg0: i32) -> (i32, i32) {
    %c0_i32 = arith.constant 0 : i32
    %c0_i32_0 = arith.constant 0 : i32
    %c0_i32_1 = arith.constant 0 : i32
    return %c0_i32, %c0_i32_0 : i32, i32
  }
  func.func @transform_7(%arg0: i32) -> (i32, i32) {
    %c0_i32 = arith.constant 0 : i32
    %c0_i32_0 = arith.constant 0 : i32
    %c0_i32_1 = arith.constant 0 : i32
    return %c0_i32, %c0_i32_0 : i32, i32
  }
  func.func @transform_8(%arg0: i32) -> (i32, i32) {
    %c0_i32 = arith.constant 0 : i32
    %c0_i32_0 = arith.constant 0 : i32
    %c0_i32_1 = arith.constant 0 : i32
    return %c0_i32, %c0_i32_0 : i32, i32
  }
  func.func @transform_9(%arg0: i32) -> (i32, i32) {
    %c0_i32 = arith.constant 0 : i32
    %c0_i32_0 = arith.constant 0 : i32
    %c0_i32_1 = arith.constant 0 : i32
    return %c0_i32, %c0_i32_0 : i32, i32
  }
  func.func @transform_10(%arg0: i32) -> (i32, i32) {
    %c0_i32 = arith.constant 0 : i32
    %c0_i32_0 = arith.constant 0 : i32
    %c0_i32_1 = arith.constant 0 : i32
    return %c0_i32, %c0_i32_0 : i32, i32
  }
  func.func @transform_11(%arg0: i32) -> (i32, i32) {
    %c0_i32 = arith.constant 0 : i32
    %c0_i32_0 = arith.constant 0 : i32
    %c0_i32_1 = arith.constant 0 : i32
    return %c0_i32, %c0_i32_0 : i32, i32
  }
  func.func @transform_12(%arg0: i32) -> (i32, i32) {
    %c0_i32 = arith.constant 0 : i32
    %c0_i32_0 = arith.constant 0 : i32
    %c0_i32_1 = arith.constant 0 : i32
    return %c0_i32, %c0_i32_0 : i32, i32
  }
  func.func @transform_13(%arg0: i32) -> (i32, i32, i32) {
    %c0_i32 = arith.constant 0 : i32
    %c0_i32_0 = arith.constant 0 : i32
    %c0_i32_1 = arith.constant 0 : i32
    return %arg0, %c0_i32, %c0_i32_0 : i32, i32, i32
  }
}

</mosaic_0001>

<llo_original>
// kernel: _lambda_.1
$region0: #{_lambda_.1}
  #allocation0 [shape = 'u32[]', space=smem, size = 0x4, offset = 0x4, fixed_abs, tag = 'smem constant byte address 0x4 - core index']
  #allocation1 [shape = 'u32[144,128]{1,0:T(1,128)}', space=vmem, size = 0x12000, scoped, tag = 'internal scratch']
  %s0 = inlined_call_operand.vmem [shape: bf16[2,9,5,128], index: 0, kind: input, shape index: {}]
  %s1 = inlined_call_operand.vmem [shape: bf16[256,32], index: 1, kind: input, shape index: {}]
  %s2 = inlined_call_operand.vmem [shape: bf16[128,32], index: 2, kind: input, shape index: {}]
  %s3 = inlined_call_operand.vmem [shape: bf16[128,32], index: 3, kind: input, shape index: {}]
  %s4 = inlined_call_operand.vmem [shape: f32[1,32], index: 4, kind: input, shape index: {}]
  %s5 = inlined_call_operand.vmem [shape: bf16[512,64], index: 5, kind: input, shape index: {}]
  %s6 = inlined_call_operand.vmem [shape: f32[1,64], index: 6, kind: input, shape index: {}]
  %s7 = inlined_call_operand.vmem [shape: bf16[576,64], index: 7, kind: input, shape index: {}]
  %s8 = inlined_call_operand.vmem [shape: f32[1,64], index: 8, kind: input, shape index: {}]
  %s9 = inlined_call_operand.vmem [shape: bf16[64,512], index: 9, kind: input, shape index: {}]
  %s10 = inlined_call_operand.vmem [shape: f32[1,512], index: 10, kind: input, shape index: {}]
  %s11 = inlined_call_operand.vmem [shape: bf16[512,128], index: 11, kind: input, shape index: {}]
  %s12 = inlined_call_operand.vmem [shape: f32[1,128], index: 12, kind: input, shape index: {}]
  %s13 = inlined_call_operand.hbm [shape: f32[2,1,128], index: 13, kind: output, shape index: {}]
  %s14 = sld [smem:[#allocation0]]
  $region85: #{_lambda_.1} parent=0
    _
  %s16 = ssub.s32 1, %s14
  %s17 = scalar_select 0, %s16, %s14
  $region1: #{_lambda_.1} parent=0
    #allocation2 [shape = 'u8[1024]{0}', space=vmem, size = 0x400, scoped, tag = 'output window, operand 0']
    #allocation3 [shape = 's32[2]{0}', space=sflag, size = 0x8, scoped, tag = 'scoped memory for _lambda_.1']
    %18 = vsyncpa [#allocation3], 0
    %s19 = scalar_lea.sflag [#allocation3], 1
    %20 = vsyncpa %s19, 0
    loop: start=0, step=1, limit=4
    $region2: #{_lambda_.1} parent=1 // loop_pre_header
      _
    $region3: #{_lambda_.1} parent=1 // loop_header
      %s22 = sphi 0, %s26
      %p23 = scmp.ge.s32.totalorder %s22, 4
      %s32 = sphi 0, %s34
      %s35 = sphi 0, %s32
      %s36 = sphi 0, %s35
      %s52 = sphi 0, %s36
      %s56 = sphi 0, %s56
      %s58 = sphi 0, %s56
      %s59 = sphi 0, %s58
      %s73 = sphi 0, %s59
      %s77 = sphi 0, %s77
      %s79 = sphi 0, %s77
      %s80 = sphi 0, %s79
      %s94 = sphi 0, %s80
      %s98 = sphi 0, %s98
      %s100 = sphi 0, %s98
      %s101 = sphi 0, %s100
      %s115 = sphi 0, %s101
      %s119 = sphi 0, %s119
      %s121 = sphi 0, %s119
      %s122 = sphi 0, %s121
      %s136 = sphi 0, %s122
      %s140 = sphi 0, %s140
      %s142 = sphi 0, %s140
      %s143 = sphi 0, %s142
      %s157 = sphi 0, %s143
      %s161 = sphi 0, %s161
      %s163 = sphi 0, %s161
      %s164 = sphi 0, %s163
      %s178 = sphi 0, %s164
      %s182 = sphi 0, %s182
      %s184 = sphi 0, %s182
      %s185 = sphi 0, %s184
      %s199 = sphi 0, %s185
      %s203 = sphi 0, %s203
      %s205 = sphi 0, %s203
      %s206 = sphi 0, %s205
      %s220 = sphi 0, %s206
      %s224 = sphi 0, %s224
      %s226 = sphi 0, %s224
      %s227 = sphi 0, %s226
      %s241 = sphi 0, %s227
      %s245 = sphi 0, %s245
      %s247 = sphi 0, %s245
      %s248 = sphi 0, %s247
      %s262 = sphi 0, %s248
      %s266 = sphi 0, %s266
      %s268 = sphi 0, %s266
      %s269 = sphi 0, %s268
      %s283 = sphi 0, %s269
      %s287 = sphi 0, %s287
      %s289 = sphi 0, %s287
      %s290 = sphi 0, %s289
      %s304 = sphi 0, %s290
      %s310 = sphi 0, %s312
      %s313 = sphi 0, %s310
      %s314 = sphi 0, %s313
      %s330 = sphi 0, %s314
    $region4: #{_lambda_.1} parent=1 // loop_header_branch
      %25 = sbr.rel (%p23) target = $region8
    $region5: #{_lambda_.1} parent=1 // loop_body
      %s27 = ssub.s32 %s22, 1
      %s28 = ssub.s32 %s22, 2
      %s29 = sadd.s32 %s22, 1
      %s30 = ssub.s32 %s22, %s29
      %p31 = scmp.eq.s32.totalorder %s30, 0
      %s33 = sadd.s32 %s32, 1
      %s34 = scalar_select %p31, %s32, %s33
      %p37 = pneg %p31
      %p38 = scmp.eq.s32.totalorder %s22, 1
      %p39 = por %p37, %p38
      %p40 = scmp.ne.s32.totalorder %s32, %s35
      %p41 = scmp.eq.s32.totalorder %s22, 0
      %p42 = por %p40, %p41
      %p43 = scmp.ne.s32.totalorder %s32, %s35
      %p44 = scmp.eq.s32.totalorder %s27, 1
      %p45 = por %p43, %p44
      %p46 = scmp.ne.s32.totalorder %s35, %s36
      %p47 = scmp.eq.s32.totalorder %s27, 0
      %p48 = por %p46, %p47
      %p49 = scmp.ne.s32.totalorder %s35, %s36
      %p50 = scmp.eq.s32.totalorder %s28, 1
      %p51 = por %p49, %p50
      %p53 = scmp.ne.s32.totalorder %s36, %s52
      %p54 = scmp.eq.s32.totalorder %s28, 0
      %p55 = por %p53, %p54
      %s57 = sadd.s32 %s56, 1
      %p60 = scmp.eq.s32.totalorder %s22, 1
      %p61 = scmp.ne.s32.totalorder %s56, %s58
      %p62 = scmp.eq.s32.totalorder %s22, 0
      %p63 = por %p61, %p62
      %p64 = scmp.ne.s32.totalorder %s56, %s58
      %p65 = scmp.eq.s32.totalorder %s27, 1
      %p66 = por %p64, %p65
      %p67 = scmp.ne.s32.totalorder %s58, %s59
      %p68 = scmp.eq.s32.totalorder %s27, 0
      %p69 = por %p67, %p68
      %p70 = scmp.ne.s32.totalorder %s58, %s59
      %p71 = scmp.eq.s32.totalorder %s28, 1
      %p72 = por %p70, %p71
      %p74 = scmp.ne.s32.totalorder %s59, %s73
      %p75 = scmp.eq.s32.totalorder %s28, 0
      %p76 = por %p74, %p75
      %s78 = sadd.s32 %s77, 1
      %p81 = scmp.eq.s32.totalorder %s22, 1
      %p82 = scmp.ne.s32.totalorder %s77, %s79
      %p83 = scmp.eq.s32.totalorder %s22, 0
      %p84 = por %p82, %p83
      %p85 = scmp.ne.s32.totalorder %s77, %s79
      %p86 = scmp.eq.s32.totalorder %s27, 1
      %p87 = por %p85, %p86
      %p88 = scmp.ne.s32.totalorder %s79, %s80
      %p89 = scmp.eq.s32.totalorder %s27, 0
      %p90 = por %p88, %p89
      %p91 = scmp.ne.s32.totalorder %s79, %s80
      %p92 = scmp.eq.s32.totalorder %s28, 1
      %p93 = por %p91, %p92
      %p95 = scmp.ne.s32.totalorder %s80, %s94
      %p96 = scmp.eq.s32.totalorder %s28, 0
      %p97 = por %p95, %p96
      %s99 = sadd.s32 %s98, 1
      %p102 = scmp.eq.s32.totalorder %s22, 1
      %p103 = scmp.ne.s32.totalorder %s98, %s100
      %p104 = scmp.eq.s32.totalorder %s22, 0
      %p105 = por %p103, %p104
      %p106 = scmp.ne.s32.totalorder %s98, %s100
      %p107 = scmp.eq.s32.totalorder %s27, 1
      %p108 = por %p106, %p107
      %p109 = scmp.ne.s32.totalorder %s100, %s101
      %p110 = scmp.eq.s32.totalorder %s27, 0
      %p111 = por %p109, %p110
      %p112 = scmp.ne.s32.totalorder %s100, %s101
      %p113 = scmp.eq.s32.totalorder %s28, 1
      %p114 = por %p112, %p113
      %p116 = scmp.ne.s32.totalorder %s101, %s115
      %p117 = scmp.eq.s32.totalorder %s28, 0
      %p118 = por %p116, %p117
      %s120 = sadd.s32 %s119, 1
      %p123 = scmp.eq.s32.totalorder %s22, 1
      %p124 = scmp.ne.s32.totalorder %s119, %s121
      %p125 = scmp.eq.s32.totalorder %s22, 0
      %p126 = por %p124, %p125
      %p127 = scmp.ne.s32.totalorder %s119, %s121
      %p128 = scmp.eq.s32.totalorder %s27, 1
      %p129 = por %p127, %p128
      %p130 = scmp.ne.s32.totalorder %s121, %s122
      %p131 = scmp.eq.s32.totalorder %s27, 0
      %p132 = por %p130, %p131
      %p133 = scmp.ne.s32.totalorder %s121, %s122
      %p134 = scmp.eq.s32.totalorder %s28, 1
      %p135 = por %p133, %p134
      %p137 = scmp.ne.s32.totalorder %s122, %s136
      %p138 = scmp.eq.s32.totalorder %s28, 0
      %p139 = por %p137, %p138
      %s141 = sadd.s32 %s140, 1
      %p144 = scmp.eq.s32.totalorder %s22, 1
      %p145 = scmp.ne.s32.totalorder %s140, %s142
      %p146 = scmp.eq.s32.totalorder %s22, 0
      %p147 = por %p145, %p146
      %p148 = scmp.ne.s32.totalorder %s140, %s142
      %p149 = scmp.eq.s32.totalorder %s27, 1
      %p150 = por %p148, %p149
      %p151 = scmp.ne.s32.totalorder %s142, %s143
      %p152 = scmp.eq.s32.totalorder %s27, 0
      %p153 = por %p151, %p152
      %p154 = scmp.ne.s32.totalorder %s142, %s143
      %p155 = scmp.eq.s32.totalorder %s28, 1
      %p156 = por %p154, %p155
      %p158 = scmp.ne.s32.totalorder %s143, %s157
      %p159 = scmp.eq.s32.totalorder %s28, 0
      %p160 = por %p158, %p159
      %s162 = sadd.s32 %s161, 1
      %p165 = scmp.eq.s32.totalorder %s22, 1
      %p166 = scmp.ne.s32.totalorder %s161, %s163
      %p167 = scmp.eq.s32.totalorder %s22, 0
      %p168 = por %p166, %p167
      %p169 = scmp.ne.s32.totalorder %s161, %s163
      %p170 = scmp.eq.s32.totalorder %s27, 1
      %p171 = por %p169, %p170
      %p172 = scmp.ne.s32.totalorder %s163, %s164
      %p173 = scmp.eq.s32.totalorder %s27, 0
      %p174 = por %p172, %p173
      %p175 = scmp.ne.s32.totalorder %s163, %s164
      %p176 = scmp.eq.s32.totalorder %s28, 1
      %p177 = por %p175, %p176
      %p179 = scmp.ne.s32.totalorder %s164, %s178
      %p180 = scmp.eq.s32.totalorder %s28, 0
      %p181 = por %p179, %p180
      %s183 = sadd.s32 %s182, 1
      %p186 = scmp.eq.s32.totalorder %s22, 1
      %p187 = scmp.ne.s32.totalorder %s182, %s184
      %p188 = scmp.eq.s32.totalorder %s22, 0
      %p189 = por %p187, %p188
      %p190 = scmp.ne.s32.totalorder %s182, %s184
      %p191 = scmp.eq.s32.totalorder %s27, 1
      %p192 = por %p190, %p191
      %p193 = scmp.ne.s32.totalorder %s184, %s185
      %p194 = scmp.eq.s32.totalorder %s27, 0
      %p195 = por %p193, %p194
      %p196 = scmp.ne.s32.totalorder %s184, %s185
      %p197 = scmp.eq.s32.totalorder %s28, 1
      %p198 = por %p196, %p197
      %p200 = scmp.ne.s32.totalorder %s185, %s199
      %p201 = scmp.eq.s32.totalorder %s28, 0
      %p202 = por %p200, %p201
      %s204 = sadd.s32 %s203, 1
      %p207 = scmp.eq.s32.totalorder %s22, 1
      %p208 = scmp.ne.s32.totalorder %s203, %s205
      %p209 = scmp.eq.s32.totalorder %s22, 0
      %p210 = por %p208, %p209
      %p211 = scmp.ne.s32.totalorder %s203, %s205
      %p212 = scmp.eq.s32.totalorder %s27, 1
      %p213 = por %p211, %p212
      %p214 = scmp.ne.s32.totalorder %s205, %s206
      %p215 = scmp.eq.s32.totalorder %s27, 0
      %p216 = por %p214, %p215
      %p217 = scmp.ne.s32.totalorder %s205, %s206
      %p218 = scmp.eq.s32.totalorder %s28, 1
      %p219 = por %p217, %p218
      %p221 = scmp.ne.s32.totalorder %s206, %s220
      %p222 = scmp.eq.s32.totalorder %s28, 0
      %p223 = por %p221, %p222
      %s225 = sadd.s32 %s224, 1
      %p228 = scmp.eq.s32.totalorder %s22, 1
      %p229 = scmp.ne.s32.totalorder %s224, %s226
      %p230 = scmp.eq.s32.totalorder %s22, 0
      %p231 = por %p229, %p230
      %p232 = scmp.ne.s32.totalorder %s224, %s226
      %p233 = scmp.eq.s32.totalorder %s27, 1
      %p234 = por %p232, %p233
      %p235 = scmp.ne.s32.totalorder %s226, %s227
      %p236 = scmp.eq.s32.totalorder %s27, 0
      %p237 = por %p235, %p236
      %p238 = scmp.ne.s32.totalorder %s226, %s227
      %p239 = scmp.eq.s32.totalorder %s28, 1
      %p240 = por %p238, %p239
      %p242 = scmp.ne.s32.totalorder %s227, %s241
      %p243 = scmp.eq.s32.totalorder %s28, 0
      %p244 = por %p242, %p243
      %s246 = sadd.s32 %s245, 1
      %p249 = scmp.eq.s32.totalorder %s22, 1
      %p250 = scmp.ne.s32.totalorder %s245, %s247
      %p251 = scmp.eq.s32.totalorder %s22, 0
      %p252 = por %p250, %p251
      %p253 = scmp.ne.s32.totalorder %s245, %s247
      %p254 = scmp.eq.s32.totalorder %s27, 1
      %p255 = por %p253, %p254
      %p256 = scmp.ne.s32.totalorder %s247, %s248
      %p257 = scmp.eq.s32.totalorder %s27, 0
      %p258 = por %p256, %p257
      %p259 = scmp.ne.s32.totalorder %s247, %s248
      %p260 = scmp.eq.s32.totalorder %s28, 1
      %p261 = por %p259, %p260
      %p263 = scmp.ne.s32.totalorder %s248, %s262
      %p264 = scmp.eq.s32.totalorder %s28, 0
      %p265 = por %p263, %p264
      %s267 = sadd.s32 %s266, 1
      %p270 = scmp.eq.s32.totalorder %s22, 1
      %p271 = scmp.ne.s32.totalorder %s266, %s268
      %p272 = scmp.eq.s32.totalorder %s22, 0
      %p273 = por %p271, %p272
      %p274 = scmp.ne.s32.totalorder %s266, %s268
      %p275 = scmp.eq.s32.totalorder %s27, 1
      %p276 = por %p274, %p275
      %p277 = scmp.ne.s32.totalorder %s268, %s269
      %p278 = scmp.eq.s32.totalorder %s27, 0
      %p279 = por %p277, %p278
      %p280 = scmp.ne.s32.totalorder %s268, %s269
      %p281 = scmp.eq.s32.totalorder %s28, 1
      %p282 = por %p280, %p281
      %p284 = scmp.ne.s32.totalorder %s269, %s283
      %p285 = scmp.eq.s32.totalorder %s28, 0
      %p286 = por %p284, %p285
      %s288 = sadd.s32 %s287, 1
      %p291 = scmp.eq.s32.totalorder %s22, 1
      %p292 = scmp.ne.s32.totalorder %s287, %s289
      %p293 = scmp.eq.s32.totalorder %s22, 0
      %p294 = por %p292, %p293
      %p295 = scmp.ne.s32.totalorder %s287, %s289
      %p296 = scmp.eq.s32.totalorder %s27, 1
      %p297 = por %p295, %p296
      %p298 = scmp.ne.s32.totalorder %s289, %s290
      %p299 = scmp.eq.s32.totalorder %s27, 0
      %p300 = por %p298, %p299
      %p301 = scmp.ne.s32.totalorder %s289, %s290
      %p302 = scmp.eq.s32.totalorder %s28, 1
      %p303 = por %p301, %p302
      %p305 = scmp.ne.s32.totalorder %s290, %s304
      %p306 = scmp.eq.s32.totalorder %s28, 0
      %p307 = por %p305, %p306
      %s308 = ssub.s32 %s22, %s29
      %p309 = scmp.eq.s32.totalorder %s308, 0
      %s311 = sadd.s32 %s310, 1
      %s312 = scalar_select %p309, %s310, %s311
      %p315 = pneg %p309
      %p316 = scmp.eq.s32.totalorder %s22, 1
      %p317 = por %p315, %p316
      %p318 = scmp.ne.s32.totalorder %s310, %s313
      %p319 = scmp.eq.s32.totalorder %s22, 0
      %p320 = por %p318, %p319
      %p321 = scmp.ne.s32.totalorder %s310, %s313
      %p322 = scmp.eq.s32.totalorder %s27, 1
      %p323 = por %p321, %p322
      %p324 = scmp.ne.s32.totalorder %s313, %s314
      %p325 = scmp.eq.s32.totalorder %s27, 0
      %p326 = por %p324, %p325
      %p327 = scmp.ne.s32.totalorder %s313, %s314
      %p328 = scmp.eq.s32.totalorder %s28, 1
      %p329 = por %p327, %p328
      %p331 = scmp.ne.s32.totalorder %s314, %s330
      %p332 = scmp.eq.s32.totalorder %s28, 0
      %p333 = por %p331, %p332
      %p334 = scmp.le.s32.totalorder 1, %s22
      %p335 = scmp.lt.s32.totalorder %s22, 3
      %p336 = pnand %p334, %p335
      %p337 = pneg %p336
      // Predicated region
      $region9: #{_lambda_.1} parent=5 // pred_check
        _
      $region10: #{_lambda_.1} parent=5 // pred_check_branch
        %339 = sbr.rel (%p336) target = $region12
      $region11: #{_lambda_.1} parent=5 // pred_region
        %s340 = ssub.s32 %s22, 1
        // Predicated region
        $region13: #{_lambda_.1} parent=11 // pred_check
          %p341 = pneg %p69
        $region14: #{_lambda_.1} parent=11 // pred_check_branch
          %343 = sbr.rel (%p341) target = $region16
        $region15: #{_lambda_.1} parent=11 // pred_region
          _
        $region16: #{_lambda_.1} parent=11 // pred_fallthru
          _
        // Predicated region
        $region17: #{_lambda_.1} parent=11 // pred_check
          %p344 = pneg %p90
        $region18: #{_lambda_.1} parent=11 // pred_check_branch
          %346 = sbr.rel (%p344) target = $region20
        $region19: #{_lambda_.1} parent=11 // pred_region
          _
        $region20: #{_lambda_.1} parent=11 // pred_fallthru
          _
        // Predicated region
        $region21: #{_lambda_.1} parent=11 // pred_check
          %p347 = pneg %p111
        $region22: #{_lambda_.1} parent=11 // pred_check_branch
          %349 = sbr.rel (%p347) target = $region24
        $region23: #{_lambda_.1} parent=11 // pred_region
          _
        $region24: #{_lambda_.1} parent=11 // pred_fallthru
          _
        // Predicated region
        $region25: #{_lambda_.1} parent=11 // pred_check
          %p350 = pneg %p132
        $region26: #{_lambda_.1} parent=11 // pred_check_branch
          %352 = sbr.rel (%p350) target = $region28
        $region27: #{_lambda_.1} parent=11 // pred_region
          _
        $region28: #{_lambda_.1} parent=11 // pred_fallthru
          _
        // Predicated region
        $region29: #{_lambda_.1} parent=11 // pred_check
          %p353 = pneg %p153
        $region30: #{_lambda_.1} parent=11 // pred_check_branch
          %355 = sbr.rel (%p353) target = $region32
        $region31: #{_lambda_.1} parent=11 // pred_region
          _
        $region32: #{_lambda_.1} parent=11 // pred_fallthru
          _
        // Predicated region
        $region33: #{_lambda_.1} parent=11 // pred_check
          %p356 = pneg %p174
        $region34: #{_lambda_.1} parent=11 // pred_check_branch
          %358 = sbr.rel (%p356) target = $region36
        $region35: #{_lambda_.1} parent=11 // pred_region
          _
        $region36: #{_lambda_.1} parent=11 // pred_fallthru
          _
        // Predicated region
        $region37: #{_lambda_.1} parent=11 // pred_check
          %p359 = pneg %p195
        $region38: #{_lambda_.1} parent=11 // pred_check_branch
          %361 = sbr.rel (%p359) target = $region40
        $region39: #{_lambda_.1} parent=11 // pred_region
          _
        $region40: #{_lambda_.1} parent=11 // pred_fallthru
          _
        // Predicated region
        $region41: #{_lambda_.1} parent=11 // pred_check
          %p362 = pneg %p216
        $region42: #{_lambda_.1} parent=11 // pred_check_branch
          %364 = sbr.rel (%p362) target = $region44
        $region43: #{_lambda_.1} parent=11 // pred_region
          _
        $region44: #{_lambda_.1} parent=11 // pred_fallthru
          _
        // Predicated region
        $region45: #{_lambda_.1} parent=11 // pred_check
          %p365 = pneg %p237
        $region46: #{_lambda_.1} parent=11 // pred_check_branch
          %367 = sbr.rel (%p365) target = $region48
        $region47: #{_lambda_.1} parent=11 // pred_region
          _
        $region48: #{_lambda_.1} parent=11 // pred_fallthru
          _
        // Predicated region
        $region49: #{_lambda_.1} parent=11 // pred_check
          %p368 = pneg %p258
        $region50: #{_lambda_.1} parent=11 // pred_check_branch
          %370 = sbr.rel (%p368) target = $region52
        $region51: #{_lambda_.1} parent=11 // pred_region
          _
        $region52: #{_lambda_.1} parent=11 // pred_fallthru
          _
        // Predicated region
        $region53: #{_lambda_.1} parent=11 // pred_check
          %p371 = pneg %p279
        $region54: #{_lambda_.1} parent=11 // pred_check_branch
          %373 = sbr.rel (%p371) target = $region56
        $region55: #{_lambda_.1} parent=11 // pred_region
          _
        $region56: #{_lambda_.1} parent=11 // pred_fallthru
          _
        // Predicated region
        $region57: #{_lambda_.1} parent=11 // pred_check
          %p374 = pneg %p300
        $region58: #{_lambda_.1} parent=11 // pred_check_branch
          %376 = sbr.rel (%p374) target = $region60
        $region59: #{_lambda_.1} parent=11 // pred_region
          _
        $region60: #{_lambda_.1} parent=11 // pred_fallthru
          _
      $region12: #{_lambda_.1} parent=5 // pred_fallthru
        _
      %p377 = scmp.lt.s32.totalorder %s22, 2
      // Predicated region
      $region61: #{_lambda_.1} parent=5 // pred_check
        %p378 = pneg %p377
      $region62: #{_lambda_.1} parent=5 // pred_check_branch
        %380 = sbr.rel (%p378) target = $region64
      $region63: #{_lambda_.1} parent=5 // pred_region
        // Predicated region
        $region65: #{_lambda_.1} parent=63 // pred_check
          %p381 = pneg %p42
        $region66: #{_lambda_.1} parent=63 // pred_check_branch
          %383 = sbr.rel (%p381) target = $region68
        $region67: #{_lambda_.1} parent=63 // pred_region
          %p384 = scmp.lt.s32.totalorder %s22, 1
          %s385 = scalar_select %p384, %s22, 1
          %s386 = smul.addr %s385, 9
          %s387 = smul.addr %s386, 4
          %s388 = scalar_lea.vmem %s0, %s387
        $region68: #{_lambda_.1} parent=63 // pred_fallthru
          _
      $region64: #{_lambda_.1} parent=5 // pred_fallthru
        _
      %p389 = scmp.le.s32.totalorder 1, %s22
      %p390 = scmp.lt.s32.totalorder %s22, 3
      %p391 = pnand %p389, %p390
      %p392 = pneg %p391
      // Predicated region
      $region69: #{_lambda_.1} parent=5 // pred_check
        _
      $region70: #{_lambda_.1} parent=5 // pred_check_branch
        %394 = sbr.rel (%p391) target = $region72
      $region71: #{_lambda_.1} parent=5 // pred_region
        %s395 = ssub.s32 %s22, 1
        %p396 = scmp.lt.s32.totalorder %s27, 1
        %s397 = scalar_select %p396, %s27, 1
        %s398 = smul.addr %s397, 9
        %s399 = smul.addr %s398, 4
        %s400 = scalar_lea.vmem %s0, %s399
        %p401 = pneg %p48
        %p402 = pneg %p45
        %p403 = pneg %p69
        %p404 = pneg %p66
        %p405 = pneg %p90
        %p406 = pneg %p87
        %p407 = pneg %p111
        %p408 = pneg %p108
        %p409 = pneg %p132
        %p410 = pneg %p129
        %p411 = pneg %p153
        %p412 = pneg %p150
        %p413 = pneg %p174
        %p414 = pneg %p171
        %p415 = pneg %p195
        %p416 = pneg %p192
        %p417 = pneg %p216
        %p418 = pneg %p213
        %p419 = pneg %p237
        %p420 = pneg %p234
        %p421 = pneg %p258
        %p422 = pneg %p255
        %p423 = pneg %p279
        %p424 = pneg %p276
        %p425 = pneg %p300
        %p426 = pneg %p297
        %p427 = pneg %p326
        %p428 = pneg %p323
        %s429 = sand.u32 %s313, 1
        %s430 = scalar_lea.sflag [#allocation3], %s429
        %s431 = sand.u32 %s313, 1
        %s432 = scalar_lea.vmem [#allocation2], %s431
        %p433 = scmp.lt.s32.totalorder %s27, 1
        %s434 = scalar_select %p433, %s27, 1
        %s435 = smul.addr %s434, 9
        %s436 = smul.addr %s435, 4
        %s437 = scalar_lea.vmem %s0, %s436
        %v439 = vld [vmem:[%s4] sm:$0x1]
        %v440 = vld [vmem:[%s6] sm:$0x1]
        %v441 = vld [vmem:[%s8] sm:$0x1]
        %v442 = vld [vmem:[%s10] sm:$0xf]
        %v443 = vld [vmem:[%s12] sm:$0x1]
        %v444 = vld [vmem:[%s1] sm:$0xf]
        %v445 = vld [vmem:[%s1 + $0x4] sm:$0xf]
        %v446 = vld [vmem:[%s1 + $0x8] sm:$0xf]
        %v447 = vld [vmem:[%s1 + $0xc] sm:$0xf]
        %v448 = vld [vmem:[%s1 + $0x10] sm:$0xf]
        %v449 = vld [vmem:[%s1 + $0x14] sm:$0xf]
        %v450 = vld [vmem:[%s1 + $0x18] sm:$0xf]
        %v451 = vld [vmem:[%s1 + $0x1c] sm:$0xf]
        %v452 = vld [vmem:[%s1 + $0x20] sm:$0xf]
        %v453 = vld [vmem:[%s1 + $0x24] sm:$0xf]
        %v454 = vld [vmem:[%s1 + $0x28] sm:$0xf]
        %v455 = vld [vmem:[%s1 + $0x2c] sm:$0xf]
        %v456 = vld [vmem:[%s1 + $0x30] sm:$0xf]
        %v457 = vld [vmem:[%s1 + $0x34] sm:$0xf]
        %v458 = vld [vmem:[%s1 + $0x38] sm:$0xf]
        %v459 = vld [vmem:[%s1 + $0x3c] sm:$0xf]
        %v460 = vld [vmem:[%s1 + $0x40] sm:$0xf]
        %v461 = vld [vmem:[%s1 + $0x44] sm:$0xf]
        %v462 = vld [vmem:[%s1 + $0x48] sm:$0xf]
        %v463 = vld [vmem:[%s1 + $0x4c] sm:$0xf]
        %v464 = vld [vmem:[%s1 + $0x50] sm:$0xf]
        %v465 = vld [vmem:[%s1 + $0x54] sm:$0xf]
        %v466 = vld [vmem:[%s1 + $0x58] sm:$0xf]
        %v467 = vld [vmem:[%s1 + $0x5c] sm:$0xf]
        %v468 = vld [vmem:[%s1 + $0x60] sm:$0xf]
        %v469 = vld [vmem:[%s1 + $0x64] sm:$0xf]
        %v470 = vld [vmem:[%s1 + $0x68] sm:$0xf]
        %v471 = vld [vmem:[%s1 + $0x6c] sm:$0xf]
        %v472 = vld [vmem:[%s1 + $0x70] sm:$0xf]
        %v473 = vld [vmem:[%s1 + $0x74] sm:$0xf]
        %v474 = vld [vmem:[%s1 + $0x78] sm:$0xf]
        %v475 = vld [vmem:[%s1 + $0x7c] sm:$0xf]
        %v476 = vld [vmem:[%s2] sm:$0xf]
        %v477 = vld [vmem:[%s2 + $0x4] sm:$0xf]
        %v478 = vld [vmem:[%s2 + $0x8] sm:$0xf]
        %v479 = vld [vmem:[%s2 + $0xc] sm:$0xf]
        %v480 = vld [vmem:[%s2 + $0x10] sm:$0xf]
        %v481 = vld [vmem:[%s2 + $0x14] sm:$0xf]
        %v482 = vld [vmem:[%s2 + $0x18] sm:$0xf]
        %v483 = vld [vmem:[%s2 + $0x1c] sm:$0xf]
        %v484 = vld [vmem:[%s2 + $0x20] sm:$0xf]
        %v485 = vld [vmem:[%s2 + $0x24] sm:$0xf]
        %v486 = vld [vmem:[%s2 + $0x28] sm:$0xf]
        %v487 = vld [vmem:[%s2 + $0x2c] sm:$0xf]
        %v488 = vld [vmem:[%s2 + $0x30] sm:$0xf]
        %v489 = vld [vmem:[%s2 + $0x34] sm:$0xf]
        %v490 = vld [vmem:[%s2 + $0x38] sm:$0xf]
        %v491 = vld [vmem:[%s2 + $0x3c] sm:$0xf]
        %v492 = vld [vmem:[%s3] sm:$0xf]
        %v493 = vld [vmem:[%s3 + $0x4] sm:$0xf]
        %v494 = vld [vmem:[%s3 + $0x8] sm:$0xf]
        %v495 = vld [vmem:[%s3 + $0xc] sm:$0xf]
        %v496 = vld [vmem:[%s3 + $0x10] sm:$0xf]
        %v497 = vld [vmem:[%s3 + $0x14] sm:$0xf]
        %v498 = vld [vmem:[%s3 + $0x18] sm:$0xf]
        %v499 = vld [vmem:[%s3 + $0x1c] sm:$0xf]
        %v500 = vld [vmem:[%s3 + $0x20] sm:$0xf]
        %v501 = vld [vmem:[%s3 + $0x24] sm:$0xf]
        %v502 = vld [vmem:[%s3 + $0x28] sm:$0xf]
        %v503 = vld [vmem:[%s3 + $0x2c] sm:$0xf]
        %v504 = vld [vmem:[%s3 + $0x30] sm:$0xf]
        %v505 = vld [vmem:[%s3 + $0x34] sm:$0xf]
        %v506 = vld [vmem:[%s3 + $0x38] sm:$0xf]
        %v507 = vld [vmem:[%s3 + $0x3c] sm:$0xf]
        %v508 = vld [vmem:[%s5] sm:$0xf]
        %v509 = vld [vmem:[%s5 + $0x4] sm:$0xf]
        %v510 = vld [vmem:[%s5 + $0x8] sm:$0xf]
        %v511 = vld [vmem:[%s5 + $0xc] sm:$0xf]
        %v512 = vld [vmem:[%s5 + $0x10] sm:$0xf]
        %v513 = vld [vmem:[%s5 + $0x14] sm:$0xf]
        %v514 = vld [vmem:[%s5 + $0x18] sm:$0xf]
        %v515 = vld [vmem:[%s5 + $0x1c] sm:$0xf]
        %v516 = vld [vmem:[%s5 + $0x20] sm:$0xf]
        %v517 = vld [vmem:[%s5 + $0x24] sm:$0xf]
        %v518 = vld [vmem:[%s5 + $0x28] sm:$0xf]
        %v519 = vld [vmem:[%s5 + $0x2c] sm:$0xf]
        %v520 = vld [vmem:[%s5 + $0x30] sm:$0xf]
        %v521 = vld [vmem:[%s5 + $0x34] sm:$0xf]
        %v522 = vld [vmem:[%s5 + $0x38] sm:$0xf]
        %v523 = vld [vmem:[%s5 + $0x3c] sm:$0xf]
        %v524 = vld [vmem:[%s5 + $0x40] sm:$0xf]
        %v525 = vld [vmem:[%s5 + $0x44] sm:$0xf]
        %v526 = vld [vmem:[%s5 + $0x48] sm:$0xf]
        %v527 = vld [vmem:[%s5 + $0x4c] sm:$0xf]
        %v528 = vld [vmem:[%s5 + $0x50] sm:$0xf]
        %v529 = vld [vmem:[%s5 + $0x54] sm:$0xf]
        %v530 = vld [vmem:[%s5 + $0x58] sm:$0xf]
        %v531 = vld [vmem:[%s5 + $0x5c] sm:$0xf]
        %v532 = vld [vmem:[%s5 + $0x60] sm:$0xf]
        %v533 = vld [vmem:[%s5 + $0x64] sm:$0xf]
        %v534 = vld [vmem:[%s5 + $0x68] sm:$0xf]
        %v535 = vld [vmem:[%s5 + $0x6c] sm:$0xf]
        %v536 = vld [vmem:[%s5 + $0x70] sm:$0xf]
        %v537 = vld [vmem:[%s5 + $0x74] sm:$0xf]
        %v538 = vld [vmem:[%s5 + $0x78] sm:$0xf]
        %v539 = vld [vmem:[%s5 + $0x7c] sm:$0xf]
        %v540 = vld [vmem:[%s5 + $0x80] sm:$0xf]
        %v541 = vld [vmem:[%s5 + $0x84] sm:$0xf]
        %v542 = vld [vmem:[%s5 + $0x88] sm:$0xf]
        %v543 = vld [vmem:[%s5 + $0x8c] sm:$0xf]
        %v544 = vld [vmem:[%s5 + $0x90] sm:$0xf]
        %v545 = vld [vmem:[%s5 + $0x94] sm:$0xf]
        %v546 = vld [vmem:[%s5 + $0x98] sm:$0xf]
        %v547 = vld [vmem:[%s5 + $0x9c] sm:$0xf]
        %v548 = vld [vmem:[%s5 + $0xa0] sm:$0xf]
        %v549 = vld [vmem:[%s5 + $0xa4] sm:$0xf]
        %v550 = vld [vmem:[%s5 + $0xa8] sm:$0xf]
        %v551 = vld [vmem:[%s5 + $0xac] sm:$0xf]
        %v552 = vld [vmem:[%s5 + $0xb0] sm:$0xf]
        %v553 = vld [vmem:[%s5 + $0xb4] sm:$0xf]
        %v554 = vld [vmem:[%s5 + $0xb8] sm:$0xf]
        %v555 = vld [vmem:[%s5 + $0xbc] sm:$0xf]
        %v556 = vld [vmem:[%s5 + $0xc0] sm:$0xf]
        %v557 = vld [vmem:[%s5 + $0xc4] sm:$0xf]
        %v558 = vld [vmem:[%s5 + $0xc8] sm:$0xf]
        %v559 = vld [vmem:[%s5 + $0xcc] sm:$0xf]
        %v560 = vld [vmem:[%s5 + $0xd0] sm:$0xf]
        %v561 = vld [vmem:[%s5 + $0xd4] sm:$0xf]
        %v562 = vld [vmem:[%s5 + $0xd8] sm:$0xf]
        %v563 = vld [vmem:[%s5 + $0xdc] sm:$0xf]
        %v564 = vld [vmem:[%s5 + $0xe0] sm:$0xf]
        %v565 = vld [vmem:[%s5 + $0xe4] sm:$0xf]
        %v566 = vld [vmem:[%s5 + $0xe8] sm:$0xf]
        %v567 = vld [vmem:[%s5 + $0xec] sm:$0xf]
        %v568 = vld [vmem:[%s5 + $0xf0] sm:$0xf]
        %v569 = vld [vmem:[%s5 + $0xf4] sm:$0xf]
        %v570 = vld [vmem:[%s5 + $0xf8] sm:$0xf]
        %v571 = vld [vmem:[%s5 + $0xfc] sm:$0xf]
        %v572 = vld [vmem:[%s7] sm:$0xf]
        %v573 = vld [vmem:[%s7 + $0x4] sm:$0xf]
        %v574 = vld [vmem:[%s7 + $0x8] sm:$0xf]
        %v575 = vld [vmem:[%s7 + $0xc] sm:$0xf]
        %v576 = vld [vmem:[%s7 + $0x10] sm:$0xf]
        %v577 = vld [vmem:[%s7 + $0x14] sm:$0xf]
        %v578 = vld [vmem:[%s7 + $0x18] sm:$0xf]
        %v579 = vld [vmem:[%s7 + $0x1c] sm:$0xf]
        %v580 = vld [vmem:[%s7 + $0x20] sm:$0xf]
        %v581 = vld [vmem:[%s7 + $0x24] sm:$0xf]
        %v582 = vld [vmem:[%s7 + $0x28] sm:$0xf]
        %v583 = vld [vmem:[%s7 + $0x2c] sm:$0xf]
        %v584 = vld [vmem:[%s7 + $0x30] sm:$0xf]
        %v585 = vld [vmem:[%s7 + $0x34] sm:$0xf]
        %v586 = vld [vmem:[%s7 + $0x38] sm:$0xf]
        %v587 = vld [vmem:[%s7 + $0x3c] sm:$0xf]
        %v588 = vld [vmem:[%s7 + $0x40] sm:$0xf]
        %v589 = vld [vmem:[%s7 + $0x44] sm:$0xf]
        %v590 = vld [vmem:[%s7 + $0x48] sm:$0xf]
        %v591 = vld [vmem:[%s7 + $0x4c] sm:$0xf]
        %v592 = vld [vmem:[%s7 + $0x50] sm:$0xf]
        %v593 = vld [vmem:[%s7 + $0x54] sm:$0xf]
        %v594 = vld [vmem:[%s7 + $0x58] sm:$0xf]
        %v595 = vld [vmem:[%s7 + $0x5c] sm:$0xf]
        %v596 = vld [vmem:[%s7 + $0x60] sm:$0xf]
        %v597 = vld [vmem:[%s7 + $0x64] sm:$0xf]
        %v598 = vld [vmem:[%s7 + $0x68] sm:$0xf]
        %v599 = vld [vmem:[%s7 + $0x6c] sm:$0xf]
        %v600 = vld [vmem:[%s7 + $0x70] sm:$0xf]
        %v601 = vld [vmem:[%s7 + $0x74] sm:$0xf]
        %v602 = vld [vmem:[%s7 + $0x78] sm:$0xf]
        %v603 = vld [vmem:[%s7 + $0x7c] sm:$0xf]
        %v604 = vld [vmem:[%s7 + $0x80] sm:$0xf]
        %v605 = vld [vmem:[%s7 + $0x84] sm:$0xf]
        %v606 = vld [vmem:[%s7 + $0x88] sm:$0xf]
        %v607 = vld [vmem:[%s7 + $0x8c] sm:$0xf]
        %v608 = vld [vmem:[%s7 + $0x90] sm:$0xf]
        %v609 = vld [vmem:[%s7 + $0x94] sm:$0xf]
        %v610 = vld [vmem:[%s7 + $0x98] sm:$0xf]
        %v611 = vld [vmem:[%s7 + $0x9c] sm:$0xf]
        %v612 = vld [vmem:[%s7 + $0xa0] sm:$0xf]
        %v613 = vld [vmem:[%s7 + $0xa4] sm:$0xf]
        %v614 = vld [vmem:[%s7 + $0xa8] sm:$0xf]
        %v615 = vld [vmem:[%s7 + $0xac] sm:$0xf]
        %v616 = vld [vmem:[%s7 + $0xb0] sm:$0xf]
        %v617 = vld [vmem:[%s7 + $0xb4] sm:$0xf]
        %v618 = vld [vmem:[%s7 + $0xb8] sm:$0xf]
        %v619 = vld [vmem:[%s7 + $0xbc] sm:$0xf]
        %v620 = vld [vmem:[%s7 + $0xc0] sm:$0xf]
        %v621 = vld [vmem:[%s7 + $0xc4] sm:$0xf]
        %v622 = vld [vmem:[%s7 + $0xc8] sm:$0xf]
        %v623 = vld [vmem:[%s7 + $0xcc] sm:$0xf]
        %v624 = vld [vmem:[%s7 + $0xd0] sm:$0xf]
        %v625 = vld [vmem:[%s7 + $0xd4] sm:$0xf]
        %v626 = vld [vmem:[%s7 + $0xd8] sm:$0xf]
        %v627 = vld [vmem:[%s7 + $0xdc] sm:$0xf]
        %v628 = vld [vmem:[%s7 + $0xe0] sm:$0xf]
        %v629 = vld [vmem:[%s7 + $0xe4] sm:$0xf]
        %v630 = vld [vmem:[%s7 + $0xe8] sm:$0xf]
        %v631 = vld [vmem:[%s7 + $0xec] sm:$0xf]
        %v632 = vld [vmem:[%s7 + $0xf0] sm:$0xf]
        %v633 = vld [vmem:[%s7 + $0xf4] sm:$0xf]
        %v634 = vld [vmem:[%s7 + $0xf8] sm:$0xf]
        %v635 = vld [vmem:[%s7 + $0xfc] sm:$0xf]
        %v636 = vld [vmem:[%s7 + $0x100] sm:$0xf]
        %v637 = vld [vmem:[%s7 + $0x104] sm:$0xf]
        %v638 = vld [vmem:[%s7 + $0x108] sm:$0xf]
        %v639 = vld [vmem:[%s7 + $0x10c] sm:$0xf]
        %v640 = vld [vmem:[%s7 + $0x110] sm:$0xf]
        %v641 = vld [vmem:[%s7 + $0x114] sm:$0xf]
        %v642 = vld [vmem:[%s7 + $0x118] sm:$0xf]
        %v643 = vld [vmem:[%s7 + $0x11c] sm:$0xf]
        %v644 = vld [vmem:[%s437] sm:$0x7]
        %s645 = scalar_lea.vmem %s437, 4
        %v646 = vld [vmem:[%s645] sm:$0x7]
        %v648 = vunpack.c.l.b16 %v644
        %v649 = vpack.c.b16 %v648, %v648
        %v651 = vshrl.u32 %v649, 16
        %v653 = vshll.u32 %v649, 16
        %v655 = vrot.slane %v653, 1
        %v656 = vor.u32 %v651, %v655
        %v665 = vunpack.c.l.b16 %v492
        %v666 = vunpack.c.l.b16 %v493
        %v667 = vunpack.c.l.b16 %v494
        %v668 = vunpack.c.l.b16 %v495
        %v669 = vunpack.c.l.b16 %v496
        %v670 = vunpack.c.l.b16 %v497
        %v671 = vunpack.c.l.b16 %v498
        %v672 = vunpack.c.l.b16 %v499
        %v673 = vpack.c.b16 %v666, %v665
        %v674 = vpack.c.b16 %v668, %v667
        %v675 = vpack.c.b16 %v670, %v669
        %v676 = vpack.c.b16 %v672, %v671
        %vm681 = vcmask 523264
        %v683 = vsel %vm681, %v656, 0
        %685 = vmatprep.subr.bf16.mxu0 0
        %686 = vmatpush1.bf16.msra.mxu0 %v673
        %687 = vmatprep.subr.bf16.mxu0 0
        %688 = vmatpush1.bf16.msra.mxu0 %v674
        %689 = vmatprep.subr.bf16.mxu0 0
        %690 = vmatpush1.bf16.msra.mxu0 %v675
        %691 = vmatprep.subr.bf16.mxu0 0
        %692 = vmatpush1.bf16.msra.mxu0 %v676
        %693 = vmatprep.subr.bf16.mxu0 0
        %694 = vmatpush1.bf16.msra.mxu0 0
        %695 = vmatprep.subr.bf16.mxu0 0
        %696 = vmatpush1.bf16.msra.mxu0 0
        %697 = vmatprep.subr.bf16.mxu0 0
        %698 = vmatpush1.bf16.msra.mxu0 0
        %699 = vmatprep.subr.bf16.mxu0 0
        %700 = vmatpush1.bf16.msra.mxu0 0
        %701 = vmatprep.subr.bf16.mxu0 0
        %702 = vmatpush1.bf16.msra.mxu0 0
        %703 = vmatprep.subr.bf16.mxu0 0
        %704 = vmatpush1.bf16.msra.mxu0 0
        %705 = vmatprep.subr.bf16.mxu0 0
        %706 = vmatpush1.bf16.msra.mxu0 0
        %707 = vmatprep.subr.bf16.mxu0 0
        %708 = vmatpush1.bf16.msra.mxu0 0
        %709 = vmatprep.subr.bf16.mxu0 0
        %710 = vmatpush1.bf16.msra.mxu0 0
        %711 = vmatprep.subr.bf16.mxu0 0
        %712 = vmatpush1.bf16.msra.mxu0 0
        %713 = vmatprep.subr.bf16.mxu0 0
        %714 = vmatpush1.bf16.msra.mxu0 0
        %715 = vmatprep.subr.bf16.mxu0 0
        %716 = vmatpush1.bf16.msra.mxu0 0
        %717 = vmatprep.mubr.bf16.mxu0 0
        %718 = vmatmul.mubr.bf16.gmra.mrb[0].mxu0 %v683
        %v719 = vpop.f32.mrb[0].mxu0
        %v720 = vadd.f32 0.0, %v719
        %v721 = vpop.f32.mrb[0].mxu0
        %v722 = vpop.f32.mrb[0].mxu0
        %v723 = vpop.f32.mrb[0].mxu0
        %724 = vdwg.mxu0
        %725 = vrot.lane.b32.xlu0 %v649, 64
        %v726 = vpop.permute.xlu0 %725
        %v735 = vunpack.c.l.b16 %v476
        %v736 = vunpack.c.l.b16 %v477
        %v737 = vunpack.c.l.b16 %v478
        %v738 = vunpack.c.l.b16 %v479
        %v739 = vunpack.c.l.b16 %v480
        %v740 = vunpack.c.l.b16 %v481
        %v741 = vunpack.c.l.b16 %v482
        %v742 = vunpack.c.l.b16 %v483
        %v743 = vpack.c.b16 %v736, %v735
        %v744 = vpack.c.b16 %v738, %v737
        %v745 = vpack.c.b16 %v740, %v739
        %v746 = vpack.c.b16 %v742, %v741
        %v752 = vsel %vm681, %v726, 0
        %754 = vmatprep.subr.bf16.mxu0 0
        %755 = vmatpush1.bf16.msra.mxu0 %v743
        %756 = vmatprep.subr.bf16.mxu0 0
        %757 = vmatpush1.bf16.msra.mxu0 %v744
        %758 = vmatprep.subr.bf16.mxu0 0
        %759 = vmatpush1.bf16.msra.mxu0 %v745
        %760 = vmatprep.subr.bf16.mxu0 0
        %761 = vmatpush1.bf16.msra.mxu0 %v746
        %762 = vmatprep.subr.bf16.mxu0 0
        %763 = vmatpush1.bf16.msra.mxu0 0
        %764 = vmatprep.subr.bf16.mxu0 0
        %765 = vmatpush1.bf16.msra.mxu0 0
        %766 = vmatprep.subr.bf16.mxu0 0
        %767 = vmatpush1.bf16.msra.mxu0 0
        %768 = vmatprep.subr.bf16.mxu0 0
        %769 = vmatpush1.bf16.msra.mxu0 0
        %770 = vmatprep.subr.bf16.mxu0 0
        %771 = vmatpush1.bf16.msra.mxu0 0
        %772 = vmatprep.subr.bf16.mxu0 0
        %773 = vmatpush1.bf16.msra.mxu0 0
        %774 = vmatprep.subr.bf16.mxu0 0
        %775 = vmatpush1.bf16.msra.mxu0 0
        %776 = vmatprep.subr.bf16.mxu0 0
        %777 = vmatpush1.bf16.msra.mxu0 0
        %778 = vmatprep.subr.bf16.mxu0 0
        %779 = vmatpush1.bf16.msra.mxu0 0
        %780 = vmatprep.subr.bf16.mxu0 0
        %781 = vmatpush1.bf16.msra.mxu0 0
        %782 = vmatprep.subr.bf16.mxu0 0
        %783 = vmatpush1.bf16.msra.mxu0 0
        %784 = vmatprep.subr.bf16.mxu0 0
        %785 = vmatpush1.bf16.msra.mxu0 0
        %786 = vmatprep.mubr.bf16.mxu0 0
        %787 = vmatmul.mubr.bf16.gmra.mrb[0].mxu0 %v752
        %v788 = vpop.f32.mrb[0].mxu0
        %v789 = vadd.f32 %v720, %v788
        %v790 = vpop.f32.mrb[0].mxu0
        %v791 = vpop.f32.mrb[0].mxu0
        %v792 = vpop.f32.mrb[0].mxu0
        %793 = vdwg.mxu0
        %v810 = vunpack.c.l.b16 %v460
        %v811 = vunpack.c.l.b16 %v461
        %v812 = vunpack.c.l.b16 %v462
        %v813 = vunpack.c.l.b16 %v463
        %v814 = vunpack.c.l.b16 %v464
        %v815 = vunpack.c.l.b16 %v465
        %v816 = vunpack.c.l.b16 %v466
        %v817 = vunpack.c.l.b16 %v467
        %v818 = vunpack.c.l.b16 %v468
        %v819 = vunpack.c.l.b16 %v469
        %v820 = vunpack.c.l.b16 %v470
        %v821 = vunpack.c.l.b16 %v471
        %v822 = vunpack.c.l.b16 %v472
        %v823 = vunpack.c.l.b16 %v473
        %v824 = vunpack.c.l.b16 %v474
        %v825 = vunpack.c.l.b16 %v475
        %v826 = vpack.c.b16 %v811, %v810
        %v827 = vpack.c.b16 %v813, %v812
        %v828 = vpack.c.b16 %v815, %v814
        %v829 = vpack.c.b16 %v817, %v816
        %v830 = vpack.c.b16 %v819, %v818
        %v831 = vpack.c.b16 %v821, %v820
        %v832 = vpack.c.b16 %v823, %v822
        %v833 = vpack.c.b16 %v825, %v824
        %842 = vmatprep.subr.bf16.mxu0 0
        %843 = vmatpush1.bf16.msra.mxu0 %v826
        %844 = vmatprep.subr.bf16.mxu0 0
        %845 = vmatpush1.bf16.msra.mxu0 %v827
        %846 = vmatprep.subr.bf16.mxu0 0
        %847 = vmatpush1.bf16.msra.mxu0 %v828
        %848 = vmatprep.subr.bf16.mxu0 0
        %849 = vmatpush1.bf16.msra.mxu0 %v829
        %850 = vmatprep.subr.bf16.mxu0 0
        %851 = vmatpush1.bf16.msra.mxu0 %v830
        %852 = vmatprep.subr.bf16.mxu0 0
        %853 = vmatpush1.bf16.msra.mxu0 %v831
        %854 = vmatprep.subr.bf16.mxu0 0
        %855 = vmatpush1.bf16.msra.mxu0 %v832
        %856 = vmatprep.subr.bf16.mxu0 0
        %857 = vmatpush1.bf16.msra.mxu0 %v833
        %858 = vmatprep.subr.bf16.mxu0 0
        %859 = vmatpush1.bf16.msra.mxu0 0
        %860 = vmatprep.subr.bf16.mxu0 0
        %861 = vmatpush1.bf16.msra.mxu0 0
        %862 = vmatprep.subr.bf16.mxu0 0
        %863 = vmatpush1.bf16.msra.mxu0 0
        %864 = vmatprep.subr.bf16.mxu0 0
        %865 = vmatpush1.bf16.msra.mxu0 0
        %866 = vmatprep.subr.bf16.mxu0 0
        %867 = vmatpush1.bf16.msra.mxu0 0
        %868 = vmatprep.subr.bf16.mxu0 0
        %869 = vmatpush1.bf16.msra.mxu0 0
        %870 = vmatprep.subr.bf16.mxu0 0
        %871 = vmatpush1.bf16.msra.mxu0 0
        %872 = vmatprep.subr.bf16.mxu0 0
        %873 = vmatpush1.bf16.msra.mxu0 0
        %874 = vmatprep.mubr.bf16.mxu0 0
        %875 = vmatmul.mubr.bf16.gmra.mrb[0].mxu0 %v646
        %v876 = vpop.f32.mrb[0].mxu0
        %v877 = vadd.f32 0.0, %v876
        %v878 = vpop.f32.mrb[0].mxu0
        %v879 = vpop.f32.mrb[0].mxu0
        %v880 = vpop.f32.mrb[0].mxu0
        %881 = vdwg.mxu0
        %v898 = vunpack.c.l.b16 %v444
        %v899 = vunpack.c.l.b16 %v445
        %v900 = vunpack.c.l.b16 %v446
        %v901 = vunpack.c.l.b16 %v447
        %v902 = vunpack.c.l.b16 %v448
        %v903 = vunpack.c.l.b16 %v449
        %v904 = vunpack.c.l.b16 %v450
        %v905 = vunpack.c.l.b16 %v451
        %v906 = vunpack.c.l.b16 %v452
        %v907 = vunpack.c.l.b16 %v453
        %v908 = vunpack.c.l.b16 %v454
        %v909 = vunpack.c.l.b16 %v455
        %v910 = vunpack.c.l.b16 %v456
        %v911 = vunpack.c.l.b16 %v457
        %v912 = vunpack.c.l.b16 %v458
        %v913 = vunpack.c.l.b16 %v459
        %v914 = vpack.c.b16 %v899, %v898
        %v915 = vpack.c.b16 %v901, %v900
        %v916 = vpack.c.b16 %v903, %v902
        %v917 = vpack.c.b16 %v905, %v904
        %v918 = vpack.c.b16 %v907, %v906
        %v919 = vpack.c.b16 %v909, %v908
        %v920 = vpack.c.b16 %v911, %v910
        %v921 = vpack.c.b16 %v913, %v912
        %930 = vmatprep.subr.bf16.mxu0 0
        %931 = vmatpush1.bf16.msra.mxu0 %v914
        %932 = vmatprep.subr.bf16.mxu0 0
        %933 = vmatpush1.bf16.msra.mxu0 %v915
        %934 = vmatprep.subr.bf16.mxu0 0
        %935 = vmatpush1.bf16.msra.mxu0 %v916
        %936 = vmatprep.subr.bf16.mxu0 0
        %937 = vmatpush1.bf16.msra.mxu0 %v917
        %938 = vmatprep.subr.bf16.mxu0 0
        %939 = vmatpush1.bf16.msra.mxu0 %v918
        %940 = vmatprep.subr.bf16.mxu0 0
        %941 = vmatpush1.bf16.msra.mxu0 %v919
        %942 = vmatprep.subr.bf16.mxu0 0
        %943 = vmatpush1.bf16.msra.mxu0 %v920
        %944 = vmatprep.subr.bf16.mxu0 0
        %945 = vmatpush1.bf16.msra.mxu0 %v921
        %946 = vmatprep.subr.bf16.mxu0 0
        %947 = vmatpush1.bf16.msra.mxu0 0
        %948 = vmatprep.subr.bf16.mxu0 0
        %949 = vmatpush1.bf16.msra.mxu0 0
        %950 = vmatprep.subr.bf16.mxu0 0
        %951 = vmatpush1.bf16.msra.mxu0 0
        %952 = vmatprep.subr.bf16.mxu0 0
        %953 = vmatpush1.bf16.msra.mxu0 0
        %954 = vmatprep.subr.bf16.mxu0 0
        %955 = vmatpush1.bf16.msra.mxu0 0
        %956 = vmatprep.subr.bf16.mxu0 0
        %957 = vmatpush1.bf16.msra.mxu0 0
        %958 = vmatprep.subr.bf16.mxu0 0
        %959 = vmatpush1.bf16.msra.mxu0 0
        %960 = vmatprep.subr.bf16.mxu0 0
        %961 = vmatpush1.bf16.msra.mxu0 0
        %962 = vmatprep.mubr.bf16.mxu0 0
        %963 = vmatmul.mubr.bf16.gmra.mrb[0].mxu0 %v644
        %v964 = vpop.f32.mrb[0].mxu0
        %v965 = vadd.f32 %v877, %v964
        %v966 = vpop.f32.mrb[0].mxu0
        %v967 = vpop.f32.mrb[0].mxu0
        %v968 = vpop.f32.mrb[0].mxu0
        %969 = vdwg.mxu0
        %v971 = vunpack.c.l.b16 %v646
        %v972 = vpack.c.b16 %v971, %v971
        %973 = vrot.lane.b32.xlu0 %v972, 64
        %v974 = vpop.permute.xlu0 %973
        %v983 = vunpack.c.l.b16 %v484
        %v984 = vunpack.c.l.b16 %v485
        %v985 = vunpack.c.l.b16 %v486
        %v986 = vunpack.c.l.b16 %v487
        %v987 = vunpack.c.l.b16 %v488
        %v988 = vunpack.c.l.b16 %v489
        %v989 = vunpack.c.l.b16 %v490
        %v990 = vunpack.c.l.b16 %v491
        %v991 = vpack.c.b16 %v984, %v983
        %v992 = vpack.c.b16 %v986, %v985
        %v993 = vpack.c.b16 %v988, %v987
        %v994 = vpack.c.b16 %v990, %v989
        %v1000 = vsel %vm681, %v974, 0
        %1002 = vmatprep.subr.bf16.mxu0 0
        %1003 = vmatpush1.bf16.msra.mxu0 %v991
        %1004 = vmatprep.subr.bf16.mxu0 0
        %1005 = vmatpush1.bf16.msra.mxu0 %v992
        %1006 = vmatprep.subr.bf16.mxu0 0
        %1007 = vmatpush1.bf16.msra.mxu0 %v993
        %1008 = vmatprep.subr.bf16.mxu0 0
        %1009 = vmatpush1.bf16.msra.mxu0 %v994
        %1010 = vmatprep.subr.bf16.mxu0 0
        %1011 = vmatpush1.bf16.msra.mxu0 0
        %1012 = vmatprep.subr.bf16.mxu0 0
        %1013 = vmatpush1.bf16.msra.mxu0 0
        %1014 = vmatprep.subr.bf16.mxu0 0
        %1015 = vmatpush1.bf16.msra.mxu0 0
        %1016 = vmatprep.subr.bf16.mxu0 0
        %1017 = vmatpush1.bf16.msra.mxu0 0
        %1018 = vmatprep.subr.bf16.mxu0 0
        %1019 = vmatpush1.bf16.msra.mxu0 0
        %1020 = vmatprep.subr.bf16.mxu0 0
        %1021 = vmatpush1.bf16.msra.mxu0 0
        %1022 = vmatprep.subr.bf16.mxu0 0
        %1023 = vmatpush1.bf16.msra.mxu0 0
        %1024 = vmatprep.subr.bf16.mxu0 0
        %1025 = vmatpush1.bf16.msra.mxu0 0
        %1026 = vmatprep.subr.bf16.mxu0 0
        %1027 = vmatpush1.bf16.msra.mxu0 0
        %1028 = vmatprep.subr.bf16.mxu0 0
        %1029 = vmatpush1.bf16.msra.mxu0 0
        %1030 = vmatprep.subr.bf16.mxu0 0
        %1031 = vmatpush1.bf16.msra.mxu0 0
        %1032 = vmatprep.subr.bf16.mxu0 0
        %1033 = vmatpush1.bf16.msra.mxu0 0
        %1034 = vmatprep.mubr.bf16.mxu0 0
        %1035 = vmatmul.mubr.bf16.gmra.mrb[0].mxu0 %v1000
        %v1036 = vpop.f32.mrb[0].mxu0
        %v1037 = vadd.f32 0.0, %v1036
        %v1038 = vpop.f32.mrb[0].mxu0
        %v1039 = vpop.f32.mrb[0].mxu0
        %v1040 = vpop.f32.mrb[0].mxu0
        %1041 = vdwg.mxu0
        %v1042 = vadd.f32 %v789, %v1037
        %v1044 = vshrl.u32 %v972, 16
        %v1046 = vshll.u32 %v972, 16
        %v1048 = vrot.slane %v1046, 1
        %v1049 = vor.u32 %v1044, %v1048
        %v1058 = vunpack.c.l.b16 %v500
        %v1059 = vunpack.c.l.b16 %v501
        %v1060 = vunpack.c.l.b16 %v502
        %v1061 = vunpack.c.l.b16 %v503
        %v1062 = vunpack.c.l.b16 %v504
        %v1063 = vunpack.c.l.b16 %v505
        %v1064 = vunpack.c.l.b16 %v506
        %v1065 = vunpack.c.l.b16 %v507
        %v1066 = vpack.c.b16 %v1059, %v1058
        %v1067 = vpack.c.b16 %v1061, %v1060
        %v1068 = vpack.c.b16 %v1063, %v1062
        %v1069 = vpack.c.b16 %v1065, %v1064
        %v1075 = vsel %vm681, %v1049, 0
        %1077 = vmatprep.subr.bf16.mxu0 0
        %1078 = vmatpush1.bf16.msra.mxu0 %v1066
        %1079 = vmatprep.subr.bf16.mxu0 0
        %1080 = vmatpush1.bf16.msra.mxu0 %v1067
        %1081 = vmatprep.subr.bf16.mxu0 0
        %1082 = vmatpush1.bf16.msra.mxu0 %v1068
        %1083 = vmatprep.subr.bf16.mxu0 0
        %1084 = vmatpush1.bf16.msra.mxu0 %v1069
        %1085 = vmatprep.subr.bf16.mxu0 0
        %1086 = vmatpush1.bf16.msra.mxu0 0
        %1087 = vmatprep.subr.bf16.mxu0 0
        %1088 = vmatpush1.bf16.msra.mxu0 0
        %1089 = vmatprep.subr.bf16.mxu0 0
        %1090 = vmatpush1.bf16.msra.mxu0 0
        %1091 = vmatprep.subr.bf16.mxu0 0
        %1092 = vmatpush1.bf16.msra.mxu0 0
        %1093 = vmatprep.subr.bf16.mxu0 0
        %1094 = vmatpush1.bf16.msra.mxu0 0
        %1095 = vmatprep.subr.bf16.mxu0 0
        %1096 = vmatpush1.bf16.msra.mxu0 0
        %1097 = vmatprep.subr.bf16.mxu0 0
        %1098 = vmatpush1.bf16.msra.mxu0 0
        %1099 = vmatprep.subr.bf16.mxu0 0
        %1100 = vmatpush1.bf16.msra.mxu0 0
        %1101 = vmatprep.subr.bf16.mxu0 0
        %1102 = vmatpush1.bf16.msra.mxu0 0
        %1103 = vmatprep.subr.bf16.mxu0 0
        %1104 = vmatpush1.bf16.msra.mxu0 0
        %1105 = vmatprep.subr.bf16.mxu0 0
        %1106 = vmatpush1.bf16.msra.mxu0 0
        %1107 = vmatprep.subr.bf16.mxu0 0
        %1108 = vmatpush1.bf16.msra.mxu0 0
        %1109 = vmatprep.mubr.bf16.mxu0 0
        %1110 = vmatmul.mubr.bf16.gmra.mrb[0].mxu0 %v1075
        %v1111 = vpop.f32.mrb[0].mxu0
        %v1112 = vadd.f32 0.0, %v1111
        %v1113 = vpop.f32.mrb[0].mxu0
        %v1114 = vpop.f32.mrb[0].mxu0
        %v1115 = vpop.f32.mrb[0].mxu0
        %1116 = vdwg.mxu0
        %v1117 = vadd.f32 %v1042, %v1112
        %v1119 = vlaneseq
        %v1120 = vshrl.u32 %v1119, 7
        %v1121 = vsub.s32 0, %v1120
        %v1122 = vrot.slane %v439, %v1121
        %v1124 = vadd.f32 %v965, %v1122
        %v1125 = vmax.f32 %v1124, 0.0
        %v1126 = vpack.c.bf16 %v1125, %v1125
        %v1127 = vadd.f32 %v1117, %v1122
        %v1128 = vmax.f32 %v1127, 0.0
        %v1129 = vpack.c.bf16 %v1128, %v1128
        %s1130 = scalar_lea.vmem %s437, 8
        %v1131 = vld [vmem:[%s1130] sm:$0x7]
        %1132 = vmatprep.subr.bf16.mxu0 0
        %1133 = vmatpush1.bf16.msra.mxu0 %v673
        %1134 = vmatprep.subr.bf16.mxu0 0
        %1135 = vmatpush1.bf16.msra.mxu0 %v674
        %1136 = vmatprep.subr.bf16.mxu0 0
        %1137 = vmatpush1.bf16.msra.mxu0 %v675
        %1138 = vmatprep.subr.bf16.mxu0 0
        %1139 = vmatpush1.bf16.msra.mxu0 %v676
        %1140 = vmatprep.subr.bf16.mxu0 0
        %1141 = vmatpush1.bf16.msra.mxu0 0
        %1142 = vmatprep.subr.bf16.mxu0 0
        %1143 = vmatpush1.bf16.msra.mxu0 0
        %1144 = vmatprep.subr.bf16.mxu0 0
        %1145 = vmatpush1.bf16.msra.mxu0 0
        %1146 = vmatprep.subr.bf16.mxu0 0
        %1147 = vmatpush1.bf16.msra.mxu0 0
        %1148 = vmatprep.subr.bf16.mxu0 0
        %1149 = vmatpush1.bf16.msra.mxu0 0
        %1150 = vmatprep.subr.bf16.mxu0 0
        %1151 = vmatpush1.bf16.msra.mxu0 0
        %1152 = vmatprep.subr.bf16.mxu0 0
        %1153 = vmatpush1.bf16.msra.mxu0 0
        %1154 = vmatprep.subr.bf16.mxu0 0
        %1155 = vmatpush1.bf16.msra.mxu0 0
        %1156 = vmatprep.subr.bf16.mxu0 0
        %1157 = vmatpush1.bf16.msra.mxu0 0
        %1158 = vmatprep.subr.bf16.mxu0 0
        %1159 = vmatpush1.bf16.msra.mxu0 0
        %1160 = vmatprep.subr.bf16.mxu0 0
        %1161 = vmatpush1.bf16.msra.mxu0 0
        %1162 = vmatprep.subr.bf16.mxu0 0
        %1163 = vmatpush1.bf16.msra.mxu0 0
        %1164 = vmatprep.mubr.bf16.mxu0 0
        %1165 = vmatmul.mubr.bf16.gmra.mrb[0].mxu0 %v1075
        %v1166 = vpop.f32.mrb[0].mxu0
        %v1167 = vadd.f32 0.0, %v1166
        %v1168 = vpop.f32.mrb[0].mxu0
        %v1169 = vpop.f32.mrb[0].mxu0
        %v1170 = vpop.f32.mrb[0].mxu0
        %1171 = vdwg.mxu0
        %1172 = vmatprep.subr.bf16.mxu0 0
        %1173 = vmatpush1.bf16.msra.mxu0 %v743
        %1174 = vmatprep.subr.bf16.mxu0 0
        %1175 = vmatpush1.bf16.msra.mxu0 %v744
        %1176 = vmatprep.subr.bf16.mxu0 0
        %1177 = vmatpush1.bf16.msra.mxu0 %v745
        %1178 = vmatprep.subr.bf16.mxu0 0
        %1179 = vmatpush1.bf16.msra.mxu0 %v746
        %1180 = vmatprep.subr.bf16.mxu0 0
        %1181 = vmatpush1.bf16.msra.mxu0 0
        %1182 = vmatprep.subr.bf16.mxu0 0
        %1183 = vmatpush1.bf16.msra.mxu0 0
        %1184 = vmatprep.subr.bf16.mxu0 0
        %1185 = vmatpush1.bf16.msra.mxu0 0
        %1186 = vmatprep.subr.bf16.mxu0 0
        %1187 = vmatpush1.bf16.msra.mxu0 0
        %1188 = vmatprep.subr.bf16.mxu0 0
        %1189 = vmatpush1.bf16.msra.mxu0 0
        %1190 = vmatprep.subr.bf16.mxu0 0
        %1191 = vmatpush1.bf16.msra.mxu0 0
        %1192 = vmatprep.subr.bf16.mxu0 0
        %1193 = vmatpush1.bf16.msra.mxu0 0
        %1194 = vmatprep.subr.bf16.mxu0 0
        %1195 = vmatpush1.bf16.msra.mxu0 0
        %1196 = vmatprep.subr.bf16.mxu0 0
        %1197 = vmatpush1.bf16.msra.mxu0 0
        %1198 = vmatprep.subr.bf16.mxu0 0
        %1199 = vmatpush1.bf16.msra.mxu0 0
        %1200 = vmatprep.subr.bf16.mxu0 0
        %1201 = vmatpush1.bf16.msra.mxu0 0
        %1202 = vmatprep.subr.bf16.mxu0 0
        %1203 = vmatpush1.bf16.msra.mxu0 0
        %1204 = vmatprep.mubr.bf16.mxu0 0
        %1205 = vmatmul.mubr.bf16.gmra.mrb[0].mxu0 %v1000
        %v1206 = vpop.f32.mrb[0].mxu0
        %v1207 = vadd.f32 %v1167, %v1206
        %v1208 = vpop.f32.mrb[0].mxu0
        %v1209 = vpop.f32.mrb[0].mxu0
        %v1210 = vpop.f32.mrb[0].mxu0
        %1211 = vdwg.mxu0
        %1212 = vmatprep.subr.bf16.mxu0 0
        %1213 = vmatpush1.bf16.msra.mxu0 %v826
        %1214 = vmatprep.subr.bf16.mxu0 0
        %1215 = vmatpush1.bf16.msra.mxu0 %v827
        %1216 = vmatprep.subr.bf16.mxu0 0
        %1217 = vmatpush1.bf16.msra.mxu0 %v828
        %1218 = vmatprep.subr.bf16.mxu0 0
        %1219 = vmatpush1.bf16.msra.mxu0 %v829
        %1220 = vmatprep.subr.bf16.mxu0 0
        %1221 = vmatpush1.bf16.msra.mxu0 %v830
        %1222 = vmatprep.subr.bf16.mxu0 0
        %1223 = vmatpush1.bf16.msra.mxu0 %v831
        %1224 = vmatprep.subr.bf16.mxu0 0
        %1225 = vmatpush1.bf16.msra.mxu0 %v832
        %1226 = vmatprep.subr.bf16.mxu0 0
        %1227 = vmatpush1.bf16.msra.mxu0 %v833
        %1228 = vmatprep.subr.bf16.mxu0 0
        %1229 = vmatpush1.bf16.msra.mxu0 0
        %1230 = vmatprep.subr.bf16.mxu0 0
        %1231 = vmatpush1.bf16.msra.mxu0 0
        %1232 = vmatprep.subr.bf16.mxu0 0
        %1233 = vmatpush1.bf16.msra.mxu0 0
        %1234 = vmatprep.subr.bf16.mxu0 0
        %1235 = vmatpush1.bf16.msra.mxu0 0
        %1236 = vmatprep.subr.bf16.mxu0 0
        %1237 = vmatpush1.bf16.msra.mxu0 0
        %1238 = vmatprep.subr.bf16.mxu0 0
        %1239 = vmatpush1.bf16.msra.mxu0 0
        %1240 = vmatprep.subr.bf16.mxu0 0
        %1241 = vmatpush1.bf16.msra.mxu0 0
        %1242 = vmatprep.subr.bf16.mxu0 0
        %1243 = vmatpush1.bf16.msra.mxu0 0
        %1244 = vmatprep.mubr.bf16.mxu0 0
        %1245 = vmatmul.mubr.bf16.gmra.mrb[0].mxu0 %v1131
        %v1246 = vpop.f32.mrb[0].mxu0
        %v1247 = vadd.f32 0.0, %v1246
        %v1248 = vpop.f32.mrb[0].mxu0
        %v1249 = vpop.f32.mrb[0].mxu0
        %v1250 = vpop.f32.mrb[0].mxu0
        %1251 = vdwg.mxu0
        %1252 = vmatprep.subr.bf16.mxu0 0
        %1253 = vmatpush1.bf16.msra.mxu0 %v914
        %1254 = vmatprep.subr.bf16.mxu0 0
        %1255 = vmatpush1.bf16.msra.mxu0 %v915
        %1256 = vmatprep.subr.bf16.mxu0 0
        %1257 = vmatpush1.bf16.msra.mxu0 %v916
        %1258 = vmatprep.subr.bf16.mxu0 0
        %1259 = vmatpush1.bf16.msra.mxu0 %v917
        %1260 = vmatprep.subr.bf16.mxu0 0
        %1261 = vmatpush1.bf16.msra.mxu0 %v918
        %1262 = vmatprep.subr.bf16.mxu0 0
        %1263 = vmatpush1.bf16.msra.mxu0 %v919
        %1264 = vmatprep.subr.bf16.mxu0 0
        %1265 = vmatpush1.bf16.msra.mxu0 %v920
        %1266 = vmatprep.subr.bf16.mxu0 0
        %1267 = vmatpush1.bf16.msra.mxu0 %v921
        %1268 = vmatprep.subr.bf16.mxu0 0
        %1269 = vmatpush1.bf16.msra.mxu0 0
        %1270 = vmatprep.subr.bf16.mxu0 0
        %1271 = vmatpush1.bf16.msra.mxu0 0
        %1272 = vmatprep.subr.bf16.mxu0 0
        %1273 = vmatpush1.bf16.msra.mxu0 0
        %1274 = vmatprep.subr.bf16.mxu0 0
        %1275 = vmatpush1.bf16.msra.mxu0 0
        %1276 = vmatprep.subr.bf16.mxu0 0
        %1277 = vmatpush1.bf16.msra.mxu0 0
        %1278 = vmatprep.subr.bf16.mxu0 0
        %1279 = vmatpush1.bf16.msra.mxu0 0
        %1280 = vmatprep.subr.bf16.mxu0 0
        %1281 = vmatpush1.bf16.msra.mxu0 0
        %1282 = vmatprep.subr.bf16.mxu0 0
        %1283 = vmatpush1.bf16.msra.mxu0 0
        %1284 = vmatprep.mubr.bf16.mxu0 0
        %1285 = vmatmul.mubr.bf16.gmra.mrb[0].mxu0 %v646
        %v1286 = vpop.f32.mrb[0].mxu0
        %v1287 = vadd.f32 %v1247, %v1286
        %v1288 = vpop.f32.mrb[0].mxu0
        %v1289 = vpop.f32.mrb[0].mxu0
        %v1290 = vpop.f32.mrb[0].mxu0
        %1291 = vdwg.mxu0
        %v1293 = vunpack.c.l.b16 %v1131
        %v1294 = vpack.c.b16 %v1293, %v1293
        %1295 = vrot.lane.b32.xlu0 %v1294, 64
        %v1296 = vpop.permute.xlu0 %1295
        %v1298 = vsel %vm681, %v1296, 0
        %1300 = vmatprep.subr.bf16.mxu0 0
        %1301 = vmatpush1.bf16.msra.mxu0 %v991
        %1302 = vmatprep.subr.bf16.mxu0 0
        %1303 = vmatpush1.bf16.msra.mxu0 %v992
        %1304 = vmatprep.subr.bf16.mxu0 0
        %1305 = vmatpush1.bf16.msra.mxu0 %v993
        %1306 = vmatprep.subr.bf16.mxu0 0
        %1307 = vmatpush1.bf16.msra.mxu0 %v994
        %1308 = vmatprep.subr.bf16.mxu0 0
        %1309 = vmatpush1.bf16.msra.mxu0 0
        %1310 = vmatprep.subr.bf16.mxu0 0
        %1311 = vmatpush1.bf16.msra.mxu0 0
        %1312 = vmatprep.subr.bf16.mxu0 0
        %1313 = vmatpush1.bf16.msra.mxu0 0
        %1314 = vmatprep.subr.bf16.mxu0 0
        %1315 = vmatpush1.bf16.msra.mxu0 0
        %1316 = vmatprep.subr.bf16.mxu0 0
        %1317 = vmatpush1.bf16.msra.mxu0 0
        %1318 = vmatprep.subr.bf16.mxu0 0
        %1319 = vmatpush1.bf16.msra.mxu0 0
        %1320 = vmatprep.subr.bf16.mxu0 0
        %1321 = vmatpush1.bf16.msra.mxu0 0
        %1322 = vmatprep.subr.bf16.mxu0 0
        %1323 = vmatpush1.bf16.msra.mxu0 0
        %1324 = vmatprep.subr.bf16.mxu0 0
        %1325 = vmatpush1.bf16.msra.mxu0 0
        %1326 = vmatprep.subr.bf16.mxu0 0
        %1327 = vmatpush1.bf16.msra.mxu0 0
        %1328 = vmatprep.subr.bf16.mxu0 0
        %1329 = vmatpush1.bf16.msra.mxu0 0
        %1330 = vmatprep.subr.bf16.mxu0 0
        %1331 = vmatpush1.bf16.msra.mxu0 0
        %1332 = vmatprep.mubr.bf16.mxu0 0
        %1333 = vmatmul.mubr.bf16.gmra.mrb[0].mxu0 %v1298
        %v1334 = vpop.f32.mrb[0].mxu0
        %v1335 = vadd.f32 0.0, %v1334
        %v1336 = vpop.f32.mrb[0].mxu0
        %v1337 = vpop.f32.mrb[0].mxu0
        %v1338 = vpop.f32.mrb[0].mxu0
        %1339 = vdwg.mxu0
        %v1340 = vadd.f32 %v1207, %v1335
        %v1342 = vshrl.u32 %v1294, 16
        %v1344 = vshll.u32 %v1294, 16
        %v1346 = vrot.slane %v1344, 1
        %v1347 = vor.u32 %v1342, %v1346
        %v1349 = vsel %vm681, %v1347, 0
        %1351 = vmatprep.subr.bf16.mxu0 0
        %1352 = vmatpush1.bf16.msra.mxu0 %v1066
        %1353 = vmatprep.subr.bf16.mxu0 0
        %1354 = vmatpush1.bf16.msra.mxu0 %v1067
        %1355 = vmatprep.subr.bf16.mxu0 0
        %1356 = vmatpush1.bf16.msra.mxu0 %v1068
        %1357 = vmatprep.subr.bf16.mxu0 0
        %1358 = vmatpush1.bf16.msra.mxu0 %v1069
        %1359 = vmatprep.subr.bf16.mxu0 0
        %1360 = vmatpush1.bf16.msra.mxu0 0
        %1361 = vmatprep.subr.bf16.mxu0 0
        %1362 = vmatpush1.bf16.msra.mxu0 0
        %1363 = vmatprep.subr.bf16.mxu0 0
        %1364 = vmatpush1.bf16.msra.mxu0 0
        %1365 = vmatprep.subr.bf16.mxu0 0
        %1366 = vmatpush1.bf16.msra.mxu0 0
        %1367 = vmatprep.subr.bf16.mxu0 0
        %1368 = vmatpush1.bf16.msra.mxu0 0
        %1369 = vmatprep.subr.bf16.mxu0 0
        %1370 = vmatpush1.bf16.msra.mxu0 0
        %1371 = vmatprep.subr.bf16.mxu0 0
        %1372 = vmatpush1.bf16.msra.mxu0 0
        %1373 = vmatprep.subr.bf16.mxu0 0
        %1374 = vmatpush1.bf16.msra.mxu0 0
        %1375 = vmatprep.subr.bf16.mxu0 0
        %1376 = vmatpush1.bf16.msra.mxu0 0
        %1377 = vmatprep.subr.bf16.mxu0 0
        %1378 = vmatpush1.bf16.msra.mxu0 0
        %1379 = vmatprep.subr.bf16.mxu0 0
        %1380 = vmatpush1.bf16.msra.mxu0 0
        %1381 = vmatprep.subr.bf16.mxu0 0
        %1382 = vmatpush1.bf16.msra.mxu0 0
        %1383 = vmatprep.mubr.bf16.mxu0 0
        %1384 = vmatmul.mubr.bf16.gmra.mrb[0].mxu0 %v1349
        %v1385 = vpop.f32.mrb[0].mxu0
        %v1386 = vadd.f32 0.0, %v1385
        %v1387 = vpop.f32.mrb[0].mxu0
        %v1388 = vpop.f32.mrb[0].mxu0
        %v1389 = vpop.f32.mrb[0].mxu0
        %1390 = vdwg.mxu0
        %v1391 = vadd.f32 %v1340, %v1386
        %v1392 = vadd.f32 %v1287, %v1122
        %v1393 = vmax.f32 %v1392, 0.0
        %v1394 = vpack.c.bf16 %v1393, %v1393
        %v1395 = vadd.f32 %v1391, %v1122
        %v1396 = vmax.f32 %v1395, 0.0
        %v1397 = vpack.c.bf16 %v1396, %v1396
        %s1398 = scalar_lea.vmem %s437, 12
        %v1399 = vld [vmem:[%s1398] sm:$0x7]
        %1400 = vmatprep.subr.bf16.mxu0 0
        %1401 = vmatpush1.bf16.msra.mxu0 %v673
        %1402 = vmatprep.subr.bf16.mxu0 0
        %1403 = vmatpush1.bf16.msra.mxu0 %v674
        %1404 = vmatprep.subr.bf16.mxu0 0
        %1405 = vmatpush1.bf16.msra.mxu0 %v675
        %1406 = vmatprep.subr.bf16.mxu0 0
        %1407 = vmatpush1.bf16.msra.mxu0 %v676
        %1408 = vmatprep.subr.bf16.mxu0 0
        %1409 = vmatpush1.bf16.msra.mxu0 0
        %1410 = vmatprep.subr.bf16.mxu0 0
        %1411 = vmatpush1.bf16.msra.mxu0 0
        %1412 = vmatprep.subr.bf16.mxu0 0
        %1413 = vmatpush1.bf16.msra.mxu0 0
        %1414 = vmatprep.subr.bf16.mxu0 0
        %1415 = vmatpush1.bf16.msra.mxu0 0
        %1416 = vmatprep.subr.bf16.mxu0 0
        %1417 = vmatpush1.bf16.msra.mxu0 0
        %1418 = vmatprep.subr.bf16.mxu0 0
        %1419 = vmatpush1.bf16.msra.mxu0 0
        %1420 = vmatprep.subr.bf16.mxu0 0
        %1421 = vmatpush1.bf16.msra.mxu0 0
        %1422 = vmatprep.subr.bf16.mxu0 0
        %1423 = vmatpush1.bf16.msra.mxu0 0
        %1424 = vmatprep.subr.bf16.mxu0 0
        %1425 = vmatpush1.bf16.msra.mxu0 0
        %1426 = vmatprep.subr.bf16.mxu0 0
        %1427 = vmatpush1.bf16.msra.mxu0 0
        %1428 = vmatprep.subr.bf16.mxu0 0
        %1429 = vmatpush1.bf16.msra.mxu0 0
        %1430 = vmatprep.subr.bf16.mxu0 0
        %1431 = vmatpush1.bf16.msra.mxu0 0
        %1432 = vmatprep.mubr.bf16.mxu0 0
        %1433 = vmatmul.mubr.bf16.gmra.mrb[0].mxu0 %v1349
        %v1434 = vpop.f32.mrb[0].mxu0
        %v1435 = vadd.f32 0.0, %v1434
        %v1436 = vpop.f32.mrb[0].mxu0
        %v1437 = vpop.f32.mrb[0].mxu0
        %v1438 = vpop.f32.mrb[0].mxu0
        %1439 = vdwg.mxu0
        %1440 = vmatprep.subr.bf16.mxu0 0
        %1441 = vmatpush1.bf16.msra.mxu0 %v743
        %1442 = vmatprep.subr.bf16.mxu0 0
        %1443 = vmatpush1.bf16.msra.mxu0 %v744
        %1444 = vmatprep.subr.bf16.mxu0 0
        %1445 = vmatpush1.bf16.msra.mxu0 %v745
        %1446 = vmatprep.subr.bf16.mxu0 0
        %1447 = vmatpush1.bf16.msra.mxu0 %v746
        %1448 = vmatprep.subr.bf16.mxu0 0
        %1449 = vmatpush1.bf16.msra.mxu0 0
        %1450 = vmatprep.subr.bf16.mxu0 0
        %1451 = vmatpush1.bf16.msra.mxu0 0
        %1452 = vmatprep.subr.bf16.mxu0 0
        %1453 = vmatpush1.bf16.msra.mxu0 0
        %1454 = vmatprep.subr.bf16.mxu0 0
        %1455 = vmatpush1.bf16.msra.mxu0 0
        %1456 = vmatprep.subr.bf16.mxu0 0
        %1457 = vmatpush1.bf16.msra.mxu0 0
        %1458 = vmatprep.subr.bf16.mxu0 0
        %1459 = vmatpush1.bf16.msra.mxu0 0
        %1460 = vmatprep.subr.bf16.mxu0 0
        %1461 = vmatpush1.bf16.msra.mxu0 0
        %1462 = vmatprep.subr.bf16.mxu0 0
        %1463 = vmatpush1.bf16.msra.mxu0 0
        %1464 = vmatprep.subr.bf16.mxu0 0
        %1465 = vmatpush1.bf16.msra.mxu0 0
        %1466 = vmatprep.subr.bf16.mxu0 0
        %1467 = vmatpush1.bf16.msra.mxu0 0
        %1468 = vmatprep.subr.bf16.mxu0 0
        %1469 = vmatpush1.bf16.msra.mxu0 0
        %1470 = vmatprep.subr.bf16.mxu0 0
        %1471 = vmatpush1.bf16.msra.mxu0 0
        %1472 = vmatprep.mubr.bf16.mxu0 0
        %1473 = vmatmul.mubr.bf16.gmra.mrb[0].mxu0 %v1298
        %v1474 = vpop.f32.mrb[0].mxu0
        %v1475 = vadd.f32 %v1435, %v1474
        %v1476 = vpop.f32.mrb[0].mxu0
        %v1477 = vpop.f32.mrb[0].mxu0
        %v1478 = vpop.f32.mrb[0].mxu0
        %1479 = vdwg.mxu0
        %1480 = vmatprep.subr.bf16.mxu0 0
        %1481 = vmatpush1.bf16.msra.mxu0 %v826
        %1482 = vmatprep.subr.bf16.mxu0 0
        %1483 = vmatpush1.bf16.msra.mxu0 %v827
        %1484 = vmatprep.subr.bf16.mxu0 0
        %1485 = vmatpush1.bf16.msra.mxu0 %v828
        %1486 = vmatprep.subr.bf16.mxu0 0
        %1487 = vmatpush1.bf16.msra.mxu0 %v829
        %1488 = vmatprep.subr.bf16.mxu0 0
        %1489 = vmatpush1.bf16.msra.mxu0 %v830
        %1490 = vmatprep.subr.bf16.mxu0 0
        %1491 = vmatpush1.bf16.msra.mxu0 %v831
        %1492 = vmatprep.subr.bf16.mxu0 0
        %1493 = vmatpush1.bf16.msra.mxu0 %v832
        %1494 = vmatprep.subr.bf16.mxu0 0
        %1495 = vmatpush1.bf16.msra.mxu0 %v833
        %1496 = vmatprep.subr.bf16.mxu0 0
        %1497 = vmatpush1.bf16.msra.mxu0 0
        %1498 = vmatprep.subr.bf16.mxu0 0
        %1499 = vmatpush1.bf16.msra.mxu0 0
        %1500 = vmatprep.subr.bf16.mxu0 0
        %1501 = vmatpush1.bf16.msra.mxu0 0
        %1502 = vmatprep.subr.bf16.mxu0 0
        %1503 = vmatpush1.bf16.msra.mxu0 0
        %1504 = vmatprep.subr.bf16.mxu0 0
        %1505 = vmatpush1.bf16.msra.mxu0 0
        %1506 = vmatprep.subr.bf16.mxu0 0
        %1507 = vmatpush1.bf16.msra.mxu0 0
        %1508 = vmatprep.subr.bf16.mxu0 0
        %1509 = vmatpush1.bf16.msra.mxu0 0
        %1510 = vmatprep.subr.bf16.mxu0 0
        %1511 = vmatpush1.bf16.msra.mxu0 0
        %1512 = vmatprep.mubr.bf16.mxu0 0
        %1513 = vmatmul.mubr.bf16.gmra.mrb[0].mxu0 %v1399
        %v1514 = vpop.f32.mrb[0].mxu0
        %v1515 = vadd.f32 0.0, %v1514
        %v1516 = vpop.f32.mrb[0].mxu0
        %v1517 = vpop.f32.mrb[0].mxu0
        %v1518 = vpop.f32.mrb[0].mxu0
        %1519 = vdwg.mxu0
        %1520 = vmatprep.subr.bf16.mxu0 0
        %1521 = vmatpush1.bf16.msra.mxu0 %v914
        %1522 = vmatprep.subr.bf16.mxu0 0
        %1523 = vmatpush1.bf16.msra.mxu0 %v915
        %1524 = vmatprep.subr.bf16.mxu0 0
        %1525 = vmatpush1.bf16.msra.mxu0 %v916
        %1526 = vmatprep.subr.bf16.mxu0 0
        %1527 = vmatpush1.bf16.msra.mxu0 %v917
        %1528 = vmatprep.subr.bf16.mxu0 0
        %1529 = vmatpush1.bf16.msra.mxu0 %v918
        %1530 = vmatprep.subr.bf16.mxu0 0
        %1531 = vmatpush1.bf16.msra.mxu0 %v919
        %1532 = vmatprep.subr.bf16.mxu0 0
        %1533 = vmatpush1.bf16.msra.mxu0 %v920
        %1534 = vmatprep.subr.bf16.mxu0 0
        %1535 = vmatpush1.bf16.msra.mxu0 %v921
        %1536 = vmatprep.subr.bf16.mxu0 0
        %1537 = vmatpush1.bf16.msra.mxu0 0
        %1538 = vmatprep.subr.bf16.mxu0 0
        %1539 = vmatpush1.bf16.msra.mxu0 0
        %1540 = vmatprep.subr.bf16.mxu0 0
        %1541 = vmatpush1.bf16.msra.mxu0 0
        %1542 = vmatprep.subr.bf16.mxu0 0
        %1543 = vmatpush1.bf16.msra.mxu0 0
        %1544 = vmatprep.subr.bf16.mxu0 0
        %1545 = vmatpush1.bf16.msra.mxu0 0
        %1546 = vmatprep.subr.bf16.mxu0 0
        %1547 = vmatpush1.bf16.msra.mxu0 0
        %1548 = vmatprep.subr.bf16.mxu0 0
        %1549 = vmatpush1.bf16.msra.mxu0 0
        %1550 = vmatprep.subr.bf16.mxu0 0
        %1551 = vmatpush1.bf16.msra.mxu0 0
        %1552 = vmatprep.mubr.bf16.mxu0 0
        %1553 = vmatmul.mubr.bf16.gmra.mrb[0].mxu0 %v1131
        %v1554 = vpop.f32.mrb[0].mxu0
        %v1555 = vadd.f32 %v1515, %v1554
        %v1556 = vpop.f32.mrb[0].mxu0
        %v1557 = vpop.f32.mrb[0].mxu0
        %v1558 = vpop.f32.mrb[0].mxu0
        %1559 = vdwg.mxu0
        %v1561 = vunpack.c.l.b16 %v1399
        %v1562 = vpack.c.b16 %v1561, %v1561
        %1563 = vrot.lane.b32.xlu0 %v1562, 64
        %v1564 = vpop.permute.xlu0 %1563
        %v1566 = vsel %vm681, %v1564, 0
        %1568 = vmatprep.subr.bf16.mxu0 0
        %1569 = vmatpush1.bf16.msra.mxu0 %v991
        %1570 = vmatprep.subr.bf16.mxu0 0
        %1571 = vmatpush1.bf16.msra.mxu0 %v992
        %1572 = vmatprep.subr.bf16.mxu0 0
        %1573 = vmatpush1.bf16.msra.mxu0 %v993
        %1574 = vmatprep.subr.bf16.mxu0 0
        %1575 = vmatpush1.bf16.msra.mxu0 %v994
        %1576 = vmatprep.subr.bf16.mxu0 0
        %1577 = vmatpush1.bf16.msra.mxu0 0
        %1578 = vmatprep.subr.bf16.mxu0 0
        %1579 = vmatpush1.bf16.msra.mxu0 0
        %1580 = vmatprep.subr.bf16.mxu0 0
        %1581 = vmatpush1.bf16.msra.mxu0 0
        %1582 = vmatprep.subr.bf16.mxu0 0
        %1583 = vmatpush1.bf16.msra.mxu0 0
        %1584 = vmatprep.subr.bf16.mxu0 0
        %1585 = vmatpush1.bf16.msra.mxu0 0
        %1586 = vmatprep.subr.bf16.mxu0 0
        %1587 = vmatpush1.bf16.msra.mxu0 0
        %1588 = vmatprep.subr.bf16.mxu0 0
        %1589 = vmatpush1.bf16.msra.mxu0 0
        %1590 = vmatprep.subr.bf16.mxu0 0
        %1591 = vmatpush1.bf16.msra.mxu0 0
        %1592 = vmatprep.subr.bf16.mxu0 0
        %1593 = vmatpush1.bf16.msra.mxu0 0
        %1594 = vmatprep.subr.bf16.mxu0 0
        %1595 = vmatpush1.bf16.msra.mxu0 0
        %1596 = vmatprep.subr.bf16.mxu0 0
        %1597 = vmatpush1.bf16.msra.mxu0 0
        %1598 = vmatprep.subr.bf16.mxu0 0
        %1599 = vmatpush1.bf16.msra.mxu0 0
        %1600 = vmatprep.mubr.bf16.mxu0 0
        %1601 = vmatmul.mubr.bf16.gmra.mrb[0].mxu0 %v1566
        %v1602 = vpop.f32.mrb[0].mxu0
        %v1603 = vadd.f32 0.0, %v1602
        %v1604 = vpop.f32.mrb[0].mxu0
        %v1605 = vpop.f32.mrb[0].mxu0
        %v1606 = vpop.f32.mrb[0].mxu0
        %1607 = vdwg.mxu0
        %v1608 = vadd.f32 %v1475, %v1603
        %v1610 = vshrl.u32 %v1562, 16
        %v1612 = vshll.u32 %v1562, 16
        %v1614 = vrot.slane %v1612, 1
        %v1615 = vor.u32 %v1610, %v1614
        %v1617 = vsel %vm681, %v1615, 0
        %1619 = vmatprep.subr.bf16.mxu0 0
        %1620 = vmatpush1.bf16.msra.mxu0 %v1066
        %1621 = vmatprep.subr.bf16.mxu0 0
        %1622 = vmatpush1.bf16.msra.mxu0 %v1067
        %1623 = vmatprep.subr.bf16.mxu0 0
        %1624 = vmatpush1.bf16.msra.mxu0 %v1068
        %1625 = vmatprep.subr.bf16.mxu0 0
        %1626 = vmatpush1.bf16.msra.mxu0 %v1069
        %1627 = vmatprep.subr.bf16.mxu0 0
        %1628 = vmatpush1.bf16.msra.mxu0 0
        %1629 = vmatprep.subr.bf16.mxu0 0
        %1630 = vmatpush1.bf16.msra.mxu0 0
        %1631 = vmatprep.subr.bf16.mxu0 0
        %1632 = vmatpush1.bf16.msra.mxu0 0
        %1633 = vmatprep.subr.bf16.mxu0 0
        %1634 = vmatpush1.bf16.msra.mxu0 0
        %1635 = vmatprep.subr.bf16.mxu0 0
        %1636 = vmatpush1.bf16.msra.mxu0 0
        %1637 = vmatprep.subr.bf16.mxu0 0
        %1638 = vmatpush1.bf16.msra.mxu0 0
        %1639 = vmatprep.subr.bf16.mxu0 0
        %1640 = vmatpush1.bf16.msra.mxu0 0
        %1641 = vmatprep.subr.bf16.mxu0 0
        %1642 = vmatpush1.bf16.msra.mxu0 0
        %1643 = vmatprep.subr.bf16.mxu0 0
        %1644 = vmatpush1.bf16.msra.mxu0 0
        %1645 = vmatprep.subr.bf16.mxu0 0
        %1646 = vmatpush1.bf16.msra.mxu0 0
        %1647 = vmatprep.subr.bf16.mxu0 0
        %1648 = vmatpush1.bf16.msra.mxu0 0
        %1649 = vmatprep.subr.bf16.mxu0 0
        %1650 = vmatpush1.bf16.msra.mxu0 0
        %1651 = vmatprep.mubr.bf16.mxu0 0
        %1652 = vmatmul.mubr.bf16.gmra.mrb[0].mxu0 %v1617
        %v1653 = vpop.f32.mrb[0].mxu0
        %v1654 = vadd.f32 0.0, %v1653
        %v1655 = vpop.f32.mrb[0].mxu0
        %v1656 = vpop.f32.mrb[0].mxu0
        %v1657 = vpop.f32.mrb[0].mxu0
        %1658 = vdwg.mxu0
        %v1659 = vadd.f32 %v1608, %v1654
        %v1660 = vadd.f32 %v1555, %v1122
        %v1661 = vmax.f32 %v1660, 0.0
        %v1662 = vpack.c.bf16 %v1661, %v1661
        %v1663 = vadd.f32 %v1659, %v1122
        %v1664 = vmax.f32 %v1663, 0.0
        %v1665 = vpack.c.bf16 %v1664, %v1664
        %s1666 = scalar_lea.vmem %s437, 16
        %v1667 = vld [vmem:[%s1666] sm:$0x7]
        %1668 = vmatprep.subr.bf16.mxu0 0
        %1669 = vmatpush1.bf16.msra.mxu0 %v673
        %1670 = vmatprep.subr.bf16.mxu0 0
        %1671 = vmatpush1.bf16.msra.mxu0 %v674
        %1672 = vmatprep.subr.bf16.mxu0 0
        %1673 = vmatpush1.bf16.msra.mxu0 %v675
        %1674 = vmatprep.subr.bf16.mxu0 0
        %1675 = vmatpush1.bf16.msra.mxu0 %v676
        %1676 = vmatprep.subr.bf16.mxu0 0
        %1677 = vmatpush1.bf16.msra.mxu0 0
        %1678 = vmatprep.subr.bf16.mxu0 0
        %1679 = vmatpush1.bf16.msra.mxu0 0
        %1680 = vmatprep.subr.bf16.mxu0 0
        %1681 = vmatpush1.bf16.msra.mxu0 0
        %1682 = vmatprep.subr.bf16.mxu0 0
        %1683 = vmatpush1.bf16.msra.mxu0 0
        %1684 = vmatprep.subr.bf16.mxu0 0
        %1685 = vmatpush1.bf16.msra.mxu0 0
        %1686 = vmatprep.subr.bf16.mxu0 0
        %1687 = vmatpush1.bf16.msra.mxu0 0
        %1688 = vmatprep.subr.bf16.mxu0 0
        %1689 = vmatpush1.bf16.msra.mxu0 0
        %1690 = vmatprep.subr.bf16.mxu0 0
        %1691 = vmatpush1.bf16.msra.mxu0 0
        %1692 = vmatprep.subr.bf16.mxu0 0
        %1693 = vmatpush1.bf16.msra.mxu0 0
        %1694 = vmatprep.subr.bf16.mxu0 0
        %1695 = vmatpush1.bf16.msra.mxu0 0
        %1696 = vmatprep.subr.bf16.mxu0 0
        %1697 = vmatpush1.bf16.msra.mxu0 0
        %1698 = vmatprep.subr.bf16.mxu0 0
        %1699 = vmatpush1.bf16.msra.mxu0 0
        %1700 = vmatprep.mubr.bf16.mxu0 0
        %1701 = vmatmul.mubr.bf16.gmra.mrb[0].mxu0 %v1617
        %v1702 = vpop.f32.mrb[0].mxu0
        %v1703 = vadd.f32 0.0, %v1702
        %v1704 = vpop.f32.mrb[0].mxu0
        %v1705 = vpop.f32.mrb[0].mxu0
        %v1706 = vpop.f32.mrb[0].mxu0
        %1707 = vdwg.mxu0
        %1708 = vmatprep.subr.bf16.mxu0 0
        %1709 = vmatpush1.bf16.msra.mxu0 %v743
        %1710 = vmatprep.subr.bf16.mxu0 0
        %1711 = vmatpush1.bf16.msra.mxu0 %v744
        %1712 = vmatprep.subr.bf16.mxu0 0
        %1713 = vmatpush1.bf16.msra.mxu0 %v745
        %1714 = vmatprep.subr.bf16.mxu0 0
        %1715 = vmatpush1.bf16.msra.mxu0 %v746
        %1716 = vmatprep.subr.bf16.mxu0 0
        %1717 = vmatpush1.bf16.msra.mxu0 0
        %1718 = vmatprep.subr.bf16.mxu0 0
        %1719 = vmatpush1.bf16.msra.mxu0 0
        %1720 = vmatprep.subr.bf16.mxu0 0
        %1721 = vmatpush1.bf16.msra.mxu0 0
        %1722 = vmatprep.subr.bf16.mxu0 0
        %1723 = vmatpush1.bf16.msra.mxu0 0
        %1724 = vmatprep.subr.bf16.mxu0 0
        %1725 = vmatpush1.bf16.msra.mxu0 0
        %1726 = vmatprep.subr.bf16.mxu0 0
        %1727 = vmatpush1.bf16.msra.mxu0 0
        %1728 = vmatprep.subr.bf16.mxu0 0
        %1729 = vmatpush1.bf16.msra.mxu0 0
        %1730 = vmatprep.subr.bf16.mxu0 0
        %1731 = vmatpush1.bf16.msra.mxu0 0
        %1732 = vmatprep.subr.bf16.mxu0 0
        %1733 = vmatpush1.bf16.msra.mxu0 0
        %1734 = vmatprep.subr.bf16.mxu0 0
        %1735 = vmatpush1.bf16.msra.mxu0 0
        %1736 = vmatprep.subr.bf16.mxu0 0
        %1737 = vmatpush1.bf16.msra.mxu0 0
        %1738 = vmatprep.subr.bf16.mxu0 0
        %1739 = vmatpush1.bf16.msra.mxu0 0
        %1740 = vmatprep.mubr.bf16.mxu0 0
        %1741 = vmatmul.mubr.bf16.gmra.mrb[0].mxu0 %v1566
        %v1742 = vpop.f32.mrb[0].mxu0
        %v1743 = vadd.f32 %v1703, %v1742
        %v1744 = vpop.f32.mrb[0].mxu0
        %v1745 = vpop.f32.mrb[0].mxu0
        %v1746 = vpop.f32.mrb[0].mxu0
        %1747 = vdwg.mxu0
        %1748 = vmatprep.subr.bf16.mxu0 0
        %1749 = vmatpush1.bf16.msra.mxu0 %v826
        %1750 = vmatprep.subr.bf16.mxu0 0
        %1751 = vmatpush1.bf16.msra.mxu0 %v827
        %1752 = vmatprep.subr.bf16.mxu0 0
        %1753 = vmatpush1.bf16.msra.mxu0 %v828
        %1754 = vmatprep.subr.bf16.mxu0 0
        %1755 = vmatpush1.bf16.msra.mxu0 %v829
        %1756 = vmatprep.subr.bf16.mxu0 0
        %1757 = vmatpush1.bf16.msra.mxu0 %v830
        %1758 = vmatprep.subr.bf16.mxu0 0
        %1759 = vmatpush1.bf16.msra.mxu0 %v831
        %1760 = vmatprep.subr.bf16.mxu0 0
        %1761 = vmatpush1.bf16.msra.mxu0 %v832
        %1762 = vmatprep.subr.bf16.mxu0 0
        %1763 = vmatpush1.bf16.msra.mxu0 %v833
        %1764 = vmatprep.subr.bf16.mxu0 0
        %1765 = vmatpush1.bf16.msra.mxu0 0
        %1766 = vmatprep.subr.bf16.mxu0 0
        %1767 = vmatpush1.bf16.msra.mxu0 0
        %1768 = vmatprep.subr.bf16.mxu0 0
        %1769 = vmatpush1.bf16.msra.mxu0 0
        %1770 = vmatprep.subr.bf16.mxu0 0
        %1771 = vmatpush1.bf16.msra.mxu0 0
        %1772 = vmatprep.subr.bf16.mxu0 0
        %1773 = vmatpush1.bf16.msra.mxu0 0
        %1774 = vmatprep.subr.bf16.mxu0 0
        %1775 = vmatpush1.bf16.msra.mxu0 0
        %1776 = vmatprep.subr.bf16.mxu0 0
        %1777 = vmatpush1.bf16.msra.mxu0 0
        %1778 = vmatprep.subr.bf16.mxu0 0
        %1779 = vmatpush1.bf16.msra.mxu0 0
        %1780 = vmatprep.mubr.bf16.mxu0 0
        %1781 = vmatmul.mubr.bf16.gmra.mrb[0].mxu0 %v1667
        %v1782 = vpop.f32.mrb[0].mxu0
        %v1783 = vadd.f32 0.0, %v1782
        %v1784 = vpop.f32.mrb[0].mxu0
        %v1785 = vpop.f32.mrb[0].mxu0
        %v1786 = vpop.f32.mrb[0].mxu0
        %1787 = vdwg.mxu0
        %1788 = vmatprep.subr.bf16.mxu0 0
        %1789 = vmatpush1.bf16.msra.mxu0 %v914
        %1790 = vmatprep.subr.bf16.mxu0 0
        %1791 = vmatpush1.bf16.msra.mxu0 %v915
        %1792 = vmatprep.subr.bf16.mxu0 0
        %1793 = vmatpush1.bf16.msra.mxu0 %v916
        %1794 = vmatprep.subr.bf16.mxu0 0
        %1795 = vmatpush1.bf16.msra.mxu0 %v917
        %1796 = vmatprep.subr.bf16.mxu0 0
        %1797 = vmatpush1.bf16.msra.mxu0 %v918
        %1798 = vmatprep.subr.bf16.mxu0 0
        %1799 = vmatpush1.bf16.msra.mxu0 %v919
        %1800 = vmatprep.subr.bf16.mxu0 0
        %1801 = vmatpush1.bf16.msra.mxu0 %v920
        %1802 = vmatprep.subr.bf16.mxu0 0
        %1803 = vmatpush1.bf16.msra.mxu0 %v921
        %1804 = vmatprep.subr.bf16.mxu0 0
        %1805 = vmatpush1.bf16.msra.mxu0 0
        %1806 = vmatprep.subr.bf16.mxu0 0
        %1807 = vmatpush1.bf16.msra.mxu0 0
        %1808 = vmatprep.subr.bf16.mxu0 0
        %1809 = vmatpush1.bf16.msra.mxu0 0
        %1810 = vmatprep.subr.bf16.mxu0 0
        %1811 = vmatpush1.bf16.msra.mxu0 0
        %1812 = vmatprep.subr.bf16.mxu0 0
        %1813 = vmatpush1.bf16.msra.mxu0 0
        %1814 = vmatprep.subr.bf16.mxu0 0
        %1815 = vmatpush1.bf16.msra.mxu0 0
        %1816 = vmatprep.subr.bf16.mxu0 0
        %1817 = vmatpush1.bf16.msra.mxu0 0
        %1818 = vmatprep.subr.bf16.mxu0 0
        %1819 = vmatpush1.bf16.msra.mxu0 0
        %1820 = vmatprep.mubr.bf16.mxu0 0
        %1821 = vmatmul.mubr.bf16.gmra.mrb[0].mxu0 %v1399
        %v1822 = vpop.f32.mrb[0].mxu0
        %v1823 = vadd.f32 %v1783, %v1822
        %v1824 = vpop.f32.mrb[0].mxu0
        %v1825 = vpop.f32.mrb[0].mxu0
        %v1826 = vpop.f32.mrb[0].mxu0
        %1827 = vdwg.mxu0
        %v1829 = vunpack.c.l.b16 %v1667
        %v1830 = vpack.c.b16 %v1829, %v1829
        %1831 = vrot.lane.b32.xlu0 %v1830, 64
        %v1832 = vpop.permute.xlu0 %1831
        %v1834 = vsel %vm681, %v1832, 0
        %1836 = vmatprep.subr.bf16.mxu0 0
        %1837 = vmatpush1.bf16.msra.mxu0 %v991
        %1838 = vmatprep.subr.bf16.mxu0 0
        %1839 = vmatpush1.bf16.msra.mxu0 %v992
        %1840 = vmatprep.subr.bf16.mxu0 0
        %1841 = vmatpush1.bf16.msra.mxu0 %v993
        %1842 = vmatprep.subr.bf16.mxu0 0
        %1843 = vmatpush1.bf16.msra.mxu0 %v994
        %1844 = vmatprep.subr.bf16.mxu0 0
        %1845 = vmatpush1.bf16.msra.mxu0 0
        %1846 = vmatprep.subr.bf16.mxu0 0
        %1847 = vmatpush1.bf16.msra.mxu0 0
        %1848 = vmatprep.subr.bf16.mxu0 0
        %1849 = vmatpush1.bf16.msra.mxu0 0
        %1850 = vmatprep.subr.bf16.mxu0 0
        %1851 = vmatpush1.bf16.msra.mxu0 0
        %1852 = vmatprep.subr.bf16.mxu0 0
        %1853 = vmatpush1.bf16.msra.mxu0 0
        %1854 = vmatprep.subr.bf16.mxu0 0
        %1855 = vmatpush1.bf16.msra.mxu0 0
        %1856 = vmatprep.subr.bf16.mxu0 0
        %1857 = vmatpush1.bf16.msra.mxu0 0
        %1858 = vmatprep.subr.bf16.mxu0 0
        %1859 = vmatpush1.bf16.msra.mxu0 0
        %1860 = vmatprep.subr.bf16.mxu0 0
        %1861 = vmatpush1.bf16.msra.mxu0 0
        %1862 = vmatprep.subr.bf16.mxu0 0
        %1863 = vmatpush1.bf16.msra.mxu0 0
        %1864 = vmatprep.subr.bf16.mxu0 0
        %1865 = vmatpush1.bf16.msra.mxu0 0
        %1866 = vmatprep.subr.bf16.mxu0 0
        %1867 = vmatpush1.bf16.msra.mxu0 0
        %1868 = vmatprep.mubr.bf16.mxu0 0
        %1869 = vmatmul.mubr.bf16.gmra.mrb[0].mxu0 %v1834
        %v1870 = vpop.f32.mrb[0].mxu0
        %v1871 = vadd.f32 0.0, %v1870
        %v1872 = vpop.f32.mrb[0].mxu0
        %v1873 = vpop.f32.mrb[0].mxu0
        %v1874 = vpop.f32.mrb[0].mxu0
        %1875 = vdwg.mxu0
        %v1876 = vadd.f32 %v1743, %v1871
        %v1878 = vshrl.u32 %v1830, 16
        %v1880 = vshll.u32 %v1830, 16
        %v1882 = vrot.slane %v1880, 1
        %v1883 = vor.u32 %v1878, %v1882
        %v1885 = vsel %vm681, %v1883, 0
        %1887 = vmatprep.subr.bf16.mxu0 0
        %1888 = vmatpush1.bf16.msra.mxu0 %v1066
        %1889 = vmatprep.subr.bf16.mxu0 0
        %1890 = vmatpush1.bf16.msra.mxu0 %v1067
        %1891 = vmatprep.subr.bf16.mxu0 0
        %1892 = vmatpush1.bf16.msra.mxu0 %v1068
        %1893 = vmatprep.subr.bf16.mxu0 0
        %1894 = vmatpush1.bf16.msra.mxu0 %v1069
        %1895 = vmatprep.subr.bf16.mxu0 0
        %1896 = vmatpush1.bf16.msra.mxu0 0
        %1897 = vmatprep.subr.bf16.mxu0 0
        %1898 = vmatpush1.bf16.msra.mxu0 0
        %1899 = vmatprep.subr.bf16.mxu0 0
        %1900 = vmatpush1.bf16.msra.mxu0 0
        %1901 = vmatprep.subr.bf16.mxu0 0
        %1902 = vmatpush1.bf16.msra.mxu0 0
        %1903 = vmatprep.subr.bf16.mxu0 0
        %1904 = vmatpush1.bf16.msra.mxu0 0
        %1905 = vmatprep.subr.bf16.mxu0 0
        %1906 = vmatpush1.bf16.msra.mxu0 0
        %1907 = vmatprep.subr.bf16.mxu0 0
        %1908 = vmatpush1.bf16.msra.mxu0 0
        %1909 = vmatprep.subr.bf16.mxu0 0
        %1910 = vmatpush1.bf16.msra.mxu0 0
        %1911 = vmatprep.subr.bf16.mxu0 0
        %1912 = vmatpush1.bf16.msra.mxu0 0
        %1913 = vmatprep.subr.bf16.mxu0 0
        %1914 = vmatpush1.bf16.msra.mxu0 0
        %1915 = vmatprep.subr.bf16.mxu0 0
        %1916 = vmatpush1.bf16.msra.mxu0 0
        %1917 = vmatprep.subr.bf16.mxu0 0
        %1918 = vmatpush1.bf16.msra.mxu0 0
        %1919 = vmatprep.mubr.bf16.mxu0 0
        %1920 = vmatmul.mubr.bf16.gmra.mrb[0].mxu0 %v1885
        %v1921 = vpop.f32.mrb[0].mxu0
        %v1922 = vadd.f32 0.0, %v1921
        %v1923 = vpop.f32.mrb[0].mxu0
        %v1924 = vpop.f32.mrb[0].mxu0
        %v1925 = vpop.f32.mrb[0].mxu0
        %1926 = vdwg.mxu0
        %v1927 = vadd.f32 %v1876, %v1922
        %v1928 = vadd.f32 %v1823, %v1122
        %v1929 = vmax.f32 %v1928, 0.0
        %v1930 = vpack.c.bf16 %v1929, %v1929
        %v1931 = vadd.f32 %v1927, %v1122
        %v1932 = vmax.f32 %v1931, 0.0
        %v1933 = vpack.c.bf16 %v1932, %v1932
        %s1934 = scalar_lea.vmem %s437, 20
        %v1935 = vld [vmem:[%s1934] sm:$0x7]
        %1936 = vmatprep.subr.bf16.mxu0 0
        %1937 = vmatpush1.bf16.msra.mxu0 %v673
        %1938 = vmatprep.subr.bf16.mxu0 0
        %1939 = vmatpush1.bf16.msra.mxu0 %v674
        %1940 = vmatprep.subr.bf16.mxu0 0
        %1941 = vmatpush1.bf16.msra.mxu0 %v675
        %1942 = vmatprep.subr.bf16.mxu0 0
        %1943 = vmatpush1.bf16.msra.mxu0 %v676
        %1944 = vmatprep.subr.bf16.mxu0 0
        %1945 = vmatpush1.bf16.msra.mxu0 0
        %1946 = vmatprep.subr.bf16.mxu0 0
        %1947 = vmatpush1.bf16.msra.mxu0 0
        %1948 = vmatprep.subr.bf16.mxu0 0
        %1949 = vmatpush1.bf16.msra.mxu0 0
        %1950 = vmatprep.subr.bf16.mxu0 0
        %1951 = vmatpush1.bf16.msra.mxu0 0
        %1952 = vmatprep.subr.bf16.mxu0 0
        %1953 = vmatpush1.bf16.msra.mxu0 0
        %1954 = vmatprep.subr.bf16.mxu0 0
        %1955 = vmatpush1.bf16.msra.mxu0 0
        %1956 = vmatprep.subr.bf16.mxu0 0
        %1957 = vmatpush1.bf16.msra.mxu0 0
        %1958 = vmatprep.subr.bf16.mxu0 0
        %1959 = vmatpush1.bf16.msra.mxu0 0
        %1960 = vmatprep.subr.bf16.mxu0 0
        %1961 = vmatpush1.bf16.msra.mxu0 0
        %1962 = vmatprep.subr.bf16.mxu0 0
        %1963 = vmatpush1.bf16.msra.mxu0 0
        %1964 = vmatprep.subr.bf16.mxu0 0
        %1965 = vmatpush1.bf16.msra.mxu0 0
        %1966 = vmatprep.subr.bf16.mxu0 0
        %1967 = vmatpush1.bf16.msra.mxu0 0
        %1968 = vmatprep.mubr.bf16.mxu0 0
        %1969 = vmatmul.mubr.bf16.gmra.mrb[0].mxu0 %v1885
        %v1970 = vpop.f32.mrb[0].mxu0
        %v1971 = vadd.f32 0.0, %v1970
        %v1972 = vpop.f32.mrb[0].mxu0
        %v1973 = vpop.f32.mrb[0].mxu0
        %v1974 = vpop.f32.mrb[0].mxu0
        %1975 = vdwg.mxu0
        %1976 = vmatprep.subr.bf16.mxu0 0
        %1977 = vmatpush1.bf16.msra.mxu0 %v743
        %1978 = vmatprep.subr.bf16.mxu0 0
        %1979 = vmatpush1.bf16.msra.mxu0 %v744
        %1980 = vmatprep.subr.bf16.mxu0 0
        %1981 = vmatpush1.bf16.msra.mxu0 %v745
        %1982 = vmatprep.subr.bf16.mxu0 0
        %1983 = vmatpush1.bf16.msra.mxu0 %v746
        %1984 = vmatprep.subr.bf16.mxu0 0
        %1985 = vmatpush1.bf16.msra.mxu0 0
        %1986 = vmatprep.subr.bf16.mxu0 0
        %1987 = vmatpush1.bf16.msra.mxu0 0
        %1988 = vmatprep.subr.bf16.mxu0 0
        %1989 = vmatpush1.bf16.msra.mxu0 0
        %1990 = vmatprep.subr.bf16.mxu0 0
        %1991 = vmatpush1.bf16.msra.mxu0 0
        %1992 = vmatprep.subr.bf16.mxu0 0
        %1993 = vmatpush1.bf16.msra.mxu0 0
        %1994 = vmatprep.subr.bf16.mxu0 0
        %1995 = vmatpush1.bf16.msra.mxu0 0
        %1996 = vmatprep.subr.bf16.mxu0 0
        %1997 = vmatpush1.bf16.msra.mxu0 0
        %1998 = vmatprep.subr.bf16.mxu0 0
        %1999 = vmatpush1.bf16.msra.mxu0 0
        %2000 = vmatprep.subr.bf16.mxu0 0
        %2001 = vmatpush1.bf16.msra.mxu0 0
        %2002 = vmatprep.subr.bf16.mxu0 0
        %2003 = vmatpush1.bf16.msra.mxu0 0
        %2004 = vmatprep.subr.bf16.mxu0 0
        %2005 = vmatpush1.bf16.msra.mxu0 0
        %2006 = vmatprep.subr.bf16.mxu0 0
        %2007 = vmatpush1.bf16.msra.mxu0 0
        %2008 = vmatprep.mubr.bf16.mxu0 0
        %2009 = vmatmul.mubr.bf16.gmra.mrb[0].mxu0 %v1834
        %v2010 = vpop.f32.mrb[0].mxu0
        %v2011 = vadd.f32 %v1971, %v2010
        %v2012 = vpop.f32.mrb[0].mxu0
        %v2013 = vpop.f32.mrb[0].mxu0
        %v2014 = vpop.f32.mrb[0].mxu0
        %2015 = vdwg.mxu0
        %2016 = vmatprep.subr.bf16.mxu0 0
        %2017 = vmatpush1.bf16.msra.mxu0 %v826
        %2018 = vmatprep.subr.bf16.mxu0 0
        %2019 = vmatpush1.bf16.msra.mxu0 %v827
        %2020 = vmatprep.subr.bf16.mxu0 0
        %2021 = vmatpush1.bf16.msra.mxu0 %v828
        %2022 = vmatprep.subr.bf16.mxu0 0
        %2023 = vmatpush1.bf16.msra.mxu0 %v829
        %2024 = vmatprep.subr.bf16.mxu0 0
        %2025 = vmatpush1.bf16.msra.mxu0 %v830
        %2026 = vmatprep.subr.bf16.mxu0 0
        %2027 = vmatpush1.bf16.msra.mxu0 %v831
        %2028 = vmatprep.subr.bf16.mxu0 0
        %2029 = vmatpush1.bf16.msra.mxu0 %v832
        %2030 = vmatprep.subr.bf16.mxu0 0
        %2031 = vmatpush1.bf16.msra.mxu0 %v833
        %2032 = vmatprep.subr.bf16.mxu0 0
        %2033 = vmatpush1.bf16.msra.mxu0 0
        %2034 = vmatprep.subr.bf16.mxu0 0
        %2035 = vmatpush1.bf16.msra.mxu0 0
        %2036 = vmatprep.subr.bf16.mxu0 0
        %2037 = vmatpush1.bf16.msra.mxu0 0
        %2038 = vmatprep.subr.bf16.mxu0 0
        %2039 = vmatpush1.bf16.msra.mxu0 0
        %2040 = vmatprep.subr.bf16.mxu0 0
        %2041 = vmatpush1.bf16.msra.mxu0 0
        %2042 = vmatprep.subr.bf16.mxu0 0
        %2043 = vmatpush1.bf16.msra.mxu0 0
        %2044 = vmatprep.subr.bf16.mxu0 0
        %2045 = vmatpush1.bf16.msra.mxu0 0
        %2046 = vmatprep.subr.bf16.mxu0 0
        %2047 = vmatpush1.bf16.msra.mxu0 0
        %2048 = vmatprep.mubr.bf16.mxu0 0
        %2049 = vmatmul.mubr.bf16.gmra.mrb[0].mxu0 %v1935
        %v2050 = vpop.f32.mrb[0].mxu0
        %v2051 = vadd.f32 0.0, %v2050
        %v2052 = vpop.f32.mrb[0].mxu0
        %v2053 = vpop.f32.mrb[0].mxu0
        %v2054 = vpop.f32.mrb[0].mxu0
        %2055 = vdwg.mxu0
        %2056 = vmatprep.subr.bf16.mxu0 0
        %2057 = vmatpush1.bf16.msra.mxu0 %v914
        %2058 = vmatprep.subr.bf16.mxu0 0
        %2059 = vmatpush1.bf16.msra.mxu0 %v915
        %2060 = vmatprep.subr.bf16.mxu0 0
        %2061 = vmatpush1.bf16.msra.mxu0 %v916
        %2062 = vmatprep.subr.bf16.mxu0 0
        %2063 = vmatpush1.bf16.msra.mxu0 %v917
        %2064 = vmatprep.subr.bf16.mxu0 0
        %2065 = vmatpush1.bf16.msra.mxu0 %v918
        %2066 = vmatprep.subr.bf16.mxu0 0
        %2067 = vmatpush1.bf16.msra.mxu0 %v919
        %2068 = vmatprep.subr.bf16.mxu0 0
        %2069 = vmatpush1.bf16.msra.mxu0 %v920
        %2070 = vmatprep.subr.bf16.mxu0 0
        %2071 = vmatpush1.bf16.msra.mxu0 %v921
        %2072 = vmatprep.subr.bf16.mxu0 0
        %2073 = vmatpush1.bf16.msra.mxu0 0
        %2074 = vmatprep.subr.bf16.mxu0 0
        %2075 = vmatpush1.bf16.msra.mxu0 0
        %2076 = vmatprep.subr.bf16.mxu0 0
        %2077 = vmatpush1.bf16.msra.mxu0 0
        %2078 = vmatprep.subr.bf16.mxu0 0
        %2079 = vmatpush1.bf16.msra.mxu0 0
        %2080 = vmatprep.subr.bf16.mxu0 0
        %2081 = vmatpush1.bf16.msra.mxu0 0
        %2082 = vmatprep.subr.bf16.mxu0 0
        %2083 = vmatpush1.bf16.msra.mxu0 0
        %2084 = vmatprep.subr.bf16.mxu0 0
        %2085 = vmatpush1.bf16.msra.mxu0 0
        %2086 = vmatprep.subr.bf16.mxu0 0
        %2087 = vmatpush1.bf16.msra.mxu0 0
        %2088 = vmatprep.mubr.bf16.mxu0 0
        %2089 = vmatmul.mubr.bf16.gmra.mrb[0].mxu0 %v1667
        %v2090 = vpop.f32.mrb[0].mxu0
        %v2091 = vadd.f32 %v2051, %v2090
        %v2092 = vpop.f32.mrb[0].mxu0
        %v2093 = vpop.f32.mrb[0].mxu0
        %v2094 = vpop.f32.mrb[0].mxu0
        %2095 = vdwg.mxu0
        %v2097 = vunpack.c.l.b16 %v1935
        %v2098 = vpack.c.b16 %v2097, %v2097
        %2099 = vrot.lane.b32.xlu0 %v2098, 64
        %v2100 = vpop.permute.xlu0 %2099
        %v2102 = vsel %vm681, %v2100, 0
        %2104 = vmatprep.subr.bf16.mxu0 0
        %2105 = vmatpush1.bf16.msra.mxu0 %v991
        %2106 = vmatprep.subr.bf16.mxu0 0
        %2107 = vmatpush1.bf16.msra.mxu0 %v992
        %2108 = vmatprep.subr.bf16.mxu0 0
        %2109 = vmatpush1.bf16.msra.mxu0 %v993
        %2110 = vmatprep.subr.bf16.mxu0 0
        %2111 = vmatpush1.bf16.msra.mxu0 %v994
        %2112 = vmatprep.subr.bf16.mxu0 0
        %2113 = vmatpush1.bf16.msra.mxu0 0
        %2114 = vmatprep.subr.bf16.mxu0 0
        %2115 = vmatpush1.bf16.msra.mxu0 0
        %2116 = vmatprep.subr.bf16.mxu0 0
        %2117 = vmatpush1.bf16.msra.mxu0 0
        %2118 = vmatprep.subr.bf16.mxu0 0
        %2119 = vmatpush1.bf16.msra.mxu0 0
        %2120 = vmatprep.subr.bf16.mxu0 0
        %2121 = vmatpush1.bf16.msra.mxu0 0
        %2122 = vmatprep.subr.bf16.mxu0 0
        %2123 = vmatpush1.bf16.msra.mxu0 0
        %2124 = vmatprep.subr.bf16.mxu0 0
        %2125 = vmatpush1.bf16.msra.mxu0 0
        %2126 = vmatprep.subr.bf16.mxu0 0
        %2127 = vmatpush1.bf16.msra.mxu0 0
        %2128 = vmatprep.subr.bf16.mxu0 0
        %2129 = vmatpush1.bf16.msra.mxu0 0
        %2130 = vmatprep.subr.bf16.mxu0 0
        %2131 = vmatpush1.bf16.msra.mxu0 0
        %2132 = vmatprep.subr.bf16.mxu0 0
        %2133 = vmatpush1.bf16.msra.mxu0 0
        %2134 = vmatprep.subr.bf16.mxu0 0
        %2135 = vmatpush1.bf16.msra.mxu0 0
        %2136 = vmatprep.mubr.bf16.mxu0 0
        %2137 = vmatmul.mubr.bf16.gmra.mrb[0].mxu0 %v2102
        %v2138 = vpop.f32.mrb[0].mxu0
        %v2139 = vadd.f32 0.0, %v2138
        %v2140 = vpop.f32.mrb[0].mxu0
        %v2141 = vpop.f32.mrb[0].mxu0
        %v2142 = vpop.f32.mrb[0].mxu0
        %2143 = vdwg.mxu0
        %v2144 = vadd.f32 %v2011, %v2139
        %v2146 = vshrl.u32 %v2098, 16
        %v2148 = vshll.u32 %v2098, 16
        %v2150 = vrot.slane %v2148, 1
        %v2151 = vor.u32 %v2146, %v2150
        %v2153 = vsel %vm681, %v2151, 0
        %2155 = vmatprep.subr.bf16.mxu0 0
        %2156 = vmatpush1.bf16.msra.mxu0 %v1066
        %2157 = vmatprep.subr.bf16.mxu0 0
        %2158 = vmatpush1.bf16.msra.mxu0 %v1067
        %2159 = vmatprep.subr.bf16.mxu0 0
        %2160 = vmatpush1.bf16.msra.mxu0 %v1068
        %2161 = vmatprep.subr.bf16.mxu0 0
        %2162 = vmatpush1.bf16.msra.mxu0 %v1069
        %2163 = vmatprep.subr.bf16.mxu0 0
        %2164 = vmatpush1.bf16.msra.mxu0 0
        %2165 = vmatprep.subr.bf16.mxu0 0
        %2166 = vmatpush1.bf16.msra.mxu0 0
        %2167 = vmatprep.subr.bf16.mxu0 0
        %2168 = vmatpush1.bf16.msra.mxu0 0
        %2169 = vmatprep.subr.bf16.mxu0 0
        %2170 = vmatpush1.bf16.msra.mxu0 0
        %2171 = vmatprep.subr.bf16.mxu0 0
        %2172 = vmatpush1.bf16.msra.mxu0 0
        %2173 = vmatprep.subr.bf16.mxu0 0
        %2174 = vmatpush1.bf16.msra.mxu0 0
        %2175 = vmatprep.subr.bf16.mxu0 0
        %2176 = vmatpush1.bf16.msra.mxu0 0
        %2177 = vmatprep.subr.bf16.mxu0 0
        %2178 = vmatpush1.bf16.msra.mxu0 0
        %2179 = vmatprep.subr.bf16.mxu0 0
        %2180 = vmatpush1.bf16.msra.mxu0 0
        %2181 = vmatprep.subr.bf16.mxu0 0
        %2182 = vmatpush1.bf16.msra.mxu0 0
        %2183 = vmatprep.subr.bf16.mxu0 0
        %2184 = vmatpush1.bf16.msra.mxu0 0
        %2185 = vmatprep.subr.bf16.mxu0 0
        %2186 = vmatpush1.bf16.msra.mxu0 0
        %2187 = vmatprep.mubr.bf16.mxu0 0
        %2188 = vmatmul.mubr.bf16.gmra.mrb[0].mxu0 %v2153
        %v2189 = vpop.f32.mrb[0].mxu0
        %v2190 = vadd.f32 0.0, %v2189
        %v2191 = vpop.f32.mrb[0].mxu0
        %v2192 = vpop.f32.mrb[0].mxu0
        %v2193 = vpop.f32.mrb[0].mxu0
        %2194 = vdwg.mxu0
        %v2195 = vadd.f32 %v2144, %v2190
        %v2196 = vadd.f32 %v2091, %v1122
        %v2197 = vmax.f32 %v2196, 0.0
        %v2198 = vpack.c.bf16 %v2197, %v2197
        %v2199 = vadd.f32 %v2195, %v1122
        %v2200 = vmax.f32 %v2199, 0.0
        %v2201 = vpack.c.bf16 %v2200, %v2200
        %s2202 = scalar_lea.vmem %s437, 24
        %v2203 = vld [vmem:[%s2202] sm:$0x7]
        %2204 = vmatprep.subr.bf16.mxu0 0
        %2205 = vmatpush1.bf16.msra.mxu0 %v673
        %2206 = vmatprep.subr.bf16.mxu0 0
        %2207 = vmatpush1.bf16.msra.mxu0 %v674
        %2208 = vmatprep.subr.bf16.mxu0 0
        %2209 = vmatpush1.bf16.msra.mxu0 %v675
        %2210 = vmatprep.subr.bf16.mxu0 0
        %2211 = vmatpush1.bf16.msra.mxu0 %v676
        %2212 = vmatprep.subr.bf16.mxu0 0
        %2213 = vmatpush1.bf16.msra.mxu0 0
        %2214 = vmatprep.subr.bf16.mxu0 0
        %2215 = vmatpush1.bf16.msra.mxu0 0
        %2216 = vmatprep.subr.bf16.mxu0 0
        %2217 = vmatpush1.bf16.msra.mxu0 0
        %2218 = vmatprep.subr.bf16.mxu0 0
        %2219 = vmatpush1.bf16.msra.mxu0 0
        %2220 = vmatprep.subr.bf16.mxu0 0
        %2221 = vmatpush1.bf16.msra.mxu0 0
        %2222 = vmatprep.subr.bf16.mxu0 0
        %2223 = vmatpush1.bf16.msra.mxu0 0
        %2224 = vmatprep.subr.bf16.mxu0 0
        %2225 = vmatpush1.bf16.msra.mxu0 0
        %2226 = vmatprep.subr.bf16.mxu0 0
        %2227 = vmatpush1.bf16.msra.mxu0 0
        %2228 = vmatprep.subr.bf16.mxu0 0
        %2229 = vmatpush1.bf16.msra.mxu0 0
        %2230 = vmatprep.subr.bf16.mxu0 0
        %2231 = vmatpush1.bf16.msra.mxu0 0
        %2232 = vmatprep.subr.bf16.mxu0 0
        %2233 = vmatpush1.bf16.msra.mxu0 0
        %2234 = vmatprep.subr.bf16.mxu0 0
        %2235 = vmatpush1.bf16.msra.mxu0 0
        %2236 = vmatprep.mubr.bf16.mxu0 0
        %2237 = vmatmul.mubr.bf16.gmra.mrb[0].mxu0 %v2153
        %v2238 = vpop.f32.mrb[0].mxu0
        %v2239 = vadd.f32 0.0, %v2238
        %v2240 = vpop.f32.mrb[0].mxu0
        %v2241 = vpop.f32.mrb[0].mxu0
        %v2242 = vpop.f32.mrb[0].mxu0
        %2243 = vdwg.mxu0
        %2244 = vmatprep.subr.bf16.mxu0 0
        %2245 = vmatpush1.bf16.msra.mxu0 %v743
        %2246 = vmatprep.subr.bf16.mxu0 0
        %2247 = vmatpush1.bf16.msra.mxu0 %v744
        %2248 = vmatprep.subr.bf16.mxu0 0
        %2249 = vmatpush1.bf16.msra.mxu0 %v745
        %2250 = vmatprep.subr.bf16.mxu0 0
        %2251 = vmatpush1.bf16.msra.mxu0 %v746
        %2252 = vmatprep.subr.bf16.mxu0 0
        %2253 = vmatpush1.bf16.msra.mxu0 0
        %2254 = vmatprep.subr.bf16.mxu0 0
        %2255 = vmatpush1.bf16.msra.mxu0 0
        %2256 = vmatprep.subr.bf16.mxu0 0
        %2257 = vmatpush1.bf16.msra.mxu0 0
        %2258 = vmatprep.subr.bf16.mxu0 0
        %2259 = vmatpush1.bf16.msra.mxu0 0
        %2260 = vmatprep.subr.bf16.mxu0 0
        %2261 = vmatpush1.bf16.msra.mxu0 0
        %2262 = vmatprep.subr.bf16.mxu0 0
        %2263 = vmatpush1.bf16.msra.mxu0 0
        %2264 = vmatprep.subr.bf16.mxu0 0
        %2265 = vmatpush1.bf16.msra.mxu0 0
        %2266 = vmatprep.subr.bf16.mxu0 0
        %2267 = vmatpush1.bf16.msra.mxu0 0
        %2268 = vmatprep.subr.bf16.mxu0 0
        %2269 = vmatpush1.bf16.msra.mxu0 0
        %2270 = vmatprep.subr.bf16.mxu0 0
        %2271 = vmatpush1.bf16.msra.mxu0 0
        %2272 = vmatprep.subr.bf16.mxu0 0
        %2273 = vmatpush1.bf16.msra.mxu0 0
        %2274 = vmatprep.subr.bf16.mxu0 0
        %2275 = vmatpush1.bf16.msra.mxu0 0
        %2276 = vmatprep.mubr.bf16.mxu0 0
        %2277 = vmatmul.mubr.bf16.gmra.mrb[0].mxu0 %v2102
        %v2278 = vpop.f32.mrb[0].mxu0
        %v2279 = vadd.f32 %v2239, %v2278
        %v2280 = vpop.f32.mrb[0].mxu0
        %v2281 = vpop.f32.mrb[0].mxu0
        %v2282 = vpop.f32.mrb[0].mxu0
        %2283 = vdwg.mxu0
        %2284 = vmatprep.subr.bf16.mxu0 0
        %2285 = vmatpush1.bf16.msra.mxu0 %v826
        %2286 = vmatprep.subr.bf16.mxu0 0
        %2287 = vmatpush1.bf16.msra.mxu0 %v827
        %2288 = vmatprep.subr.bf16.mxu0 0
        %2289 = vmatpush1.bf16.msra.mxu0 %v828
        %2290 = vmatprep.subr.bf16.mxu0 0
        %2291 = vmatpush1.bf16.msra.mxu0 %v829
        %2292 = vmatprep.subr.bf16.mxu0 0
        %2293 = vmatpush1.bf16.msra.mxu0 %v830
        %2294 = vmatprep.subr.bf16.mxu0 0
        %2295 = vmatpush1.bf16.msra.mxu0 %v831
        %2296 = vmatprep.subr.bf16.mxu0 0
        %2297 = vmatpush1.bf16.msra.mxu0 %v832
        %2298 = vmatprep.subr.bf16.mxu0 0
        %2299 = vmatpush1.bf16.msra.mxu0 %v833
        %2300 = vmatprep.subr.bf16.mxu0 0
        %2301 = vmatpush1.bf16.msra.mxu0 0
        %2302 = vmatprep.subr.bf16.mxu0 0
        %2303 = vmatpush1.bf16.msra.mxu0 0
        %2304 = vmatprep.subr.bf16.mxu0 0
        %2305 = vmatpush1.bf16.msra.mxu0 0
        %2306 = vmatprep.subr.bf16.mxu0 0
        %2307 = vmatpush1.bf16.msra.mxu0 0
        %2308 = vmatprep.subr.bf16.mxu0 0
        %2309 = vmatpush1.bf16.msra.mxu0 0
        %2310 = vmatprep.subr.bf16.mxu0 0
        %2311 = vmatpush1.bf16.msra.mxu0 0
        %2312 = vmatprep.subr.bf16.mxu0 0
        %2313 = vmatpush1.bf16.msra.mxu0 0
        %2314 = vmatprep.subr.bf16.mxu0 0
        %2315 = vmatpush1.bf16.msra.mxu0 0
        %2316 = vmatprep.mubr.bf16.mxu0 0
        %2317 = vmatmul.mubr.bf16.gmra.mrb[0].mxu0 %v2203
        %v2318 = vpop.f32.mrb[0].mxu0
        %v2319 = vadd.f32 0.0, %v2318
        %v2320 = vpop.f32.mrb[0].mxu0
        %v2321 = vpop.f32.mrb[0].mxu0
        %v2322 = vpop.f32.mrb[0].mxu0
        %2323 = vdwg.mxu0
        %2324 = vmatprep.subr.bf16.mxu0 0
        %2325 = vmatpush1.bf16.msra.mxu0 %v914
        %2326 = vmatprep.subr.bf16.mxu0 0
        %2327 = vmatpush1.bf16.msra.mxu0 %v915
        %2328 = vmatprep.subr.bf16.mxu0 0
        %2329 = vmatpush1.bf16.msra.mxu0 %v916
        %2330 = vmatprep.subr.bf16.mxu0 0
        %2331 = vmatpush1.bf16.msra.mxu0 %v917
        %2332 = vmatprep.subr.bf16.mxu0 0
        %2333 = vmatpush1.bf16.msra.mxu0 %v918
        %2334 = vmatprep.subr.bf16.mxu0 0
        %2335 = vmatpush1.bf16.msra.mxu0 %v919
        %2336 = vmatprep.subr.bf16.mxu0 0
        %2337 = vmatpush1.bf16.msra.mxu0 %v920
        %2338 = vmatprep.subr.bf16.mxu0 0
        %2339 = vmatpush1.bf16.msra.mxu0 %v921
        %2340 = vmatprep.subr.bf16.mxu0 0
        %2341 = vmatpush1.bf16.msra.mxu0 0
        %2342 = vmatprep.subr.bf16.mxu0 0
        %2343 = vmatpush1.bf16.msra.mxu0 0
        %2344 = vmatprep.subr.bf16.mxu0 0
        %2345 = vmatpush1.bf16.msra.mxu0 0
        %2346 = vmatprep.subr.bf16.mxu0 0
        %2347 = vmatpush1.bf16.msra.mxu0 0
        %2348 = vmatprep.subr.bf16.mxu0 0
        %2349 = vmatpush1.bf16.msra.mxu0 0
        %2350 = vmatprep.subr.bf16.mxu0 0
        %2351 = vmatpush1.bf16.msra.mxu0 0
        %2352 = vmatprep.subr.bf16.mxu0 0
        %2353 = vmatpush1.bf16.msra.mxu0 0
        %2354 = vmatprep.subr.bf16.mxu0 0
        %2355 = vmatpush1.bf16.msra.mxu0 0
        %2356 = vmatprep.mubr.bf16.mxu0 0
        %2357 = vmatmul.mubr.bf16.gmra.mrb[0].mxu0 %v1935
        %v2358 = vpop.f32.mrb[0].mxu0
        %v2359 = vadd.f32 %v2319, %v2358
        %v2360 = vpop.f32.mrb[0].mxu0
        %v2361 = vpop.f32.mrb[0].mxu0
        %v2362 = vpop.f32.mrb[0].mxu0
        %2363 = vdwg.mxu0
        %v2365 = vunpack.c.l.b16 %v2203
        %v2366 = vpack.c.b16 %v2365, %v2365
        %2367 = vrot.lane.b32.xlu0 %v2366, 64
        %v2368 = vpop.permute.xlu0 %2367
        %v2370 = vsel %vm681, %v2368, 0
        %2372 = vmatprep.subr.bf16.mxu0 0
        %2373 = vmatpush1.bf16.msra.mxu0 %v991
        %2374 = vmatprep.subr.bf16.mxu0 0
        %2375 = vmatpush1.bf16.msra.mxu0 %v992
        %2376 = vmatprep.subr.bf16.mxu0 0
        %2377 = vmatpush1.bf16.msra.mxu0 %v993
        %2378 = vmatprep.subr.bf16.mxu0 0
        %2379 = vmatpush1.bf16.msra.mxu0 %v994
        %2380 = vmatprep.subr.bf16.mxu0 0
        %2381 = vmatpush1.bf16.msra.mxu0 0
        %2382 = vmatprep.subr.bf16.mxu0 0
        %2383 = vmatpush1.bf16.msra.mxu0 0
        %2384 = vmatprep.subr.bf16.mxu0 0
        %2385 = vmatpush1.bf16.msra.mxu0 0
        %2386 = vmatprep.subr.bf16.mxu0 0
        %2387 = vmatpush1.bf16.msra.mxu0 0
        %2388 = vmatprep.subr.bf16.mxu0 0
        %2389 = vmatpush1.bf16.msra.mxu0 0
        %2390 = vmatprep.subr.bf16.mxu0 0
        %2391 = vmatpush1.bf16.msra.mxu0 0
        %2392 = vmatprep.subr.bf16.mxu0 0
        %2393 = vmatpush1.bf16.msra.mxu0 0
        %2394 = vmatprep.subr.bf16.mxu0 0
        %2395 = vmatpush1.bf16.msra.mxu0 0
        %2396 = vmatprep.subr.bf16.mxu0 0
        %2397 = vmatpush1.bf16.msra.mxu0 0
        %2398 = vmatprep.subr.bf16.mxu0 0
        %2399 = vmatpush1.bf16.msra.mxu0 0
        %2400 = vmatprep.subr.bf16.mxu0 0
        %2401 = vmatpush1.bf16.msra.mxu0 0
        %2402 = vmatprep.subr.bf16.mxu0 0
        %2403 = vmatpush1.bf16.msra.mxu0 0
        %2404 = vmatprep.mubr.bf16.mxu0 0
        %2405 = vmatmul.mubr.bf16.gmra.mrb[0].mxu0 %v2370
        %v2406 = vpop.f32.mrb[0].mxu0
        %v2407 = vadd.f32 0.0, %v2406
        %v2408 = vpop.f32.mrb[0].mxu0
        %v2409 = vpop.f32.mrb[0].mxu0
        %v2410 = vpop.f32.mrb[0].mxu0
        %2411 = vdwg.mxu0
        %v2412 = vadd.f32 %v2279, %v2407
        %v2414 = vshrl.u32 %v2366, 16
        %v2416 = vshll.u32 %v2366, 16
        %v2418 = vrot.slane %v2416, 1
        %v2419 = vor.u32 %v2414, %v2418
        %v2421 = vsel %vm681, %v2419, 0
        %2423 = vmatprep.subr.bf16.mxu0 0
        %2424 = vmatpush1.bf16.msra.mxu0 %v1066
        %2425 = vmatprep.subr.bf16.mxu0 0
        %2426 = vmatpush1.bf16.msra.mxu0 %v1067
        %2427 = vmatprep.subr.bf16.mxu0 0
        %2428 = vmatpush1.bf16.msra.mxu0 %v1068
        %2429 = vmatprep.subr.bf16.mxu0 0
        %2430 = vmatpush1.bf16.msra.mxu0 %v1069
        %2431 = vmatprep.subr.bf16.mxu0 0
        %2432 = vmatpush1.bf16.msra.mxu0 0
        %2433 = vmatprep.subr.bf16.mxu0 0
        %2434 = vmatpush1.bf16.msra.mxu0 0
        %2435 = vmatprep.subr.bf16.mxu0 0
        %2436 = vmatpush1.bf16.msra.mxu0 0
        %2437 = vmatprep.subr.bf16.mxu0 0
        %2438 = vmatpush1.bf16.msra.mxu0 0
        %2439 = vmatprep.subr.bf16.mxu0 0
        %2440 = vmatpush1.bf16.msra.mxu0 0
        %2441 = vmatprep.subr.bf16.mxu0 0
        %2442 = vmatpush1.bf16.msra.mxu0 0
        %2443 = vmatprep.subr.bf16.mxu0 0
        %2444 = vmatpush1.bf16.msra.mxu0 0
        %2445 = vmatprep.subr.bf16.mxu0 0
        %2446 = vmatpush1.bf16.msra.mxu0 0
        %2447 = vmatprep.subr.bf16.mxu0 0
        %2448 = vmatpush1.bf16.msra.mxu0 0
        %2449 = vmatprep.subr.bf16.mxu0 0
        %2450 = vmatpush1.bf16.msra.mxu0 0
        %2451 = vmatprep.subr.bf16.mxu0 0
        %2452 = vmatpush1.bf16.msra.mxu0 0
        %2453 = vmatprep.subr.bf16.mxu0 0
        %2454 = vmatpush1.bf16.msra.mxu0 0
        %2455 = vmatprep.mubr.bf16.mxu0 0
        %2456 = vmatmul.mubr.bf16.gmra.mrb[0].mxu0 %v2421
        %v2457 = vpop.f32.mrb[0].mxu0
        %v2458 = vadd.f32 0.0, %v2457
        %v2459 = vpop.f32.mrb[0].mxu0
        %v2460 = vpop.f32.mrb[0].mxu0
        %v2461 = vpop.f32.mrb[0].mxu0
        %2462 = vdwg.mxu0
        %v2463 = vadd.f32 %v2412, %v2458
        %v2464 = vadd.f32 %v2359, %v1122
        %v2465 = vmax.f32 %v2464, 0.0
        %v2466 = vpack.c.bf16 %v2465, %v2465
        %v2467 = vadd.f32 %v2463, %v1122
        %v2468 = vmax.f32 %v2467, 0.0
        %v2469 = vpack.c.bf16 %v2468, %v2468
        %s2470 = scalar_lea.vmem %s437, 28
        %v2471 = vld [vmem:[%s2470] sm:$0x7]
        %2472 = vmatprep.subr.bf16.mxu0 0
        %2473 = vmatpush1.bf16.msra.mxu0 %v673
        %2474 = vmatprep.subr.bf16.mxu0 0
        %2475 = vmatpush1.bf16.msra.mxu0 %v674
        %2476 = vmatprep.subr.bf16.mxu0 0
        %2477 = vmatpush1.bf16.msra.mxu0 %v675
        %2478 = vmatprep.subr.bf16.mxu0 0
        %2479 = vmatpush1.bf16.msra.mxu0 %v676
        %2480 = vmatprep.subr.bf16.mxu0 0
        %2481 = vmatpush1.bf16.msra.mxu0 0
        %2482 = vmatprep.subr.bf16.mxu0 0
        %2483 = vmatpush1.bf16.msra.mxu0 0
        %2484 = vmatprep.subr.bf16.mxu0 0
        %2485 = vmatpush1.bf16.msra.mxu0 0
        %2486 = vmatprep.subr.bf16.mxu0 0
        %2487 = vmatpush1.bf16.msra.mxu0 0
        %2488 = vmatprep.subr.bf16.mxu0 0
        %2489 = vmatpush1.bf16.msra.mxu0 0
        %2490 = vmatprep.subr.bf16.mxu0 0
        %2491 = vmatpush1.bf16.msra.mxu0 0
        %2492 = vmatprep.subr.bf16.mxu0 0
        %2493 = vmatpush1.bf16.msra.mxu0 0
        %2494 = vmatprep.subr.bf16.mxu0 0
        %2495 = vmatpush1.bf16.msra.mxu0 0
        %2496 = vmatprep.subr.bf16.mxu0 0
        %2497 = vmatpush1.bf16.msra.mxu0 0
        %2498 = vmatprep.subr.bf16.mxu0 0
        %2499 = vmatpush1.bf16.msra.mxu0 0
        %2500 = vmatprep.subr.bf16.mxu0 0
        %2501 = vmatpush1.bf16.msra.mxu0 0
        %2502 = vmatprep.subr.bf16.mxu0 0
        %2503 = vmatpush1.bf16.msra.mxu0 0
        %2504 = vmatprep.mubr.bf16.mxu0 0
        %2505 = vmatmul.mubr.bf16.gmra.mrb[0].mxu0 %v2421
        %v2506 = vpop.f32.mrb[0].mxu0
        %v2507 = vadd.f32 0.0, %v2506
        %v2508 = vpop.f32.mrb[0].mxu0
        %v2509 = vpop.f32.mrb[0].mxu0
        %v2510 = vpop.f32.mrb[0].mxu0
        %2511 = vdwg.mxu0
        %2512 = vmatprep.subr.bf16.mxu0 0
        %2513 = vmatpush1.bf16.msra.mxu0 %v743
        %2514 = vmatprep.subr.bf16.mxu0 0
        %2515 = vmatpush1.bf16.msra.mxu0 %v744
        %2516 = vmatprep.subr.bf16.mxu0 0
        %2517 = vmatpush1.bf16.msra.mxu0 %v745
        %2518 = vmatprep.subr.bf16.mxu0 0
        %2519 = vmatpush1.bf16.msra.mxu0 %v746
        %2520 = vmatprep.subr.bf16.mxu0 0
        %2521 = vmatpush1.bf16.msra.mxu0 0
        %2522 = vmatprep.subr.bf16.mxu0 0
        %2523 = vmatpush1.bf16.msra.mxu0 0
        %2524 = vmatprep.subr.bf16.mxu0 0
        %2525 = vmatpush1.bf16.msra.mxu0 0
        %2526 = vmatprep.subr.bf16.mxu0 0
        %2527 = vmatpush1.bf16.msra.mxu0 0
        %2528 = vmatprep.subr.bf16.mxu0 0
        %2529 = vmatpush1.bf16.msra.mxu0 0
        %2530 = vmatprep.subr.bf16.mxu0 0
        %2531 = vmatpush1.bf16.msra.mxu0 0
        %2532 = vmatprep.subr.bf16.mxu0 0
        %2533 = vmatpush1.bf16.msra.mxu0 0
        %2534 = vmatprep.subr.bf16.mxu0 0
        %2535 = vmatpush1.bf16.msra.mxu0 0
        %2536 = vmatprep.subr.bf16.mxu0 0
        %2537 = vmatpush1.bf16.msra.mxu0 0
        %2538 = vmatprep.subr.bf16.mxu0 0
        %2539 = vmatpush1.bf16.msra.mxu0 0
        %2540 = vmatprep.subr.bf16.mxu0 0
        %2541 = vmatpush1.bf16.msra.mxu0 0
        %2542 = vmatprep.subr.bf16.mxu0 0
        %2543 = vmatpush1.bf16.msra.mxu0 0
        %2544 = vmatprep.mubr.bf16.mxu0 0
        %2545 = vmatmul.mubr.bf16.gmra.mrb[0].mxu0 %v2370
        %v2546 = vpop.f32.mrb[0].mxu0
        %v2547 = vadd.f32 %v2507, %v2546
        %v2548 = vpop.f32.mrb[0].mxu0
        %v2549 = vpop.f32.mrb[0].mxu0
        %v2550 = vpop.f32.mrb[0].mxu0
        %2551 = vdwg.mxu0
        %2552 = vmatprep.subr.bf16.mxu0 0
        %2553 = vmatpush1.bf16.msra.mxu0 %v826
        %2554 = vmatprep.subr.bf16.mxu0 0
        %2555 = vmatpush1.bf16.msra.mxu0 %v827
        %2556 = vmatprep.subr.bf16.mxu0 0
        %2557 = vmatpush1.bf16.msra.mxu0 %v828
        %2558 = vmatprep.subr.bf16.mxu0 0
        %2559 = vmatpush1.bf16.msra.mxu0 %v829
        %2560 = vmatprep.subr.bf16.mxu0 0
        %2561 = vmatpush1.bf16.msra.mxu0 %v830
        %2562 = vmatprep.subr.bf16.mxu0 0
        %2563 = vmatpush1.bf16.msra.mxu0 %v831
        %2564 = vmatprep.subr.bf16.mxu0 0
        %2565 = vmatpush1.bf16.msra.mxu0 %v832
        %2566 = vmatprep.subr.bf16.mxu0 0
        %2567 = vmatpush1.bf16.msra.mxu0 %v833
        %2568 = vmatprep.subr.bf16.mxu0 0
        %2569 = vmatpush1.bf16.msra.mxu0 0
        %2570 = vmatprep.subr.bf16.mxu0 0
        %2571 = vmatpush1.bf16.msra.mxu0 0
        %2572 = vmatprep.subr.bf16.mxu0 0
        %2573 = vmatpush1.bf16.msra.mxu0 0
        %2574 = vmatprep.subr.bf16.mxu0 0
        %2575 = vmatpush1.bf16.msra.mxu0 0
        %2576 = vmatprep.subr.bf16.mxu0 0
        %2577 = vmatpush1.bf16.msra.mxu0 0
        %2578 = vmatprep.subr.bf16.mxu0 0
        %2579 = vmatpush1.bf16.msra.mxu0 0
        %2580 = vmatprep.subr.bf16.mxu0 0
        %2581 = vmatpush1.bf16.msra.mxu0 0
        %2582 = vmatprep.subr.bf16.mxu0 0
        %2583 = vmatpush1.bf16.msra.mxu0 0
        %2584 = vmatprep.mubr.bf16.mxu0 0
        %2585 = vmatmul.mubr.bf16.gmra.mrb[0].mxu0 %v2471
        %v2586 = vpop.f32.mrb[0].mxu0
        %v2587 = vadd.f32 0.0, %v2586
        %v2588 = vpop.f32.mrb[0].mxu0
        %v2589 = vpop.f32.mrb[0].mxu0
        %v2590 = vpop.f32.mrb[0].mxu0
        %2591 = vdwg.mxu0
        %2592 = vmatprep.subr.bf16.mxu0 0
        %2593 = vmatpush1.bf16.msra.mxu0 %v914
        %2594 = vmatprep.subr.bf16.mxu0 0
        %2595 = vmatpush1.bf16.msra.mxu0 %v915
        %2596 = vmatprep.subr.bf16.mxu0 0
        %2597 = vmatpush1.bf16.msra.mxu0 %v916
        %2598 = vmatprep.subr.bf16.mxu0 0
        %2599 = vmatpush1.bf16.msra.mxu0 %v917
        %2600 = vmatprep.subr.bf16.mxu0 0
        %2601 = vmatpush1.bf16.msra.mxu0 %v918
        %2602 = vmatprep.subr.bf16.mxu0 0
        %2603 = vmatpush1.bf16.msra.mxu0 %v919
        %2604 = vmatprep.subr.bf16.mxu0 0
        %2605 = vmatpush1.bf16.msra.mxu0 %v920
        %2606 = vmatprep.subr.bf16.mxu0 0
        %2607 = vmatpush1.bf16.msra.mxu0 %v921
        %2608 = vmatprep.subr.bf16.mxu0 0
        %2609 = vmatpush1.bf16.msra.mxu0 0
        %2610 = vmatprep.subr.bf16.mxu0 0
        %2611 = vmatpush1.bf16.msra.mxu0 0
        %2612 = vmatprep.subr.bf16.mxu0 0
        %2613 = vmatpush1.bf16.msra.mxu0 0
        %2614 = vmatprep.subr.bf16.mxu0 0
        %2615 = vmatpush1.bf16.msra.mxu0 0
        %2616 = vmatprep.subr.bf16.mxu0 0
        %2617 = vmatpush1.bf16.msra.mxu0 0
        %2618 = vmatprep.subr.bf16.mxu0 0
        %2619 = vmatpush1.bf16.msra.mxu0 0
        %2620 = vmatprep.subr.bf16.mxu0 0
        %2621 = vmatpush1.bf16.msra.mxu0 0
        %2622 = vmatprep.subr.bf16.mxu0 0
        %2623 = vmatpush1.bf16.msra.mxu0 0
        %2624 = vmatprep.mubr.bf16.mxu0 0
        %2625 = vmatmul.mubr.bf16.gmra.mrb[0].mxu0 %v2203
        %v2626 = vpop.f32.mrb[0].mxu0
        %v2627 = vadd.f32 %v2587, %v2626
        %v2628 = vpop.f32.mrb[0].mxu0
        %v2629 = vpop.f32.mrb[0].mxu0
        %v2630 = vpop.f32.mrb[0].mxu0
        %2631 = vdwg.mxu0
        %v2633 = vunpack.c.l.b16 %v2471
        %v2634 = vpack.c.b16 %v2633, %v2633
        %2635 = vrot.lane.b32.xlu0 %v2634, 64
        %v2636 = vpop.permute.xlu0 %2635
        %v2638 = vsel %vm681, %v2636, 0
        %2640 = vmatprep.subr.bf16.mxu0 0
        %2641 = vmatpush1.bf16.msra.mxu0 %v991
        %2642 = vmatprep.subr.bf16.mxu0 0
        %2643 = vmatpush1.bf16.msra.mxu0 %v992
        %2644 = vmatprep.subr.bf16.mxu0 0
        %2645 = vmatpush1.bf16.msra.mxu0 %v993
        %2646 = vmatprep.subr.bf16.mxu0 0
        %2647 = vmatpush1.bf16.msra.mxu0 %v994
        %2648 = vmatprep.subr.bf16.mxu0 0
        %2649 = vmatpush1.bf16.msra.mxu0 0
        %2650 = vmatprep.subr.bf16.mxu0 0
        %2651 = vmatpush1.bf16.msra.mxu0 0
        %2652 = vmatprep.subr.bf16.mxu0 0
        %2653 = vmatpush1.bf16.msra.mxu0 0
        %2654 = vmatprep.subr.bf16.mxu0 0
        %2655 = vmatpush1.bf16.msra.mxu0 0
        %2656 = vmatprep.subr.bf16.mxu0 0
        %2657 = vmatpush1.bf16.msra.mxu0 0
        %2658 = vmatprep.subr.bf16.mxu0 0
        %2659 = vmatpush1.bf16.msra.mxu0 0
        %2660 = vmatprep.subr.bf16.mxu0 0
        %2661 = vmatpush1.bf16.msra.mxu0 0
        %2662 = vmatprep.subr.bf16.mxu0 0
        %2663 = vmatpush1.bf16.msra.mxu0 0
        %2664 = vmatprep.subr.bf16.mxu0 0
        %2665 = vmatpush1.bf16.msra.mxu0 0
        %2666 = vmatprep.subr.bf16.mxu0 0
        %2667 = vmatpush1.bf16.msra.mxu0 0
        %2668 = vmatprep.subr.bf16.mxu0 0
        %2669 = vmatpush1.bf16.msra.mxu0 0
        %2670 = vmatprep.subr.bf16.mxu0 0
        %2671 = vmatpush1.bf16.msra.mxu0 0
        %2672 = vmatprep.mubr.bf16.mxu0 0
        %2673 = vmatmul.mubr.bf16.gmra.mrb[0].mxu0 %v2638
        %v2674 = vpop.f32.mrb[0].mxu0
        %v2675 = vadd.f32 0.0, %v2674
        %v2676 = vpop.f32.mrb[0].mxu0
        %v2677 = vpop.f32.mrb[0].mxu0
        %v2678 = vpop.f32.mrb[0].mxu0
        %2679 = vdwg.mxu0
        %v2680 = vadd.f32 %v2547, %v2675
        %v2682 = vshrl.u32 %v2634, 16
        %v2684 = vshll.u32 %v2634, 16
        %v2686 = vrot.slane %v2684, 1
        %v2687 = vor.u32 %v2682, %v2686
        %v2689 = vsel %vm681, %v2687, 0
        %2691 = vmatprep.subr.bf16.mxu0 0
        %2692 = vmatpush1.bf16.msra.mxu0 %v1066
        %2693 = vmatprep.subr.bf16.mxu0 0
        %2694 = vmatpush1.bf16.msra.mxu0 %v1067
        %2695 = vmatprep.subr.bf16.mxu0 0
        %2696 = vmatpush1.bf16.msra.mxu0 %v1068
        %2697 = vmatprep.subr.bf16.mxu0 0
        %2698 = vmatpush1.bf16.msra.mxu0 %v1069
        %2699 = vmatprep.subr.bf16.mxu0 0
        %2700 = vmatpush1.bf16.msra.mxu0 0
        %2701 = vmatprep.subr.bf16.mxu0 0
        %2702 = vmatpush1.bf16.msra.mxu0 0
        %2703 = vmatprep.subr.bf16.mxu0 0
        %2704 = vmatpush1.bf16.msra.mxu0 0
        %2705 = vmatprep.subr.bf16.mxu0 0
        %2706 = vmatpush1.bf16.msra.mxu0 0
        %2707 = vmatprep.subr.bf16.mxu0 0
        %2708 = vmatpush1.bf16.msra.mxu0 0
        %2709 = vmatprep.subr.bf16.mxu0 0
        %2710 = vmatpush1.bf16.msra.mxu0 0
        %2711 = vmatprep.subr.bf16.mxu0 0
        %2712 = vmatpush1.bf16.msra.mxu0 0
        %2713 = vmatprep.subr.bf16.mxu0 0
        %2714 = vmatpush1.bf16.msra.mxu0 0
        %2715 = vmatprep.subr.bf16.mxu0 0
        %2716 = vmatpush1.bf16.msra.mxu0 0
        %2717 = vmatprep.subr.bf16.mxu0 0
        %2718 = vmatpush1.bf16.msra.mxu0 0
        %2719 = vmatprep.subr.bf16.mxu0 0
        %2720 = vmatpush1.bf16.msra.mxu0 0
        %2721 = vmatprep.subr.bf16.mxu0 0
        %2722 = vmatpush1.bf16.msra.mxu0 0
        %2723 = vmatprep.mubr.bf16.mxu0 0
        %2724 = vmatmul.mubr.bf16.gmra.mrb[0].mxu0 %v2689
        %v2725 = vpop.f32.mrb[0].mxu0
        %v2726 = vadd.f32 0.0, %v2725
        %v2727 = vpop.f32.mrb[0].mxu0
        %v2728 = vpop.f32.mrb[0].mxu0
        %v2729 = vpop.f32.mrb[0].mxu0
        %2730 = vdwg.mxu0
        %v2731 = vadd.f32 %v2680, %v2726
        %v2732 = vadd.f32 %v2627, %v1122
        %v2733 = vmax.f32 %v2732, 0.0
        %v2734 = vpack.c.bf16 %v2733, %v2733
        %v2735 = vadd.f32 %v2731, %v1122
        %v2736 = vmax.f32 %v2735, 0.0
        %v2737 = vpack.c.bf16 %v2736, %v2736
        %s2738 = scalar_lea.vmem %s437, 32
        %v2739 = vld [vmem:[%s2738] sm:$0x7]
        %2740 = vmatprep.subr.bf16.mxu0 0
        %2741 = vmatpush1.bf16.msra.mxu0 %v673
        %2742 = vmatprep.subr.bf16.mxu0 0
        %2743 = vmatpush1.bf16.msra.mxu0 %v674
        %2744 = vmatprep.subr.bf16.mxu0 0
        %2745 = vmatpush1.bf16.msra.mxu0 %v675
        %2746 = vmatprep.subr.bf16.mxu0 0
        %2747 = vmatpush1.bf16.msra.mxu0 %v676
        %2748 = vmatprep.subr.bf16.mxu0 0
        %2749 = vmatpush1.bf16.msra.mxu0 0
        %2750 = vmatprep.subr.bf16.mxu0 0
        %2751 = vmatpush1.bf16.msra.mxu0 0
        %2752 = vmatprep.subr.bf16.mxu0 0
        %2753 = vmatpush1.bf16.msra.mxu0 0
        %2754 = vmatprep.subr.bf16.mxu0 0
        %2755 = vmatpush1.bf16.msra.mxu0 0
        %2756 = vmatprep.subr.bf16.mxu0 0
        %2757 = vmatpush1.bf16.msra.mxu0 0
        %2758 = vmatprep.subr.bf16.mxu0 0
        %2759 = vmatpush1.bf16.msra.mxu0 0
        %2760 = vmatprep.subr.bf16.mxu0 0
        %2761 = vmatpush1.bf16.msra.mxu0 0
        %2762 = vmatprep.subr.bf16.mxu0 0
        %2763 = vmatpush1.bf16.msra.mxu0 0
        %2764 = vmatprep.subr.bf16.mxu0 0
        %2765 = vmatpush1.bf16.msra.mxu0 0
        %2766 = vmatprep.subr.bf16.mxu0 0
        %2767 = vmatpush1.bf16.msra.mxu0 0
        %2768 = vmatprep.subr.bf16.mxu0 0
        %2769 = vmatpush1.bf16.msra.mxu0 0
        %2770 = vmatprep.subr.bf16.mxu0 0
        %2771 = vmatpush1.bf16.msra.mxu0 0
        %2772 = vmatprep.mubr.bf16.mxu0 0
        %2773 = vmatmul.mubr.bf16.gmra.mrb[0].mxu0 %v2689
        %v2774 = vpop.f32.mrb[0].mxu0
        %v2775 = vadd.f32 0.0, %v2774
        %v2776 = vpop.f32.mrb[0].mxu0
        %v2777 = vpop.f32.mrb[0].mxu0
        %v2778 = vpop.f32.mrb[0].mxu0
        %2779 = vdwg.mxu0
        %2780 = vmatprep.subr.bf16.mxu0 0
        %2781 = vmatpush1.bf16.msra.mxu0 %v743
        %2782 = vmatprep.subr.bf16.mxu0 0
        %2783 = vmatpush1.bf16.msra.mxu0 %v744
        %2784 = vmatprep.subr.bf16.mxu0 0
        %2785 = vmatpush1.bf16.msra.mxu0 %v745
        %2786 = vmatprep.subr.bf16.mxu0 0
        %2787 = vmatpush1.bf16.msra.mxu0 %v746
        %2788 = vmatprep.subr.bf16.mxu0 0
        %2789 = vmatpush1.bf16.msra.mxu0 0
        %2790 = vmatprep.subr.bf16.mxu0 0
        %2791 = vmatpush1.bf16.msra.mxu0 0
        %2792 = vmatprep.subr.bf16.mxu0 0
        %2793 = vmatpush1.bf16.msra.mxu0 0
        %2794 = vmatprep.subr.bf16.mxu0 0
        %2795 = vmatpush1.bf16.msra.mxu0 0
        %2796 = vmatprep.subr.bf16.mxu0 0
        %2797 = vmatpush1.bf16.msra.mxu0 0
        %2798 = vmatprep.subr.bf16.mxu0 0
        %2799 = vmatpush1.bf16.msra.mxu0 0
        %2800 = vmatprep.subr.bf16.mxu0 0
        %2801 = vmatpush1.bf16.msra.mxu0 0
        %2802 = vmatprep.subr.bf16.mxu0 0
        %2803 = vmatpush1.bf16.msra.mxu0 0
        %2804 = vmatprep.subr.bf16.mxu0 0
        %2805 = vmatpush1.bf16.msra.mxu0 0
        %2806 = vmatprep.subr.bf16.mxu0 0
        %2807 = vmatpush1.bf16.msra.mxu0 0
        %2808 = vmatprep.subr.bf16.mxu0 0
        %2809 = vmatpush1.bf16.msra.mxu0 0
        %2810 = vmatprep.subr.bf16.mxu0 0
        %2811 = vmatpush1.bf16.msra.mxu0 0
        %2812 = vmatprep.mubr.bf16.mxu0 0
        %2813 = vmatmul.mubr.bf16.gmra.mrb[0].mxu0 %v2638
        %v2814 = vpop.f32.mrb[0].mxu0
        %v2815 = vadd.f32 %v2775, %v2814
        %v2816 = vpop.f32.mrb[0].mxu0
        %v2817 = vpop.f32.mrb[0].mxu0
        %v2818 = vpop.f32.mrb[0].mxu0
        %2819 = vdwg.mxu0
        %2820 = vmatprep.subr.bf16.mxu0 0
        %2821 = vmatpush1.bf16.msra.mxu0 %v826
        %2822 = vmatprep.subr.bf16.mxu0 0
        %2823 = vmatpush1.bf16.msra.mxu0 %v827
        %2824 = vmatprep.subr.bf16.mxu0 0
        %2825 = vmatpush1.bf16.msra.mxu0 %v828
        %2826 = vmatprep.subr.bf16.mxu0 0
        %2827 = vmatpush1.bf16.msra.mxu0 %v829
        %2828 = vmatprep.subr.bf16.mxu0 0
        %2829 = vmatpush1.bf16.msra.mxu0 %v830
        %2830 = vmatprep.subr.bf16.mxu0 0
        %2831 = vmatpush1.bf16.msra.mxu0 %v831
        %2832 = vmatprep.subr.bf16.mxu0 0
        %2833 = vmatpush1.bf16.msra.mxu0 %v832
        %2834 = vmatprep.subr.bf16.mxu0 0
        %2835 = vmatpush1.bf16.msra.mxu0 %v833
        %2836 = vmatprep.subr.bf16.mxu0 0
        %2837 = vmatpush1.bf16.msra.mxu0 0
        %2838 = vmatprep.subr.bf16.mxu0 0
        %2839 = vmatpush1.bf16.msra.mxu0 0
        %2840 = vmatprep.subr.bf16.mxu0 0
        %2841 = vmatpush1.bf16.msra.mxu0 0
        %2842 = vmatprep.subr.bf16.mxu0 0
        %2843 = vmatpush1.bf16.msra.mxu0 0
        %2844 = vmatprep.subr.bf16.mxu0 0
        %2845 = vmatpush1.bf16.msra.mxu0 0
        %2846 = vmatprep.subr.bf16.mxu0 0
        %2847 = vmatpush1.bf16.msra.mxu0 0
        %2848 = vmatprep.subr.bf16.mxu0 0
        %2849 = vmatpush1.bf16.msra.mxu0 0
        %2850 = vmatprep.subr.bf16.mxu0 0
        %2851 = vmatpush1.bf16.msra.mxu0 0
        %2852 = vmatprep.mubr.bf16.mxu0 0
        %2853 = vmatmul.mubr.bf16.gmra.mrb[0].mxu0 %v2739
        %v2854 = vpop.f32.mrb[0].mxu0
        %v2855 = vadd.f32 0.0, %v2854
        %v2856 = vpop.f32.mrb[0].mxu0
        %v2857 = vpop.f32.mrb[0].mxu0
        %v2858 = vpop.f32.mrb[0].mxu0
        %2859 = vdwg.mxu0
        %2860 = vmatprep.subr.bf16.mxu0 0
        %2861 = vmatpush1.bf16.msra.mxu0 %v914
        %2862 = vmatprep.subr.bf16.mxu0 0
        %2863 = vmatpush1.bf16.msra.mxu0 %v915
        %2864 = vmatprep.subr.bf16.mxu0 0
        %2865 = vmatpush1.bf16.msra.mxu0 %v916
        %2866 = vmatprep.subr.bf16.mxu0 0
        %2867 = vmatpush1.bf16.msra.mxu0 %v917
        %2868 = vmatprep.subr.bf16.mxu0 0
        %2869 = vmatpush1.bf16.msra.mxu0 %v918
        %2870 = vmatprep.subr.bf16.mxu0 0
        %2871 = vmatpush1.bf16.msra.mxu0 %v919
        %2872 = vmatprep.subr.bf16.mxu0 0
        %2873 = vmatpush1.bf16.msra.mxu0 %v920
        %2874 = vmatprep.subr.bf16.mxu0 0
        %2875 = vmatpush1.bf16.msra.mxu0 %v921
        %2876 = vmatprep.subr.bf16.mxu0 0
        %2877 = vmatpush1.bf16.msra.mxu0 0
        %2878 = vmatprep.subr.bf16.mxu0 0
        %2879 = vmatpush1.bf16.msra.mxu0 0
        %2880 = vmatprep.subr.bf16.mxu0 0
        %2881 = vmatpush1.bf16.msra.mxu0 0
        %2882 = vmatprep.subr.bf16.mxu0 0
        %2883 = vmatpush1.bf16.msra.mxu0 0
        %2884 = vmatprep.subr.bf16.mxu0 0
        %2885 = vmatpush1.bf16.msra.mxu0 0
        %2886 = vmatprep.subr.bf16.mxu0 0
        %2887 = vmatpush1.bf16.msra.mxu0 0
        %2888 = vmatprep.subr.bf16.mxu0 0
        %2889 = vmatpush1.bf16.msra.mxu0 0
        %2890 = vmatprep.subr.bf16.mxu0 0
        %2891 = vmatpush1.bf16.msra.mxu0 0
        %2892 = vmatprep.mubr.bf16.mxu0 0
        %2893 = vmatmul.mubr.bf16.gmra.mrb[0].mxu0 %v2471
        %v2894 = vpop.f32.mrb[0].mxu0
        %v2895 = vadd.f32 %v2855, %v2894
        %v2896 = vpop.f32.mrb[0].mxu0
        %v2897 = vpop.f32.mrb[0].mxu0
        %v2898 = vpop.f32.mrb[0].mxu0
        %2899 = vdwg.mxu0
        %v2901 = vunpack.c.l.b16 %v2739
        %v2902 = vpack.c.b16 %v2901, %v2901
        %2903 = vrot.lane.b32.xlu0 %v2902, 64
        %v2904 = vpop.permute.xlu0 %2903
        %v2906 = vsel %vm681, %v2904, 0
        %2908 = vmatprep.subr.bf16.mxu0 0
        %2909 = vmatpush1.bf16.msra.mxu0 %v991
        %2910 = vmatprep.subr.bf16.mxu0 0
        %2911 = vmatpush1.bf16.msra.mxu0 %v992
        %2912 = vmatprep.subr.bf16.mxu0 0
        %2913 = vmatpush1.bf16.msra.mxu0 %v993
        %2914 = vmatprep.subr.bf16.mxu0 0
        %2915 = vmatpush1.bf16.msra.mxu0 %v994
        %2916 = vmatprep.subr.bf16.mxu0 0
        %2917 = vmatpush1.bf16.msra.mxu0 0
        %2918 = vmatprep.subr.bf16.mxu0 0
        %2919 = vmatpush1.bf16.msra.mxu0 0
        %2920 = vmatprep.subr.bf16.mxu0 0
        %2921 = vmatpush1.bf16.msra.mxu0 0
        %2922 = vmatprep.subr.bf16.mxu0 0
        %2923 = vmatpush1.bf16.msra.mxu0 0
        %2924 = vmatprep.subr.bf16.mxu0 0
        %2925 = vmatpush1.bf16.msra.mxu0 0
        %2926 = vmatprep.subr.bf16.mxu0 0
        %2927 = vmatpush1.bf16.msra.mxu0 0
        %2928 = vmatprep.subr.bf16.mxu0 0
        %2929 = vmatpush1.bf16.msra.mxu0 0
        %2930 = vmatprep.subr.bf16.mxu0 0
        %2931 = vmatpush1.bf16.msra.mxu0 0
        %2932 = vmatprep.subr.bf16.mxu0 0
        %2933 = vmatpush1.bf16.msra.mxu0 0
        %2934 = vmatprep.subr.bf16.mxu0 0
        %2935 = vmatpush1.bf16.msra.mxu0 0
        %2936 = vmatprep.subr.bf16.mxu0 0
        %2937 = vmatpush1.bf16.msra.mxu0 0
        %2938 = vmatprep.subr.bf16.mxu0 0
        %2939 = vmatpush1.bf16.msra.mxu0 0
        %2940 = vmatprep.mubr.bf16.mxu0 0
        %2941 = vmatmul.mubr.bf16.gmra.mrb[0].mxu0 %v2906
        %v2942 = vpop.f32.mrb[0].mxu0
        %v2943 = vadd.f32 0.0, %v2942
        %v2944 = vpop.f32.mrb[0].mxu0
        %v2945 = vpop.f32.mrb[0].mxu0
        %v2946 = vpop.f32.mrb[0].mxu0
        %2947 = vdwg.mxu0
        %v2948 = vadd.f32 %v2815, %v2943
        %v2950 = vshrl.u32 %v2902, 16
        %v2952 = vshll.u32 %v2902, 16
        %v2954 = vrot.slane %v2952, 1
        %v2955 = vor.u32 %v2950, %v2954
        %v2957 = vsel %vm681, %v2955, 0
        %2959 = vmatprep.subr.bf16.mxu0 0
        %2960 = vmatpush1.bf16.msra.mxu0 %v1066
        %2961 = vmatprep.subr.bf16.mxu0 0
        %2962 = vmatpush1.bf16.msra.mxu0 %v1067
        %2963 = vmatprep.subr.bf16.mxu0 0
        %2964 = vmatpush1.bf16.msra.mxu0 %v1068
        %2965 = vmatprep.subr.bf16.mxu0 0
        %2966 = vmatpush1.bf16.msra.mxu0 %v1069
        %2967 = vmatprep.subr.bf16.mxu0 0
        %2968 = vmatpush1.bf16.msra.mxu0 0
        %2969 = vmatprep.subr.bf16.mxu0 0
        %2970 = vmatpush1.bf16.msra.mxu0 0
        %2971 = vmatprep.subr.bf16.mxu0 0
        %2972 = vmatpush1.bf16.msra.mxu0 0
        %2973 = vmatprep.subr.bf16.mxu0 0
        %2974 = vmatpush1.bf16.msra.mxu0 0
        %2975 = vmatprep.subr.bf16.mxu0 0
        %2976 = vmatpush1.bf16.msra.mxu0 0
        %2977 = vmatprep.subr.bf16.mxu0 0
        %2978 = vmatpush1.bf16.msra.mxu0 0
        %2979 = vmatprep.subr.bf16.mxu0 0
        %2980 = vmatpush1.bf16.msra.mxu0 0
        %2981 = vmatprep.subr.bf16.mxu0 0
        %2982 = vmatpush1.bf16.msra.mxu0 0
        %2983 = vmatprep.subr.bf16.mxu0 0
        %2984 = vmatpush1.bf16.msra.mxu0 0
        %2985 = vmatprep.subr.bf16.mxu0 0
        %2986 = vmatpush1.bf16.msra.mxu0 0
        %2987 = vmatprep.subr.bf16.mxu0 0
        %2988 = vmatpush1.bf16.msra.mxu0 0
        %2989 = vmatprep.subr.bf16.mxu0 0
        %2990 = vmatpush1.bf16.msra.mxu0 0
        %2991 = vmatprep.mubr.bf16.mxu0 0
        %2992 = vmatmul.mubr.bf16.gmra.mrb[0].mxu0 %v2957
        %v2993 = vpop.f32.mrb[0].mxu0
        %v2994 = vadd.f32 0.0, %v2993
        %v2995 = vpop.f32.mrb[0].mxu0
        %v2996 = vpop.f32.mrb[0].mxu0
        %v2997 = vpop.f32.mrb[0].mxu0
        %2998 = vdwg.mxu0
        %v2999 = vadd.f32 %v2948, %v2994
        %v3000 = vadd.f32 %v2895, %v1122
        %v3001 = vmax.f32 %v3000, 0.0
        %v3002 = vpack.c.bf16 %v3001, %v3001
        %v3003 = vadd.f32 %v2999, %v1122
        %v3004 = vmax.f32 %v3003, 0.0
        %v3005 = vpack.c.bf16 %v3004, %v3004
        %v3010 = vunpack.c.l.b16 %v512
        %v3011 = vunpack.c.l.b16 %v513
        %v3012 = vunpack.c.l.b16 %v514
        %v3013 = vunpack.c.l.b16 %v515
        %v3014 = vpack.c.b16 %v3011, %v3010
        %v3015 = vpack.c.b16 %v3013, %v3012
        %vm3018 = vcmask 261120
        %v3020 = vsel %vm3018, %v1129, 0
        %3022 = vmatprep.subr.bf16.mxu0 0
        %3023 = vmatpush1.bf16.msra.mxu0 %v3014
        %3024 = vmatprep.subr.bf16.mxu0 0
        %3025 = vmatpush1.bf16.msra.mxu0 %v3015
        %3026 = vmatprep.subr.bf16.mxu0 0
        %3027 = vmatpush1.bf16.msra.mxu0 0
        %3028 = vmatprep.subr.bf16.mxu0 0
        %3029 = vmatpush1.bf16.msra.mxu0 0
        %3030 = vmatprep.subr.bf16.mxu0 0
        %3031 = vmatpush1.bf16.msra.mxu0 0
        %3032 = vmatprep.subr.bf16.mxu0 0
        %3033 = vmatpush1.bf16.msra.mxu0 0
        %3034 = vmatprep.subr.bf16.mxu0 0
        %3035 = vmatpush1.bf16.msra.mxu0 0
        %3036 = vmatprep.subr.bf16.mxu0 0
        %3037 = vmatpush1.bf16.msra.mxu0 0
        %3038 = vmatprep.subr.bf16.mxu0 0
        %3039 = vmatpush1.bf16.msra.mxu0 0
        %3040 = vmatprep.subr.bf16.mxu0 0
        %3041 = vmatpush1.bf16.msra.mxu0 0
        %3042 = vmatprep.subr.bf16.mxu0 0
        %3043 = vmatpush1.bf16.msra.mxu0 0
        %3044 = vmatprep.subr.bf16.mxu0 0
        %3045 = vmatpush1.bf16.msra.mxu0 0
        %3046 = vmatprep.subr.bf16.mxu0 0
        %3047 = vmatpush1.bf16.msra.mxu0 0
        %3048 = vmatprep.subr.bf16.mxu0 0
        %3049 = vmatpush1.bf16.msra.mxu0 0
        %3050 = vmatprep.subr.bf16.mxu0 0
        %3051 = vmatpush1.bf16.msra.mxu0 0
        %3052 = vmatprep.subr.bf16.mxu0 0
        %3053 = vmatpush1.bf16.msra.mxu0 0
        %3054 = vmatprep.mubr.bf16.mxu0 0
        %3055 = vmatmul.mubr.bf16.gmra.mrb[0].mxu0 %v3020
        %v3056 = vpop.f32.mrb[0].mxu0
        %v3057 = vadd.f32 0.0, %v3056
        %v3058 = vpop.f32.mrb[0].mxu0
        %v3059 = vpop.f32.mrb[0].mxu0
        %v3060 = vpop.f32.mrb[0].mxu0
        %3061 = vdwg.mxu0
        %v3066 = vunpack.c.l.b16 %v508
        %v3067 = vunpack.c.l.b16 %v509
        %v3068 = vunpack.c.l.b16 %v510
        %v3069 = vunpack.c.l.b16 %v511
        %v3070 = vpack.c.b16 %v3067, %v3066
        %v3071 = vpack.c.b16 %v3069, %v3068
        %v3075 = vsel %vm3018, %v1126, 0
        %3077 = vmatprep.subr.bf16.mxu0 0
        %3078 = vmatpush1.bf16.msra.mxu0 %v3070
        %3079 = vmatprep.subr.bf16.mxu0 0
        %3080 = vmatpush1.bf16.msra.mxu0 %v3071
        %3081 = vmatprep.subr.bf16.mxu0 0
        %3082 = vmatpush1.bf16.msra.mxu0 0
        %3083 = vmatprep.subr.bf16.mxu0 0
        %3084 = vmatpush1.bf16.msra.mxu0 0
        %3085 = vmatprep.subr.bf16.mxu0 0
        %3086 = vmatpush1.bf16.msra.mxu0 0
        %3087 = vmatprep.subr.bf16.mxu0 0
        %3088 = vmatpush1.bf16.msra.mxu0 0
        %3089 = vmatprep.subr.bf16.mxu0 0
        %3090 = vmatpush1.bf16.msra.mxu0 0
        %3091 = vmatprep.subr.bf16.mxu0 0
        %3092 = vmatpush1.bf16.msra.mxu0 0
        %3093 = vmatprep.subr.bf16.mxu0 0
        %3094 = vmatpush1.bf16.msra.mxu0 0
        %3095 = vmatprep.subr.bf16.mxu0 0
        %3096 = vmatpush1.bf16.msra.mxu0 0
        %3097 = vmatprep.subr.bf16.mxu0 0
        %3098 = vmatpush1.bf16.msra.mxu0 0
        %3099 = vmatprep.subr.bf16.mxu0 0
        %3100 = vmatpush1.bf16.msra.mxu0 0
        %3101 = vmatprep.subr.bf16.mxu0 0
        %3102 = vmatpush1.bf16.msra.mxu0 0
        %3103 = vmatprep.subr.bf16.mxu0 0
        %3104 = vmatpush1.bf16.msra.mxu0 0
        %3105 = vmatprep.subr.bf16.mxu0 0
        %3106 = vmatpush1.bf16.msra.mxu0 0
        %3107 = vmatprep.subr.bf16.mxu0 0
        %3108 = vmatpush1.bf16.msra.mxu0 0
        %3109 = vmatprep.mubr.bf16.mxu0 0
        %3110 = vmatmul.mubr.bf16.gmra.mrb[0].mxu0 %v3075
        %v3111 = vpop.f32.mrb[0].mxu0
        %v3112 = vadd.f32 %v3057, %v3111
        %v3113 = vpop.f32.mrb[0].mxu0
        %v3114 = vpop.f32.mrb[0].mxu0
        %v3115 = vpop.f32.mrb[0].mxu0
        %3116 = vdwg.mxu0
        %v3117 = vshrl.u32 %v1126, 16
        %v3119 = vshll.u32 %v1126, 16
        %v3121 = vrot.slane %v3119, 1
        %v3122 = vor.u32 %v3117, %v3121
        %v3127 = vunpack.c.l.b16 %v516
        %v3128 = vunpack.c.l.b16 %v517
        %v3129 = vunpack.c.l.b16 %v518
        %v3130 = vunpack.c.l.b16 %v519
        %v3131 = vpack.c.b16 %v3128, %v3127
        %v3132 = vpack.c.b16 %v3130, %v3129
        %v3136 = vsel %vm3018, %v3122, 0
        %3138 = vmatprep.subr.bf16.mxu0 0
        %3139 = vmatpush1.bf16.msra.mxu0 %v3131
        %3140 = vmatprep.subr.bf16.mxu0 0
        %3141 = vmatpush1.bf16.msra.mxu0 %v3132
        %3142 = vmatprep.subr.bf16.mxu0 0
        %3143 = vmatpush1.bf16.msra.mxu0 0
        %3144 = vmatprep.subr.bf16.mxu0 0
        %3145 = vmatpush1.bf16.msra.mxu0 0
        %3146 = vmatprep.subr.bf16.mxu0 0
        %3147 = vmatpush1.bf16.msra.mxu0 0
        %3148 = vmatprep.subr.bf16.mxu0 0
        %3149 = vmatpush1.bf16.msra.mxu0 0
        %3150 = vmatprep.subr.bf16.mxu0 0
        %3151 = vmatpush1.bf16.msra.mxu0 0
        %3152 = vmatprep.subr.bf16.mxu0 0
        %3153 = vmatpush1.bf16.msra.mxu0 0
        %3154 = vmatprep.subr.bf16.mxu0 0
        %3155 = vmatpush1.bf16.msra.mxu0 0
        %3156 = vmatprep.subr.bf16.mxu0 0
        %3157 = vmatpush1.bf16.msra.mxu0 0
        %3158 = vmatprep.subr.bf16.mxu0 0
        %3159 = vmatpush1.bf16.msra.mxu0 0
        %3160 = vmatprep.subr.bf16.mxu0 0
        %3161 = vmatpush1.bf16.msra.mxu0 0
        %3162 = vmatprep.subr.bf16.mxu0 0
        %3163 = vmatpush1.bf16.msra.mxu0 0
        %3164 = vmatprep.subr.bf16.mxu0 0
        %3165 = vmatpush1.bf16.msra.mxu0 0
        %3166 = vmatprep.subr.bf16.mxu0 0
        %3167 = vmatpush1.bf16.msra.mxu0 0
        %3168 = vmatprep.subr.bf16.mxu0 0
        %3169 = vmatpush1.bf16.msra.mxu0 0
        %3170 = vmatprep.mubr.bf16.mxu0 0
        %3171 = vmatmul.mubr.bf16.gmra.mrb[0].mxu0 %v3136
        %v3172 = vpop.f32.mrb[0].mxu0
        %v3173 = vadd.f32 0.0, %v3172
        %v3174 = vpop.f32.mrb[0].mxu0
        %v3175 = vpop.f32.mrb[0].mxu0
        %v3176 = vpop.f32.mrb[0].mxu0
        %3177 = vdwg.mxu0
        %v3178 = vadd.f32 %v3112, %v3173
        %v3179 = vshrl.u32 %v1129, 16
        %v3181 = vshll.u32 %v1129, 16
        %v3183 = vrot.slane %v3181, 1
        %v3184 = vor.u32 %v3179, %v3183
        %v3189 = vunpack.c.l.b16 %v520
        %v3190 = vunpack.c.l.b16 %v521
        %v3191 = vunpack.c.l.b16 %v522
        %v3192 = vunpack.c.l.b16 %v523
        %v3193 = vpack.c.b16 %v3190, %v3189
        %v3194 = vpack.c.b16 %v3192, %v3191
        %v3198 = vsel %vm3018, %v3184, 0
        %3200 = vmatprep.subr.bf16.mxu0 0
        %3201 = vmatpush1.bf16.msra.mxu0 %v3193
        %3202 = vmatprep.subr.bf16.mxu0 0
        %3203 = vmatpush1.bf16.msra.mxu0 %v3194
        %3204 = vmatprep.subr.bf16.mxu0 0
        %3205 = vmatpush1.bf16.msra.mxu0 0
        %3206 = vmatprep.subr.bf16.mxu0 0
        %3207 = vmatpush1.bf16.msra.mxu0 0
        %3208 = vmatprep.subr.bf16.mxu0 0
        %3209 = vmatpush1.bf16.msra.mxu0 0
        %3210 = vmatprep.subr.bf16.mxu0 0
        %3211 = vmatpush1.bf16.msra.mxu0 0
        %3212 = vmatprep.subr.bf16.mxu0 0
        %3213 = vmatpush1.bf16.msra.mxu0 0
        %3214 = vmatprep.subr.bf16.mxu0 0
        %3215 = vmatpush1.bf16.msra.mxu0 0
        %3216 = vmatprep.subr.bf16.mxu0 0
        %3217 = vmatpush1.bf16.msra.mxu0 0
        %3218 = vmatprep.subr.bf16.mxu0 0
        %3219 = vmatpush1.bf16.msra.mxu0 0
        %3220 = vmatprep.subr.bf16.mxu0 0
        %3221 = vmatpush1.bf16.msra.mxu0 0
        %3222 = vmatprep.subr.bf16.mxu0 0
        %3223 = vmatpush1.bf16.msra.mxu0 0
        %3224 = vmatprep.subr.bf16.mxu0 0
        %3225 = vmatpush1.bf16.msra.mxu0 0
        %3226 = vmatprep.subr.bf16.mxu0 0
        %3227 = vmatpush1.bf16.msra.mxu0 0
        %3228 = vmatprep.subr.bf16.mxu0 0
        %3229 = vmatpush1.bf16.msra.mxu0 0
        %3230 = vmatprep.subr.bf16.mxu0 0
        %3231 = vmatpush1.bf16.msra.mxu0 0
        %3232 = vmatprep.mubr.bf16.mxu0 0
        %3233 = vmatmul.mubr.bf16.gmra.mrb[0].mxu0 %v3198
        %v3234 = vpop.f32.mrb[0].mxu0
        %v3235 = vadd.f32 0.0, %v3234
        %v3236 = vpop.f32.mrb[0].mxu0
        %v3237 = vpop.f32.mrb[0].mxu0
        %v3238 = vpop.f32.mrb[0].mxu0
        %3239 = vdwg.mxu0
        %v3240 = vadd.f32 %v3178, %v3235
        %v3245 = vunpack.c.l.b16 %v524
        %v3246 = vunpack.c.l.b16 %v525
        %v3247 = vunpack.c.l.b16 %v526
        %v3248 = vunpack.c.l.b16 %v527
        %v3249 = vpack.c.b16 %v3246, %v3245
        %v3250 = vpack.c.b16 %v3248, %v3247
        %v3254 = vsel %vm3018, %v1394, 0
        %3256 = vmatprep.subr.bf16.mxu0 0
        %3257 = vmatpush1.bf16.msra.mxu0 %v3249
        %3258 = vmatprep.subr.bf16.mxu0 0
        %3259 = vmatpush1.bf16.msra.mxu0 %v3250
        %3260 = vmatprep.subr.bf16.mxu0 0
        %3261 = vmatpush1.bf16.msra.mxu0 0
        %3262 = vmatprep.subr.bf16.mxu0 0
        %3263 = vmatpush1.bf16.msra.mxu0 0
        %3264 = vmatprep.subr.bf16.mxu0 0
        %3265 = vmatpush1.bf16.msra.mxu0 0
        %3266 = vmatprep.subr.bf16.mxu0 0
        %3267 = vmatpush1.bf16.msra.mxu0 0
        %3268 = vmatprep.subr.bf16.mxu0 0
        %3269 = vmatpush1.bf16.msra.mxu0 0
        %3270 = vmatprep.subr.bf16.mxu0 0
        %3271 = vmatpush1.bf16.msra.mxu0 0
        %3272 = vmatprep.subr.bf16.mxu0 0
        %3273 = vmatpush1.bf16.msra.mxu0 0
        %3274 = vmatprep.subr.bf16.mxu0 0
        %3275 = vmatpush1.bf16.msra.mxu0 0
        %3276 = vmatprep.subr.bf16.mxu0 0
        %3277 = vmatpush1.bf16.msra.mxu0 0
        %3278 = vmatprep.subr.bf16.mxu0 0
        %3279 = vmatpush1.bf16.msra.mxu0 0
        %3280 = vmatprep.subr.bf16.mxu0 0
        %3281 = vmatpush1.bf16.msra.mxu0 0
        %3282 = vmatprep.subr.bf16.mxu0 0
        %3283 = vmatpush1.bf16.msra.mxu0 0
        %3284 = vmatprep.subr.bf16.mxu0 0
        %3285 = vmatpush1.bf16.msra.mxu0 0
        %3286 = vmatprep.subr.bf16.mxu0 0
        %3287 = vmatpush1.bf16.msra.mxu0 0
        %3288 = vmatprep.mubr.bf16.mxu0 0
        %3289 = vmatmul.mubr.bf16.gmra.mrb[0].mxu0 %v3254
        %v3290 = vpop.f32.mrb[0].mxu0
        %v3291 = vadd.f32 0.0, %v3290
        %v3292 = vpop.f32.mrb[0].mxu0
        %v3293 = vpop.f32.mrb[0].mxu0
        %v3294 = vpop.f32.mrb[0].mxu0
        %3295 = vdwg.mxu0
        %v3296 = vadd.f32 %v3240, %v3291
        %v3301 = vunpack.c.l.b16 %v528
        %v3302 = vunpack.c.l.b16 %v529
        %v3303 = vunpack.c.l.b16 %v530
        %v3304 = vunpack.c.l.b16 %v531
        %v3305 = vpack.c.b16 %v3302, %v3301
        %v3306 = vpack.c.b16 %v3304, %v3303
        %v3310 = vsel %vm3018, %v1397, 0
        %3312 = vmatprep.subr.bf16.mxu0 0
        %3313 = vmatpush1.bf16.msra.mxu0 %v3305
        %3314 = vmatprep.subr.bf16.mxu0 0
        %3315 = vmatpush1.bf16.msra.mxu0 %v3306
        %3316 = vmatprep.subr.bf16.mxu0 0
        %3317 = vmatpush1.bf16.msra.mxu0 0
        %3318 = vmatprep.subr.bf16.mxu0 0
        %3319 = vmatpush1.bf16.msra.mxu0 0
        %3320 = vmatprep.subr.bf16.mxu0 0
        %3321 = vmatpush1.bf16.msra.mxu0 0
        %3322 = vmatprep.subr.bf16.mxu0 0
        %3323 = vmatpush1.bf16.msra.mxu0 0
        %3324 = vmatprep.subr.bf16.mxu0 0
        %3325 = vmatpush1.bf16.msra.mxu0 0
        %3326 = vmatprep.subr.bf16.mxu0 0
        %3327 = vmatpush1.bf16.msra.mxu0 0
        %3328 = vmatprep.subr.bf16.mxu0 0
        %3329 = vmatpush1.bf16.msra.mxu0 0
        %3330 = vmatprep.subr.bf16.mxu0 0
        %3331 = vmatpush1.bf16.msra.mxu0 0
        %3332 = vmatprep.subr.bf16.mxu0 0
        %3333 = vmatpush1.bf16.msra.mxu0 0
        %3334 = vmatprep.subr.bf16.mxu0 0
        %3335 = vmatpush1.bf16.msra.mxu0 0
        %3336 = vmatprep.subr.bf16.mxu0 0
        %3337 = vmatpush1.bf16.msra.mxu0 0
        %3338 = vmatprep.subr.bf16.mxu0 0
        %3339 = vmatpush1.bf16.msra.mxu0 0
        %3340 = vmatprep.subr.bf16.mxu0 0
        %3341 = vmatpush1.bf16.msra.mxu0 0
        %3342 = vmatprep.subr.bf16.mxu0 0
        %3343 = vmatpush1.bf16.msra.mxu0 0
        %3344 = vmatprep.mubr.bf16.mxu0 0
        %3345 = vmatmul.mubr.bf16.gmra.mrb[0].mxu0 %v3310
        %v3346 = vpop.f32.mrb[0].mxu0
        %v3347 = vadd.f32 0.0, %v3346
        %v3348 = vpop.f32.mrb[0].mxu0
        %v3349 = vpop.f32.mrb[0].mxu0
        %v3350 = vpop.f32.mrb[0].mxu0
        %3351 = vdwg.mxu0
        %v3352 = vadd.f32 %v3296, %v3347
        %v3353 = vshrl.u32 %v1394, 16
        %v3355 = vshll.u32 %v1394, 16
        %v3357 = vrot.slane %v3355, 1
        %v3358 = vor.u32 %v3353, %v3357
        %v3363 = vunpack.c.l.b16 %v532
        %v3364 = vunpack.c.l.b16 %v533
        %v3365 = vunpack.c.l.b16 %v534
        %v3366 = vunpack.c.l.b16 %v535
        %v3367 = vpack.c.b16 %v3364, %v3363
        %v3368 = vpack.c.b16 %v3366, %v3365
        %v3372 = vsel %vm3018, %v3358, 0
        %3374 = vmatprep.subr.bf16.mxu0 0
        %3375 = vmatpush1.bf16.msra.mxu0 %v3367
        %3376 = vmatprep.subr.bf16.mxu0 0
        %3377 = vmatpush1.bf16.msra.mxu0 %v3368
        %3378 = vmatprep.subr.bf16.mxu0 0
        %3379 = vmatpush1.bf16.msra.mxu0 0
        %3380 = vmatprep.subr.bf16.mxu0 0
        %3381 = vmatpush1.bf16.msra.mxu0 0
        %3382 = vmatprep.subr.bf16.mxu0 0
        %3383 = vmatpush1.bf16.msra.mxu0 0
        %3384 = vmatprep.subr.bf16.mxu0 0
        %3385 = vmatpush1.bf16.msra.mxu0 0
        %3386 = vmatprep.subr.bf16.mxu0 0
        %3387 = vmatpush1.bf16.msra.mxu0 0
        %3388 = vmatprep.subr.bf16.mxu0 0
        %3389 = vmatpush1.bf16.msra.mxu0 0
        %3390 = vmatprep.subr.bf16.mxu0 0
        %3391 = vmatpush1.bf16.msra.mxu0 0
        %3392 = vmatprep.subr.bf16.mxu0 0
        %3393 = vmatpush1.bf16.msra.mxu0 0
        %3394 = vmatprep.subr.bf16.mxu0 0
        %3395 = vmatpush1.bf16.msra.mxu0 0
        %3396 = vmatprep.subr.bf16.mxu0 0
        %3397 = vmatpush1.bf16.msra.mxu0 0
        %3398 = vmatprep.subr.bf16.mxu0 0
        %3399 = vmatpush1.bf16.msra.mxu0 0
        %3400 = vmatprep.subr.bf16.mxu0 0
        %3401 = vmatpush1.bf16.msra.mxu0 0
        %3402 = vmatprep.subr.bf16.mxu0 0
        %3403 = vmatpush1.bf16.msra.mxu0 0
        %3404 = vmatprep.subr.bf16.mxu0 0
        %3405 = vmatpush1.bf16.msra.mxu0 0
        %3406 = vmatprep.mubr.bf16.mxu0 0
        %3407 = vmatmul.mubr.bf16.gmra.mrb[0].mxu0 %v3372
        %v3408 = vpop.f32.mrb[0].mxu0
        %v3409 = vadd.f32 0.0, %v3408
        %v3410 = vpop.f32.mrb[0].mxu0
        %v3411 = vpop.f32.mrb[0].mxu0
        %v3412 = vpop.f32.mrb[0].mxu0
        %3413 = vdwg.mxu0
        %v3414 = vadd.f32 %v3352, %v3409
        %v3415 = vshrl.u32 %v1397, 16
        %v3417 = vshll.u32 %v1397, 16
        %v3419 = vrot.slane %v3417, 1
        %v3420 = vor.u32 %v3415, %v3419
        %v3425 = vunpack.c.l.b16 %v536
        %v3426 = vunpack.c.l.b16 %v537
        %v3427 = vunpack.c.l.b16 %v538
        %v3428 = vunpack.c.l.b16 %v539
        %v3429 = vpack.c.b16 %v3426, %v3425
        %v3430 = vpack.c.b16 %v3428, %v3427
        %v3434 = vsel %vm3018, %v3420, 0
        %3436 = vmatprep.subr.bf16.mxu0 0
        %3437 = vmatpush1.bf16.msra.mxu0 %v3429
        %3438 = vmatprep.subr.bf16.mxu0 0
        %3439 = vmatpush1.bf16.msra.mxu0 %v3430
        %3440 = vmatprep.subr.bf16.mxu0 0
        %3441 = vmatpush1.bf16.msra.mxu0 0
        %3442 = vmatprep.subr.bf16.mxu0 0
        %3443 = vmatpush1.bf16.msra.mxu0 0
        %3444 = vmatprep.subr.bf16.mxu0 0
        %3445 = vmatpush1.bf16.msra.mxu0 0
        %3446 = vmatprep.subr.bf16.mxu0 0
        %3447 = vmatpush1.bf16.msra.mxu0 0
        %3448 = vmatprep.subr.bf16.mxu0 0
        %3449 = vmatpush1.bf16.msra.mxu0 0
        %3450 = vmatprep.subr.bf16.mxu0 0
        %3451 = vmatpush1.bf16.msra.mxu0 0
        %3452 = vmatprep.subr.bf16.mxu0 0
        %3453 = vmatpush1.bf16.msra.mxu0 0
        %3454 = vmatprep.subr.bf16.mxu0 0
        %3455 = vmatpush1.bf16.msra.mxu0 0
        %3456 = vmatprep.subr.bf16.mxu0 0
        %3457 = vmatpush1.bf16.msra.mxu0 0
        %3458 = vmatprep.subr.bf16.mxu0 0
        %3459 = vmatpush1.bf16.msra.mxu0 0
        %3460 = vmatprep.subr.bf16.mxu0 0
        %3461 = vmatpush1.bf16.msra.mxu0 0
        %3462 = vmatprep.subr.bf16.mxu0 0
        %3463 = vmatpush1.bf16.msra.mxu0 0
        %3464 = vmatprep.subr.bf16.mxu0 0
        %3465 = vmatpush1.bf16.msra.mxu0 0
        %3466 = vmatprep.subr.bf16.mxu0 0
        %3467 = vmatpush1.bf16.msra.mxu0 0
        %3468 = vmatprep.mubr.bf16.mxu0 0
        %3469 = vmatmul.mubr.bf16.gmra.mrb[0].mxu0 %v3434
        %v3470 = vpop.f32.mrb[0].mxu0
        %v3471 = vadd.f32 0.0, %v3470
        %v3472 = vpop.f32.mrb[0].mxu0
        %v3473 = vpop.f32.mrb[0].mxu0
        %v3474 = vpop.f32.mrb[0].mxu0
        %3475 = vdwg.mxu0
        %v3476 = vadd.f32 %v3414, %v3471
        %v3481 = vunpack.c.l.b16 %v540
        %v3482 = vunpack.c.l.b16 %v541
        %v3483 = vunpack.c.l.b16 %v542
        %v3484 = vunpack.c.l.b16 %v543
        %v3485 = vpack.c.b16 %v3482, %v3481
        %v3486 = vpack.c.b16 %v3484, %v3483
        %v3490 = vsel %vm3018, %v1662, 0
        %3492 = vmatprep.subr.bf16.mxu0 0
        %3493 = vmatpush1.bf16.msra.mxu0 %v3485
        %3494 = vmatprep.subr.bf16.mxu0 0
        %3495 = vmatpush1.bf16.msra.mxu0 %v3486
        %3496 = vmatprep.subr.bf16.mxu0 0
        %3497 = vmatpush1.bf16.msra.mxu0 0
        %3498 = vmatprep.subr.bf16.mxu0 0
        %3499 = vmatpush1.bf16.msra.mxu0 0
        %3500 = vmatprep.subr.bf16.mxu0 0
        %3501 = vmatpush1.bf16.msra.mxu0 0
        %3502 = vmatprep.subr.bf16.mxu0 0
        %3503 = vmatpush1.bf16.msra.mxu0 0
        %3504 = vmatprep.subr.bf16.mxu0 0
        %3505 = vmatpush1.bf16.msra.mxu0 0
        %3506 = vmatprep.subr.bf16.mxu0 0
        %3507 = vmatpush1.bf16.msra.mxu0 0
        %3508 = vmatprep.subr.bf16.mxu0 0
        %3509 = vmatpush1.bf16.msra.mxu0 0
        %3510 = vmatprep.subr.bf16.mxu0 0
        %3511 = vmatpush1.bf16.msra.mxu0 0
        %3512 = vmatprep.subr.bf16.mxu0 0
        %3513 = vmatpush1.bf16.msra.mxu0 0
        %3514 = vmatprep.subr.bf16.mxu0 0
        %3515 = vmatpush1.bf16.msra.mxu0 0
        %3516 = vmatprep.subr.bf16.mxu0 0
        %3517 = vmatpush1.bf16.msra.mxu0 0
        %3518 = vmatprep.subr.bf16.mxu0 0
        %3519 = vmatpush1.bf16.msra.mxu0 0
        %3520 = vmatprep.subr.bf16.mxu0 0
        %3521 = vmatpush1.bf16.msra.mxu0 0
        %3522 = vmatprep.subr.bf16.mxu0 0
        %3523 = vmatpush1.bf16.msra.mxu0 0
        %3524 = vmatprep.mubr.bf16.mxu0 0
        %3525 = vmatmul.mubr.bf16.gmra.mrb[0].mxu0 %v3490
        %v3526 = vpop.f32.mrb[0].mxu0
        %v3527 = vadd.f32 0.0, %v3526
        %v3528 = vpop.f32.mrb[0].mxu0
        %v3529 = vpop.f32.mrb[0].mxu0
        %v3530 = vpop.f32.mrb[0].mxu0
        %3531 = vdwg.mxu0
        %v3532 = vadd.f32 %v3476, %v3527
        %v3537 = vunpack.c.l.b16 %v544
        %v3538 = vunpack.c.l.b16 %v545
        %v3539 = vunpack.c.l.b16 %v546
        %v3540 = vunpack.c.l.b16 %v547
        %v3541 = vpack.c.b16 %v3538, %v3537
        %v3542 = vpack.c.b16 %v3540, %v3539
        %v3546 = vsel %vm3018, %v1665, 0
        %3548 = vmatprep.subr.bf16.mxu0 0
        %3549 = vmatpush1.bf16.msra.mxu0 %v3541
        %3550 = vmatprep.subr.bf16.mxu0 0
        %3551 = vmatpush1.bf16.msra.mxu0 %v3542
        %3552 = vmatprep.subr.bf16.mxu0 0
        %3553 = vmatpush1.bf16.msra.mxu0 0
        %3554 = vmatprep.subr.bf16.mxu0 0
        %3555 = vmatpush1.bf16.msra.mxu0 0
        %3556 = vmatprep.subr.bf16.mxu0 0
        %3557 = vmatpush1.bf16.msra.mxu0 0
        %3558 = vmatprep.subr.bf16.mxu0 0
        %3559 = vmatpush1.bf16.msra.mxu0 0
        %3560 = vmatprep.subr.bf16.mxu0 0
        %3561 = vmatpush1.bf16.msra.mxu0 0
        %3562 = vmatprep.subr.bf16.mxu0 0
        %3563 = vmatpush1.bf16.msra.mxu0 0
        %3564 = vmatprep.subr.bf16.mxu0 0
        %3565 = vmatpush1.bf16.msra.mxu0 0
        %3566 = vmatprep.subr.bf16.mxu0 0
        %3567 = vmatpush1.bf16.msra.mxu0 0
        %3568 = vmatprep.subr.bf16.mxu0 0
        %3569 = vmatpush1.bf16.msra.mxu0 0
        %3570 = vmatprep.subr.bf16.mxu0 0
        %3571 = vmatpush1.bf16.msra.mxu0 0
        %3572 = vmatprep.subr.bf16.mxu0 0
        %3573 = vmatpush1.bf16.msra.mxu0 0
        %3574 = vmatprep.subr.bf16.mxu0 0
        %3575 = vmatpush1.bf16.msra.mxu0 0
        %3576 = vmatprep.subr.bf16.mxu0 0
        %3577 = vmatpush1.bf16.msra.mxu0 0
        %3578 = vmatprep.subr.bf16.mxu0 0
        %3579 = vmatpush1.bf16.msra.mxu0 0
        %3580 = vmatprep.mubr.bf16.mxu0 0
        %3581 = vmatmul.mubr.bf16.gmra.mrb[0].mxu0 %v3546
        %v3582 = vpop.f32.mrb[0].mxu0
        %v3583 = vadd.f32 0.0, %v3582
        %v3584 = vpop.f32.mrb[0].mxu0
        %v3585 = vpop.f32.mrb[0].mxu0
        %v3586 = vpop.f32.mrb[0].mxu0
        %3587 = vdwg.mxu0
        %v3588 = vadd.f32 %v3532, %v3583
        %v3589 = vshrl.u32 %v1662, 16
        %v3591 = vshll.u32 %v1662, 16
        %v3593 = vrot.slane %v3591, 1
        %v3594 = vor.u32 %v3589, %v3593
        %v3599 = vunpack.c.l.b16 %v548
        %v3600 = vunpack.c.l.b16 %v549
        %v3601 = vunpack.c.l.b16 %v550
        %v3602 = vunpack.c.l.b16 %v551
        %v3603 = vpack.c.b16 %v3600, %v3599
        %v3604 = vpack.c.b16 %v3602, %v3601
        %v3608 = vsel %vm3018, %v3594, 0
        %3610 = vmatprep.subr.bf16.mxu0 0
        %3611 = vmatpush1.bf16.msra.mxu0 %v3603
        %3612 = vmatprep.subr.bf16.mxu0 0
        %3613 = vmatpush1.bf16.msra.mxu0 %v3604
        %3614 = vmatprep.subr.bf16.mxu0 0
        %3615 = vmatpush1.bf16.msra.mxu0 0
        %3616 = vmatprep.subr.bf16.mxu0 0
        %3617 = vmatpush1.bf16.msra.mxu0 0
        %3618 = vmatprep.subr.bf16.mxu0 0
        %3619 = vmatpush1.bf16.msra.mxu0 0
        %3620 = vmatprep.subr.bf16.mxu0 0
        %3621 = vmatpush1.bf16.msra.mxu0 0
        %3622 = vmatprep.subr.bf16.mxu0 0
        %3623 = vmatpush1.bf16.msra.mxu0 0
        %3624 = vmatprep.subr.bf16.mxu0 0
        %3625 = vmatpush1.bf16.msra.mxu0 0
        %3626 = vmatprep.subr.bf16.mxu0 0
        %3627 = vmatpush1.bf16.msra.mxu0 0
        %3628 = vmatprep.subr.bf16.mxu0 0
        %3629 = vmatpush1.bf16.msra.mxu0 0
        %3630 = vmatprep.subr.bf16.mxu0 0
        %3631 = vmatpush1.bf16.msra.mxu0 0
        %3632 = vmatprep.subr.bf16.mxu0 0
        %3633 = vmatpush1.bf16.msra.mxu0 0
        %3634 = vmatprep.subr.bf16.mxu0 0
        %3635 = vmatpush1.bf16.msra.mxu0 0
        %3636 = vmatprep.subr.bf16.mxu0 0
        %3637 = vmatpush1.bf16.msra.mxu0 0
        %3638 = vmatprep.subr.bf16.mxu0 0
        %3639 = vmatpush1.bf16.msra.mxu0 0
        %3640 = vmatprep.subr.bf16.mxu0 0
        %3641 = vmatpush1.bf16.msra.mxu0 0
        %3642 = vmatprep.mubr.bf16.mxu0 0
        %3643 = vmatmul.mubr.bf16.gmra.mrb[0].mxu0 %v3608
        %v3644 = vpop.f32.mrb[0].mxu0
        %v3645 = vadd.f32 0.0, %v3644
        %v3646 = vpop.f32.mrb[0].mxu0
        %v3647 = vpop.f32.mrb[0].mxu0
        %v3648 = vpop.f32.mrb[0].mxu0
        %3649 = vdwg.mxu0
        %v3650 = vadd.f32 %v3588, %v3645
        %v3651 = vshrl.u32 %v1665, 16
        %v3653 = vshll.u32 %v1665, 16
        %v3655 = vrot.slane %v3653, 1
        %v3656 = vor.u32 %v3651, %v3655
        %v3661 = vunpack.c.l.b16 %v552
        %v3662 = vunpack.c.l.b16 %v553
        %v3663 = vunpack.c.l.b16 %v554
        %v3664 = vunpack.c.l.b16 %v555
        %v3665 = vpack.c.b16 %v3662, %v3661
        %v3666 = vpack.c.b16 %v3664, %v3663
        %v3670 = vsel %vm3018, %v3656, 0
        %3672 = vmatprep.subr.bf16.mxu0 0
        %3673 = vmatpush1.bf16.msra.mxu0 %v3665
        %3674 = vmatprep.subr.bf16.mxu0 0
        %3675 = vmatpush1.bf16.msra.mxu0 %v3666
        %3676 = vmatprep.subr.bf16.mxu0 0
        %3677 = vmatpush1.bf16.msra.mxu0 0
        %3678 = vmatprep.subr.bf16.mxu0 0
        %3679 = vmatpush1.bf16.msra.mxu0 0
        %3680 = vmatprep.subr.bf16.mxu0 0
        %3681 = vmatpush1.bf16.msra.mxu0 0
        %3682 = vmatprep.subr.bf16.mxu0 0
        %3683 = vmatpush1.bf16.msra.mxu0 0
        %3684 = vmatprep.subr.bf16.mxu0 0
        %3685 = vmatpush1.bf16.msra.mxu0 0
        %3686 = vmatprep.subr.bf16.mxu0 0
        %3687 = vmatpush1.bf16.msra.mxu0 0
        %3688 = vmatprep.subr.bf16.mxu0 0
        %3689 = vmatpush1.bf16.msra.mxu0 0
        %3690 = vmatprep.subr.bf16.mxu0 0
        %3691 = vmatpush1.bf16.msra.mxu0 0
        %3692 = vmatprep.subr.bf16.mxu0 0
        %3693 = vmatpush1.bf16.msra.mxu0 0
        %3694 = vmatprep.subr.bf16.mxu0 0
        %3695 = vmatpush1.bf16.msra.mxu0 0
        %3696 = vmatprep.subr.bf16.mxu0 0
        %3697 = vmatpush1.bf16.msra.mxu0 0
        %3698 = vmatprep.subr.bf16.mxu0 0
        %3699 = vmatpush1.bf16.msra.mxu0 0
        %3700 = vmatprep.subr.bf16.mxu0 0
        %3701 = vmatpush1.bf16.msra.mxu0 0
        %3702 = vmatprep.subr.bf16.mxu0 0
        %3703 = vmatpush1.bf16.msra.mxu0 0
        %3704 = vmatprep.mubr.bf16.mxu0 0
        %3705 = vmatmul.mubr.bf16.gmra.mrb[0].mxu0 %v3670
        %v3706 = vpop.f32.mrb[0].mxu0
        %v3707 = vadd.f32 0.0, %v3706
        %v3708 = vpop.f32.mrb[0].mxu0
        %v3709 = vpop.f32.mrb[0].mxu0
        %v3710 = vpop.f32.mrb[0].mxu0
        %3711 = vdwg.mxu0
        %v3712 = vadd.f32 %v3650, %v3707
        %v3717 = vunpack.c.l.b16 %v556
        %v3718 = vunpack.c.l.b16 %v557
        %v3719 = vunpack.c.l.b16 %v558
        %v3720 = vunpack.c.l.b16 %v559
        %v3721 = vpack.c.b16 %v3718, %v3717
        %v3722 = vpack.c.b16 %v3720, %v3719
        %v3726 = vsel %vm3018, %v1930, 0
        %3728 = vmatprep.subr.bf16.mxu0 0
        %3729 = vmatpush1.bf16.msra.mxu0 %v3721
        %3730 = vmatprep.subr.bf16.mxu0 0
        %3731 = vmatpush1.bf16.msra.mxu0 %v3722
        %3732 = vmatprep.subr.bf16.mxu0 0
        %3733 = vmatpush1.bf16.msra.mxu0 0
        %3734 = vmatprep.subr.bf16.mxu0 0
        %3735 = vmatpush1.bf16.msra.mxu0 0
        %3736 = vmatprep.subr.bf16.mxu0 0
        %3737 = vmatpush1.bf16.msra.mxu0 0
        %3738 = vmatprep.subr.bf16.mxu0 0
        %3739 = vmatpush1.bf16.msra.mxu0 0
        %3740 = vmatprep.subr.bf16.mxu0 0
        %3741 = vmatpush1.bf16.msra.mxu0 0
        %3742 = vmatprep.subr.bf16.mxu0 0
        %3743 = vmatpush1.bf16.msra.mxu0 0
        %3744 = vmatprep.subr.bf16.mxu0 0
        %3745 = vmatpush1.bf16.msra.mxu0 0
        %3746 = vmatprep.subr.bf16.mxu0 0
        %3747 = vmatpush1.bf16.msra.mxu0 0
        %3748 = vmatprep.subr.bf16.mxu0 0
        %3749 = vmatpush1.bf16.msra.mxu0 0
        %3750 = vmatprep.subr.bf16.mxu0 0
        %3751 = vmatpush1.bf16.msra.mxu0 0
        %3752 = vmatprep.subr.bf16.mxu0 0
        %3753 = vmatpush1.bf16.msra.mxu0 0
        %3754 = vmatprep.subr.bf16.mxu0 0
        %3755 = vmatpush1.bf16.msra.mxu0 0
        %3756 = vmatprep.subr.bf16.mxu0 0
        %3757 = vmatpush1.bf16.msra.mxu0 0
        %3758 = vmatprep.subr.bf16.mxu0 0
        %3759 = vmatpush1.bf16.msra.mxu0 0
        %3760 = vmatprep.mubr.bf16.mxu0 0
        %3761 = vmatmul.mubr.bf16.gmra.mrb[0].mxu0 %v3726
        %v3762 = vpop.f32.mrb[0].mxu0
        %v3763 = vadd.f32 0.0, %v3762
        %v3764 = vpop.f32.mrb[0].mxu0
        %v3765 = vpop.f32.mrb[0].mxu0
        %v3766 = vpop.f32.mrb[0].mxu0
        %3767 = vdwg.mxu0
        %v3768 = vadd.f32 %v3712, %v3763
        %v3773 = vunpack.c.l.b16 %v560
        %v3774 = vunpack.c.l.b16 %v561
        %v3775 = vunpack.c.l.b16 %v562
        %v3776 = vunpack.c.l.b16 %v563
        %v3777 = vpack.c.b16 %v3774, %v3773
        %v3778 = vpack.c.b16 %v3776, %v3775
        %v3782 = vsel %vm3018, %v1933, 0
        %3784 = vmatprep.subr.bf16.mxu0 0
        %3785 = vmatpush1.bf16.msra.mxu0 %v3777
        %3786 = vmatprep.subr.bf16.mxu0 0
        %3787 = vmatpush1.bf16.msra.mxu0 %v3778
        %3788 = vmatprep.subr.bf16.mxu0 0
        %3789 = vmatpush1.bf16.msra.mxu0 0
        %3790 = vmatprep.subr.bf16.mxu0 0
        %3791 = vmatpush1.bf16.msra.mxu0 0
        %3792 = vmatprep.subr.bf16.mxu0 0
        %3793 = vmatpush1.bf16.msra.mxu0 0
        %3794 = vmatprep.subr.bf16.mxu0 0
        %3795 = vmatpush1.bf16.msra.mxu0 0
        %3796 = vmatprep.subr.bf16.mxu0 0
        %3797 = vmatpush1.bf16.msra.mxu0 0
        %3798 = vmatprep.subr.bf16.mxu0 0
        %3799 = vmatpush1.bf16.msra.mxu0 0
        %3800 = vmatprep.subr.bf16.mxu0 0
        %3801 = vmatpush1.bf16.msra.mxu0 0
        %3802 = vmatprep.subr.bf16.mxu0 0
        %3803 = vmatpush1.bf16.msra.mxu0 0
        %3804 = vmatprep.subr.bf16.mxu0 0
        %3805 = vmatpush1.bf16.msra.mxu0 0
        %3806 = vmatprep.subr.bf16.mxu0 0
        %3807 = vmatpush1.bf16.msra.mxu0 0
        %3808 = vmatprep.subr.bf16.mxu0 0
        %3809 = vmatpush1.bf16.msra.mxu0 0
        %3810 = vmatprep.subr.bf16.mxu0 0
        %3811 = vmatpush1.bf16.msra.mxu0 0
        %3812 = vmatprep.subr.bf16.mxu0 0
        %3813 = vmatpush1.bf16.msra.mxu0 0
        %3814 = vmatprep.subr.bf16.mxu0 0
        %3815 = vmatpush1.bf16.msra.mxu0 0
        %3816 = vmatprep.mubr.bf16.mxu0 0
        %3817 = vmatmul.mubr.bf16.gmra.mrb[0].mxu0 %v3782
        %v3818 = vpop.f32.mrb[0].mxu0
        %v3819 = vadd.f32 0.0, %v3818
        %v3820 = vpop.f32.mrb[0].mxu0
        %v3821 = vpop.f32.mrb[0].mxu0
        %v3822 = vpop.f32.mrb[0].mxu0
        %3823 = vdwg.mxu0
        %v3824 = vadd.f32 %v3768, %v3819
        %v3825 = vshrl.u32 %v1930, 16
        %v3827 = vshll.u32 %v1930, 16
        %v3829 = vrot.slane %v3827, 1
        %v3830 = vor.u32 %v3825, %v3829
        %v3835 = vunpack.c.l.b16 %v564
        %v3836 = vunpack.c.l.b16 %v565
        %v3837 = vunpack.c.l.b16 %v566
        %v3838 = vunpack.c.l.b16 %v567
        %v3839 = vpack.c.b16 %v3836, %v3835
        %v3840 = vpack.c.b16 %v3838, %v3837
        %v3844 = vsel %vm3018, %v3830, 0
        %3846 = vmatprep.subr.bf16.mxu0 0
        %3847 = vmatpush1.bf16.msra.mxu0 %v3839
        %3848 = vmatprep.subr.bf16.mxu0 0
        %3849 = vmatpush1.bf16.msra.mxu0 %v3840
        %3850 = vmatprep.subr.bf16.mxu0 0
        %3851 = vmatpush1.bf16.msra.mxu0 0
        %3852 = vmatprep.subr.bf16.mxu0 0
        %3853 = vmatpush1.bf16.msra.mxu0 0
        %3854 = vmatprep.subr.bf16.mxu0 0
        %3855 = vmatpush1.bf16.msra.mxu0 0
        %3856 = vmatprep.subr.bf16.mxu0 0
        %3857 = vmatpush1.bf16.msra.mxu0 0
        %3858 = vmatprep.subr.bf16.mxu0 0
        %3859 = vmatpush1.bf16.msra.mxu0 0
        %3860 = vmatprep.subr.bf16.mxu0 0
        %3861 = vmatpush1.bf16.msra.mxu0 0
        %3862 = vmatprep.subr.bf16.mxu0 0
        %3863 = vmatpush1.bf16.msra.mxu0 0
        %3864 = vmatprep.subr.bf16.mxu0 0
        %3865 = vmatpush1.bf16.msra.mxu0 0
        %3866 = vmatprep.subr.bf16.mxu0 0
        %3867 = vmatpush1.bf16.msra.mxu0 0
        %3868 = vmatprep.subr.bf16.mxu0 0
        %3869 = vmatpush1.bf16.msra.mxu0 0
        %3870 = vmatprep.subr.bf16.mxu0 0
        %3871 = vmatpush1.bf16.msra.mxu0 0
        %3872 = vmatprep.subr.bf16.mxu0 0
        %3873 = vmatpush1.bf16.msra.mxu0 0
        %3874 = vmatprep.subr.bf16.mxu0 0
        %3875 = vmatpush1.bf16.msra.mxu0 0
        %3876 = vmatprep.subr.bf16.mxu0 0
        %3877 = vmatpush1.bf16.msra.mxu0 0
        %3878 = vmatprep.mubr.bf16.mxu0 0
        %3879 = vmatmul.mubr.bf16.gmra.mrb[0].mxu0 %v3844
        %v3880 = vpop.f32.mrb[0].mxu0
        %v3881 = vadd.f32 0.0, %v3880
        %v3882 = vpop.f32.mrb[0].mxu0
        %v3883 = vpop.f32.mrb[0].mxu0
        %v3884 = vpop.f32.mrb[0].mxu0
        %3885 = vdwg.mxu0
        %v3886 = vadd.f32 %v3824, %v3881
        %v3887 = vshrl.u32 %v1933, 16
        %v3889 = vshll.u32 %v1933, 16
        %v3891 = vrot.slane %v3889, 1
        %v3892 = vor.u32 %v3887, %v3891
        %v3897 = vunpack.c.l.b16 %v568
        %v3898 = vunpack.c.l.b16 %v569
        %v3899 = vunpack.c.l.b16 %v570
        %v3900 = vunpack.c.l.b16 %v571
        %v3901 = vpack.c.b16 %v3898, %v3897
        %v3902 = vpack.c.b16 %v3900, %v3899
        %v3906 = vsel %vm3018, %v3892, 0
        %3908 = vmatprep.subr.bf16.mxu0 0
        %3909 = vmatpush1.bf16.msra.mxu0 %v3901
        %3910 = vmatprep.subr.bf16.mxu0 0
        %3911 = vmatpush1.bf16.msra.mxu0 %v3902
        %3912 = vmatprep.subr.bf16.mxu0 0
        %3913 = vmatpush1.bf16.msra.mxu0 0
        %3914 = vmatprep.subr.bf16.mxu0 0
        %3915 = vmatpush1.bf16.msra.mxu0 0
        %3916 = vmatprep.subr.bf16.mxu0 0
        %3917 = vmatpush1.bf16.msra.mxu0 0
        %3918 = vmatprep.subr.bf16.mxu0 0
        %3919 = vmatpush1.bf16.msra.mxu0 0
        %3920 = vmatprep.subr.bf16.mxu0 0
        %3921 = vmatpush1.bf16.msra.mxu0 0
        %3922 = vmatprep.subr.bf16.mxu0 0
        %3923 = vmatpush1.bf16.msra.mxu0 0
        %3924 = vmatprep.subr.bf16.mxu0 0
        %3925 = vmatpush1.bf16.msra.mxu0 0
        %3926 = vmatprep.subr.bf16.mxu0 0
        %3927 = vmatpush1.bf16.msra.mxu0 0
        %3928 = vmatprep.subr.bf16.mxu0 0
        %3929 = vmatpush1.bf16.msra.mxu0 0
        %3930 = vmatprep.subr.bf16.mxu0 0
        %3931 = vmatpush1.bf16.msra.mxu0 0
        %3932 = vmatprep.subr.bf16.mxu0 0
        %3933 = vmatpush1.bf16.msra.mxu0 0
        %3934 = vmatprep.subr.bf16.mxu0 0
        %3935 = vmatpush1.bf16.msra.mxu0 0
        %3936 = vmatprep.subr.bf16.mxu0 0
        %3937 = vmatpush1.bf16.msra.mxu0 0
        %3938 = vmatprep.subr.bf16.mxu0 0
        %3939 = vmatpush1.bf16.msra.mxu0 0
        %3940 = vmatprep.mubr.bf16.mxu0 0
        %3941 = vmatmul.mubr.bf16.gmra.mrb[0].mxu0 %v3906
        %v3942 = vpop.f32.mrb[0].mxu0
        %v3943 = vadd.f32 0.0, %v3942
        %v3944 = vpop.f32.mrb[0].mxu0
        %v3945 = vpop.f32.mrb[0].mxu0
        %v3946 = vpop.f32.mrb[0].mxu0
        %3947 = vdwg.mxu0
        %v3948 = vadd.f32 %v3886, %v3943
        %v3950 = vlaneseq
        %v3951 = vshrl.u32 %v3950, 7
        %v3952 = vsub.s32 0, %v3951
        %v3953 = vrot.slane %v440, %v3952
        %v3955 = vadd.f32 %v3948, %v3953
        %v3956 = vmax.f32 %v3955, 0.0
        %v3957 = vpack.c.bf16 %v3956, %v3956
        %3958 = vmatprep.subr.bf16.mxu0 0
        %3959 = vmatpush1.bf16.msra.mxu0 %v3014
        %3960 = vmatprep.subr.bf16.mxu0 0
        %3961 = vmatpush1.bf16.msra.mxu0 %v3015
        %3962 = vmatprep.subr.bf16.mxu0 0
        %3963 = vmatpush1.bf16.msra.mxu0 0
        %3964 = vmatprep.subr.bf16.mxu0 0
        %3965 = vmatpush1.bf16.msra.mxu0 0
        %3966 = vmatprep.subr.bf16.mxu0 0
        %3967 = vmatpush1.bf16.msra.mxu0 0
        %3968 = vmatprep.subr.bf16.mxu0 0
        %3969 = vmatpush1.bf16.msra.mxu0 0
        %3970 = vmatprep.subr.bf16.mxu0 0
        %3971 = vmatpush1.bf16.msra.mxu0 0
        %3972 = vmatprep.subr.bf16.mxu0 0
        %3973 = vmatpush1.bf16.msra.mxu0 0
        %3974 = vmatprep.subr.bf16.mxu0 0
        %3975 = vmatpush1.bf16.msra.mxu0 0
        %3976 = vmatprep.subr.bf16.mxu0 0
        %3977 = vmatpush1.bf16.msra.mxu0 0
        %3978 = vmatprep.subr.bf16.mxu0 0
        %3979 = vmatpush1.bf16.msra.mxu0 0
        %3980 = vmatprep.subr.bf16.mxu0 0
        %3981 = vmatpush1.bf16.msra.mxu0 0
        %3982 = vmatprep.subr.bf16.mxu0 0
        %3983 = vmatpush1.bf16.msra.mxu0 0
        %3984 = vmatprep.subr.bf16.mxu0 0
        %3985 = vmatpush1.bf16.msra.mxu0 0
        %3986 = vmatprep.subr.bf16.mxu0 0
        %3987 = vmatpush1.bf16.msra.mxu0 0
        %3988 = vmatprep.subr.bf16.mxu0 0
        %3989 = vmatpush1.bf16.msra.mxu0 0
        %3990 = vmatprep.mubr.bf16.mxu0 0
        %3991 = vmatmul.mubr.bf16.gmra.mrb[0].mxu0 %v3546
        %v3992 = vpop.f32.mrb[0].mxu0
        %v3993 = vadd.f32 0.0, %v3992
        %v3994 = vpop.f32.mrb[0].mxu0
        %v3995 = vpop.f32.mrb[0].mxu0
        %v3996 = vpop.f32.mrb[0].mxu0
        %3997 = vdwg.mxu0
        %3998 = vmatprep.subr.bf16.mxu0 0
        %3999 = vmatpush1.bf16.msra.mxu0 %v3070
        %4000 = vmatprep.subr.bf16.mxu0 0
        %4001 = vmatpush1.bf16.msra.mxu0 %v3071
        %4002 = vmatprep.subr.bf16.mxu0 0
        %4003 = vmatpush1.bf16.msra.mxu0 0
        %4004 = vmatprep.subr.bf16.mxu0 0
        %4005 = vmatpush1.bf16.msra.mxu0 0
        %4006 = vmatprep.subr.bf16.mxu0 0
        %4007 = vmatpush1.bf16.msra.mxu0 0
        %4008 = vmatprep.subr.bf16.mxu0 0
        %4009 = vmatpush1.bf16.msra.mxu0 0
        %4010 = vmatprep.subr.bf16.mxu0 0
        %4011 = vmatpush1.bf16.msra.mxu0 0
        %4012 = vmatprep.subr.bf16.mxu0 0
        %4013 = vmatpush1.bf16.msra.mxu0 0
        %4014 = vmatprep.subr.bf16.mxu0 0
        %4015 = vmatpush1.bf16.msra.mxu0 0
        %4016 = vmatprep.subr.bf16.mxu0 0
        %4017 = vmatpush1.bf16.msra.mxu0 0
        %4018 = vmatprep.subr.bf16.mxu0 0
        %4019 = vmatpush1.bf16.msra.mxu0 0
        %4020 = vmatprep.subr.bf16.mxu0 0
        %4021 = vmatpush1.bf16.msra.mxu0 0
        %4022 = vmatprep.subr.bf16.mxu0 0
        %4023 = vmatpush1.bf16.msra.mxu0 0
        %4024 = vmatprep.subr.bf16.mxu0 0
        %4025 = vmatpush1.bf16.msra.mxu0 0
        %4026 = vmatprep.subr.bf16.mxu0 0
        %4027 = vmatpush1.bf16.msra.mxu0 0
        %4028 = vmatprep.subr.bf16.mxu0 0
        %4029 = vmatpush1.bf16.msra.mxu0 0
        %4030 = vmatprep.mubr.bf16.mxu0 0
        %4031 = vmatmul.mubr.bf16.gmra.mrb[0].mxu0 %v3490
        %v4032 = vpop.f32.mrb[0].mxu0
        %v4033 = vadd.f32 %v3993, %v4032
        %v4034 = vpop.f32.mrb[0].mxu0
        %v4035 = vpop.f32.mrb[0].mxu0
        %v4036 = vpop.f32.mrb[0].mxu0
        %4037 = vdwg.mxu0
        %4038 = vmatprep.subr.bf16.mxu0 0
        %4039 = vmatpush1.bf16.msra.mxu0 %v3131
        %4040 = vmatprep.subr.bf16.mxu0 0
        %4041 = vmatpush1.bf16.msra.mxu0 %v3132
        %4042 = vmatprep.subr.bf16.mxu0 0
        %4043 = vmatpush1.bf16.msra.mxu0 0
        %4044 = vmatprep.subr.bf16.mxu0 0
        %4045 = vmatpush1.bf16.msra.mxu0 0
        %4046 = vmatprep.subr.bf16.mxu0 0
        %4047 = vmatpush1.bf16.msra.mxu0 0
        %4048 = vmatprep.subr.bf16.mxu0 0
        %4049 = vmatpush1.bf16.msra.mxu0 0
        %4050 = vmatprep.subr.bf16.mxu0 0
        %4051 = vmatpush1.bf16.msra.mxu0 0
        %4052 = vmatprep.subr.bf16.mxu0 0
        %4053 = vmatpush1.bf16.msra.mxu0 0
        %4054 = vmatprep.subr.bf16.mxu0 0
        %4055 = vmatpush1.bf16.msra.mxu0 0
        %4056 = vmatprep.subr.bf16.mxu0 0
        %4057 = vmatpush1.bf16.msra.mxu0 0
        %4058 = vmatprep.subr.bf16.mxu0 0
        %4059 = vmatpush1.bf16.msra.mxu0 0
        %4060 = vmatprep.subr.bf16.mxu0 0
        %4061 = vmatpush1.bf16.msra.mxu0 0
        %4062 = vmatprep.subr.bf16.mxu0 0
        %4063 = vmatpush1.bf16.msra.mxu0 0
        %4064 = vmatprep.subr.bf16.mxu0 0
        %4065 = vmatpush1.bf16.msra.mxu0 0
        %4066 = vmatprep.subr.bf16.mxu0 0
        %4067 = vmatpush1.bf16.msra.mxu0 0
        %4068 = vmatprep.subr.bf16.mxu0 0
        %4069 = vmatpush1.bf16.msra.mxu0 0
        %4070 = vmatprep.mubr.bf16.mxu0 0
        %4071 = vmatmul.mubr.bf16.gmra.mrb[0].mxu0 %v3608
        %v4072 = vpop.f32.mrb[0].mxu0
        %v4073 = vadd.f32 0.0, %v4072
        %v4074 = vpop.f32.mrb[0].mxu0
        %v4075 = vpop.f32.mrb[0].mxu0
        %v4076 = vpop.f32.mrb[0].mxu0
        %4077 = vdwg.mxu0
        %v4078 = vadd.f32 %v4033, %v4073
        %4079 = vmatprep.subr.bf16.mxu0 0
        %4080 = vmatpush1.bf16.msra.mxu0 %v3193
        %4081 = vmatprep.subr.bf16.mxu0 0
        %4082 = vmatpush1.bf16.msra.mxu0 %v3194
        %4083 = vmatprep.subr.bf16.mxu0 0
        %4084 = vmatpush1.bf16.msra.mxu0 0
        %4085 = vmatprep.subr.bf16.mxu0 0
        %4086 = vmatpush1.bf16.msra.mxu0 0
        %4087 = vmatprep.subr.bf16.mxu0 0
        %4088 = vmatpush1.bf16.msra.mxu0 0
        %4089 = vmatprep.subr.bf16.mxu0 0
        %4090 = vmatpush1.bf16.msra.mxu0 0
        %4091 = vmatprep.subr.bf16.mxu0 0
        %4092 = vmatpush1.bf16.msra.mxu0 0
        %4093 = vmatprep.subr.bf16.mxu0 0
        %4094 = vmatpush1.bf16.msra.mxu0 0
        %4095 = vmatprep.subr.bf16.mxu0 0
        %4096 = vmatpush1.bf16.msra.mxu0 0
        %4097 = vmatprep.subr.bf16.mxu0 0
        %4098 = vmatpush1.bf16.msra.mxu0 0
        %4099 = vmatprep.subr.bf16.mxu0 0
        %4100 = vmatpush1.bf16.msra.mxu0 0
        %4101 = vmatprep.subr.bf16.mxu0 0
        %4102 = vmatpush1.bf16.msra.mxu0 0
        %4103 = vmatprep.subr.bf16.mxu0 0
        %4104 = vmatpush1.bf16.msra.mxu0 0
        %4105 = vmatprep.subr.bf16.mxu0 0
        %4106 = vmatpush1.bf16.msra.mxu0 0
        %4107 = vmatprep.subr.bf16.mxu0 0
        %4108 = vmatpush1.bf16.msra.mxu0 0
        %4109 = vmatprep.subr.bf16.mxu0 0
        %4110 = vmatpush1.bf16.msra.mxu0 0
        %4111 = vmatprep.mubr.bf16.mxu0 0
        %4112 = vmatmul.mubr.bf16.gmra.mrb[0].mxu0 %v3670
        %v4113 = vpop.f32.mrb[0].mxu0
        %v4114 = vadd.f32 0.0, %v4113
        %v4115 = vpop.f32.mrb[0].mxu0
        %v4116 = vpop.f32.mrb[0].mxu0
        %v4117 = vpop.f32.mrb[0].mxu0
        %4118 = vdwg.mxu0
        %v4119 = vadd.f32 %v4078, %v4114
        %4120 = vmatprep.subr.bf16.mxu0 0
        %4121 = vmatpush1.bf16.msra.mxu0 %v3249
        %4122 = vmatprep.subr.bf16.mxu0 0
        %4123 = vmatpush1.bf16.msra.mxu0 %v3250
        %4124 = vmatprep.subr.bf16.mxu0 0
        %4125 = vmatpush1.bf16.msra.mxu0 0
        %4126 = vmatprep.subr.bf16.mxu0 0
        %4127 = vmatpush1.bf16.msra.mxu0 0
        %4128 = vmatprep.subr.bf16.mxu0 0
        %4129 = vmatpush1.bf16.msra.mxu0 0
        %4130 = vmatprep.subr.bf16.mxu0 0
        %4131 = vmatpush1.bf16.msra.mxu0 0
        %4132 = vmatprep.subr.bf16.mxu0 0
        %4133 = vmatpush1.bf16.msra.mxu0 0
        %4134 = vmatprep.subr.bf16.mxu0 0
        %4135 = vmatpush1.bf16.msra.mxu0 0
        %4136 = vmatprep.subr.bf16.mxu0 0
        %4137 = vmatpush1.bf16.msra.mxu0 0
        %4138 = vmatprep.subr.bf16.mxu0 0
        %4139 = vmatpush1.bf16.msra.mxu0 0
        %4140 = vmatprep.subr.bf16.mxu0 0
        %4141 = vmatpush1.bf16.msra.mxu0 0
        %4142 = vmatprep.subr.bf16.mxu0 0
        %4143 = vmatpush1.bf16.msra.mxu0 0
        %4144 = vmatprep.subr.bf16.mxu0 0
        %4145 = vmatpush1.bf16.msra.mxu0 0
        %4146 = vmatprep.subr.bf16.mxu0 0
        %4147 = vmatpush1.bf16.msra.mxu0 0
        %4148 = vmatprep.subr.bf16.mxu0 0
        %4149 = vmatpush1.bf16.msra.mxu0 0
        %4150 = vmatprep.subr.bf16.mxu0 0
        %4151 = vmatpush1.bf16.msra.mxu0 0
        %4152 = vmatprep.mubr.bf16.mxu0 0
        %4153 = vmatmul.mubr.bf16.gmra.mrb[0].mxu0 %v3726
        %v4154 = vpop.f32.mrb[0].mxu0
        %v4155 = vadd.f32 0.0, %v4154
        %v4156 = vpop.f32.mrb[0].mxu0
        %v4157 = vpop.f32.mrb[0].mxu0
        %v4158 = vpop.f32.mrb[0].mxu0
        %4159 = vdwg.mxu0
        %v4160 = vadd.f32 %v4119, %v4155
        %4161 = vmatprep.subr.bf16.mxu0 0
        %4162 = vmatpush1.bf16.msra.mxu0 %v3305
        %4163 = vmatprep.subr.bf16.mxu0 0
        %4164 = vmatpush1.bf16.msra.mxu0 %v3306
        %4165 = vmatprep.subr.bf16.mxu0 0
        %4166 = vmatpush1.bf16.msra.mxu0 0
        %4167 = vmatprep.subr.bf16.mxu0 0
        %4168 = vmatpush1.bf16.msra.mxu0 0
        %4169 = vmatprep.subr.bf16.mxu0 0
        %4170 = vmatpush1.bf16.msra.mxu0 0
        %4171 = vmatprep.subr.bf16.mxu0 0
        %4172 = vmatpush1.bf16.msra.mxu0 0
        %4173 = vmatprep.subr.bf16.mxu0 0
        %4174 = vmatpush1.bf16.msra.mxu0 0
        %4175 = vmatprep.subr.bf16.mxu0 0
        %4176 = vmatpush1.bf16.msra.mxu0 0
        %4177 = vmatprep.subr.bf16.mxu0 0
        %4178 = vmatpush1.bf16.msra.mxu0 0
        %4179 = vmatprep.subr.bf16.mxu0 0
        %4180 = vmatpush1.bf16.msra.mxu0 0
        %4181 = vmatprep.subr.bf16.mxu0 0
        %4182 = vmatpush1.bf16.msra.mxu0 0
        %4183 = vmatprep.subr.bf16.mxu0 0
        %4184 = vmatpush1.bf16.msra.mxu0 0
        %4185 = vmatprep.subr.bf16.mxu0 0
        %4186 = vmatpush1.bf16.msra.mxu0 0
        %4187 = vmatprep.subr.bf16.mxu0 0
        %4188 = vmatpush1.bf16.msra.mxu0 0
        %4189 = vmatprep.subr.bf16.mxu0 0
        %4190 = vmatpush1.bf16.msra.mxu0 0
        %4191 = vmatprep.subr.bf16.mxu0 0
        %4192 = vmatpush1.bf16.msra.mxu0 0
        %4193 = vmatprep.mubr.bf16.mxu0 0
        %4194 = vmatmul.mubr.bf16.gmra.mrb[0].mxu0 %v3782
        %v4195 = vpop.f32.mrb[0].mxu0
        %v4196 = vadd.f32 0.0, %v4195
        %v4197 = vpop.f32.mrb[0].mxu0
        %v4198 = vpop.f32.mrb[0].mxu0
        %v4199 = vpop.f32.mrb[0].mxu0
        %4200 = vdwg.mxu0
        %v4201 = vadd.f32 %v4160, %v4196
        %4202 = vmatprep.subr.bf16.mxu0 0
        %4203 = vmatpush1.bf16.msra.mxu0 %v3367
        %4204 = vmatprep.subr.bf16.mxu0 0
        %4205 = vmatpush1.bf16.msra.mxu0 %v3368
        %4206 = vmatprep.subr.bf16.mxu0 0
        %4207 = vmatpush1.bf16.msra.mxu0 0
        %4208 = vmatprep.subr.bf16.mxu0 0
        %4209 = vmatpush1.bf16.msra.mxu0 0
        %4210 = vmatprep.subr.bf16.mxu0 0
        %4211 = vmatpush1.bf16.msra.mxu0 0
        %4212 = vmatprep.subr.bf16.mxu0 0
        %4213 = vmatpush1.bf16.msra.mxu0 0
        %4214 = vmatprep.subr.bf16.mxu0 0
        %4215 = vmatpush1.bf16.msra.mxu0 0
        %4216 = vmatprep.subr.bf16.mxu0 0
        %4217 = vmatpush1.bf16.msra.mxu0 0
        %4218 = vmatprep.subr.bf16.mxu0 0
        %4219 = vmatpush1.bf16.msra.mxu0 0
        %4220 = vmatprep.subr.bf16.mxu0 0
        %4221 = vmatpush1.bf16.msra.mxu0 0
        %4222 = vmatprep.subr.bf16.mxu0 0
        %4223 = vmatpush1.bf16.msra.mxu0 0
        %4224 = vmatprep.subr.bf16.mxu0 0
        %4225 = vmatpush1.bf16.msra.mxu0 0
        %4226 = vmatprep.subr.bf16.mxu0 0
        %4227 = vmatpush1.bf16.msra.mxu0 0
        %4228 = vmatprep.subr.bf16.mxu0 0
        %4229 = vmatpush1.bf16.msra.mxu0 0
        %4230 = vmatprep.subr.bf16.mxu0 0
        %4231 = vmatpush1.bf16.msra.mxu0 0
        %4232 = vmatprep.subr.bf16.mxu0 0
        %4233 = vmatpush1.bf16.msra.mxu0 0
        %4234 = vmatprep.mubr.bf16.mxu0 0
        %4235 = vmatmul.mubr.bf16.gmra.mrb[0].mxu0 %v3844
        %v4236 = vpop.f32.mrb[0].mxu0
        %v4237 = vadd.f32 0.0, %v4236
        %v4238 = vpop.f32.mrb[0].mxu0
        %v4239 = vpop.f32.mrb[0].mxu0
        %v4240 = vpop.f32.mrb[0].mxu0
        %4241 = vdwg.mxu0
        %v4242 = vadd.f32 %v4201, %v4237
        %4243 = vmatprep.subr.bf16.mxu0 0
        %4244 = vmatpush1.bf16.msra.mxu0 %v3429
        %4245 = vmatprep.subr.bf16.mxu0 0
        %4246 = vmatpush1.bf16.msra.mxu0 %v3430
        %4247 = vmatprep.subr.bf16.mxu0 0
        %4248 = vmatpush1.bf16.msra.mxu0 0
        %4249 = vmatprep.subr.bf16.mxu0 0
        %4250 = vmatpush1.bf16.msra.mxu0 0
        %4251 = vmatprep.subr.bf16.mxu0 0
        %4252 = vmatpush1.bf16.msra.mxu0 0
        %4253 = vmatprep.subr.bf16.mxu0 0
        %4254 = vmatpush1.bf16.msra.mxu0 0
        %4255 = vmatprep.subr.bf16.mxu0 0
        %4256 = vmatpush1.bf16.msra.mxu0 0
        %4257 = vmatprep.subr.bf16.mxu0 0
        %4258 = vmatpush1.bf16.msra.mxu0 0
        %4259 = vmatprep.subr.bf16.mxu0 0
        %4260 = vmatpush1.bf16.msra.mxu0 0
        %4261 = vmatprep.subr.bf16.mxu0 0
        %4262 = vmatpush1.bf16.msra.mxu0 0
        %4263 = vmatprep.subr.bf16.mxu0 0
        %4264 = vmatpush1.bf16.msra.mxu0 0
        %4265 = vmatprep.subr.bf16.mxu0 0
        %4266 = vmatpush1.bf16.msra.mxu0 0
        %4267 = vmatprep.subr.bf16.mxu0 0
        %4268 = vmatpush1.bf16.msra.mxu0 0
        %4269 = vmatprep.subr.bf16.mxu0 0
        %4270 = vmatpush1.bf16.msra.mxu0 0
        %4271 = vmatprep.subr.bf16.mxu0 0
        %4272 = vmatpush1.bf16.msra.mxu0 0
        %4273 = vmatprep.subr.bf16.mxu0 0
        %4274 = vmatpush1.bf16.msra.mxu0 0
        %4275 = vmatprep.mubr.bf16.mxu0 0
        %4276 = vmatmul.mubr.bf16.gmra.mrb[0].mxu0 %v3906
        %v4277 = vpop.f32.mrb[0].mxu0
        %v4278 = vadd.f32 0.0, %v4277
        %v4279 = vpop.f32.mrb[0].mxu0
        %v4280 = vpop.f32.mrb[0].mxu0
        %v4281 = vpop.f32.mrb[0].mxu0
        %4282 = vdwg.mxu0
        %v4283 = vadd.f32 %v4242, %v4278
        %v4285 = vsel %vm3018, %v2198, 0
        %4287 = vmatprep.subr.bf16.mxu0 0
        %4288 = vmatpush1.bf16.msra.mxu0 %v3485
        %4289 = vmatprep.subr.bf16.mxu0 0
        %4290 = vmatpush1.bf16.msra.mxu0 %v3486
        %4291 = vmatprep.subr.bf16.mxu0 0
        %4292 = vmatpush1.bf16.msra.mxu0 0
        %4293 = vmatprep.subr.bf16.mxu0 0
        %4294 = vmatpush1.bf16.msra.mxu0 0
        %4295 = vmatprep.subr.bf16.mxu0 0
        %4296 = vmatpush1.bf16.msra.mxu0 0
        %4297 = vmatprep.subr.bf16.mxu0 0
        %4298 = vmatpush1.bf16.msra.mxu0 0
        %4299 = vmatprep.subr.bf16.mxu0 0
        %4300 = vmatpush1.bf16.msra.mxu0 0
        %4301 = vmatprep.subr.bf16.mxu0 0
        %4302 = vmatpush1.bf16.msra.mxu0 0
        %4303 = vmatprep.subr.bf16.mxu0 0
        %4304 = vmatpush1.bf16.msra.mxu0 0
        %4305 = vmatprep.subr.bf16.mxu0 0
        %4306 = vmatpush1.bf16.msra.mxu0 0
        %4307 = vmatprep.subr.bf16.mxu0 0
        %4308 = vmatpush1.bf16.msra.mxu0 0
        %4309 = vmatprep.subr.bf16.mxu0 0
        %4310 = vmatpush1.bf16.msra.mxu0 0
        %4311 = vmatprep.subr.bf16.mxu0 0
        %4312 = vmatpush1.bf16.msra.mxu0 0
        %4313 = vmatprep.subr.bf16.mxu0 0
        %4314 = vmatpush1.bf16.msra.mxu0 0
        %4315 = vmatprep.subr.bf16.mxu0 0
        %4316 = vmatpush1.bf16.msra.mxu0 0
        %4317 = vmatprep.subr.bf16.mxu0 0
        %4318 = vmatpush1.bf16.msra.mxu0 0
        %4319 = vmatprep.mubr.bf16.mxu0 0
        %4320 = vmatmul.mubr.bf16.gmra.mrb[0].mxu0 %v4285
        %v4321 = vpop.f32.mrb[0].mxu0
        %v4322 = vadd.f32 0.0, %v4321
        %v4323 = vpop.f32.mrb[0].mxu0
        %v4324 = vpop.f32.mrb[0].mxu0
        %v4325 = vpop.f32.mrb[0].mxu0
        %4326 = vdwg.mxu0
        %v4327 = vadd.f32 %v4283, %v4322
        %v4329 = vsel %vm3018, %v2201, 0
        %4331 = vmatprep.subr.bf16.mxu0 0
        %4332 = vmatpush1.bf16.msra.mxu0 %v3541
        %4333 = vmatprep.subr.bf16.mxu0 0
        %4334 = vmatpush1.bf16.msra.mxu0 %v3542
        %4335 = vmatprep.subr.bf16.mxu0 0
        %4336 = vmatpush1.bf16.msra.mxu0 0
        %4337 = vmatprep.subr.bf16.mxu0 0
        %4338 = vmatpush1.bf16.msra.mxu0 0
        %4339 = vmatprep.subr.bf16.mxu0 0
        %4340 = vmatpush1.bf16.msra.mxu0 0
        %4341 = vmatprep.subr.bf16.mxu0 0
        %4342 = vmatpush1.bf16.msra.mxu0 0
        %4343 = vmatprep.subr.bf16.mxu0 0
        %4344 = vmatpush1.bf16.msra.mxu0 0
        %4345 = vmatprep.subr.bf16.mxu0 0
        %4346 = vmatpush1.bf16.msra.mxu0 0
        %4347 = vmatprep.subr.bf16.mxu0 0
        %4348 = vmatpush1.bf16.msra.mxu0 0
        %4349 = vmatprep.subr.bf16.mxu0 0
        %4350 = vmatpush1.bf16.msra.mxu0 0
        %4351 = vmatprep.subr.bf16.mxu0 0
        %4352 = vmatpush1.bf16.msra.mxu0 0
        %4353 = vmatprep.subr.bf16.mxu0 0
        %4354 = vmatpush1.bf16.msra.mxu0 0
        %4355 = vmatprep.subr.bf16.mxu0 0
        %4356 = vmatpush1.bf16.msra.mxu0 0
        %4357 = vmatprep.subr.bf16.mxu0 0
        %4358 = vmatpush1.bf16.msra.mxu0 0
        %4359 = vmatprep.subr.bf16.mxu0 0
        %4360 = vmatpush1.bf16.msra.mxu0 0
        %4361 = vmatprep.subr.bf16.mxu0 0
        %4362 = vmatpush1.bf16.msra.mxu0 0
        %4363 = vmatprep.mubr.bf16.mxu0 0
        %4364 = vmatmul.mubr.bf16.gmra.mrb[0].mxu0 %v4329
        %v4365 = vpop.f32.mrb[0].mxu0
        %v4366 = vadd.f32 0.0, %v4365
        %v4367 = vpop.f32.mrb[0].mxu0
        %v4368 = vpop.f32.mrb[0].mxu0
        %v4369 = vpop.f32.mrb[0].mxu0
        %4370 = vdwg.mxu0
        %v4371 = vadd.f32 %v4327, %v4366
        %v4372 = vshrl.u32 %v2198, 16
        %v4374 = vshll.u32 %v2198, 16
        %v4376 = vrot.slane %v4374, 1
        %v4377 = vor.u32 %v4372, %v4376
        %v4379 = vsel %vm3018, %v4377, 0
        %4381 = vmatprep.subr.bf16.mxu0 0
        %4382 = vmatpush1.bf16.msra.mxu0 %v3603
        %4383 = vmatprep.subr.bf16.mxu0 0
        %4384 = vmatpush1.bf16.msra.mxu0 %v3604
        %4385 = vmatprep.subr.bf16.mxu0 0
        %4386 = vmatpush1.bf16.msra.mxu0 0
        %4387 = vmatprep.subr.bf16.mxu0 0
        %4388 = vmatpush1.bf16.msra.mxu0 0
        %4389 = vmatprep.subr.bf16.mxu0 0
        %4390 = vmatpush1.bf16.msra.mxu0 0
        %4391 = vmatprep.subr.bf16.mxu0 0
        %4392 = vmatpush1.bf16.msra.mxu0 0
        %4393 = vmatprep.subr.bf16.mxu0 0
        %4394 = vmatpush1.bf16.msra.mxu0 0
        %4395 = vmatprep.subr.bf16.mxu0 0
        %4396 = vmatpush1.bf16.msra.mxu0 0
        %4397 = vmatprep.subr.bf16.mxu0 0
        %4398 = vmatpush1.bf16.msra.mxu0 0
        %4399 = vmatprep.subr.bf16.mxu0 0
        %4400 = vmatpush1.bf16.msra.mxu0 0
        %4401 = vmatprep.subr.bf16.mxu0 0
        %4402 = vmatpush1.bf16.msra.mxu0 0
        %4403 = vmatprep.subr.bf16.mxu0 0
        %4404 = vmatpush1.bf16.msra.mxu0 0
        %4405 = vmatprep.subr.bf16.mxu0 0
        %4406 = vmatpush1.bf16.msra.mxu0 0
        %4407 = vmatprep.subr.bf16.mxu0 0
        %4408 = vmatpush1.bf16.msra.mxu0 0
        %4409 = vmatprep.subr.bf16.mxu0 0
        %4410 = vmatpush1.bf16.msra.mxu0 0
        %4411 = vmatprep.subr.bf16.mxu0 0
        %4412 = vmatpush1.bf16.msra.mxu0 0
        %4413 = vmatprep.mubr.bf16.mxu0 0
        %4414 = vmatmul.mubr.bf16.gmra.mrb[0].mxu0 %v4379
        %v4415 = vpop.f32.mrb[0].mxu0
        %v4416 = vadd.f32 0.0, %v4415
        %v4417 = vpop.f32.mrb[0].mxu0
        %v4418 = vpop.f32.mrb[0].mxu0
        %v4419 = vpop.f32.mrb[0].mxu0
        %4420 = vdwg.mxu0
        %v4421 = vadd.f32 %v4371, %v4416
        %v4422 = vshrl.u32 %v2201, 16
        %v4424 = vshll.u32 %v2201, 16
        %v4426 = vrot.slane %v4424, 1
        %v4427 = vor.u32 %v4422, %v4426
        %v4429 = vsel %vm3018, %v4427, 0
        %4431 = vmatprep.subr.bf16.mxu0 0
        %4432 = vmatpush1.bf16.msra.mxu0 %v3665
        %4433 = vmatprep.subr.bf16.mxu0 0
        %4434 = vmatpush1.bf16.msra.mxu0 %v3666
        %4435 = vmatprep.subr.bf16.mxu0 0
        %4436 = vmatpush1.bf16.msra.mxu0 0
        %4437 = vmatprep.subr.bf16.mxu0 0
        %4438 = vmatpush1.bf16.msra.mxu0 0
        %4439 = vmatprep.subr.bf16.mxu0 0
        %4440 = vmatpush1.bf16.msra.mxu0 0
        %4441 = vmatprep.subr.bf16.mxu0 0
        %4442 = vmatpush1.bf16.msra.mxu0 0
        %4443 = vmatprep.subr.bf16.mxu0 0
        %4444 = vmatpush1.bf16.msra.mxu0 0
        %4445 = vmatprep.subr.bf16.mxu0 0
        %4446 = vmatpush1.bf16.msra.mxu0 0
        %4447 = vmatprep.subr.bf16.mxu0 0
        %4448 = vmatpush1.bf16.msra.mxu0 0
        %4449 = vmatprep.subr.bf16.mxu0 0
        %4450 = vmatpush1.bf16.msra.mxu0 0
        %4451 = vmatprep.subr.bf16.mxu0 0
        %4452 = vmatpush1.bf16.msra.mxu0 0
        %4453 = vmatprep.subr.bf16.mxu0 0
        %4454 = vmatpush1.bf16.msra.mxu0 0
        %4455 = vmatprep.subr.bf16.mxu0 0
        %4456 = vmatpush1.bf16.msra.mxu0 0
        %4457 = vmatprep.subr.bf16.mxu0 0
        %4458 = vmatpush1.bf16.msra.mxu0 0
        %4459 = vmatprep.subr.bf16.mxu0 0
        %4460 = vmatpush1.bf16.msra.mxu0 0
        %4461 = vmatprep.subr.bf16.mxu0 0
        %4462 = vmatpush1.bf16.msra.mxu0 0
        %4463 = vmatprep.mubr.bf16.mxu0 0
        %4464 = vmatmul.mubr.bf16.gmra.mrb[0].mxu0 %v4429
        %v4465 = vpop.f32.mrb[0].mxu0
        %v4466 = vadd.f32 0.0, %v4465
        %v4467 = vpop.f32.mrb[0].mxu0
        %v4468 = vpop.f32.mrb[0].mxu0
        %v4469 = vpop.f32.mrb[0].mxu0
        %4470 = vdwg.mxu0
        %v4471 = vadd.f32 %v4421, %v4466
        %v4473 = vsel %vm3018, %v2466, 0
        %4475 = vmatprep.subr.bf16.mxu0 0
        %4476 = vmatpush1.bf16.msra.mxu0 %v3721
        %4477 = vmatprep.subr.bf16.mxu0 0
        %4478 = vmatpush1.bf16.msra.mxu0 %v3722
        %4479 = vmatprep.subr.bf16.mxu0 0
        %4480 = vmatpush1.bf16.msra.mxu0 0
        %4481 = vmatprep.subr.bf16.mxu0 0
        %4482 = vmatpush1.bf16.msra.mxu0 0
        %4483 = vmatprep.subr.bf16.mxu0 0
        %4484 = vmatpush1.bf16.msra.mxu0 0
        %4485 = vmatprep.subr.bf16.mxu0 0
        %4486 = vmatpush1.bf16.msra.mxu0 0
        %4487 = vmatprep.subr.bf16.mxu0 0
        %4488 = vmatpush1.bf16.msra.mxu0 0
        %4489 = vmatprep.subr.bf16.mxu0 0
        %4490 = vmatpush1.bf16.msra.mxu0 0
        %4491 = vmatprep.subr.bf16.mxu0 0
        %4492 = vmatpush1.bf16.msra.mxu0 0
        %4493 = vmatprep.subr.bf16.mxu0 0
        %4494 = vmatpush1.bf16.msra.mxu0 0
        %4495 = vmatprep.subr.bf16.mxu0 0
        %4496 = vmatpush1.bf16.msra.mxu0 0
        %4497 = vmatprep.subr.bf16.mxu0 0
        %4498 = vmatpush1.bf16.msra.mxu0 0
        %4499 = vmatprep.subr.bf16.mxu0 0
        %4500 = vmatpush1.bf16.msra.mxu0 0
        %4501 = vmatprep.subr.bf16.mxu0 0
        %4502 = vmatpush1.bf16.msra.mxu0 0
        %4503 = vmatprep.subr.bf16.mxu0 0
        %4504 = vmatpush1.bf16.msra.mxu0 0
        %4505 = vmatprep.subr.bf16.mxu0 0
        %4506 = vmatpush1.bf16.msra.mxu0 0
        %4507 = vmatprep.mubr.bf16.mxu0 0
        %4508 = vmatmul.mubr.bf16.gmra.mrb[0].mxu0 %v4473
        %v4509 = vpop.f32.mrb[0].mxu0
        %v4510 = vadd.f32 0.0, %v4509
        %v4511 = vpop.f32.mrb[0].mxu0
        %v4512 = vpop.f32.mrb[0].mxu0
        %v4513 = vpop.f32.mrb[0].mxu0
        %4514 = vdwg.mxu0
        %v4515 = vadd.f32 %v4471, %v4510
        %v4517 = vsel %vm3018, %v2469, 0
        %4519 = vmatprep.subr.bf16.mxu0 0
        %4520 = vmatpush1.bf16.msra.mxu0 %v3777
        %4521 = vmatprep.subr.bf16.mxu0 0
        %4522 = vmatpush1.bf16.msra.mxu0 %v3778
        %4523 = vmatprep.subr.bf16.mxu0 0
        %4524 = vmatpush1.bf16.msra.mxu0 0
        %4525 = vmatprep.subr.bf16.mxu0 0
        %4526 = vmatpush1.bf16.msra.mxu0 0
        %4527 = vmatprep.subr.bf16.mxu0 0
        %4528 = vmatpush1.bf16.msra.mxu0 0
        %4529 = vmatprep.subr.bf16.mxu0 0
        %4530 = vmatpush1.bf16.msra.mxu0 0
        %4531 = vmatprep.subr.bf16.mxu0 0
        %4532 = vmatpush1.bf16.msra.mxu0 0
        %4533 = vmatprep.subr.bf16.mxu0 0
        %4534 = vmatpush1.bf16.msra.mxu0 0
        %4535 = vmatprep.subr.bf16.mxu0 0
        %4536 = vmatpush1.bf16.msra.mxu0 0
        %4537 = vmatprep.subr.bf16.mxu0 0
        %4538 = vmatpush1.bf16.msra.mxu0 0
        %4539 = vmatprep.subr.bf16.mxu0 0
        %4540 = vmatpush1.bf16.msra.mxu0 0
        %4541 = vmatprep.subr.bf16.mxu0 0
        %4542 = vmatpush1.bf16.msra.mxu0 0
        %4543 = vmatprep.subr.bf16.mxu0 0
        %4544 = vmatpush1.bf16.msra.mxu0 0
        %4545 = vmatprep.subr.bf16.mxu0 0
        %4546 = vmatpush1.bf16.msra.mxu0 0
        %4547 = vmatprep.subr.bf16.mxu0 0
        %4548 = vmatpush1.bf16.msra.mxu0 0
        %4549 = vmatprep.subr.bf16.mxu0 0
        %4550 = vmatpush1.bf16.msra.mxu0 0
        %4551 = vmatprep.mubr.bf16.mxu0 0
        %4552 = vmatmul.mubr.bf16.gmra.mrb[0].mxu0 %v4517
        %v4553 = vpop.f32.mrb[0].mxu0
        %v4554 = vadd.f32 0.0, %v4553
        %v4555 = vpop.f32.mrb[0].mxu0
        %v4556 = vpop.f32.mrb[0].mxu0
        %v4557 = vpop.f32.mrb[0].mxu0
        %4558 = vdwg.mxu0
        %v4559 = vadd.f32 %v4515, %v4554
        %v4560 = vshrl.u32 %v2466, 16
        %v4562 = vshll.u32 %v2466, 16
        %v4564 = vrot.slane %v4562, 1
        %v4565 = vor.u32 %v4560, %v4564
        %v4567 = vsel %vm3018, %v4565, 0
        %4569 = vmatprep.subr.bf16.mxu0 0
        %4570 = vmatpush1.bf16.msra.mxu0 %v3839
        %4571 = vmatprep.subr.bf16.mxu0 0
        %4572 = vmatpush1.bf16.msra.mxu0 %v3840
        %4573 = vmatprep.subr.bf16.mxu0 0
        %4574 = vmatpush1.bf16.msra.mxu0 0
        %4575 = vmatprep.subr.bf16.mxu0 0
        %4576 = vmatpush1.bf16.msra.mxu0 0
        %4577 = vmatprep.subr.bf16.mxu0 0
        %4578 = vmatpush1.bf16.msra.mxu0 0
        %4579 = vmatprep.subr.bf16.mxu0 0
        %4580 = vmatpush1.bf16.msra.mxu0 0
        %4581 = vmatprep.subr.bf16.mxu0 0
        %4582 = vmatpush1.bf16.msra.mxu0 0
        %4583 = vmatprep.subr.bf16.mxu0 0
        %4584 = vmatpush1.bf16.msra.mxu0 0
        %4585 = vmatprep.subr.bf16.mxu0 0
        %4586 = vmatpush1.bf16.msra.mxu0 0
        %4587 = vmatprep.subr.bf16.mxu0 0
        %4588 = vmatpush1.bf16.msra.mxu0 0
        %4589 = vmatprep.subr.bf16.mxu0 0
        %4590 = vmatpush1.bf16.msra.mxu0 0
        %4591 = vmatprep.subr.bf16.mxu0 0
        %4592 = vmatpush1.bf16.msra.mxu0 0
        %4593 = vmatprep.subr.bf16.mxu0 0
        %4594 = vmatpush1.bf16.msra.mxu0 0
        %4595 = vmatprep.subr.bf16.mxu0 0
        %4596 = vmatpush1.bf16.msra.mxu0 0
        %4597 = vmatprep.subr.bf16.mxu0 0
        %4598 = vmatpush1.bf16.msra.mxu0 0
        %4599 = vmatprep.subr.bf16.mxu0 0
        %4600 = vmatpush1.bf16.msra.mxu0 0
        %4601 = vmatprep.mubr.bf16.mxu0 0
        %4602 = vmatmul.mubr.bf16.gmra.mrb[0].mxu0 %v4567
        %v4603 = vpop.f32.mrb[0].mxu0
        %v4604 = vadd.f32 0.0, %v4603
        %v4605 = vpop.f32.mrb[0].mxu0
        %v4606 = vpop.f32.mrb[0].mxu0
        %v4607 = vpop.f32.mrb[0].mxu0
        %4608 = vdwg.mxu0
        %v4609 = vadd.f32 %v4559, %v4604
        %v4610 = vshrl.u32 %v2469, 16
        %v4612 = vshll.u32 %v2469, 16
        %v4614 = vrot.slane %v4612, 1
        %v4615 = vor.u32 %v4610, %v4614
        %v4617 = vsel %vm3018, %v4615, 0
        %4619 = vmatprep.subr.bf16.mxu0 0
        %4620 = vmatpush1.bf16.msra.mxu0 %v3901
        %4621 = vmatprep.subr.bf16.mxu0 0
        %4622 = vmatpush1.bf16.msra.mxu0 %v3902
        %4623 = vmatprep.subr.bf16.mxu0 0
        %4624 = vmatpush1.bf16.msra.mxu0 0
        %4625 = vmatprep.subr.bf16.mxu0 0
        %4626 = vmatpush1.bf16.msra.mxu0 0
        %4627 = vmatprep.subr.bf16.mxu0 0
        %4628 = vmatpush1.bf16.msra.mxu0 0
        %4629 = vmatprep.subr.bf16.mxu0 0
        %4630 = vmatpush1.bf16.msra.mxu0 0
        %4631 = vmatprep.subr.bf16.mxu0 0
        %4632 = vmatpush1.bf16.msra.mxu0 0
        %4633 = vmatprep.subr.bf16.mxu0 0
        %4634 = vmatpush1.bf16.msra.mxu0 0
        %4635 = vmatprep.subr.bf16.mxu0 0
        %4636 = vmatpush1.bf16.msra.mxu0 0
        %4637 = vmatprep.subr.bf16.mxu0 0
        %4638 = vmatpush1.bf16.msra.mxu0 0
        %4639 = vmatprep.subr.bf16.mxu0 0
        %4640 = vmatpush1.bf16.msra.mxu0 0
        %4641 = vmatprep.subr.bf16.mxu0 0
        %4642 = vmatpush1.bf16.msra.mxu0 0
        %4643 = vmatprep.subr.bf16.mxu0 0
        %4644 = vmatpush1.bf16.msra.mxu0 0
        %4645 = vmatprep.subr.bf16.mxu0 0
        %4646 = vmatpush1.bf16.msra.mxu0 0
        %4647 = vmatprep.subr.bf16.mxu0 0
        %4648 = vmatpush1.bf16.msra.mxu0 0
        %4649 = vmatprep.subr.bf16.mxu0 0
        %4650 = vmatpush1.bf16.msra.mxu0 0
        %4651 = vmatprep.mubr.bf16.mxu0 0
        %4652 = vmatmul.mubr.bf16.gmra.mrb[0].mxu0 %v4617
        %v4653 = vpop.f32.mrb[0].mxu0
        %v4654 = vadd.f32 0.0, %v4653
        %v4655 = vpop.f32.mrb[0].mxu0
        %v4656 = vpop.f32.mrb[0].mxu0
        %v4657 = vpop.f32.mrb[0].mxu0
        %4658 = vdwg.mxu0
        %v4659 = vadd.f32 %v4609, %v4654
        %v4660 = vadd.f32 %v4659, %v3953
        %v4661 = vmax.f32 %v4660, 0.0
        %v4662 = vpack.c.bf16 %v4661, %v4661
        %4663 = vmatprep.subr.bf16.mxu0 0
        %4664 = vmatpush1.bf16.msra.mxu0 %v3014
        %4665 = vmatprep.subr.bf16.mxu0 0
        %4666 = vmatpush1.bf16.msra.mxu0 %v3015
        %4667 = vmatprep.subr.bf16.mxu0 0
        %4668 = vmatpush1.bf16.msra.mxu0 0
        %4669 = vmatprep.subr.bf16.mxu0 0
        %4670 = vmatpush1.bf16.msra.mxu0 0
        %4671 = vmatprep.subr.bf16.mxu0 0
        %4672 = vmatpush1.bf16.msra.mxu0 0
        %4673 = vmatprep.subr.bf16.mxu0 0
        %4674 = vmatpush1.bf16.msra.mxu0 0
        %4675 = vmatprep.subr.bf16.mxu0 0
        %4676 = vmatpush1.bf16.msra.mxu0 0
        %4677 = vmatprep.subr.bf16.mxu0 0
        %4678 = vmatpush1.bf16.msra.mxu0 0
        %4679 = vmatprep.subr.bf16.mxu0 0
        %4680 = vmatpush1.bf16.msra.mxu0 0
        %4681 = vmatprep.subr.bf16.mxu0 0
        %4682 = vmatpush1.bf16.msra.mxu0 0
        %4683 = vmatprep.subr.bf16.mxu0 0
        %4684 = vmatpush1.bf16.msra.mxu0 0
        %4685 = vmatprep.subr.bf16.mxu0 0
        %4686 = vmatpush1.bf16.msra.mxu0 0
        %4687 = vmatprep.subr.bf16.mxu0 0
        %4688 = vmatpush1.bf16.msra.mxu0 0
        %4689 = vmatprep.subr.bf16.mxu0 0
        %4690 = vmatpush1.bf16.msra.mxu0 0
        %4691 = vmatprep.subr.bf16.mxu0 0
        %4692 = vmatpush1.bf16.msra.mxu0 0
        %4693 = vmatprep.subr.bf16.mxu0 0
        %4694 = vmatpush1.bf16.msra.mxu0 0
        %4695 = vmatprep.mubr.bf16.mxu0 0
        %4696 = vmatmul.mubr.bf16.gmra.mrb[0].mxu0 %v4329
        %v4697 = vpop.f32.mrb[0].mxu0
        %v4698 = vadd.f32 0.0, %v4697
        %v4699 = vpop.f32.mrb[0].mxu0
        %v4700 = vpop.f32.mrb[0].mxu0
        %v4701 = vpop.f32.mrb[0].mxu0
        %4702 = vdwg.mxu0
        %4703 = vmatprep.subr.bf16.mxu0 0
        %4704 = vmatpush1.bf16.msra.mxu0 %v3070
        %4705 = vmatprep.subr.bf16.mxu0 0
        %4706 = vmatpush1.bf16.msra.mxu0 %v3071
        %4707 = vmatprep.subr.bf16.mxu0 0
        %4708 = vmatpush1.bf16.msra.mxu0 0
        %4709 = vmatprep.subr.bf16.mxu0 0
        %4710 = vmatpush1.bf16.msra.mxu0 0
        %4711 = vmatprep.subr.bf16.mxu0 0
        %4712 = vmatpush1.bf16.msra.mxu0 0
        %4713 = vmatprep.subr.bf16.mxu0 0
        %4714 = vmatpush1.bf16.msra.mxu0 0
        %4715 = vmatprep.subr.bf16.mxu0 0
        %4716 = vmatpush1.bf16.msra.mxu0 0
        %4717 = vmatprep.subr.bf16.mxu0 0
        %4718 = vmatpush1.bf16.msra.mxu0 0
        %4719 = vmatprep.subr.bf16.mxu0 0
        %4720 = vmatpush1.bf16.msra.mxu0 0
        %4721 = vmatprep.subr.bf16.mxu0 0
        %4722 = vmatpush1.bf16.msra.mxu0 0
        %4723 = vmatprep.subr.bf16.mxu0 0
        %4724 = vmatpush1.bf16.msra.mxu0 0
        %4725 = vmatprep.subr.bf16.mxu0 0
        %4726 = vmatpush1.bf16.msra.mxu0 0
        %4727 = vmatprep.subr.bf16.mxu0 0
        %4728 = vmatpush1.bf16.msra.mxu0 0
        %4729 = vmatprep.subr.bf16.mxu0 0
        %4730 = vmatpush1.bf16.msra.mxu0 0
        %4731 = vmatprep.subr.bf16.mxu0 0
        %4732 = vmatpush1.bf16.msra.mxu0 0
        %4733 = vmatprep.subr.bf16.mxu0 0
        %4734 = vmatpush1.bf16.msra.mxu0 0
        %4735 = vmatprep.mubr.bf16.mxu0 0
        %4736 = vmatmul.mubr.bf16.gmra.mrb[0].mxu0 %v4285
        %v4737 = vpop.f32.mrb[0].mxu0
        %v4738 = vadd.f32 %v4698, %v4737
        %v4739 = vpop.f32.mrb[0].mxu0
        %v4740 = vpop.f32.mrb[0].mxu0
        %v4741 = vpop.f32.mrb[0].mxu0
        %4742 = vdwg.mxu0
        %4743 = vmatprep.subr.bf16.mxu0 0
        %4744 = vmatpush1.bf16.msra.mxu0 %v3131
        %4745 = vmatprep.subr.bf16.mxu0 0
        %4746 = vmatpush1.bf16.msra.mxu0 %v3132
        %4747 = vmatprep.subr.bf16.mxu0 0
        %4748 = vmatpush1.bf16.msra.mxu0 0
        %4749 = vmatprep.subr.bf16.mxu0 0
        %4750 = vmatpush1.bf16.msra.mxu0 0
        %4751 = vmatprep.subr.bf16.mxu0 0
        %4752 = vmatpush1.bf16.msra.mxu0 0
        %4753 = vmatprep.subr.bf16.mxu0 0
        %4754 = vmatpush1.bf16.msra.mxu0 0
        %4755 = vmatprep.subr.bf16.mxu0 0
        %4756 = vmatpush1.bf16.msra.mxu0 0
        %4757 = vmatprep.subr.bf16.mxu0 0
        %4758 = vmatpush1.bf16.msra.mxu0 0
        %4759 = vmatprep.subr.bf16.mxu0 0
        %4760 = vmatpush1.bf16.msra.mxu0 0
        %4761 = vmatprep.subr.bf16.mxu0 0
        %4762 = vmatpush1.bf16.msra.mxu0 0
        %4763 = vmatprep.subr.bf16.mxu0 0
        %4764 = vmatpush1.bf16.msra.mxu0 0
        %4765 = vmatprep.subr.bf16.mxu0 0
        %4766 = vmatpush1.bf16.msra.mxu0 0
        %4767 = vmatprep.subr.bf16.mxu0 0
        %4768 = vmatpush1.bf16.msra.mxu0 0
        %4769 = vmatprep.subr.bf16.mxu0 0
        %4770 = vmatpush1.bf16.msra.mxu0 0
        %4771 = vmatprep.subr.bf16.mxu0 0
        %4772 = vmatpush1.bf16.msra.mxu0 0
        %4773 = vmatprep.subr.bf16.mxu0 0
        %4774 = vmatpush1.bf16.msra.mxu0 0
        %4775 = vmatprep.mubr.bf16.mxu0 0
        %4776 = vmatmul.mubr.bf16.gmra.mrb[0].mxu0 %v4379
        %v4777 = vpop.f32.mrb[0].mxu0
        %v4778 = vadd.f32 0.0, %v4777
        %v4779 = vpop.f32.mrb[0].mxu0
        %v4780 = vpop.f32.mrb[0].mxu0
        %v4781 = vpop.f32.mrb[0].mxu0
        %4782 = vdwg.mxu0
        %v4783 = vadd.f32 %v4738, %v4778
        %4784 = vmatprep.subr.bf16.mxu0 0
        %4785 = vmatpush1.bf16.msra.mxu0 %v3193
        %4786 = vmatprep.subr.bf16.mxu0 0
        %4787 = vmatpush1.bf16.msra.mxu0 %v3194
        %4788 = vmatprep.subr.bf16.mxu0 0
        %4789 = vmatpush1.bf16.msra.mxu0 0
        %4790 = vmatprep.subr.bf16.mxu0 0
        %4791 = vmatpush1.bf16.msra.mxu0 0
        %4792 = vmatprep.subr.bf16.mxu0 0
        %4793 = vmatpush1.bf16.msra.mxu0 0
        %4794 = vmatprep.subr.bf16.mxu0 0
        %4795 = vmatpush1.bf16.msra.mxu0 0
        %4796 = vmatprep.subr.bf16.mxu0 0
        %4797 = vmatpush1.bf16.msra.mxu0 0
        %4798 = vmatprep.subr.bf16.mxu0 0
        %4799 = vmatpush1.bf16.msra.mxu0 0
        %4800 = vmatprep.subr.bf16.mxu0 0
        %4801 = vmatpush1.bf16.msra.mxu0 0
        %4802 = vmatprep.subr.bf16.mxu0 0
        %4803 = vmatpush1.bf16.msra.mxu0 0
        %4804 = vmatprep.subr.bf16.mxu0 0
        %4805 = vmatpush1.bf16.msra.mxu0 0
        %4806 = vmatprep.subr.bf16.mxu0 0
        %4807 = vmatpush1.bf16.msra.mxu0 0
        %4808 = vmatprep.subr.bf16.mxu0 0
        %4809 = vmatpush1.bf16.msra.mxu0 0
        %4810 = vmatprep.subr.bf16.mxu0 0
        %4811 = vmatpush1.bf16.msra.mxu0 0
        %4812 = vmatprep.subr.bf16.mxu0 0
        %4813 = vmatpush1.bf16.msra.mxu0 0
        %4814 = vmatprep.subr.bf16.mxu0 0
        %4815 = vmatpush1.bf16.msra.mxu0 0
        %4816 = vmatprep.mubr.bf16.mxu0 0
        %4817 = vmatmul.mubr.bf16.gmra.mrb[0].mxu0 %v4429
        %v4818 = vpop.f32.mrb[0].mxu0
        %v4819 = vadd.f32 0.0, %v4818
        %v4820 = vpop.f32.mrb[0].mxu0
        %v4821 = vpop.f32.mrb[0].mxu0
        %v4822 = vpop.f32.mrb[0].mxu0
        %4823 = vdwg.mxu0
        %v4824 = vadd.f32 %v4783, %v4819
        %4825 = vmatprep.subr.bf16.mxu0 0
        %4826 = vmatpush1.bf16.msra.mxu0 %v3249
        %4827 = vmatprep.subr.bf16.mxu0 0
        %4828 = vmatpush1.bf16.msra.mxu0 %v3250
        %4829 = vmatprep.subr.bf16.mxu0 0
        %4830 = vmatpush1.bf16.msra.mxu0 0
        %4831 = vmatprep.subr.bf16.mxu0 0
        %4832 = vmatpush1.bf16.msra.mxu0 0
        %4833 = vmatprep.subr.bf16.mxu0 0
        %4834 = vmatpush1.bf16.msra.mxu0 0
        %4835 = vmatprep.subr.bf16.mxu0 0
        %4836 = vmatpush1.bf16.msra.mxu0 0
        %4837 = vmatprep.subr.bf16.mxu0 0
        %4838 = vmatpush1.bf16.msra.mxu0 0
        %4839 = vmatprep.subr.bf16.mxu0 0
        %4840 = vmatpush1.bf16.msra.mxu0 0
        %4841 = vmatprep.subr.bf16.mxu0 0
        %4842 = vmatpush1.bf16.msra.mxu0 0
        %4843 = vmatprep.subr.bf16.mxu0 0
        %4844 = vmatpush1.bf16.msra.mxu0 0
        %4845 = vmatprep.subr.bf16.mxu0 0
        %4846 = vmatpush1.bf16.msra.mxu0 0
        %4847 = vmatprep.subr.bf16.mxu0 0
        %4848 = vmatpush1.bf16.msra.mxu0 0
        %4849 = vmatprep.subr.bf16.mxu0 0
        %4850 = vmatpush1.bf16.msra.mxu0 0
        %4851 = vmatprep.subr.bf16.mxu0 0
        %4852 = vmatpush1.bf16.msra.mxu0 0
        %4853 = vmatprep.subr.bf16.mxu0 0
        %4854 = vmatpush1.bf16.msra.mxu0 0
        %4855 = vmatprep.subr.bf16.mxu0 0
        %4856 = vmatpush1.bf16.msra.mxu0 0
        %4857 = vmatprep.mubr.bf16.mxu0 0
        %4858 = vmatmul.mubr.bf16.gmra.mrb[0].mxu0 %v4473
        %v4859 = vpop.f32.mrb[0].mxu0
        %v4860 = vadd.f32 0.0, %v4859
        %v4861 = vpop.f32.mrb[0].mxu0
        %v4862 = vpop.f32.mrb[0].mxu0
        %v4863 = vpop.f32.mrb[0].mxu0
        %4864 = vdwg.mxu0
        %v4865 = vadd.f32 %v4824, %v4860
        %4866 = vmatprep.subr.bf16.mxu0 0
        %4867 = vmatpush1.bf16.msra.mxu0 %v3305
        %4868 = vmatprep.subr.bf16.mxu0 0
        %4869 = vmatpush1.bf16.msra.mxu0 %v3306
        %4870 = vmatprep.subr.bf16.mxu0 0
        %4871 = vmatpush1.bf16.msra.mxu0 0
        %4872 = vmatprep.subr.bf16.mxu0 0
        %4873 = vmatpush1.bf16.msra.mxu0 0
        %4874 = vmatprep.subr.bf16.mxu0 0
        %4875 = vmatpush1.bf16.msra.mxu0 0
        %4876 = vmatprep.subr.bf16.mxu0 0
        %4877 = vmatpush1.bf16.msra.mxu0 0
        %4878 = vmatprep.subr.bf16.mxu0 0
        %4879 = vmatpush1.bf16.msra.mxu0 0
        %4880 = vmatprep.subr.bf16.mxu0 0
        %4881 = vmatpush1.bf16.msra.mxu0 0
        %4882 = vmatprep.subr.bf16.mxu0 0
        %4883 = vmatpush1.bf16.msra.mxu0 0
        %4884 = vmatprep.subr.bf16.mxu0 0
        %4885 = vmatpush1.bf16.msra.mxu0 0
        %4886 = vmatprep.subr.bf16.mxu0 0
        %4887 = vmatpush1.bf16.msra.mxu0 0
        %4888 = vmatprep.subr.bf16.mxu0 0
        %4889 = vmatpush1.bf16.msra.mxu0 0
        %4890 = vmatprep.subr.bf16.mxu0 0
        %4891 = vmatpush1.bf16.msra.mxu0 0
        %4892 = vmatprep.subr.bf16.mxu0 0
        %4893 = vmatpush1.bf16.msra.mxu0 0
        %4894 = vmatprep.subr.bf16.mxu0 0
        %4895 = vmatpush1.bf16.msra.mxu0 0
        %4896 = vmatprep.subr.bf16.mxu0 0
        %4897 = vmatpush1.bf16.msra.mxu0 0
        %4898 = vmatprep.mubr.bf16.mxu0 0
        %4899 = vmatmul.mubr.bf16.gmra.mrb[0].mxu0 %v4517
        %v4900 = vpop.f32.mrb[0].mxu0
        %v4901 = vadd.f32 0.0, %v4900
        %v4902 = vpop.f32.mrb[0].mxu0
        %v4903 = vpop.f32.mrb[0].mxu0
        %v4904 = vpop.f32.mrb[0].mxu0
        %4905 = vdwg.mxu0
        %v4906 = vadd.f32 %v4865, %v4901
        %4907 = vmatprep.subr.bf16.mxu0 0
        %4908 = vmatpush1.bf16.msra.mxu0 %v3367
        %4909 = vmatprep.subr.bf16.mxu0 0
        %4910 = vmatpush1.bf16.msra.mxu0 %v3368
        %4911 = vmatprep.subr.bf16.mxu0 0
        %4912 = vmatpush1.bf16.msra.mxu0 0
        %4913 = vmatprep.subr.bf16.mxu0 0
        %4914 = vmatpush1.bf16.msra.mxu0 0
        %4915 = vmatprep.subr.bf16.mxu0 0
        %4916 = vmatpush1.bf16.msra.mxu0 0
        %4917 = vmatprep.subr.bf16.mxu0 0
        %4918 = vmatpush1.bf16.msra.mxu0 0
        %4919 = vmatprep.subr.bf16.mxu0 0
        %4920 = vmatpush1.bf16.msra.mxu0 0
        %4921 = vmatprep.subr.bf16.mxu0 0
        %4922 = vmatpush1.bf16.msra.mxu0 0
        %4923 = vmatprep.subr.bf16.mxu0 0
        %4924 = vmatpush1.bf16.msra.mxu0 0
        %4925 = vmatprep.subr.bf16.mxu0 0
        %4926 = vmatpush1.bf16.msra.mxu0 0
        %4927 = vmatprep.subr.bf16.mxu0 0
        %4928 = vmatpush1.bf16.msra.mxu0 0
        %4929 = vmatprep.subr.bf16.mxu0 0
        %4930 = vmatpush1.bf16.msra.mxu0 0
        %4931 = vmatprep.subr.bf16.mxu0 0
        %4932 = vmatpush1.bf16.msra.mxu0 0
        %4933 = vmatprep.subr.bf16.mxu0 0
        %4934 = vmatpush1.bf16.msra.mxu0 0
        %4935 = vmatprep.subr.bf16.mxu0 0
        %4936 = vmatpush1.bf16.msra.mxu0 0
        %4937 = vmatprep.subr.bf16.mxu0 0
        %4938 = vmatpush1.bf16.msra.mxu0 0
        %4939 = vmatprep.mubr.bf16.mxu0 0
        %4940 = vmatmul.mubr.bf16.gmra.mrb[0].mxu0 %v4567
        %v4941 = vpop.f32.mrb[0].mxu0
        %v4942 = vadd.f32 0.0, %v4941
        %v4943 = vpop.f32.mrb[0].mxu0
        %v4944 = vpop.f32.mrb[0].mxu0
        %v4945 = vpop.f32.mrb[0].mxu0
        %4946 = vdwg.mxu0
        %v4947 = vadd.f32 %v4906, %v4942
        %4948 = vmatprep.subr.bf16.mxu0 0
        %4949 = vmatpush1.bf16.msra.mxu0 %v3429
        %4950 = vmatprep.subr.bf16.mxu0 0
        %4951 = vmatpush1.bf16.msra.mxu0 %v3430
        %4952 = vmatprep.subr.bf16.mxu0 0
        %4953 = vmatpush1.bf16.msra.mxu0 0
        %4954 = vmatprep.subr.bf16.mxu0 0
        %4955 = vmatpush1.bf16.msra.mxu0 0
        %4956 = vmatprep.subr.bf16.mxu0 0
        %4957 = vmatpush1.bf16.msra.mxu0 0
        %4958 = vmatprep.subr.bf16.mxu0 0
        %4959 = vmatpush1.bf16.msra.mxu0 0
        %4960 = vmatprep.subr.bf16.mxu0 0
        %4961 = vmatpush1.bf16.msra.mxu0 0
        %4962 = vmatprep.subr.bf16.mxu0 0
        %4963 = vmatpush1.bf16.msra.mxu0 0
        %4964 = vmatprep.subr.bf16.mxu0 0
        %4965 = vmatpush1.bf16.msra.mxu0 0
        %4966 = vmatprep.subr.bf16.mxu0 0
        %4967 = vmatpush1.bf16.msra.mxu0 0
        %4968 = vmatprep.subr.bf16.mxu0 0
        %4969 = vmatpush1.bf16.msra.mxu0 0
        %4970 = vmatprep.subr.bf16.mxu0 0
        %4971 = vmatpush1.bf16.msra.mxu0 0
        %4972 = vmatprep.subr.bf16.mxu0 0
        %4973 = vmatpush1.bf16.msra.mxu0 0
        %4974 = vmatprep.subr.bf16.mxu0 0
        %4975 = vmatpush1.bf16.msra.mxu0 0
        %4976 = vmatprep.subr.bf16.mxu0 0
        %4977 = vmatpush1.bf16.msra.mxu0 0
        %4978 = vmatprep.subr.bf16.mxu0 0
        %4979 = vmatpush1.bf16.msra.mxu0 0
        %4980 = vmatprep.mubr.bf16.mxu0 0
        %4981 = vmatmul.mubr.bf16.gmra.mrb[0].mxu0 %v4617
        %v4982 = vpop.f32.mrb[0].mxu0
        %v4983 = vadd.f32 0.0, %v4982
        %v4984 = vpop.f32.mrb[0].mxu0
        %v4985 = vpop.f32.mrb[0].mxu0
        %v4986 = vpop.f32.mrb[0].mxu0
        %4987 = vdwg.mxu0
        %v4988 = vadd.f32 %v4947, %v4983
        %v4990 = vsel %vm3018, %v2734, 0
        %4992 = vmatprep.subr.bf16.mxu0 0
        %4993 = vmatpush1.bf16.msra.mxu0 %v3485
        %4994 = vmatprep.subr.bf16.mxu0 0
        %4995 = vmatpush1.bf16.msra.mxu0 %v3486
        %4996 = vmatprep.subr.bf16.mxu0 0
        %4997 = vmatpush1.bf16.msra.mxu0 0
        %4998 = vmatprep.subr.bf16.mxu0 0
        %4999 = vmatpush1.bf16.msra.mxu0 0
        %5000 = vmatprep.subr.bf16.mxu0 0
        %5001 = vmatpush1.bf16.msra.mxu0 0
        %5002 = vmatprep.subr.bf16.mxu0 0
        %5003 = vmatpush1.bf16.msra.mxu0 0
        %5004 = vmatprep.subr.bf16.mxu0 0
        %5005 = vmatpush1.bf16.msra.mxu0 0
        %5006 = vmatprep.subr.bf16.mxu0 0
        %5007 = vmatpush1.bf16.msra.mxu0 0
        %5008 = vmatprep.subr.bf16.mxu0 0
        %5009 = vmatpush1.bf16.msra.mxu0 0
        %5010 = vmatprep.subr.bf16.mxu0 0
        %5011 = vmatpush1.bf16.msra.mxu0 0
        %5012 = vmatprep.subr.bf16.mxu0 0
        %5013 = vmatpush1.bf16.msra.mxu0 0
        %5014 = vmatprep.subr.bf16.mxu0 0
        %5015 = vmatpush1.bf16.msra.mxu0 0
        %5016 = vmatprep.subr.bf16.mxu0 0
        %5017 = vmatpush1.bf16.msra.mxu0 0
        %5018 = vmatprep.subr.bf16.mxu0 0
        %5019 = vmatpush1.bf16.msra.mxu0 0
        %5020 = vmatprep.subr.bf16.mxu0 0
        %5021 = vmatpush1.bf16.msra.mxu0 0
        %5022 = vmatprep.subr.bf16.mxu0 0
        %5023 = vmatpush1.bf16.msra.mxu0 0
        %5024 = vmatprep.mubr.bf16.mxu0 0
        %5025 = vmatmul.mubr.bf16.gmra.mrb[0].mxu0 %v4990
        %v5026 = vpop.f32.mrb[0].mxu0
        %v5027 = vadd.f32 0.0, %v5026
        %v5028 = vpop.f32.mrb[0].mxu0
        %v5029 = vpop.f32.mrb[0].mxu0
        %v5030 = vpop.f32.mrb[0].mxu0
        %5031 = vdwg.mxu0
        %v5032 = vadd.f32 %v4988, %v5027
        %v5034 = vsel %vm3018, %v2737, 0
        %5036 = vmatprep.subr.bf16.mxu0 0
        %5037 = vmatpush1.bf16.msra.mxu0 %v3541
        %5038 = vmatprep.subr.bf16.mxu0 0
        %5039 = vmatpush1.bf16.msra.mxu0 %v3542
        %5040 = vmatprep.subr.bf16.mxu0 0
        %5041 = vmatpush1.bf16.msra.mxu0 0
        %5042 = vmatprep.subr.bf16.mxu0 0
        %5043 = vmatpush1.bf16.msra.mxu0 0
        %5044 = vmatprep.subr.bf16.mxu0 0
        %5045 = vmatpush1.bf16.msra.mxu0 0
        %5046 = vmatprep.subr.bf16.mxu0 0
        %5047 = vmatpush1.bf16.msra.mxu0 0
        %5048 = vmatprep.subr.bf16.mxu0 0
        %5049 = vmatpush1.bf16.msra.mxu0 0
        %5050 = vmatprep.subr.bf16.mxu0 0
        %5051 = vmatpush1.bf16.msra.mxu0 0
        %5052 = vmatprep.subr.bf16.mxu0 0
        %5053 = vmatpush1.bf16.msra.mxu0 0
        %5054 = vmatprep.subr.bf16.mxu0 0
        %5055 = vmatpush1.bf16.msra.mxu0 0
        %5056 = vmatprep.subr.bf16.mxu0 0
        %5057 = vmatpush1.bf16.msra.mxu0 0
        %5058 = vmatprep.subr.bf16.mxu0 0
        %5059 = vmatpush1.bf16.msra.mxu0 0
        %5060 = vmatprep.subr.bf16.mxu0 0
        %5061 = vmatpush1.bf16.msra.mxu0 0
        %5062 = vmatprep.subr.bf16.mxu0 0
        %5063 = vmatpush1.bf16.msra.mxu0 0
        %5064 = vmatprep.subr.bf16.mxu0 0
        %5065 = vmatpush1.bf16.msra.mxu0 0
        %5066 = vmatprep.subr.bf16.mxu0 0
        %5067 = vmatpush1.bf16.msra.mxu0 0
        %5068 = vmatprep.mubr.bf16.mxu0 0
        %5069 = vmatmul.mubr.bf16.gmra.mrb[0].mxu0 %v5034
        %v5070 = vpop.f32.mrb[0].mxu0
        %v5071 = vadd.f32 0.0, %v5070
        %v5072 = vpop.f32.mrb[0].mxu0
        %v5073 = vpop.f32.mrb[0].mxu0
        %v5074 = vpop.f32.mrb[0].mxu0
        %5075 = vdwg.mxu0
        %v5076 = vadd.f32 %v5032, %v5071
        %v5077 = vshrl.u32 %v2734, 16
        %v5079 = vshll.u32 %v2734, 16
        %v5081 = vrot.slane %v5079, 1
        %v5082 = vor.u32 %v5077, %v5081
        %v5084 = vsel %vm3018, %v5082, 0
        %5086 = vmatprep.subr.bf16.mxu0 0
        %5087 = vmatpush1.bf16.msra.mxu0 %v3603
        %5088 = vmatprep.subr.bf16.mxu0 0
        %5089 = vmatpush1.bf16.msra.mxu0 %v3604
        %5090 = vmatprep.subr.bf16.mxu0 0
        %5091 = vmatpush1.bf16.msra.mxu0 0
        %5092 = vmatprep.subr.bf16.mxu0 0
        %5093 = vmatpush1.bf16.msra.mxu0 0
        %5094 = vmatprep.subr.bf16.mxu0 0
        %5095 = vmatpush1.bf16.msra.mxu0 0
        %5096 = vmatprep.subr.bf16.mxu0 0
        %5097 = vmatpush1.bf16.msra.mxu0 0
        %5098 = vmatprep.subr.bf16.mxu0 0
        %5099 = vmatpush1.bf16.msra.mxu0 0
        %5100 = vmatprep.subr.bf16.mxu0 0
        %5101 = vmatpush1.bf16.msra.mxu0 0
        %5102 = vmatprep.subr.bf16.mxu0 0
        %5103 = vmatpush1.bf16.msra.mxu0 0
        %5104 = vmatprep.subr.bf16.mxu0 0
        %5105 = vmatpush1.bf16.msra.mxu0 0
        %5106 = vmatprep.subr.bf16.mxu0 0
        %5107 = vmatpush1.bf16.msra.mxu0 0
        %5108 = vmatprep.subr.bf16.mxu0 0
        %5109 = vmatpush1.bf16.msra.mxu0 0
        %5110 = vmatprep.subr.bf16.mxu0 0
        %5111 = vmatpush1.bf16.msra.mxu0 0
        %5112 = vmatprep.subr.bf16.mxu0 0
        %5113 = vmatpush1.bf16.msra.mxu0 0
        %5114 = vmatprep.subr.bf16.mxu0 0
        %5115 = vmatpush1.bf16.msra.mxu0 0
        %5116 = vmatprep.subr.bf16.mxu0 0
        %5117 = vmatpush1.bf16.msra.mxu0 0
        %5118 = vmatprep.mubr.bf16.mxu0 0
        %5119 = vmatmul.mubr.bf16.gmra.mrb[0].mxu0 %v5084
        %v5120 = vpop.f32.mrb[0].mxu0
        %v5121 = vadd.f32 0.0, %v5120
        %v5122 = vpop.f32.mrb[0].mxu0
        %v5123 = vpop.f32.mrb[0].mxu0
        %v5124 = vpop.f32.mrb[0].mxu0
        %5125 = vdwg.mxu0
        %v5126 = vadd.f32 %v5076, %v5121
        %v5127 = vshrl.u32 %v2737, 16
        %v5129 = vshll.u32 %v2737, 16
        %v5131 = vrot.slane %v5129, 1
        %v5132 = vor.u32 %v5127, %v5131
        %v5134 = vsel %vm3018, %v5132, 0
        %5136 = vmatprep.subr.bf16.mxu0 0
        %5137 = vmatpush1.bf16.msra.mxu0 %v3665
        %5138 = vmatprep.subr.bf16.mxu0 0
        %5139 = vmatpush1.bf16.msra.mxu0 %v3666
        %5140 = vmatprep.subr.bf16.mxu0 0
        %5141 = vmatpush1.bf16.msra.mxu0 0
        %5142 = vmatprep.subr.bf16.mxu0 0
        %5143 = vmatpush1.bf16.msra.mxu0 0
        %5144 = vmatprep.subr.bf16.mxu0 0
        %5145 = vmatpush1.bf16.msra.mxu0 0
        %5146 = vmatprep.subr.bf16.mxu0 0
        %5147 = vmatpush1.bf16.msra.mxu0 0
        %5148 = vmatprep.subr.bf16.mxu0 0
        %5149 = vmatpush1.bf16.msra.mxu0 0
        %5150 = vmatprep.subr.bf16.mxu0 0
        %5151 = vmatpush1.bf16.msra.mxu0 0
        %5152 = vmatprep.subr.bf16.mxu0 0
        %5153 = vmatpush1.bf16.msra.mxu0 0
        %5154 = vmatprep.subr.bf16.mxu0 0
        %5155 = vmatpush1.bf16.msra.mxu0 0
        %5156 = vmatprep.subr.bf16.mxu0 0
        %5157 = vmatpush1.bf16.msra.mxu0 0
        %5158 = vmatprep.subr.bf16.mxu0 0
        %5159 = vmatpush1.bf16.msra.mxu0 0
        %5160 = vmatprep.subr.bf16.mxu0 0
        %5161 = vmatpush1.bf16.msra.mxu0 0
        %5162 = vmatprep.subr.bf16.mxu0 0
        %5163 = vmatpush1.bf16.msra.mxu0 0
        %5164 = vmatprep.subr.bf16.mxu0 0
        %5165 = vmatpush1.bf16.msra.mxu0 0
        %5166 = vmatprep.subr.bf16.mxu0 0
        %5167 = vmatpush1.bf16.msra.mxu0 0
        %5168 = vmatprep.mubr.bf16.mxu0 0
        %5169 = vmatmul.mubr.bf16.gmra.mrb[0].mxu0 %v5134
        %v5170 = vpop.f32.mrb[0].mxu0
        %v5171 = vadd.f32 0.0, %v5170
        %v5172 = vpop.f32.mrb[0].mxu0
        %v5173 = vpop.f32.mrb[0].mxu0
        %v5174 = vpop.f32.mrb[0].mxu0
        %5175 = vdwg.mxu0
        %v5176 = vadd.f32 %v5126, %v5171
        %v5178 = vsel %vm3018, %v3002, 0
        %5180 = vmatprep.subr.bf16.mxu0 0
        %5181 = vmatpush1.bf16.msra.mxu0 %v3721
        %5182 = vmatprep.subr.bf16.mxu0 0
        %5183 = vmatpush1.bf16.msra.mxu0 %v3722
        %5184 = vmatprep.subr.bf16.mxu0 0
        %5185 = vmatpush1.bf16.msra.mxu0 0
        %5186 = vmatprep.subr.bf16.mxu0 0
        %5187 = vmatpush1.bf16.msra.mxu0 0
        %5188 = vmatprep.subr.bf16.mxu0 0
        %5189 = vmatpush1.bf16.msra.mxu0 0
        %5190 = vmatprep.subr.bf16.mxu0 0
        %5191 = vmatpush1.bf16.msra.mxu0 0
        %5192 = vmatprep.subr.bf16.mxu0 0
        %5193 = vmatpush1.bf16.msra.mxu0 0
        %5194 = vmatprep.subr.bf16.mxu0 0
        %5195 = vmatpush1.bf16.msra.mxu0 0
        %5196 = vmatprep.subr.bf16.mxu0 0
        %5197 = vmatpush1.bf16.msra.mxu0 0
        %5198 = vmatprep.subr.bf16.mxu0 0
        %5199 = vmatpush1.bf16.msra.mxu0 0
        %5200 = vmatprep.subr.bf16.mxu0 0
        %5201 = vmatpush1.bf16.msra.mxu0 0
        %5202 = vmatprep.subr.bf16.mxu0 0
        %5203 = vmatpush1.bf16.msra.mxu0 0
        %5204 = vmatprep.subr.bf16.mxu0 0
        %5205 = vmatpush1.bf16.msra.mxu0 0
        %5206 = vmatprep.subr.bf16.mxu0 0
        %5207 = vmatpush1.bf16.msra.mxu0 0
        %5208 = vmatprep.subr.bf16.mxu0 0
        %5209 = vmatpush1.bf16.msra.mxu0 0
        %5210 = vmatprep.subr.bf16.mxu0 0
        %5211 = vmatpush1.bf16.msra.mxu0 0
        %5212 = vmatprep.mubr.bf16.mxu0 0
        %5213 = vmatmul.mubr.bf16.gmra.mrb[0].mxu0 %v5178
        %v5214 = vpop.f32.mrb[0].mxu0
        %v5215 = vadd.f32 0.0, %v5214
        %v5216 = vpop.f32.mrb[0].mxu0
        %v5217 = vpop.f32.mrb[0].mxu0
        %v5218 = vpop.f32.mrb[0].mxu0
        %5219 = vdwg.mxu0
        %v5220 = vadd.f32 %v5176, %v5215
        %v5222 = vsel %vm3018, %v3005, 0
        %5224 = vmatprep.subr.bf16.mxu0 0
        %5225 = vmatpush1.bf16.msra.mxu0 %v3777
        %5226 = vmatprep.subr.bf16.mxu0 0
        %5227 = vmatpush1.bf16.msra.mxu0 %v3778
        %5228 = vmatprep.subr.bf16.mxu0 0
        %5229 = vmatpush1.bf16.msra.mxu0 0
        %5230 = vmatprep.subr.bf16.mxu0 0
        %5231 = vmatpush1.bf16.msra.mxu0 0
        %5232 = vmatprep.subr.bf16.mxu0 0
        %5233 = vmatpush1.bf16.msra.mxu0 0
        %5234 = vmatprep.subr.bf16.mxu0 0
        %5235 = vmatpush1.bf16.msra.mxu0 0
        %5236 = vmatprep.subr.bf16.mxu0 0
        %5237 = vmatpush1.bf16.msra.mxu0 0
        %5238 = vmatprep.subr.bf16.mxu0 0
        %5239 = vmatpush1.bf16.msra.mxu0 0
        %5240 = vmatprep.subr.bf16.mxu0 0
        %5241 = vmatpush1.bf16.msra.mxu0 0
        %5242 = vmatprep.subr.bf16.mxu0 0
        %5243 = vmatpush1.bf16.msra.mxu0 0
        %5244 = vmatprep.subr.bf16.mxu0 0
        %5245 = vmatpush1.bf16.msra.mxu0 0
        %5246 = vmatprep.subr.bf16.mxu0 0
        %5247 = vmatpush1.bf16.msra.mxu0 0
        %5248 = vmatprep.subr.bf16.mxu0 0
        %5249 = vmatpush1.bf16.msra.mxu0 0
        %5250 = vmatprep.subr.bf16.mxu0 0
        %5251 = vmatpush1.bf16.msra.mxu0 0
        %5252 = vmatprep.subr.bf16.mxu0 0
        %5253 = vmatpush1.bf16.msra.mxu0 0
        %5254 = vmatprep.subr.bf16.mxu0 0
        %5255 = vmatpush1.bf16.msra.mxu0 0
        %5256 = vmatprep.mubr.bf16.mxu0 0
        %5257 = vmatmul.mubr.bf16.gmra.mrb[0].mxu0 %v5222
        %v5258 = vpop.f32.mrb[0].mxu0
        %v5259 = vadd.f32 0.0, %v5258
        %v5260 = vpop.f32.mrb[0].mxu0
        %v5261 = vpop.f32.mrb[0].mxu0
        %v5262 = vpop.f32.mrb[0].mxu0
        %5263 = vdwg.mxu0
        %v5264 = vadd.f32 %v5220, %v5259
        %v5265 = vshrl.u32 %v3002, 16
        %v5267 = vshll.u32 %v3002, 16
        %v5269 = vrot.slane %v5267, 1
        %v5270 = vor.u32 %v5265, %v5269
        %v5272 = vsel %vm3018, %v5270, 0
        %5274 = vmatprep.subr.bf16.mxu0 0
        %5275 = vmatpush1.bf16.msra.mxu0 %v3839
        %5276 = vmatprep.subr.bf16.mxu0 0
        %5277 = vmatpush1.bf16.msra.mxu0 %v3840
        %5278 = vmatprep.subr.bf16.mxu0 0
        %5279 = vmatpush1.bf16.msra.mxu0 0
        %5280 = vmatprep.subr.bf16.mxu0 0
        %5281 = vmatpush1.bf16.msra.mxu0 0
        %5282 = vmatprep.subr.bf16.mxu0 0
        %5283 = vmatpush1.bf16.msra.mxu0 0
        %5284 = vmatprep.subr.bf16.mxu0 0
        %5285 = vmatpush1.bf16.msra.mxu0 0
        %5286 = vmatprep.subr.bf16.mxu0 0
        %5287 = vmatpush1.bf16.msra.mxu0 0
        %5288 = vmatprep.subr.bf16.mxu0 0
        %5289 = vmatpush1.bf16.msra.mxu0 0
        %5290 = vmatprep.subr.bf16.mxu0 0
        %5291 = vmatpush1.bf16.msra.mxu0 0
        %5292 = vmatprep.subr.bf16.mxu0 0
        %5293 = vmatpush1.bf16.msra.mxu0 0
        %5294 = vmatprep.subr.bf16.mxu0 0
        %5295 = vmatpush1.bf16.msra.mxu0 0
        %5296 = vmatprep.subr.bf16.mxu0 0
        %5297 = vmatpush1.bf16.msra.mxu0 0
        %5298 = vmatprep.subr.bf16.mxu0 0
        %5299 = vmatpush1.bf16.msra.mxu0 0
        %5300 = vmatprep.subr.bf16.mxu0 0
        %5301 = vmatpush1.bf16.msra.mxu0 0
        %5302 = vmatprep.subr.bf16.mxu0 0
        %5303 = vmatpush1.bf16.msra.mxu0 0
        %5304 = vmatprep.subr.bf16.mxu0 0
        %5305 = vmatpush1.bf16.msra.mxu0 0
        %5306 = vmatprep.mubr.bf16.mxu0 0
        %5307 = vmatmul.mubr.bf16.gmra.mrb[0].mxu0 %v5272
        %v5308 = vpop.f32.mrb[0].mxu0
        %v5309 = vadd.f32 0.0, %v5308
        %v5310 = vpop.f32.mrb[0].mxu0
        %v5311 = vpop.f32.mrb[0].mxu0
        %v5312 = vpop.f32.mrb[0].mxu0
        %5313 = vdwg.mxu0
        %v5314 = vadd.f32 %v5264, %v5309
        %v5315 = vshrl.u32 %v3005, 16
        %v5317 = vshll.u32 %v3005, 16
        %v5319 = vrot.slane %v5317, 1
        %v5320 = vor.u32 %v5315, %v5319
        %v5322 = vsel %vm3018, %v5320, 0
        %5324 = vmatprep.subr.bf16.mxu0 0
        %5325 = vmatpush1.bf16.msra.mxu0 %v3901
        %5326 = vmatprep.subr.bf16.mxu0 0
        %5327 = vmatpush1.bf16.msra.mxu0 %v3902
        %5328 = vmatprep.subr.bf16.mxu0 0
        %5329 = vmatpush1.bf16.msra.mxu0 0
        %5330 = vmatprep.subr.bf16.mxu0 0
        %5331 = vmatpush1.bf16.msra.mxu0 0
        %5332 = vmatprep.subr.bf16.mxu0 0
        %5333 = vmatpush1.bf16.msra.mxu0 0
        %5334 = vmatprep.subr.bf16.mxu0 0
        %5335 = vmatpush1.bf16.msra.mxu0 0
        %5336 = vmatprep.subr.bf16.mxu0 0
        %5337 = vmatpush1.bf16.msra.mxu0 0
        %5338 = vmatprep.subr.bf16.mxu0 0
        %5339 = vmatpush1.bf16.msra.mxu0 0
        %5340 = vmatprep.subr.bf16.mxu0 0
        %5341 = vmatpush1.bf16.msra.mxu0 0
        %5342 = vmatprep.subr.bf16.mxu0 0
        %5343 = vmatpush1.bf16.msra.mxu0 0
        %5344 = vmatprep.subr.bf16.mxu0 0
        %5345 = vmatpush1.bf16.msra.mxu0 0
        %5346 = vmatprep.subr.bf16.mxu0 0
        %5347 = vmatpush1.bf16.msra.mxu0 0
        %5348 = vmatprep.subr.bf16.mxu0 0
        %5349 = vmatpush1.bf16.msra.mxu0 0
        %5350 = vmatprep.subr.bf16.mxu0 0
        %5351 = vmatpush1.bf16.msra.mxu0 0
        %5352 = vmatprep.subr.bf16.mxu0 0
        %5353 = vmatpush1.bf16.msra.mxu0 0
        %5354 = vmatprep.subr.bf16.mxu0 0
        %5355 = vmatpush1.bf16.msra.mxu0 0
        %5356 = vmatprep.mubr.bf16.mxu0 0
        %5357 = vmatmul.mubr.bf16.gmra.mrb[0].mxu0 %v5322
        %v5358 = vpop.f32.mrb[0].mxu0
        %v5359 = vadd.f32 0.0, %v5358
        %v5360 = vpop.f32.mrb[0].mxu0
        %v5361 = vpop.f32.mrb[0].mxu0
        %v5362 = vpop.f32.mrb[0].mxu0
        %5363 = vdwg.mxu0
        %v5364 = vadd.f32 %v5314, %v5359
        %v5365 = vadd.f32 %v5364, %v3953
        %v5366 = vmax.f32 %v5365, 0.0
        %v5367 = vpack.c.bf16 %v5366, %v5366
        %v5369 = vshrl.u32 %v3957, 16
        %v5379 = vunpack.c.l.b16 %v580
        %v5380 = vunpack.c.l.b16 %v581
        %v5381 = vunpack.c.l.b16 %v582
        %v5382 = vunpack.c.l.b16 %v583
        %v5383 = vunpack.c.l.b16 %v584
        %v5384 = vunpack.c.l.b16 %v585
        %v5385 = vunpack.c.l.b16 %v586
        %v5386 = vunpack.c.l.b16 %v587
        %v5387 = vpack.c.b16 %v5380, %v5379
        %v5388 = vpack.c.b16 %v5382, %v5381
        %v5389 = vpack.c.b16 %v5384, %v5383
        %v5390 = vpack.c.b16 %v5386, %v5385
        %v5396 = vsel %vm681, %v5369, 0
        %5398 = vmatprep.subr.bf16.mxu0 0
        %5399 = vmatpush1.bf16.msra.mxu0 %v5387
        %5400 = vmatprep.subr.bf16.mxu0 0
        %5401 = vmatpush1.bf16.msra.mxu0 %v5388
        %5402 = vmatprep.subr.bf16.mxu0 0
        %5403 = vmatpush1.bf16.msra.mxu0 %v5389
        %5404 = vmatprep.subr.bf16.mxu0 0
        %5405 = vmatpush1.bf16.msra.mxu0 %v5390
        %5406 = vmatprep.subr.bf16.mxu0 0
        %5407 = vmatpush1.bf16.msra.mxu0 0
        %5408 = vmatprep.subr.bf16.mxu0 0
        %5409 = vmatpush1.bf16.msra.mxu0 0
        %5410 = vmatprep.subr.bf16.mxu0 0
        %5411 = vmatpush1.bf16.msra.mxu0 0
        %5412 = vmatprep.subr.bf16.mxu0 0
        %5413 = vmatpush1.bf16.msra.mxu0 0
        %5414 = vmatprep.subr.bf16.mxu0 0
        %5415 = vmatpush1.bf16.msra.mxu0 0
        %5416 = vmatprep.subr.bf16.mxu0 0
        %5417 = vmatpush1.bf16.msra.mxu0 0
        %5418 = vmatprep.subr.bf16.mxu0 0
        %5419 = vmatpush1.bf16.msra.mxu0 0
        %5420 = vmatprep.subr.bf16.mxu0 0
        %5421 = vmatpush1.bf16.msra.mxu0 0
        %5422 = vmatprep.subr.bf16.mxu0 0
        %5423 = vmatpush1.bf16.msra.mxu0 0
        %5424 = vmatprep.subr.bf16.mxu0 0
        %5425 = vmatpush1.bf16.msra.mxu0 0
        %5426 = vmatprep.subr.bf16.mxu0 0
        %5427 = vmatpush1.bf16.msra.mxu0 0
        %5428 = vmatprep.subr.bf16.mxu0 0
        %5429 = vmatpush1.bf16.msra.mxu0 0
        %5430 = vmatprep.mubr.bf16.mxu0 0
        %5431 = vmatmul.mubr.bf16.gmra.mrb[0].mxu0 %v5396
        %v5432 = vpop.f32.mrb[0].mxu0
        %v5433 = vadd.f32 0.0, %v5432
        %v5434 = vpop.f32.mrb[0].mxu0
        %v5435 = vpop.f32.mrb[0].mxu0
        %v5436 = vpop.f32.mrb[0].mxu0
        %5437 = vdwg.mxu0
        %v5446 = vunpack.c.l.b16 %v572
        %v5447 = vunpack.c.l.b16 %v573
        %v5448 = vunpack.c.l.b16 %v574
        %v5449 = vunpack.c.l.b16 %v575
        %v5450 = vunpack.c.l.b16 %v576
        %v5451 = vunpack.c.l.b16 %v577
        %v5452 = vunpack.c.l.b16 %v578
        %v5453 = vunpack.c.l.b16 %v579
        %v5454 = vpack.c.b16 %v5447, %v5446
        %v5455 = vpack.c.b16 %v5449, %v5448
        %v5456 = vpack.c.b16 %v5451, %v5450
        %v5457 = vpack.c.b16 %v5453, %v5452
        %v5462 = vsel %vm681, %v3957, 0
        %5464 = vmatprep.subr.bf16.mxu0 0
        %5465 = vmatpush1.bf16.msra.mxu0 %v5454
        %5466 = vmatprep.subr.bf16.mxu0 0
        %5467 = vmatpush1.bf16.msra.mxu0 %v5455
        %5468 = vmatprep.subr.bf16.mxu0 0
        %5469 = vmatpush1.bf16.msra.mxu0 %v5456
        %5470 = vmatprep.subr.bf16.mxu0 0
        %5471 = vmatpush1.bf16.msra.mxu0 %v5457
        %5472 = vmatprep.subr.bf16.mxu0 0
        %5473 = vmatpush1.bf16.msra.mxu0 0
        %5474 = vmatprep.subr.bf16.mxu0 0
        %5475 = vmatpush1.bf16.msra.mxu0 0
        %5476 = vmatprep.subr.bf16.mxu0 0
        %5477 = vmatpush1.bf16.msra.mxu0 0
        %5478 = vmatprep.subr.bf16.mxu0 0
        %5479 = vmatpush1.bf16.msra.mxu0 0
        %5480 = vmatprep.subr.bf16.mxu0 0
        %5481 = vmatpush1.bf16.msra.mxu0 0
        %5482 = vmatprep.subr.bf16.mxu0 0
        %5483 = vmatpush1.bf16.msra.mxu0 0
        %5484 = vmatprep.subr.bf16.mxu0 0
        %5485 = vmatpush1.bf16.msra.mxu0 0
        %5486 = vmatprep.subr.bf16.mxu0 0
        %5487 = vmatpush1.bf16.msra.mxu0 0
        %5488 = vmatprep.subr.bf16.mxu0 0
        %5489 = vmatpush1.bf16.msra.mxu0 0
        %5490 = vmatprep.subr.bf16.mxu0 0
        %5491 = vmatpush1.bf16.msra.mxu0 0
        %5492 = vmatprep.subr.bf16.mxu0 0
        %5493 = vmatpush1.bf16.msra.mxu0 0
        %5494 = vmatprep.subr.bf16.mxu0 0
        %5495 = vmatpush1.bf16.msra.mxu0 0
        %5496 = vmatprep.mubr.bf16.mxu0 0
        %5497 = vmatmul.mubr.bf16.gmra.mrb[0].mxu0 %v5462
        %v5498 = vpop.f32.mrb[0].mxu0
        %v5499 = vadd.f32 %v5433, %v5498
        %v5500 = vpop.f32.mrb[0].mxu0
        %v5501 = vpop.f32.mrb[0].mxu0
        %v5502 = vpop.f32.mrb[0].mxu0
        %5503 = vdwg.mxu0
        %v5505 = vrot.slane %v3957, 1
        %v5514 = vunpack.c.l.b16 %v588
        %v5515 = vunpack.c.l.b16 %v589
        %v5516 = vunpack.c.l.b16 %v590
        %v5517 = vunpack.c.l.b16 %v591
        %v5518 = vunpack.c.l.b16 %v592
        %v5519 = vunpack.c.l.b16 %v593
        %v5520 = vunpack.c.l.b16 %v594
        %v5521 = vunpack.c.l.b16 %v595
        %v5522 = vpack.c.b16 %v5515, %v5514
        %v5523 = vpack.c.b16 %v5517, %v5516
        %v5524 = vpack.c.b16 %v5519, %v5518
        %v5525 = vpack.c.b16 %v5521, %v5520
        %v5531 = vsel %vm681, %v5505, 0
        %5533 = vmatprep.subr.bf16.mxu0 0
        %5534 = vmatpush1.bf16.msra.mxu0 %v5522
        %5535 = vmatprep.subr.bf16.mxu0 0
        %5536 = vmatpush1.bf16.msra.mxu0 %v5523
        %5537 = vmatprep.subr.bf16.mxu0 0
        %5538 = vmatpush1.bf16.msra.mxu0 %v5524
        %5539 = vmatprep.subr.bf16.mxu0 0
        %5540 = vmatpush1.bf16.msra.mxu0 %v5525
        %5541 = vmatprep.subr.bf16.mxu0 0
        %5542 = vmatpush1.bf16.msra.mxu0 0
        %5543 = vmatprep.subr.bf16.mxu0 0
        %5544 = vmatpush1.bf16.msra.mxu0 0
        %5545 = vmatprep.subr.bf16.mxu0 0
        %5546 = vmatpush1.bf16.msra.mxu0 0
        %5547 = vmatprep.subr.bf16.mxu0 0
        %5548 = vmatpush1.bf16.msra.mxu0 0
        %5549 = vmatprep.subr.bf16.mxu0 0
        %5550 = vmatpush1.bf16.msra.mxu0 0
        %5551 = vmatprep.subr.bf16.mxu0 0
        %5552 = vmatpush1.bf16.msra.mxu0 0
        %5553 = vmatprep.subr.bf16.mxu0 0
        %5554 = vmatpush1.bf16.msra.mxu0 0
        %5555 = vmatprep.subr.bf16.mxu0 0
        %5556 = vmatpush1.bf16.msra.mxu0 0
        %5557 = vmatprep.subr.bf16.mxu0 0
        %5558 = vmatpush1.bf16.msra.mxu0 0
        %5559 = vmatprep.subr.bf16.mxu0 0
        %5560 = vmatpush1.bf16.msra.mxu0 0
        %5561 = vmatprep.subr.bf16.mxu0 0
        %5562 = vmatpush1.bf16.msra.mxu0 0
        %5563 = vmatprep.subr.bf16.mxu0 0
        %5564 = vmatpush1.bf16.msra.mxu0 0
        %5565 = vmatprep.mubr.bf16.mxu0 0
        %5566 = vmatmul.mubr.bf16.gmra.mrb[0].mxu0 %v5531
        %v5567 = vpop.f32.mrb[0].mxu0
        %v5568 = vadd.f32 0.0, %v5567
        %v5569 = vpop.f32.mrb[0].mxu0
        %v5570 = vpop.f32.mrb[0].mxu0
        %v5571 = vpop.f32.mrb[0].mxu0
        %5572 = vdwg.mxu0
        %v5573 = vadd.f32 %v5499, %v5568
        %v5582 = vunpack.c.l.b16 %v596
        %v5583 = vunpack.c.l.b16 %v597
        %v5584 = vunpack.c.l.b16 %v598
        %v5585 = vunpack.c.l.b16 %v599
        %v5586 = vunpack.c.l.b16 %v600
        %v5587 = vunpack.c.l.b16 %v601
        %v5588 = vunpack.c.l.b16 %v602
        %v5589 = vunpack.c.l.b16 %v603
        %v5590 = vpack.c.b16 %v5583, %v5582
        %v5591 = vpack.c.b16 %v5585, %v5584
        %v5592 = vpack.c.b16 %v5587, %v5586
        %v5593 = vpack.c.b16 %v5589, %v5588
        %v5599 = vsel %vm681, %v4662, 0
        %5601 = vmatprep.subr.bf16.mxu0 0
        %5602 = vmatpush1.bf16.msra.mxu0 %v5590
        %5603 = vmatprep.subr.bf16.mxu0 0
        %5604 = vmatpush1.bf16.msra.mxu0 %v5591
        %5605 = vmatprep.subr.bf16.mxu0 0
        %5606 = vmatpush1.bf16.msra.mxu0 %v5592
        %5607 = vmatprep.subr.bf16.mxu0 0
        %5608 = vmatpush1.bf16.msra.mxu0 %v5593
        %5609 = vmatprep.subr.bf16.mxu0 0
        %5610 = vmatpush1.bf16.msra.mxu0 0
        %5611 = vmatprep.subr.bf16.mxu0 0
        %5612 = vmatpush1.bf16.msra.mxu0 0
        %5613 = vmatprep.subr.bf16.mxu0 0
        %5614 = vmatpush1.bf16.msra.mxu0 0
        %5615 = vmatprep.subr.bf16.mxu0 0
        %5616 = vmatpush1.bf16.msra.mxu0 0
        %5617 = vmatprep.subr.bf16.mxu0 0
        %5618 = vmatpush1.bf16.msra.mxu0 0
        %5619 = vmatprep.subr.bf16.mxu0 0
        %5620 = vmatpush1.bf16.msra.mxu0 0
        %5621 = vmatprep.subr.bf16.mxu0 0
        %5622 = vmatpush1.bf16.msra.mxu0 0
        %5623 = vmatprep.subr.bf16.mxu0 0
        %5624 = vmatpush1.bf16.msra.mxu0 0
        %5625 = vmatprep.subr.bf16.mxu0 0
        %5626 = vmatpush1.bf16.msra.mxu0 0
        %5627 = vmatprep.subr.bf16.mxu0 0
        %5628 = vmatpush1.bf16.msra.mxu0 0
        %5629 = vmatprep.subr.bf16.mxu0 0
        %5630 = vmatpush1.bf16.msra.mxu0 0
        %5631 = vmatprep.subr.bf16.mxu0 0
        %5632 = vmatpush1.bf16.msra.mxu0 0
        %5633 = vmatprep.mubr.bf16.mxu0 0
        %5634 = vmatmul.mubr.bf16.gmra.mrb[0].mxu0 %v5599
        %v5635 = vpop.f32.mrb[0].mxu0
        %v5636 = vadd.f32 0.0, %v5635
        %v5637 = vpop.f32.mrb[0].mxu0
        %v5638 = vpop.f32.mrb[0].mxu0
        %v5639 = vpop.f32.mrb[0].mxu0
        %5640 = vdwg.mxu0
        %v5641 = vadd.f32 %v5573, %v5636
        %v5642 = vshrl.u32 %v4662, 16
        %v5652 = vunpack.c.l.b16 %v604
        %v5653 = vunpack.c.l.b16 %v605
        %v5654 = vunpack.c.l.b16 %v606
        %v5655 = vunpack.c.l.b16 %v607
        %v5656 = vunpack.c.l.b16 %v608
        %v5657 = vunpack.c.l.b16 %v609
        %v5658 = vunpack.c.l.b16 %v610
        %v5659 = vunpack.c.l.b16 %v611
        %v5660 = vpack.c.b16 %v5653, %v5652
        %v5661 = vpack.c.b16 %v5655, %v5654
        %v5662 = vpack.c.b16 %v5657, %v5656
        %v5663 = vpack.c.b16 %v5659, %v5658
        %v5669 = vsel %vm681, %v5642, 0
        %5671 = vmatprep.subr.bf16.mxu0 0
        %5672 = vmatpush1.bf16.msra.mxu0 %v5660
        %5673 = vmatprep.subr.bf16.mxu0 0
        %5674 = vmatpush1.bf16.msra.mxu0 %v5661
        %5675 = vmatprep.subr.bf16.mxu0 0
        %5676 = vmatpush1.bf16.msra.mxu0 %v5662
        %5677 = vmatprep.subr.bf16.mxu0 0
        %5678 = vmatpush1.bf16.msra.mxu0 %v5663
        %5679 = vmatprep.subr.bf16.mxu0 0
        %5680 = vmatpush1.bf16.msra.mxu0 0
        %5681 = vmatprep.subr.bf16.mxu0 0
        %5682 = vmatpush1.bf16.msra.mxu0 0
        %5683 = vmatprep.subr.bf16.mxu0 0
        %5684 = vmatpush1.bf16.msra.mxu0 0
        %5685 = vmatprep.subr.bf16.mxu0 0
        %5686 = vmatpush1.bf16.msra.mxu0 0
        %5687 = vmatprep.subr.bf16.mxu0 0
        %5688 = vmatpush1.bf16.msra.mxu0 0
        %5689 = vmatprep.subr.bf16.mxu0 0
        %5690 = vmatpush1.bf16.msra.mxu0 0
        %5691 = vmatprep.subr.bf16.mxu0 0
        %5692 = vmatpush1.bf16.msra.mxu0 0
        %5693 = vmatprep.subr.bf16.mxu0 0
        %5694 = vmatpush1.bf16.msra.mxu0 0
        %5695 = vmatprep.subr.bf16.mxu0 0
        %5696 = vmatpush1.bf16.msra.mxu0 0
        %5697 = vmatprep.subr.bf16.mxu0 0
        %5698 = vmatpush1.bf16.msra.mxu0 0
        %5699 = vmatprep.subr.bf16.mxu0 0
        %5700 = vmatpush1.bf16.msra.mxu0 0
        %5701 = vmatprep.subr.bf16.mxu0 0
        %5702 = vmatpush1.bf16.msra.mxu0 0
        %5703 = vmatprep.mubr.bf16.mxu0 0
        %5704 = vmatmul.mubr.bf16.gmra.mrb[0].mxu0 %v5669
        %v5705 = vpop.f32.mrb[0].mxu0
        %v5706 = vadd.f32 0.0, %v5705
        %v5707 = vpop.f32.mrb[0].mxu0
        %v5708 = vpop.f32.mrb[0].mxu0
        %v5709 = vpop.f32.mrb[0].mxu0
        %5710 = vdwg.mxu0
        %v5711 = vadd.f32 %v5641, %v5706
        %v5713 = vrot.slane %v4662, 1
        %v5722 = vunpack.c.l.b16 %v612
        %v5723 = vunpack.c.l.b16 %v613
        %v5724 = vunpack.c.l.b16 %v614
        %v5725 = vunpack.c.l.b16 %v615
        %v5726 = vunpack.c.l.b16 %v616
        %v5727 = vunpack.c.l.b16 %v617
        %v5728 = vunpack.c.l.b16 %v618
        %v5729 = vunpack.c.l.b16 %v619
        %v5730 = vpack.c.b16 %v5723, %v5722
        %v5731 = vpack.c.b16 %v5725, %v5724
        %v5732 = vpack.c.b16 %v5727, %v5726
        %v5733 = vpack.c.b16 %v5729, %v5728
        %v5739 = vsel %vm681, %v5713, 0
        %5741 = vmatprep.subr.bf16.mxu0 0
        %5742 = vmatpush1.bf16.msra.mxu0 %v5730
        %5743 = vmatprep.subr.bf16.mxu0 0
        %5744 = vmatpush1.bf16.msra.mxu0 %v5731
        %5745 = vmatprep.subr.bf16.mxu0 0
        %5746 = vmatpush1.bf16.msra.mxu0 %v5732
        %5747 = vmatprep.subr.bf16.mxu0 0
        %5748 = vmatpush1.bf16.msra.mxu0 %v5733
        %5749 = vmatprep.subr.bf16.mxu0 0
        %5750 = vmatpush1.bf16.msra.mxu0 0
        %5751 = vmatprep.subr.bf16.mxu0 0
        %5752 = vmatpush1.bf16.msra.mxu0 0
        %5753 = vmatprep.subr.bf16.mxu0 0
        %5754 = vmatpush1.bf16.msra.mxu0 0
        %5755 = vmatprep.subr.bf16.mxu0 0
        %5756 = vmatpush1.bf16.msra.mxu0 0
        %5757 = vmatprep.subr.bf16.mxu0 0
        %5758 = vmatpush1.bf16.msra.mxu0 0
        %5759 = vmatprep.subr.bf16.mxu0 0
        %5760 = vmatpush1.bf16.msra.mxu0 0
        %5761 = vmatprep.subr.bf16.mxu0 0
        %5762 = vmatpush1.bf16.msra.mxu0 0
        %5763 = vmatprep.subr.bf16.mxu0 0
        %5764 = vmatpush1.bf16.msra.mxu0 0
        %5765 = vmatprep.subr.bf16.mxu0 0
        %5766 = vmatpush1.bf16.msra.mxu0 0
        %5767 = vmatprep.subr.bf16.mxu0 0
        %5768 = vmatpush1.bf16.msra.mxu0 0
        %5769 = vmatprep.subr.bf16.mxu0 0
        %5770 = vmatpush1.bf16.msra.mxu0 0
        %5771 = vmatprep.subr.bf16.mxu0 0
        %5772 = vmatpush1.bf16.msra.mxu0 0
        %5773 = vmatprep.mubr.bf16.mxu0 0
        %5774 = vmatmul.mubr.bf16.gmra.mrb[0].mxu0 %v5739
        %v5775 = vpop.f32.mrb[0].mxu0
        %v5776 = vadd.f32 0.0, %v5775
        %v5777 = vpop.f32.mrb[0].mxu0
        %v5778 = vpop.f32.mrb[0].mxu0
        %v5779 = vpop.f32.mrb[0].mxu0
        %5780 = vdwg.mxu0
        %v5781 = vadd.f32 %v5711, %v5776
        %v5790 = vunpack.c.l.b16 %v620
        %v5791 = vunpack.c.l.b16 %v621
        %v5792 = vunpack.c.l.b16 %v622
        %v5793 = vunpack.c.l.b16 %v623
        %v5794 = vunpack.c.l.b16 %v624
        %v5795 = vunpack.c.l.b16 %v625
        %v5796 = vunpack.c.l.b16 %v626
        %v5797 = vunpack.c.l.b16 %v627
        %v5798 = vpack.c.b16 %v5791, %v5790
        %v5799 = vpack.c.b16 %v5793, %v5792
        %v5800 = vpack.c.b16 %v5795, %v5794
        %v5801 = vpack.c.b16 %v5797, %v5796
        %v5807 = vsel %vm681, %v5367, 0
        %5809 = vmatprep.subr.bf16.mxu0 0
        %5810 = vmatpush1.bf16.msra.mxu0 %v5798
        %5811 = vmatprep.subr.bf16.mxu0 0
        %5812 = vmatpush1.bf16.msra.mxu0 %v5799
        %5813 = vmatprep.subr.bf16.mxu0 0
        %5814 = vmatpush1.bf16.msra.mxu0 %v5800
        %5815 = vmatprep.subr.bf16.mxu0 0
        %5816 = vmatpush1.bf16.msra.mxu0 %v5801
        %5817 = vmatprep.subr.bf16.mxu0 0
        %5818 = vmatpush1.bf16.msra.mxu0 0
        %5819 = vmatprep.subr.bf16.mxu0 0
        %5820 = vmatpush1.bf16.msra.mxu0 0
        %5821 = vmatprep.subr.bf16.mxu0 0
        %5822 = vmatpush1.bf16.msra.mxu0 0
        %5823 = vmatprep.subr.bf16.mxu0 0
        %5824 = vmatpush1.bf16.msra.mxu0 0
        %5825 = vmatprep.subr.bf16.mxu0 0
        %5826 = vmatpush1.bf16.msra.mxu0 0
        %5827 = vmatprep.subr.bf16.mxu0 0
        %5828 = vmatpush1.bf16.msra.mxu0 0
        %5829 = vmatprep.subr.bf16.mxu0 0
        %5830 = vmatpush1.bf16.msra.mxu0 0
        %5831 = vmatprep.subr.bf16.mxu0 0
        %5832 = vmatpush1.bf16.msra.mxu0 0
        %5833 = vmatprep.subr.bf16.mxu0 0
        %5834 = vmatpush1.bf16.msra.mxu0 0
        %5835 = vmatprep.subr.bf16.mxu0 0
        %5836 = vmatpush1.bf16.msra.mxu0 0
        %5837 = vmatprep.subr.bf16.mxu0 0
        %5838 = vmatpush1.bf16.msra.mxu0 0
        %5839 = vmatprep.subr.bf16.mxu0 0
        %5840 = vmatpush1.bf16.msra.mxu0 0
        %5841 = vmatprep.mubr.bf16.mxu0 0
        %5842 = vmatmul.mubr.bf16.gmra.mrb[0].mxu0 %v5807
        %v5843 = vpop.f32.mrb[0].mxu0
        %v5844 = vadd.f32 0.0, %v5843
        %v5845 = vpop.f32.mrb[0].mxu0
        %v5846 = vpop.f32.mrb[0].mxu0
        %v5847 = vpop.f32.mrb[0].mxu0
        %5848 = vdwg.mxu0
        %v5849 = vadd.f32 %v5781, %v5844
        %v5850 = vshrl.u32 %v5367, 16
        %v5860 = vunpack.c.l.b16 %v628
        %v5861 = vunpack.c.l.b16 %v629
        %v5862 = vunpack.c.l.b16 %v630
        %v5863 = vunpack.c.l.b16 %v631
        %v5864 = vunpack.c.l.b16 %v632
        %v5865 = vunpack.c.l.b16 %v633
        %v5866 = vunpack.c.l.b16 %v634
        %v5867 = vunpack.c.l.b16 %v635
        %v5868 = vpack.c.b16 %v5861, %v5860
        %v5869 = vpack.c.b16 %v5863, %v5862
        %v5870 = vpack.c.b16 %v5865, %v5864
        %v5871 = vpack.c.b16 %v5867, %v5866
        %v5877 = vsel %vm681, %v5850, 0
        %5879 = vmatprep.subr.bf16.mxu0 0
        %5880 = vmatpush1.bf16.msra.mxu0 %v5868
        %5881 = vmatprep.subr.bf16.mxu0 0
        %5882 = vmatpush1.bf16.msra.mxu0 %v5869
        %5883 = vmatprep.subr.bf16.mxu0 0
        %5884 = vmatpush1.bf16.msra.mxu0 %v5870
        %5885 = vmatprep.subr.bf16.mxu0 0
        %5886 = vmatpush1.bf16.msra.mxu0 %v5871
        %5887 = vmatprep.subr.bf16.mxu0 0
        %5888 = vmatpush1.bf16.msra.mxu0 0
        %5889 = vmatprep.subr.bf16.mxu0 0
        %5890 = vmatpush1.bf16.msra.mxu0 0
        %5891 = vmatprep.subr.bf16.mxu0 0
        %5892 = vmatpush1.bf16.msra.mxu0 0
        %5893 = vmatprep.subr.bf16.mxu0 0
        %5894 = vmatpush1.bf16.msra.mxu0 0
        %5895 = vmatprep.subr.bf16.mxu0 0
        %5896 = vmatpush1.bf16.msra.mxu0 0
        %5897 = vmatprep.subr.bf16.mxu0 0
        %5898 = vmatpush1.bf16.msra.mxu0 0
        %5899 = vmatprep.subr.bf16.mxu0 0
        %5900 = vmatpush1.bf16.msra.mxu0 0
        %5901 = vmatprep.subr.bf16.mxu0 0
        %5902 = vmatpush1.bf16.msra.mxu0 0
        %5903 = vmatprep.subr.bf16.mxu0 0
        %5904 = vmatpush1.bf16.msra.mxu0 0
        %5905 = vmatprep.subr.bf16.mxu0 0
        %5906 = vmatpush1.bf16.msra.mxu0 0
        %5907 = vmatprep.subr.bf16.mxu0 0
        %5908 = vmatpush1.bf16.msra.mxu0 0
        %5909 = vmatprep.subr.bf16.mxu0 0
        %5910 = vmatpush1.bf16.msra.mxu0 0
        %5911 = vmatprep.mubr.bf16.mxu0 0
        %5912 = vmatmul.mubr.bf16.gmra.mrb[0].mxu0 %v5877
        %v5913 = vpop.f32.mrb[0].mxu0
        %v5914 = vadd.f32 0.0, %v5913
        %v5915 = vpop.f32.mrb[0].mxu0
        %v5916 = vpop.f32.mrb[0].mxu0
        %v5917 = vpop.f32.mrb[0].mxu0
        %5918 = vdwg.mxu0
        %v5919 = vadd.f32 %v5849, %v5914
        %v5921 = vrot.slane %v5367, 1
        %v5930 = vunpack.c.l.b16 %v636
        %v5931 = vunpack.c.l.b16 %v637
        %v5932 = vunpack.c.l.b16 %v638
        %v5933 = vunpack.c.l.b16 %v639
        %v5934 = vunpack.c.l.b16 %v640
        %v5935 = vunpack.c.l.b16 %v641
        %v5936 = vunpack.c.l.b16 %v642
        %v5937 = vunpack.c.l.b16 %v643
        %v5938 = vpack.c.b16 %v5931, %v5930
        %v5939 = vpack.c.b16 %v5933, %v5932
        %v5940 = vpack.c.b16 %v5935, %v5934
        %v5941 = vpack.c.b16 %v5937, %v5936
        %v5947 = vsel %vm681, %v5921, 0
        %5949 = vmatprep.subr.bf16.mxu0 0
        %5950 = vmatpush1.bf16.msra.mxu0 %v5938
        %5951 = vmatprep.subr.bf16.mxu0 0
        %5952 = vmatpush1.bf16.msra.mxu0 %v5939
        %5953 = vmatprep.subr.bf16.mxu0 0
        %5954 = vmatpush1.bf16.msra.mxu0 %v5940
        %5955 = vmatprep.subr.bf16.mxu0 0
        %5956 = vmatpush1.bf16.msra.mxu0 %v5941
        %5957 = vmatprep.subr.bf16.mxu0 0
        %5958 = vmatpush1.bf16.msra.mxu0 0
        %5959 = vmatprep.subr.bf16.mxu0 0
        %5960 = vmatpush1.bf16.msra.mxu0 0
        %5961 = vmatprep.subr.bf16.mxu0 0
        %5962 = vmatpush1.bf16.msra.mxu0 0
        %5963 = vmatprep.subr.bf16.mxu0 0
        %5964 = vmatpush1.bf16.msra.mxu0 0
        %5965 = vmatprep.subr.bf16.mxu0 0
        %5966 = vmatpush1.bf16.msra.mxu0 0
        %5967 = vmatprep.subr.bf16.mxu0 0
        %5968 = vmatpush1.bf16.msra.mxu0 0
        %5969 = vmatprep.subr.bf16.mxu0 0
        %5970 = vmatpush1.bf16.msra.mxu0 0
        %5971 = vmatprep.subr.bf16.mxu0 0
        %5972 = vmatpush1.bf16.msra.mxu0 0
        %5973 = vmatprep.subr.bf16.mxu0 0
        %5974 = vmatpush1.bf16.msra.mxu0 0
        %5975 = vmatprep.subr.bf16.mxu0 0
        %5976 = vmatpush1.bf16.msra.mxu0 0
        %5977 = vmatprep.subr.bf16.mxu0 0
        %5978 = vmatpush1.bf16.msra.mxu0 0
        %5979 = vmatprep.subr.bf16.mxu0 0
        %5980 = vmatpush1.bf16.msra.mxu0 0
        %5981 = vmatprep.mubr.bf16.mxu0 0
        %5982 = vmatmul.mubr.bf16.gmra.mrb[0].mxu0 %v5947
        %v5983 = vpop.f32.mrb[0].mxu0
        %v5984 = vadd.f32 0.0, %v5983
        %v5985 = vpop.f32.mrb[0].mxu0
        %v5986 = vpop.f32.mrb[0].mxu0
        %v5987 = vpop.f32.mrb[0].mxu0
        %5988 = vdwg.mxu0
        %v5989 = vadd.f32 %v5919, %v5984
        %v5990 = vadd.f32 %v5989, %v441
        %v5991 = vmax.f32 %v5990, 0.0
        %v5992 = vpack.c.bf16 %v5991, %v5991
        %v5993 = vld [vmem:[%s9] sm:$0xff]
        %v5994 = vld [vmem:[%s9 + $0x8] sm:$0xff]
        %v5995 = vld [vmem:[%s9 + $0x10] sm:$0xff]
        %v5996 = vld [vmem:[%s9 + $0x18] sm:$0xff]
        %v5997 = vld [vmem:[%s9 + $0x20] sm:$0xff]
        %v5998 = vld [vmem:[%s9 + $0x28] sm:$0xff]
        %v5999 = vld [vmem:[%s9 + $0x30] sm:$0xff]
        %v6000 = vld [vmem:[%s9 + $0x38] sm:$0xff]
        %v6001 = vld [vmem:[%s9 + $0x40] sm:$0xff]
        %v6002 = vld [vmem:[%s9 + $0x48] sm:$0xff]
        %v6003 = vld [vmem:[%s9 + $0x50] sm:$0xff]
        %v6004 = vld [vmem:[%s9 + $0x58] sm:$0xff]
        %v6005 = vld [vmem:[%s9 + $0x60] sm:$0xff]
        %v6006 = vld [vmem:[%s9 + $0x68] sm:$0xff]
        %v6007 = vld [vmem:[%s9 + $0x70] sm:$0xff]
        %v6008 = vld [vmem:[%s9 + $0x78] sm:$0xff]
        %v6025 = vunpack.c.l.b16 %v5993
        %v6026 = vunpack.c.h.b16 %v5993
        %v6027 = vunpack.c.l.b16 %v5994
        %v6028 = vunpack.c.h.b16 %v5994
        %v6029 = vunpack.c.l.b16 %v5995
        %v6030 = vunpack.c.h.b16 %v5995
        %v6031 = vunpack.c.l.b16 %v5996
        %v6032 = vunpack.c.h.b16 %v5996
        %v6033 = vunpack.c.l.b16 %v5997
        %v6034 = vunpack.c.h.b16 %v5997
        %v6035 = vunpack.c.l.b16 %v5998
        %v6036 = vunpack.c.h.b16 %v5998
        %v6037 = vunpack.c.l.b16 %v5999
        %v6038 = vunpack.c.h.b16 %v5999
        %v6039 = vunpack.c.l.b16 %v6000
        %v6040 = vunpack.c.h.b16 %v6000
        %v6041 = vunpack.c.l.b16 %v6001
        %v6042 = vunpack.c.h.b16 %v6001
        %v6043 = vunpack.c.l.b16 %v6002
        %v6044 = vunpack.c.h.b16 %v6002
        %v6045 = vunpack.c.l.b16 %v6003
        %v6046 = vunpack.c.h.b16 %v6003
        %v6047 = vunpack.c.l.b16 %v6004
        %v6048 = vunpack.c.h.b16 %v6004
        %v6049 = vunpack.c.l.b16 %v6005
        %v6050 = vunpack.c.h.b16 %v6005
        %v6051 = vunpack.c.l.b16 %v6006
        %v6052 = vunpack.c.h.b16 %v6006
        %v6053 = vunpack.c.l.b16 %v6007
        %v6054 = vunpack.c.h.b16 %v6007
        %v6055 = vunpack.c.l.b16 %v6008
        %v6056 = vunpack.c.h.b16 %v6008
        %v6057 = vpack.c.b16 %v6029, %v6025
        %v6058 = vpack.c.b16 %v6030, %v6026
        %v6059 = vpack.c.b16 %v6031, %v6027
        %v6060 = vpack.c.b16 %v6032, %v6028
        %v6061 = vpack.c.b16 %v6037, %v6033
        %v6062 = vpack.c.b16 %v6038, %v6034
        %v6063 = vpack.c.b16 %v6039, %v6035
        %v6064 = vpack.c.b16 %v6040, %v6036
        %v6065 = vpack.c.b16 %v6045, %v6041
        %v6066 = vpack.c.b16 %v6046, %v6042
        %v6067 = vpack.c.b16 %v6047, %v6043
        %v6068 = vpack.c.b16 %v6048, %v6044
        %v6069 = vpack.c.b16 %v6053, %v6049
        %v6070 = vpack.c.b16 %v6054, %v6050
        %v6071 = vpack.c.b16 %v6055, %v6051
        %v6072 = vpack.c.b16 %v6056, %v6052
        %v6090 = vlaneseq
        %v6091 = vshrl.u32 %v6090, 7
        %v6092 = vsub.s32 0, %v6091
        %v6093 = vrot.slane %v442, %v6092
        %v6094 = vlaneseq
        %v6095 = vshrl.u32 %v6094, 7
        %v6096 = vsub.s32 1, %v6095
        %v6097 = vrot.slane %v442, %v6096
        %v6098 = vlaneseq
        %v6099 = vshrl.u32 %v6098, 7
        %v6100 = vsub.s32 2, %v6099
        %v6101 = vrot.slane %v442, %v6100
        %v6102 = vlaneseq
        %v6103 = vshrl.u32 %v6102, 7
        %v6104 = vsub.s32 3, %v6103
        %v6105 = vrot.slane %v442, %v6104
        %v6111 = vsel %vm681, %v5992, 0
        %6113 = vmatprep.subr.bf16.mxu0 %v6058
        %6114 = vmatpush1.bf16.msra.mxu0 %v6057
        %6115 = vmatprep.subr.bf16.mxu0 %v6062
        %6116 = vmatpush1.bf16.msra.mxu0 %v6061
        %6117 = vmatprep.subr.bf16.mxu0 %v6066
        %6118 = vmatpush1.bf16.msra.mxu0 %v6065
        %6119 = vmatprep.subr.bf16.mxu0 %v6070
        %6120 = vmatpush1.bf16.msra.mxu0 %v6069
        %6121 = vmatprep.subr.bf16.mxu0 0
        %6122 = vmatpush1.bf16.msra.mxu0 0
        %6123 = vmatprep.subr.bf16.mxu0 0
        %6124 = vmatpush1.bf16.msra.mxu0 0
        %6125 = vmatprep.subr.bf16.mxu0 0
        %6126 = vmatpush1.bf16.msra.mxu0 0
        %6127 = vmatprep.subr.bf16.mxu0 0
        %6128 = vmatpush1.bf16.msra.mxu0 0
        %6129 = vmatprep.subr.bf16.mxu0 0
        %6130 = vmatpush1.bf16.msra.mxu0 0
        %6131 = vmatprep.subr.bf16.mxu0 0
        %6132 = vmatpush1.bf16.msra.mxu0 0
        %6133 = vmatprep.subr.bf16.mxu0 0
        %6134 = vmatpush1.bf16.msra.mxu0 0
        %6135 = vmatprep.subr.bf16.mxu0 0
        %6136 = vmatpush1.bf16.msra.mxu0 0
        %6137 = vmatprep.subr.bf16.mxu0 0
        %6138 = vmatpush1.bf16.msra.mxu0 0
        %6139 = vmatprep.subr.bf16.mxu0 0
        %6140 = vmatpush1.bf16.msra.mxu0 0
        %6141 = vmatprep.subr.bf16.mxu0 0
        %6142 = vmatpush1.bf16.msra.mxu0 0
        %6143 = vmatprep.subr.bf16.mxu0 0
        %6144 = vmatpush1.bf16.msra.mxu0 0
        %6145 = vmatprep.mubr.bf16.mxu0 0
        %6146 = vmatmul.mubr.bf16.gmra.mrb[0].mxu0 %v6111
        %v6147 = vpop.f32.mrb[0].mxu0
        %v6148 = vadd.f32 %v6093, %v6147
        %v6149 = vpop.f32.mrb[0].mxu0
        %v6150 = vadd.f32 %v6097, %v6149
        %v6151 = vpop.f32.mrb[0].mxu0
        %v6152 = vpop.f32.mrb[0].mxu0
        %6153 = vdwg.mxu0
        %6154 = vmatprep.subr.bf16.mxu0 %v6060
        %6155 = vmatpush1.bf16.msra.mxu0 %v6059
        %6156 = vmatprep.subr.bf16.mxu0 %v6064
        %6157 = vmatpush1.bf16.msra.mxu0 %v6063
        %6158 = vmatprep.subr.bf16.mxu0 %v6068
        %6159 = vmatpush1.bf16.msra.mxu0 %v6067
        %6160 = vmatprep.subr.bf16.mxu0 %v6072
        %6161 = vmatpush1.bf16.msra.mxu0 %v6071
        %6162 = vmatprep.subr.bf16.mxu0 0
        %6163 = vmatpush1.bf16.msra.mxu0 0
        %6164 = vmatprep.subr.bf16.mxu0 0
        %6165 = vmatpush1.bf16.msra.mxu0 0
        %6166 = vmatprep.subr.bf16.mxu0 0
        %6167 = vmatpush1.bf16.msra.mxu0 0
        %6168 = vmatprep.subr.bf16.mxu0 0
        %6169 = vmatpush1.bf16.msra.mxu0 0
        %6170 = vmatprep.subr.bf16.mxu0 0
        %6171 = vmatpush1.bf16.msra.mxu0 0
        %6172 = vmatprep.subr.bf16.mxu0 0
        %6173 = vmatpush1.bf16.msra.mxu0 0
        %6174 = vmatprep.subr.bf16.mxu0 0
        %6175 = vmatpush1.bf16.msra.mxu0 0
        %6176 = vmatprep.subr.bf16.mxu0 0
        %6177 = vmatpush1.bf16.msra.mxu0 0
        %6178 = vmatprep.subr.bf16.mxu0 0
        %6179 = vmatpush1.bf16.msra.mxu0 0
        %6180 = vmatprep.subr.bf16.mxu0 0
        %6181 = vmatpush1.bf16.msra.mxu0 0
        %6182 = vmatprep.subr.bf16.mxu0 0
        %6183 = vmatpush1.bf16.msra.mxu0 0
        %6184 = vmatprep.subr.bf16.mxu0 0
        %6185 = vmatpush1.bf16.msra.mxu0 0
        %6186 = vmatprep.mubr.bf16.mxu0 0
        %6187 = vmatmul.mubr.bf16.gmra.mrb[0].mxu0 %v6111
        %v6188 = vpop.f32.mrb[0].mxu0
        %v6189 = vadd.f32 %v6101, %v6188
        %v6190 = vpop.f32.mrb[0].mxu0
        %v6191 = vadd.f32 %v6105, %v6190
        %v6192 = vpop.f32.mrb[0].mxu0
        %v6193 = vpop.f32.mrb[0].mxu0
        %6194 = vdwg.mxu0
        %v6195 = vmax.f32 %v6148, 0.0
        %v6196 = vmax.f32 %v6150, 0.0
        %v6197 = vmax.f32 %v6189, 0.0
        %v6198 = vmax.f32 %v6191, 0.0
        %v6199 = vpack.c.bf16 %v6195, %v6195
        %v6200 = vpack.c.bf16 %v6196, %v6196
        %v6201 = vpack.c.bf16 %v6197, %v6197
        %v6202 = vpack.c.bf16 %v6198, %v6198
        %v6203 = vld [vmem:[%s11] sm:$0xf]
        %v6204 = vld [vmem:[%s11 + $0x4] sm:$0xf]
        %v6205 = vld [vmem:[%s11 + $0x8] sm:$0xf]
        %v6206 = vld [vmem:[%s11 + $0xc] sm:$0xf]
        %v6207 = vld [vmem:[%s11 + $0x10] sm:$0xf]
        %v6208 = vld [vmem:[%s11 + $0x14] sm:$0xf]
        %v6209 = vld [vmem:[%s11 + $0x18] sm:$0xf]
        %v6210 = vld [vmem:[%s11 + $0x1c] sm:$0xf]
        %v6211 = vld [vmem:[%s11 + $0x20] sm:$0xf]
        %v6212 = vld [vmem:[%s11 + $0x24] sm:$0xf]
        %v6213 = vld [vmem:[%s11 + $0x28] sm:$0xf]
        %v6214 = vld [vmem:[%s11 + $0x2c] sm:$0xf]
        %v6215 = vld [vmem:[%s11 + $0x30] sm:$0xf]
        %v6216 = vld [vmem:[%s11 + $0x34] sm:$0xf]
        %v6217 = vld [vmem:[%s11 + $0x38] sm:$0xf]
        %v6218 = vld [vmem:[%s11 + $0x3c] sm:$0xf]
        %v6219 = vld [vmem:[%s11 + $0x40] sm:$0xf]
        %v6220 = vld [vmem:[%s11 + $0x44] sm:$0xf]
        %v6221 = vld [vmem:[%s11 + $0x48] sm:$0xf]
        %v6222 = vld [vmem:[%s11 + $0x4c] sm:$0xf]
        %v6223 = vld [vmem:[%s11 + $0x50] sm:$0xf]
        %v6224 = vld [vmem:[%s11 + $0x54] sm:$0xf]
        %v6225 = vld [vmem:[%s11 + $0x58] sm:$0xf]
        %v6226 = vld [vmem:[%s11 + $0x5c] sm:$0xf]
        %v6227 = vld [vmem:[%s11 + $0x60] sm:$0xf]
        %v6228 = vld [vmem:[%s11 + $0x64] sm:$0xf]
        %v6229 = vld [vmem:[%s11 + $0x68] sm:$0xf]
        %v6230 = vld [vmem:[%s11 + $0x6c] sm:$0xf]
        %v6231 = vld [vmem:[%s11 + $0x70] sm:$0xf]
        %v6232 = vld [vmem:[%s11 + $0x74] sm:$0xf]
        %v6233 = vld [vmem:[%s11 + $0x78] sm:$0xf]
        %v6234 = vld [vmem:[%s11 + $0x7c] sm:$0xf]
        %v6235 = vld [vmem:[%s11 + $0x80] sm:$0xf]
        %v6236 = vld [vmem:[%s11 + $0x84] sm:$0xf]
        %v6237 = vld [vmem:[%s11 + $0x88] sm:$0xf]
        %v6238 = vld [vmem:[%s11 + $0x8c] sm:$0xf]
        %v6239 = vld [vmem:[%s11 + $0x90] sm:$0xf]
        %v6240 = vld [vmem:[%s11 + $0x94] sm:$0xf]
        %v6241 = vld [vmem:[%s11 + $0x98] sm:$0xf]
        %v6242 = vld [vmem:[%s11 + $0x9c] sm:$0xf]
        %v6243 = vld [vmem:[%s11 + $0xa0] sm:$0xf]
        %v6244 = vld [vmem:[%s11 + $0xa4] sm:$0xf]
        %v6245 = vld [vmem:[%s11 + $0xa8] sm:$0xf]
        %v6246 = vld [vmem:[%s11 + $0xac] sm:$0xf]
        %v6247 = vld [vmem:[%s11 + $0xb0] sm:$0xf]
        %v6248 = vld [vmem:[%s11 + $0xb4] sm:$0xf]
        %v6249 = vld [vmem:[%s11 + $0xb8] sm:$0xf]
        %v6250 = vld [vmem:[%s11 + $0xbc] sm:$0xf]
        %v6251 = vld [vmem:[%s11 + $0xc0] sm:$0xf]
        %v6252 = vld [vmem:[%s11 + $0xc4] sm:$0xf]
        %v6253 = vld [vmem:[%s11 + $0xc8] sm:$0xf]
        %v6254 = vld [vmem:[%s11 + $0xcc] sm:$0xf]
        %v6255 = vld [vmem:[%s11 + $0xd0] sm:$0xf]
        %v6256 = vld [vmem:[%s11 + $0xd4] sm:$0xf]
        %v6257 = vld [vmem:[%s11 + $0xd8] sm:$0xf]
        %v6258 = vld [vmem:[%s11 + $0xdc] sm:$0xf]
        %v6259 = vld [vmem:[%s11 + $0xe0] sm:$0xf]
        %v6260 = vld [vmem:[%s11 + $0xe4] sm:$0xf]
        %v6261 = vld [vmem:[%s11 + $0xe8] sm:$0xf]
        %v6262 = vld [vmem:[%s11 + $0xec] sm:$0xf]
        %v6263 = vld [vmem:[%s11 + $0xf0] sm:$0xf]
        %v6264 = vld [vmem:[%s11 + $0xf4] sm:$0xf]
        %v6265 = vld [vmem:[%s11 + $0xf8] sm:$0xf]
        %v6266 = vld [vmem:[%s11 + $0xfc] sm:$0xf]
        %v6331 = vunpack.c.l.b16 %v6203
        %v6332 = vunpack.c.l.b16 %v6204
        %v6333 = vunpack.c.l.b16 %v6205
        %v6334 = vunpack.c.l.b16 %v6206
        %v6335 = vunpack.c.l.b16 %v6207
        %v6336 = vunpack.c.l.b16 %v6208
        %v6337 = vunpack.c.l.b16 %v6209
        %v6338 = vunpack.c.l.b16 %v6210
        %v6339 = vunpack.c.l.b16 %v6211
        %v6340 = vunpack.c.l.b16 %v6212
        %v6341 = vunpack.c.l.b16 %v6213
        %v6342 = vunpack.c.l.b16 %v6214
        %v6343 = vunpack.c.l.b16 %v6215
        %v6344 = vunpack.c.l.b16 %v6216
        %v6345 = vunpack.c.l.b16 %v6217
        %v6346 = vunpack.c.l.b16 %v6218
        %v6347 = vunpack.c.l.b16 %v6219
        %v6348 = vunpack.c.l.b16 %v6220
        %v6349 = vunpack.c.l.b16 %v6221
        %v6350 = vunpack.c.l.b16 %v6222
        %v6351 = vunpack.c.l.b16 %v6223
        %v6352 = vunpack.c.l.b16 %v6224
        %v6353 = vunpack.c.l.b16 %v6225
        %v6354 = vunpack.c.l.b16 %v6226
        %v6355 = vunpack.c.l.b16 %v6227
        %v6356 = vunpack.c.l.b16 %v6228
        %v6357 = vunpack.c.l.b16 %v6229
        %v6358 = vunpack.c.l.b16 %v6230
        %v6359 = vunpack.c.l.b16 %v6231
        %v6360 = vunpack.c.l.b16 %v6232
        %v6361 = vunpack.c.l.b16 %v6233
        %v6362 = vunpack.c.l.b16 %v6234
        %v6363 = vunpack.c.l.b16 %v6235
        %v6364 = vunpack.c.l.b16 %v6236
        %v6365 = vunpack.c.l.b16 %v6237
        %v6366 = vunpack.c.l.b16 %v6238
        %v6367 = vunpack.c.l.b16 %v6239
        %v6368 = vunpack.c.l.b16 %v6240
        %v6369 = vunpack.c.l.b16 %v6241
        %v6370 = vunpack.c.l.b16 %v6242
        %v6371 = vunpack.c.l.b16 %v6243
        %v6372 = vunpack.c.l.b16 %v6244
        %v6373 = vunpack.c.l.b16 %v6245
        %v6374 = vunpack.c.l.b16 %v6246
        %v6375 = vunpack.c.l.b16 %v6247
        %v6376 = vunpack.c.l.b16 %v6248
        %v6377 = vunpack.c.l.b16 %v6249
        %v6378 = vunpack.c.l.b16 %v6250
        %v6379 = vunpack.c.l.b16 %v6251
        %v6380 = vunpack.c.l.b16 %v6252
        %v6381 = vunpack.c.l.b16 %v6253
        %v6382 = vunpack.c.l.b16 %v6254
        %v6383 = vunpack.c.l.b16 %v6255
        %v6384 = vunpack.c.l.b16 %v6256
        %v6385 = vunpack.c.l.b16 %v6257
        %v6386 = vunpack.c.l.b16 %v6258
        %v6387 = vunpack.c.l.b16 %v6259
        %v6388 = vunpack.c.l.b16 %v6260
        %v6389 = vunpack.c.l.b16 %v6261
        %v6390 = vunpack.c.l.b16 %v6262
        %v6391 = vunpack.c.l.b16 %v6263
        %v6392 = vunpack.c.l.b16 %v6264
        %v6393 = vunpack.c.l.b16 %v6265
        %v6394 = vunpack.c.l.b16 %v6266
        %v6395 = vpack.c.b16 %v6332, %v6331
        %v6396 = vpack.c.b16 %v6334, %v6333
        %v6397 = vpack.c.b16 %v6336, %v6335
        %v6398 = vpack.c.b16 %v6338, %v6337
        %v6399 = vpack.c.b16 %v6340, %v6339
        %v6400 = vpack.c.b16 %v6342, %v6341
        %v6401 = vpack.c.b16 %v6344, %v6343
        %v6402 = vpack.c.b16 %v6346, %v6345
        %v6403 = vpack.c.b16 %v6348, %v6347
        %v6404 = vpack.c.b16 %v6350, %v6349
        %v6405 = vpack.c.b16 %v6352, %v6351
        %v6406 = vpack.c.b16 %v6354, %v6353
        %v6407 = vpack.c.b16 %v6356, %v6355
        %v6408 = vpack.c.b16 %v6358, %v6357
        %v6409 = vpack.c.b16 %v6360, %v6359
        %v6410 = vpack.c.b16 %v6362, %v6361
        %v6411 = vpack.c.b16 %v6364, %v6363
        %v6412 = vpack.c.b16 %v6366, %v6365
        %v6413 = vpack.c.b16 %v6368, %v6367
        %v6414 = vpack.c.b16 %v6370, %v6369
        %v6415 = vpack.c.b16 %v6372, %v6371
        %v6416 = vpack.c.b16 %v6374, %v6373
        %v6417 = vpack.c.b16 %v6376, %v6375
        %v6418 = vpack.c.b16 %v6378, %v6377
        %v6419 = vpack.c.b16 %v6380, %v6379
        %v6420 = vpack.c.b16 %v6382, %v6381
        %v6421 = vpack.c.b16 %v6384, %v6383
        %v6422 = vpack.c.b16 %v6386, %v6385
        %v6423 = vpack.c.b16 %v6388, %v6387
        %v6424 = vpack.c.b16 %v6390, %v6389
        %v6425 = vpack.c.b16 %v6392, %v6391
        %v6426 = vpack.c.b16 %v6394, %v6393
        %6459 = vmatprep.subr.bf16.mxu0 0
        %6460 = vmatpush1.bf16.msra.mxu0 %v6395
        %6461 = vmatprep.subr.bf16.mxu0 0
        %6462 = vmatpush1.bf16.msra.mxu0 %v6396
        %6463 = vmatprep.subr.bf16.mxu0 0
        %6464 = vmatpush1.bf16.msra.mxu0 %v6397
        %6465 = vmatprep.subr.bf16.mxu0 0
        %6466 = vmatpush1.bf16.msra.mxu0 %v6398
        %6467 = vmatprep.subr.bf16.mxu0 0
        %6468 = vmatpush1.bf16.msra.mxu0 %v6399
        %6469 = vmatprep.subr.bf16.mxu0 0
        %6470 = vmatpush1.bf16.msra.mxu0 %v6400
        %6471 = vmatprep.subr.bf16.mxu0 0
        %6472 = vmatpush1.bf16.msra.mxu0 %v6401
        %6473 = vmatprep.subr.bf16.mxu0 0
        %6474 = vmatpush1.bf16.msra.mxu0 %v6402
        %6475 = vmatprep.subr.bf16.mxu0 0
        %6476 = vmatpush1.bf16.msra.mxu0 %v6403
        %6477 = vmatprep.subr.bf16.mxu0 0
        %6478 = vmatpush1.bf16.msra.mxu0 %v6404
        %6479 = vmatprep.subr.bf16.mxu0 0
        %6480 = vmatpush1.bf16.msra.mxu0 %v6405
        %6481 = vmatprep.subr.bf16.mxu0 0
        %6482 = vmatpush1.bf16.msra.mxu0 %v6406
        %6483 = vmatprep.subr.bf16.mxu0 0
        %6484 = vmatpush1.bf16.msra.mxu0 %v6407
        %6485 = vmatprep.subr.bf16.mxu0 0
        %6486 = vmatpush1.bf16.msra.mxu0 %v6408
        %6487 = vmatprep.subr.bf16.mxu0 0
        %6488 = vmatpush1.bf16.msra.mxu0 %v6409
        %6489 = vmatprep.subr.bf16.mxu0 0
        %6490 = vmatpush1.bf16.msra.mxu0 %v6410
        %6491 = vmatprep.mubr.bf16.mxu0 %v6200
        %6492 = vmatmul.mubr.bf16.gmra.mrb[0].mxu0 %v6199
        %v6493 = vpop.f32.mrb[0].mxu0
        %v6494 = vadd.f32 %v443, %v6493
        %v6495 = vpop.f32.mrb[0].mxu0
        %v6496 = vpop.f32.mrb[0].mxu0
        %v6497 = vpop.f32.mrb[0].mxu0
        %6498 = vdwg.mxu0
        %6499 = vmatprep.subr.bf16.mxu0 0
        %6500 = vmatpush1.bf16.msra.mxu0 %v6411
        %6501 = vmatprep.subr.bf16.mxu0 0
        %6502 = vmatpush1.bf16.msra.mxu0 %v6412
        %6503 = vmatprep.subr.bf16.mxu0 0
        %6504 = vmatpush1.bf16.msra.mxu0 %v6413
        %6505 = vmatprep.subr.bf16.mxu0 0
        %6506 = vmatpush1.bf16.msra.mxu0 %v6414
        %6507 = vmatprep.subr.bf16.mxu0 0
        %6508 = vmatpush1.bf16.msra.mxu0 %v6415
        %6509 = vmatprep.subr.bf16.mxu0 0
        %6510 = vmatpush1.bf16.msra.mxu0 %v6416
        %6511 = vmatprep.subr.bf16.mxu0 0
        %6512 = vmatpush1.bf16.msra.mxu0 %v6417
        %6513 = vmatprep.subr.bf16.mxu0 0
        %6514 = vmatpush1.bf16.msra.mxu0 %v6418
        %6515 = vmatprep.subr.bf16.mxu0 0
        %6516 = vmatpush1.bf16.msra.mxu0 %v6419
        %6517 = vmatprep.subr.bf16.mxu0 0
        %6518 = vmatpush1.bf16.msra.mxu0 %v6420
        %6519 = vmatprep.subr.bf16.mxu0 0
        %6520 = vmatpush1.bf16.msra.mxu0 %v6421
        %6521 = vmatprep.subr.bf16.mxu0 0
        %6522 = vmatpush1.bf16.msra.mxu0 %v6422
        %6523 = vmatprep.subr.bf16.mxu0 0
        %6524 = vmatpush1.bf16.msra.mxu0 %v6423
        %6525 = vmatprep.subr.bf16.mxu0 0
        %6526 = vmatpush1.bf16.msra.mxu0 %v6424
        %6527 = vmatprep.subr.bf16.mxu0 0
        %6528 = vmatpush1.bf16.msra.mxu0 %v6425
        %6529 = vmatprep.subr.bf16.mxu0 0
        %6530 = vmatpush1.bf16.msra.mxu0 %v6426
        %6531 = vmatprep.mubr.bf16.mxu0 %v6202
        %6532 = vmatmul.mubr.bf16.gmra.mrb[0].mxu0 %v6201
        %v6533 = vpop.f32.mrb[0].mxu0
        %v6534 = vadd.f32 %v6494, %v6533
        %v6535 = vpop.f32.mrb[0].mxu0
        %v6536 = vpop.f32.mrb[0].mxu0
        %v6537 = vpop.f32.mrb[0].mxu0
        %6538 = vdwg.mxu0
        %6539 = vst [vmem:[%s432] sm:$0x1] %v6534
        %s6540 = sand.u32 %s313, 1
        %s6541 = scalar_lea.sflag [#allocation3], %s6540
        %s6542 = sand.u32 %s313, 1
        %s6543 = scalar_lea.vmem [#allocation2], %s6542
        // Predicated region
        $region73: #{_lambda_.1} parent=71 // pred_check
          %p6544 = pneg %p323
        $region74: #{_lambda_.1} parent=71 // pred_check_branch
          %6546 = sbr.rel (%p6544) target = $region76
        $region75: #{_lambda_.1} parent=71 // pred_region
          %s6548 = ssub.s32 16, 16
          %6549 = vsyncadd %s6541, %s6548
          %s6550 = smul.addr %s27, 16
          %s6551 = scalar_lea.hbm %s13, %s6550
          %s6553 = sshll.u32 %s6543, 4
          %s6554 = int_to_ptr.vmem [resolvable:$true] %s6553
          %6556 = dma.vmem_to_hbm [thread:$0]  %s6554, 16, %s6551, %s6541
        $region76: #{_lambda_.1} parent=71 // pred_fallthru
          _
      $region72: #{_lambda_.1} parent=5 // pred_fallthru
        _
      %p6557 = scmp.le.s32.totalorder 2, %s22
      // Predicated region
      $region77: #{_lambda_.1} parent=5 // pred_check
        %p6558 = pneg %p6557
      $region78: #{_lambda_.1} parent=5 // pred_check_branch
        %6560 = sbr.rel (%p6558) target = $region80
      $region79: #{_lambda_.1} parent=5 // pred_region
        %s6561 = ssub.s32 %s22, 2
        // Predicated region
        $region81: #{_lambda_.1} parent=79 // pred_check
          %p6562 = pneg %p329
        $region82: #{_lambda_.1} parent=79 // pred_check_branch
          %6564 = sbr.rel (%p6562) target = $region84
        $region83: #{_lambda_.1} parent=79 // pred_region
          %s6565 = sand.u32 %s314, 1
          %s6566 = scalar_lea.sflag [#allocation3], %s6565
          %s6567 = sand.u32 %s314, 1
          %s6568 = scalar_lea.vmem [#allocation2], %s6567
          %6569 = dma.done %s6566, 16
        $region84: #{_lambda_.1} parent=79 // pred_fallthru
          _
      $region80: #{_lambda_.1} parent=5 // pred_fallthru
        _
    $region6: #{_lambda_.1} parent=1 // loop_footer
      %s26 = sadd.s32 1, %s22
    $region7: #{_lambda_.1} parent=1 // loop_footer_branch
      %21 = sbr.rel target = $region3
    $region8: #{_lambda_.1} parent=1 // loop_exit
      _
    %6570 = vsyncpa [#allocation3], 1
    %s6571 = scalar_lea.sflag [#allocation3], 1
    %6572 = vsyncpa %s6571, 1

</llo_original>
